<compile_context>
chip_gen: v7x
topology: tpu7x:2x2x1
jax: 0.10.0
libtpu: 0.0.40
codegen_flags: <defaults>
</compile_context>

<pallas_src>
import numpy as np
import jax
import jax.numpy as jnp
from jax.experimental import pallas as pl
from jax.experimental.pallas import tpu as pltpu

NUM_CLASSES = 15   # module-level `num_classes` in the reference script
PATCH = 16         # DPT patch size (forward uses input//16 for the token grid)
HIDDEN = 32        # small stand-in for dpt-large hidden_size (=1024)


# ---------------------------------------------------------------------------
# Bilinear interpolation matrices (PyTorch semantics, align_corners=False).
# out = M @ in along one spatial axis; full 2D bilinear = Mh @ X @ Mw^T.
# The two cascaded resizes are composed exactly: A = a2 @ a1, Bt = (b2 @ b1)^T.
# Built with numpy at trace time -> baked in as constants (no per-call XLA work).
# ---------------------------------------------------------------------------
def bilinear_matrix_np(in_size, out_size):
    scale = in_size / out_size
    i = np.arange(out_size, dtype=np.float64)
    src = (i + 0.5) * scale - 0.5
    src = np.clip(src, 0.0, None)
    i0 = np.minimum(np.floor(src).astype(np.int64), in_size - 1)
    i1 = np.minimum(i0 + 1, in_size - 1)
    frac = src - i0
    M = np.zeros((out_size, in_size), dtype=np.float64)
    M[np.arange(out_size), i0] += 1.0 - frac
    M[np.arange(out_size), i1] += frac
    return M


def composed_bilinear_matrices(h, w, out_h=512, out_w=512, scale=32):
    a1 = bilinear_matrix_np(h, scale * h)        # Upsample rows (x32)
    b1 = bilinear_matrix_np(w, scale * w)        # Upsample cols (x32)
    a2 = bilinear_matrix_np(scale * h, out_h)    # interpolate rows -> 512
    b2 = bilinear_matrix_np(scale * w, out_w)    # interpolate cols -> 512
    A = (a2 @ a1).astype(np.float32)             # (out_h, h)
    Bt = (b2 @ b1).T.astype(np.float32)          # (w, out_w)
    return jnp.asarray(A), jnp.asarray(Bt)


# ---------------------------------------------------------------------------
# Pallas kernels
# ---------------------------------------------------------------------------
def _patch_embed_kernel(p_ref, w_ref, b_ref, pos_ref, o_ref):
    # p_ref: (B*P, D)  w_ref: (D, H)  b_ref: (1, H)  pos_ref: (B*P, H)  o_ref: (B*P, H)
    o_ref[...] = (jnp.dot(p_ref[...], w_ref[...],
                          preferred_element_type=jnp.float32)
                  + b_ref[...] + pos_ref[...])


def _fused_head_kernel(f_ref, w_ref, b_ref, a_ref, bt_ref, o_ref):
    # f_ref : (1, hidden*h, w)       channel-row-stacked features of one image
    # w_ref : (1, Cblk*h, hidden*h)  kron(conv_w_block, I_h)
    # b_ref : (1, Cblk*h, 1)         per-row conv bias
    # a_ref : (out_h, h)             composed row-interpolation matrix
    # bt_ref: (w, out_w)             composed column-interpolation matrix (transposed)
    # o_ref : (1, Cblk, out_h, out_w)
    hh = a_ref.shape[1]
    cblk = o_ref.shape[1]
    # 1x1 conv; result is already channel-row-stacked (Cblk*h, w): no reshape.
    rows = jnp.dot(w_ref[0], f_ref[0], preferred_element_type=jnp.float32) + b_ref[0]
    # Column interpolation first -> lane-dense intermediate (last dim = out_w).
    t = jnp.dot(rows, bt_ref[...], preferred_element_type=jnp.float32)   # (Cblk*h, out_w)
    # Row interpolation per channel; each store is an unmasked 512-lane write.
    # Static Python loop (cblk=5) with sublane-aligned slices (h multiple of 8).
    # TODO(synk): could cast matmul operands to bfloat16 (keep f32 accumulation)
    # for extra MXU headroom on v5e; kept f32 to match the f32 reference exactly
    # (kernel is writeback-bound, so this costs nothing in wall clock).
    for c in range(cblk):
        o_ref[0, c] = jnp.dot(a_ref[...], t[c * hh:(c + 1) * hh, :],
                              preferred_element_type=jnp.float32)


# ---------------------------------------------------------------------------
# Pallas wrappers
# ---------------------------------------------------------------------------
def patch_embed(patches_flat, w, b, pos_flat):
    # Single un-gridded call: batch folded into the matmul M dimension.
    BP, _ = patches_flat.shape
    H = w.shape[1]
    return pl.pallas_call(
        _patch_embed_kernel,
        out_shape=jax.ShapeDtypeStruct((BP, H), jnp.float32),
    )(patches_flat, w, b, pos_flat)


def _pick_cblk(num_classes, max_block=6):
    # Largest divisor of num_classes with a <= ~6 MiB f32 (Cblk,512,512) block:
    # keeps the double-buffered output comfortably inside v7x's VMEM budget.
    for c in range(min(max_block, num_classes), 0, -1):
        if num_classes % c == 0:
            return c
    return 1


def fused_seg_head(feat_stack, w_stack, b_stack, A, Bt, num_classes):
    B, KH, w = feat_stack.shape          # (B, hidden*h, w)
    out_h, h = A.shape
    out_w = Bt.shape[1]
    cblk = _pick_cblk(num_classes)
    CB = num_classes // cblk

    w_blk = w_stack.reshape(CB, cblk * h, KH)   # (CB, Cblk*h, hidden*h)
    b_blk = b_stack.reshape(CB, cblk * h, 1)    # (CB, Cblk*h, 1)

    flops_per_block = (2 * (cblk * h) * KH * w            # fused 1x1 conv
                       + 2 * (cblk * h) * w * out_w       # column interpolation
                       + cblk * 2 * out_h * h * out_w)    # row interpolation
    bytes_out = B * num_classes * out_h * out_w * 4
    bytes_in = 4 * (feat_stack.size + w_stack.size + b_stack.size + A.size + Bt.size)
    cost = pl.CostEstimate(flops=int(B * CB * flops_per_block),
                           transcendentals=0,
                           bytes_accessed=int(bytes_out + bytes_in))

    return pl.pallas_call(
        _fused_head_kernel,
        out_shape=jax.ShapeDtypeStruct((B, num_classes, out_h, out_w), jnp.float32),
        grid=(B, CB),
        in_specs=[
            pl.BlockSpec((1, KH, w), lambda b, cb: (b, 0, 0)),
            pl.BlockSpec((1, cblk * h, KH), lambda b, cb: (cb, 0, 0)),
            pl.BlockSpec((1, cblk * h, 1), lambda b, cb: (cb, 0, 0)),
            pl.BlockSpec((out_h, h), lambda b, cb: (0, 0)),
            pl.BlockSpec((w, out_w), lambda b, cb: (0, 0)),
        ],
        out_specs=pl.BlockSpec((1, cblk, out_h, out_w), lambda b, cb: (b, cb, 0, 0)),
        compiler_params=pltpu.CompilerParams(
            dimension_semantics=("parallel", "parallel"),
            vmem_limit_bytes=32 * 1024 * 1024),
        cost_estimate=cost,
    )(feat_stack, w_blk, b_blk, A, Bt)


# ---------------------------------------------------------------------------
# Forward (Pallas path)
# ---------------------------------------------------------------------------
def custom_dpt_forward(x, params):
    B, Cin, Hin, Win = x.shape
    h, w = Hin // PATCH, Win // PATCH          # forward(): input // 16
    hidden = params["pe_w"].shape[1]

    # ---- backbone stand-in (produces `last_hidden_state`) ----
    # TODO(synk): the pretrained intel/dpt-large 24-layer ViT backbone cannot be
    # reproduced here; replaced by a deterministic patch-embedding (one Pallas
    # matmul with fused bias + positional embedding) + CLS token, yielding
    # (B, h*w+1, hidden) like outputs.last_hidden_state.
    patches = x.reshape(B, Cin, h, PATCH, w, PATCH)
    patches = patches.transpose(0, 2, 4, 1, 3, 5).reshape(B * h * w, Cin * PATCH * PATCH)
    pos = params["pos"]                                   # (1, h*w+1, hidden)
    pos_patch = jnp.tile(pos[0, 1:, :], (B, 1))           # (B*h*w, hidden)
    tok = patch_embed(patches, params["pe_w"], params["pe_b"], pos_patch)
    tok = tok.reshape(B, h * w, hidden)
    cls = jnp.broadcast_to(params["cls"] + pos[:, 0:1, :], (B, 1, hidden))
    features = jnp.concatenate([cls, tok], axis=1)        # (B, h*w+1, hidden)

    # ---- forward() body ----
    batch_size, seq_len, hidden_size = features.shape
    if seq_len == h * w + 1:
        features = features[:, 1:]
        seq_len = h * w
    # reproduces torch `.view(B, hidden, h, w)` (row-major memory reinterpretation)
    features_reshaped = features.reshape(batch_size, hidden_size, h, w)

    # ---- fused segmentation head + cascaded bilinear resize ----
    # Conv2d(hidden, num_classes, 1) is expressed as kron(W, I_h) so the kernel's
    # first matmul directly yields channel-row-stacked logits (C*h, w).
    w_stack = jnp.kron(params["conv_w"], jnp.eye(h, dtype=jnp.float32))    # (C*h, hidden*h)
    b_stack = jnp.repeat(params["conv_b"], h, axis=0)                      # (C*h, 1)
    feat_stack = features_reshaped.reshape(batch_size, hidden_size * h, w) # (B, hidden*h, w)

    # Exact precomposition of Upsample(x32, bilinear) and interpolate((512,512), bilinear).
    A, Bt = composed_bilinear_matrices(h, w, 512, 512, 32)

    return fused_seg_head(feat_stack, w_stack, b_stack, A, Bt, NUM_CLASSES)


# ---------------------------------------------------------------------------
# Pure-JAX reference (same backbone stand-in, un-fused head) for validation.
# ---------------------------------------------------------------------------
def reference_forward(x, params):
    B, Cin, Hin, Win = x.shape
    h, w = Hin // PATCH, Win // PATCH
    hidden = params["pe_w"].shape[1]

    patches = x.reshape(B, Cin, h, PATCH, w, PATCH)
    patches = patches.transpose(0, 2, 4, 1, 3, 5).reshape(B * h * w, Cin * PATCH * PATCH)
    pos = params["pos"]
    tok = patches @ params["pe_w"] + params["pe_b"] + jnp.tile(pos[0, 1:, :], (B, 1))
    tok = tok.reshape(B, h * w, hidden)
    cls = jnp.broadcast_to(params["cls"] + pos[:, 0:1, :], (B, 1, hidden))
    features = jnp.concatenate([cls, tok], axis=1)[:, 1:]
    fr = features.reshape(B, hidden, h, w)

    logits = (jnp.einsum('co,bohw->bchw', params["conv_w"], fr)
              + params["conv_b"].reshape(1, -1, 1, 1))
    A, Bt = composed_bilinear_matrices(h, w, 512, 512, 32)
    # A @ X @ Bt per (batch, class)
    return jnp.einsum('Oh,bchw,wW->bcOW', A, logits, Bt)


# ---------------------------------------------------------------------------
if __name__ == "__main__":
    key = jax.random.PRNGKey(0)
    kx, k1, k2, k3, k4, k5, k6 = jax.random.split(key, 7)

    B, Cin, Hin, Win = 2, 3, 128, 128
    h, w = Hin // PATCH, Win // PATCH
    patch_dim = Cin * PATCH * PATCH

    params = {
        "pe_w":   jax.random.normal(k1, (patch_dim, HIDDEN), jnp.float32) * 0.02,
        "pe_b":   jax.random.normal(k2, (1, HIDDEN), jnp.float32) * 0.02,
        "cls":    jax.random.normal(k3, (1, 1, HIDDEN), jnp.float32) * 0.02,
        "pos":    jax.random.normal(k4, (1, h * w + 1, HIDDEN), jnp.float32) * 0.02,
        "conv_w": jax.random.normal(k5, (NUM_CLASSES, HIDDEN), jnp.float32) * 0.05,
        "conv_b": jax.random.normal(k6, (NUM_CLASSES, 1), jnp.float32) * 0.05,
    }

    x = jax.random.normal(kx, (B, Cin, Hin, Win), jnp.float32)

    fwd = jax.jit(custom_dpt_forward)
    out = jax.block_until_ready(fwd(x, params))
    assert out.shape == (B, NUM_CLASSES, 512, 512), out.shape
    assert out.dtype == jnp.float32

    ref = jax.block_until_ready(jax.jit(reference_forward)(x, params))
    np.testing.assert_allclose(np.asarray(out), np.asarray(ref), rtol=1e-2, atol=1e-2)

    print("KERNEL_OK")
</pallas_src>

<mosaic_0001>
module attributes {stable_mosaic.version = 11 : i64} {
  func.func @_patch_embed_kernel(%arg0: memref<128x768xf32, #tpu.memory_space<vmem>>, %arg1: memref<768x32xf32, #tpu.memory_space<vmem>>, %arg2: memref<1x32xf32, #tpu.memory_space<vmem>>, %arg3: memref<128x32xf32, #tpu.memory_space<vmem>>, %arg4: memref<128x32xf32, #tpu.memory_space<vmem>>) attributes {dimension_semantics = [], scalar_prefetch = 0 : i64, scratch_operands = 0 : i64, tpu.core_type = #tpu.core_type<tc>} {
    %c0 = arith.constant 0 : index
    %c0_0 = arith.constant 0 : index
    %0 = vector.load %arg0[%c0, %c0_0] : memref<128x768xf32, #tpu.memory_space<vmem>>, vector<128x768xf32>
    %c0_1 = arith.constant 0 : index
    %c0_2 = arith.constant 0 : index
    %1 = vector.load %arg1[%c0_1, %c0_2] : memref<768x32xf32, #tpu.memory_space<vmem>>, vector<768x32xf32>
    %cst = arith.constant dense<0.000000e+00> : vector<128x32xf32>
    %2 = tpu.matmul %0, %1, %cst {dimension_numbers = #tpu.dot_dimension_numbers<[1], [0], [0], [1], [0, 0, 1, 1], [], []>} : vector<128x768xf32>, vector<768x32xf32>, vector<128x32xf32> -> vector<128x32xf32>
    %c0_3 = arith.constant 0 : index
    %c0_4 = arith.constant 0 : index
    %3 = vector.load %arg2[%c0_3, %c0_4] : memref<1x32xf32, #tpu.memory_space<vmem>>, vector<1x32xf32>
    %4 = vector.broadcast %3 : vector<1x32xf32> to vector<128x32xf32>
    %5 = arith.addf %2, %4 : vector<128x32xf32>
    %c0_5 = arith.constant 0 : index
    %c0_6 = arith.constant 0 : index
    %6 = vector.load %arg3[%c0_5, %c0_6] : memref<128x32xf32, #tpu.memory_space<vmem>>, vector<128x32xf32>
    %7 = arith.addf %5, %6 : vector<128x32xf32>
    %c0_7 = arith.constant 0 : index
    %c0_8 = arith.constant 0 : index
    %8 = vector.load %arg4[%c0_7, %c0_8] : memref<128x32xf32, #tpu.memory_space<vmem>>, vector<128x32xf32>
    tpu.vector_store %arg4[%c0_7, %c0_8], %7 {strides = array<i32>} : memref<128x32xf32, #tpu.memory_space<vmem>>, vector<128x32xf32>,
    return
  }
}

module attributes {stable_mosaic.version = 11 : i64} {
  func.func @_fused_head_kernel(%arg0: i32, %arg1: i32, %arg2: memref<1x256x8xf32, #tpu.memory_space<vmem>>, %arg3: memref<1x40x256xf32, #tpu.memory_space<vmem>>, %arg4: memref<1x40x1xf32, #tpu.memory_space<vmem>>, %arg5: memref<512x8xf32, #tpu.memory_space<vmem>>, %arg6: memref<8x512xf32, #tpu.memory_space<vmem>>, %arg7: memref<1x5x512x512xf32, #tpu.memory_space<vmem>>) attributes {dimension_semantics = [#tpu.dimension_semantics<parallel>, #tpu.dimension_semantics<parallel>], iteration_bounds = array<i64: 2, 3>, scalar_prefetch = 0 : i64, scratch_operands = 0 : i64, tpu.core_type = #tpu.core_type<tc>, window_params = [{transform_indices = @transform_0, window_bounds = array<i64: 1, 256, 8>}, {transform_indices = @transform_1, window_bounds = array<i64: 1, 40, 256>}, {transform_indices = @transform_2, window_bounds = array<i64: 1, 40, 1>}, {pipeline_mode = #tpu.pipeline_mode<synchronous>, transform_indices = @transform_3, window_bounds = array<i64: 512, 8>}, {pipeline_mode = #tpu.pipeline_mode<synchronous>, transform_indices = @transform_4, window_bounds = array<i64: 8, 512>}, {transform_indices = @transform_5, window_bounds = array<i64: 1, 5, 512, 512>}]} {
    %c0 = arith.constant 0 : index
    %c0_0 = arith.constant 0 : index
    %c0_1 = arith.constant 0 : index
    %0 = vector.load %arg3[%c0, %c0_0, %c0_1] : memref<1x40x256xf32, #tpu.memory_space<vmem>>, vector<1x40x256xf32>
    %1 = vector.shape_cast %0 : vector<1x40x256xf32> to vector<40x256xf32>
    %c0_2 = arith.constant 0 : index
    %c0_3 = arith.constant 0 : index
    %c0_4 = arith.constant 0 : index
    %2 = vector.load %arg2[%c0_2, %c0_3, %c0_4] : memref<1x256x8xf32, #tpu.memory_space<vmem>>, vector<1x256x8xf32>
    %3 = vector.shape_cast %2 : vector<1x256x8xf32> to vector<256x8xf32>
    %cst = arith.constant dense<0.000000e+00> : vector<40x8xf32>
    %4 = tpu.matmul %1, %3, %cst {dimension_numbers = #tpu.dot_dimension_numbers<[1], [0], [0], [1], [0, 0, 1, 1], [], []>} : vector<40x256xf32>, vector<256x8xf32>, vector<40x8xf32> -> vector<40x8xf32>
    %c0_5 = arith.constant 0 : index
    %c0_6 = arith.constant 0 : index
    %c0_7 = arith.constant 0 : index
    %5 = vector.load %arg4[%c0_5, %c0_6, %c0_7] : memref<1x40x1xf32, #tpu.memory_space<vmem>>, vector<1x40x1xf32>
    %6 = vector.shape_cast %5 : vector<1x40x1xf32> to vector<40x1xf32>
    %7 = vector.broadcast %6 : vector<40x1xf32> to vector<40x8xf32>
    %8 = arith.addf %4, %7 : vector<40x8xf32>
    %c0_8 = arith.constant 0 : index
    %c0_9 = arith.constant 0 : index
    %9 = vector.load %arg6[%c0_8, %c0_9] : memref<8x512xf32, #tpu.memory_space<vmem>>, vector<8x512xf32>
    %cst_10 = arith.constant dense<0.000000e+00> : vector<40x512xf32>
    %10 = tpu.matmul %8, %9, %cst_10 {dimension_numbers = #tpu.dot_dimension_numbers<[1], [0], [0], [1], [0, 0, 1, 1], [], []>} : vector<40x8xf32>, vector<8x512xf32>, vector<40x512xf32> -> vector<40x512xf32>
    %c0_11 = arith.constant 0 : index
    %c0_12 = arith.constant 0 : index
    %11 = vector.load %arg5[%c0_11, %c0_12] : memref<512x8xf32, #tpu.memory_space<vmem>>, vector<512x8xf32>
    %12 = vector.extract_strided_slice %10 {offsets = [0, 0], sizes = [8, 512], strides = [1, 1]} : vector<40x512xf32> to vector<8x512xf32>
    %cst_13 = arith.constant dense<0.000000e+00> : vector<512x512xf32>
    %13 = tpu.matmul %11, %12, %cst_13 {dimension_numbers = #tpu.dot_dimension_numbers<[1], [0], [0], [1], [0, 0, 1, 1], [], []>} : vector<512x8xf32>, vector<8x512xf32>, vector<512x512xf32> -> vector<512x512xf32>
    %c0_14 = arith.constant 0 : index
    %c0_15 = arith.constant 0 : index
    %c0_16 = arith.constant 0 : index
    %c0_17 = arith.constant 0 : index
    %14 = vector.load %arg7[%c0_14, %c0_15, %c0_16, %c0_17] : memref<1x5x512x512xf32, #tpu.memory_space<vmem>>, vector<1x1x512x512xf32>
    %15 = vector.shape_cast %14 : vector<1x1x512x512xf32> to vector<512x512xf32>
    %16 = vector.shape_cast %13 : vector<512x512xf32> to vector<1x1x512x512xf32>
    tpu.vector_store %arg7[%c0_14, %c0_15, %c0_16, %c0_17], %16 {strides = array<i32>} : memref<1x5x512x512xf32, #tpu.memory_space<vmem>>, vector<1x1x512x512xf32>,
    %c0_18 = arith.constant 0 : index
    %c0_19 = arith.constant 0 : index
    %17 = vector.load %arg5[%c0_18, %c0_19] : memref<512x8xf32, #tpu.memory_space<vmem>>, vector<512x8xf32>
    %18 = vector.extract_strided_slice %10 {offsets = [8, 0], sizes = [8, 512], strides = [1, 1]} : vector<40x512xf32> to vector<8x512xf32>
    %cst_20 = arith.constant dense<0.000000e+00> : vector<512x512xf32>
    %19 = tpu.matmul %17, %18, %cst_20 {dimension_numbers = #tpu.dot_dimension_numbers<[1], [0], [0], [1], [0, 0, 1, 1], [], []>} : vector<512x8xf32>, vector<8x512xf32>, vector<512x512xf32> -> vector<512x512xf32>
    %c0_21 = arith.constant 0 : index
    %c1 = arith.constant 1 : index
    %c0_22 = arith.constant 0 : index
    %c0_23 = arith.constant 0 : index
    %20 = vector.load %arg7[%c0_21, %c1, %c0_22, %c0_23] : memref<1x5x512x512xf32, #tpu.memory_space<vmem>>, vector<1x1x512x512xf32>
    %21 = vector.shape_cast %20 : vector<1x1x512x512xf32> to vector<512x512xf32>
    %22 = vector.shape_cast %19 : vector<512x512xf32> to vector<1x1x512x512xf32>
    tpu.vector_store %arg7[%c0_21, %c1, %c0_22, %c0_23], %22 {strides = array<i32>} : memref<1x5x512x512xf32, #tpu.memory_space<vmem>>, vector<1x1x512x512xf32>,
    %c0_24 = arith.constant 0 : index
    %c0_25 = arith.constant 0 : index
    %23 = vector.load %arg5[%c0_24, %c0_25] : memref<512x8xf32, #tpu.memory_space<vmem>>, vector<512x8xf32>
    %24 = vector.extract_strided_slice %10 {offsets = [16, 0], sizes = [8, 512], strides = [1, 1]} : vector<40x512xf32> to vector<8x512xf32>
    %cst_26 = arith.constant dense<0.000000e+00> : vector<512x512xf32>
    %25 = tpu.matmul %23, %24, %cst_26 {dimension_numbers = #tpu.dot_dimension_numbers<[1], [0], [0], [1], [0, 0, 1, 1], [], []>} : vector<512x8xf32>, vector<8x512xf32>, vector<512x512xf32> -> vector<512x512xf32>
    %c0_27 = arith.constant 0 : index
    %c2 = arith.constant 2 : index
    %c0_28 = arith.constant 0 : index
    %c0_29 = arith.constant 0 : index
    %26 = vector.load %arg7[%c0_27, %c2, %c0_28, %c0_29] : memref<1x5x512x512xf32, #tpu.memory_space<vmem>>, vector<1x1x512x512xf32>
    %27 = vector.shape_cast %26 : vector<1x1x512x512xf32> to vector<512x512xf32>
    %28 = vector.shape_cast %25 : vector<512x512xf32> to vector<1x1x512x512xf32>
    tpu.vector_store %arg7[%c0_27, %c2, %c0_28, %c0_29], %28 {strides = array<i32>} : memref<1x5x512x512xf32, #tpu.memory_space<vmem>>, vector<1x1x512x512xf32>,
    %c0_30 = arith.constant 0 : index
    %c0_31 = arith.constant 0 : index
    %29 = vector.load %arg5[%c0_30, %c0_31] : memref<512x8xf32, #tpu.memory_space<vmem>>, vector<512x8xf32>
    %30 = vector.extract_strided_slice %10 {offsets = [24, 0], sizes = [8, 512], strides = [1, 1]} : vector<40x512xf32> to vector<8x512xf32>
    %cst_32 = arith.constant dense<0.000000e+00> : vector<512x512xf32>
    %31 = tpu.matmul %29, %30, %cst_32 {dimension_numbers = #tpu.dot_dimension_numbers<[1], [0], [0], [1], [0, 0, 1, 1], [], []>} : vector<512x8xf32>, vector<8x512xf32>, vector<512x512xf32> -> vector<512x512xf32>
    %c0_33 = arith.constant 0 : index
    %c3 = arith.constant 3 : index
    %c0_34 = arith.constant 0 : index
    %c0_35 = arith.constant 0 : index
    %32 = vector.load %arg7[%c0_33, %c3, %c0_34, %c0_35] : memref<1x5x512x512xf32, #tpu.memory_space<vmem>>, vector<1x1x512x512xf32>
    %33 = vector.shape_cast %32 : vector<1x1x512x512xf32> to vector<512x512xf32>
    %34 = vector.shape_cast %31 : vector<512x512xf32> to vector<1x1x512x512xf32>
    tpu.vector_store %arg7[%c0_33, %c3, %c0_34, %c0_35], %34 {strides = array<i32>} : memref<1x5x512x512xf32, #tpu.memory_space<vmem>>, vector<1x1x512x512xf32>,
    %c0_36 = arith.constant 0 : index
    %c0_37 = arith.constant 0 : index
    %35 = vector.load %arg5[%c0_36, %c0_37] : memref<512x8xf32, #tpu.memory_space<vmem>>, vector<512x8xf32>
    %36 = vector.extract_strided_slice %10 {offsets = [32, 0], sizes = [8, 512], strides = [1, 1]} : vector<40x512xf32> to vector<8x512xf32>
    %cst_38 = arith.constant dense<0.000000e+00> : vector<512x512xf32>
    %37 = tpu.matmul %35, %36, %cst_38 {dimension_numbers = #tpu.dot_dimension_numbers<[1], [0], [0], [1], [0, 0, 1, 1], [], []>} : vector<512x8xf32>, vector<8x512xf32>, vector<512x512xf32> -> vector<512x512xf32>
    %c0_39 = arith.constant 0 : index
    %c4 = arith.constant 4 : index
    %c0_40 = arith.constant 0 : index
    %c0_41 = arith.constant 0 : index
    %38 = vector.load %arg7[%c0_39, %c4, %c0_40, %c0_41] : memref<1x5x512x512xf32, #tpu.memory_space<vmem>>, vector<1x1x512x512xf32>
    %39 = vector.shape_cast %38 : vector<1x1x512x512xf32> to vector<512x512xf32>
    %40 = vector.shape_cast %37 : vector<512x512xf32> to vector<1x1x512x512xf32>
    tpu.vector_store %arg7[%c0_39, %c4, %c0_40, %c0_41], %40 {strides = array<i32>} : memref<1x5x512x512xf32, #tpu.memory_space<vmem>>, vector<1x1x512x512xf32>,
    return
  }
  func.func @transform_0(%arg0: i32, %arg1: i32) -> (i32, i32, i32) {
    %c0_i32 = arith.constant 0 : i32
    %c0_i32_0 = arith.constant 0 : i32
    %c0_i32_1 = arith.constant 0 : i32
    return %arg0, %c0_i32, %c0_i32_0 : i32, i32, i32
  }
  func.func @transform_1(%arg0: i32, %arg1: i32) -> (i32, i32, i32) {
    %c0_i32 = arith.constant 0 : i32
    %c0_i32_0 = arith.constant 0 : i32
    %c0_i32_1 = arith.constant 0 : i32
    return %arg1, %c0_i32, %c0_i32_0 : i32, i32, i32
  }
  func.func @transform_2(%arg0: i32, %arg1: i32) -> (i32, i32, i32) {
    %c0_i32 = arith.constant 0 : i32
    %c0_i32_0 = arith.constant 0 : i32
    %c0_i32_1 = arith.constant 0 : i32
    return %arg1, %c0_i32, %c0_i32_0 : i32, i32, i32
  }
  func.func @transform_3(%arg0: i32, %arg1: i32) -> (i32, i32) {
    %c0_i32 = arith.constant 0 : i32
    %c0_i32_0 = arith.constant 0 : i32
    %c0_i32_1 = arith.constant 0 : i32
    return %c0_i32, %c0_i32_0 : i32, i32
  }
  func.func @transform_4(%arg0: i32, %arg1: i32) -> (i32, i32) {
    %c0_i32 = arith.constant 0 : i32
    %c0_i32_0 = arith.constant 0 : i32
    %c0_i32_1 = arith.constant 0 : i32
    return %c0_i32, %c0_i32_0 : i32, i32
  }
  func.func @transform_5(%arg0: i32, %arg1: i32) -> (i32, i32, i32, i32) {
    %c0_i32 = arith.constant 0 : i32
    %c0_i32_0 = arith.constant 0 : i32
    %c0_i32_1 = arith.constant 0 : i32
    return %arg0, %arg1, %c0_i32, %c0_i32_0 : i32, i32, i32, i32
  }
}

</mosaic_0001>

<llo_original>
// kernel: custom_dpt_forward.2
$region0: #{custom_dpt_forward.2}
  #allocation0 [shape = 'u32[]', space=smem, size = 0x4, offset = 0x4, fixed_abs, tag = 'smem constant byte address 0x4 - core index']
  #allocation1 [shape = 'u32[144,128]{1,0:T(1,128)}', space=vmem, size = 0x12000, scoped, tag = 'internal scratch']
  %s0 = inlined_call_operand.vmem [shape: f32[128,768], index: 0, kind: input, shape index: {}]
  %s1 = inlined_call_operand.vmem [shape: f32[768,32], index: 1, kind: input, shape index: {}]
  %s2 = inlined_call_operand.vmem [shape: f32[1,32], index: 2, kind: input, shape index: {}]
  %s3 = inlined_call_operand.vmem [shape: f32[128,32], index: 3, kind: input, shape index: {}]
  %s4 = inlined_call_operand.vmem [shape: f32[128,32], index: 4, kind: output, shape index: {}]
  %s5 = sld [smem:[#allocation0]]
  $region26: #{custom_dpt_forward.2} parent=0
    _
  %s7 = ssub.s32 1, %s5
  %s8 = scalar_select 0, %s7, %s5
  // Predicated region
  $region2: #{custom_dpt_forward.2} parent=0 // pred_check
    _
  $region3: #{custom_dpt_forward.2} parent=0 // pred_check_branch
    %10 = sbr.rel (0) target = $region5
  $region4: #{custom_dpt_forward.2} parent=0 // pred_region
    _
  $region5: #{custom_dpt_forward.2} parent=0 // pred_fallthru
    _
  // Predicated region
  $region6: #{custom_dpt_forward.2} parent=0 // pred_check
    _
  $region7: #{custom_dpt_forward.2} parent=0 // pred_check_branch
    %12 = sbr.rel (0) target = $region9
  $region8: #{custom_dpt_forward.2} parent=0 // pred_region
    _
  $region9: #{custom_dpt_forward.2} parent=0 // pred_fallthru
    _
  // Predicated region
  $region10: #{custom_dpt_forward.2} parent=0 // pred_check
    _
  $region11: #{custom_dpt_forward.2} parent=0 // pred_check_branch
    %14 = sbr.rel (0) target = $region13
  $region12: #{custom_dpt_forward.2} parent=0 // pred_region
    _
  $region13: #{custom_dpt_forward.2} parent=0 // pred_fallthru
    _
  // Predicated region
  $region14: #{custom_dpt_forward.2} parent=0 // pred_check
    _
  $region15: #{custom_dpt_forward.2} parent=0 // pred_check_branch
    %16 = sbr.rel (0) target = $region17
  $region16: #{custom_dpt_forward.2} parent=0 // pred_region
    _
  $region17: #{custom_dpt_forward.2} parent=0 // pred_fallthru
    _
  %v17 = vld [vmem:[%s0] sm:$0xff]
  %v18 = vld [vmem:[%s0 + $0x8] sm:$0xff]
  %v19 = vld [vmem:[%s0 + $0x10] sm:$0xff]
  %v20 = vld [vmem:[%s0 + $0x18] sm:$0xff]
  %v21 = vld [vmem:[%s0 + $0x20] sm:$0xff]
  %v22 = vld [vmem:[%s0 + $0x28] sm:$0xff]
  %v23 = vld [vmem:[%s0 + $0x30] sm:$0xff]
  %v24 = vld [vmem:[%s0 + $0x38] sm:$0xff]
  %v25 = vld [vmem:[%s0 + $0x40] sm:$0xff]
  %v26 = vld [vmem:[%s0 + $0x48] sm:$0xff]
  %v27 = vld [vmem:[%s0 + $0x50] sm:$0xff]
  %v28 = vld [vmem:[%s0 + $0x58] sm:$0xff]
  %v29 = vld [vmem:[%s0 + $0x60] sm:$0xff]
  %v30 = vld [vmem:[%s0 + $0x68] sm:$0xff]
  %v31 = vld [vmem:[%s0 + $0x70] sm:$0xff]
  %v32 = vld [vmem:[%s0 + $0x78] sm:$0xff]
  %v33 = vld [vmem:[%s0 + $0x80] sm:$0xff]
  %v34 = vld [vmem:[%s0 + $0x88] sm:$0xff]
  %v35 = vld [vmem:[%s0 + $0x90] sm:$0xff]
  %v36 = vld [vmem:[%s0 + $0x98] sm:$0xff]
  %v37 = vld [vmem:[%s0 + $0xa0] sm:$0xff]
  %v38 = vld [vmem:[%s0 + $0xa8] sm:$0xff]
  %v39 = vld [vmem:[%s0 + $0xb0] sm:$0xff]
  %v40 = vld [vmem:[%s0 + $0xb8] sm:$0xff]
  %v41 = vld [vmem:[%s0 + $0xc0] sm:$0xff]
  %v42 = vld [vmem:[%s0 + $0xc8] sm:$0xff]
  %v43 = vld [vmem:[%s0 + $0xd0] sm:$0xff]
  %v44 = vld [vmem:[%s0 + $0xd8] sm:$0xff]
  %v45 = vld [vmem:[%s0 + $0xe0] sm:$0xff]
  %v46 = vld [vmem:[%s0 + $0xe8] sm:$0xff]
  %v47 = vld [vmem:[%s0 + $0xf0] sm:$0xff]
  %v48 = vld [vmem:[%s0 + $0xf8] sm:$0xff]
  %v49 = vld [vmem:[%s0 + $0x100] sm:$0xff]
  %v50 = vld [vmem:[%s0 + $0x108] sm:$0xff]
  %v51 = vld [vmem:[%s0 + $0x110] sm:$0xff]
  %v52 = vld [vmem:[%s0 + $0x118] sm:$0xff]
  %v53 = vld [vmem:[%s0 + $0x120] sm:$0xff]
  %v54 = vld [vmem:[%s0 + $0x128] sm:$0xff]
  %v55 = vld [vmem:[%s0 + $0x130] sm:$0xff]
  %v56 = vld [vmem:[%s0 + $0x138] sm:$0xff]
  %v57 = vld [vmem:[%s0 + $0x140] sm:$0xff]
  %v58 = vld [vmem:[%s0 + $0x148] sm:$0xff]
  %v59 = vld [vmem:[%s0 + $0x150] sm:$0xff]
  %v60 = vld [vmem:[%s0 + $0x158] sm:$0xff]
  %v61 = vld [vmem:[%s0 + $0x160] sm:$0xff]
  %v62 = vld [vmem:[%s0 + $0x168] sm:$0xff]
  %v63 = vld [vmem:[%s0 + $0x170] sm:$0xff]
  %v64 = vld [vmem:[%s0 + $0x178] sm:$0xff]
  %v65 = vld [vmem:[%s0 + $0x180] sm:$0xff]
  %v66 = vld [vmem:[%s0 + $0x188] sm:$0xff]
  %v67 = vld [vmem:[%s0 + $0x190] sm:$0xff]
  %v68 = vld [vmem:[%s0 + $0x198] sm:$0xff]
  %v69 = vld [vmem:[%s0 + $0x1a0] sm:$0xff]
  %v70 = vld [vmem:[%s0 + $0x1a8] sm:$0xff]
  %v71 = vld [vmem:[%s0 + $0x1b0] sm:$0xff]
  %v72 = vld [vmem:[%s0 + $0x1b8] sm:$0xff]
  %v73 = vld [vmem:[%s0 + $0x1c0] sm:$0xff]
  %v74 = vld [vmem:[%s0 + $0x1c8] sm:$0xff]
  %v75 = vld [vmem:[%s0 + $0x1d0] sm:$0xff]
  %v76 = vld [vmem:[%s0 + $0x1d8] sm:$0xff]
  %v77 = vld [vmem:[%s0 + $0x1e0] sm:$0xff]
  %v78 = vld [vmem:[%s0 + $0x1e8] sm:$0xff]
  %v79 = vld [vmem:[%s0 + $0x1f0] sm:$0xff]
  %v80 = vld [vmem:[%s0 + $0x1f8] sm:$0xff]
  %v81 = vld [vmem:[%s0 + $0x200] sm:$0xff]
  %v82 = vld [vmem:[%s0 + $0x208] sm:$0xff]
  %v83 = vld [vmem:[%s0 + $0x210] sm:$0xff]
  %v84 = vld [vmem:[%s0 + $0x218] sm:$0xff]
  %v85 = vld [vmem:[%s0 + $0x220] sm:$0xff]
  %v86 = vld [vmem:[%s0 + $0x228] sm:$0xff]
  %v87 = vld [vmem:[%s0 + $0x230] sm:$0xff]
  %v88 = vld [vmem:[%s0 + $0x238] sm:$0xff]
  %v89 = vld [vmem:[%s0 + $0x240] sm:$0xff]
  %v90 = vld [vmem:[%s0 + $0x248] sm:$0xff]
  %v91 = vld [vmem:[%s0 + $0x250] sm:$0xff]
  %v92 = vld [vmem:[%s0 + $0x258] sm:$0xff]
  %v93 = vld [vmem:[%s0 + $0x260] sm:$0xff]
  %v94 = vld [vmem:[%s0 + $0x268] sm:$0xff]
  %v95 = vld [vmem:[%s0 + $0x270] sm:$0xff]
  %v96 = vld [vmem:[%s0 + $0x278] sm:$0xff]
  %v97 = vld [vmem:[%s0 + $0x280] sm:$0xff]
  %v98 = vld [vmem:[%s0 + $0x288] sm:$0xff]
  %v99 = vld [vmem:[%s0 + $0x290] sm:$0xff]
  %v100 = vld [vmem:[%s0 + $0x298] sm:$0xff]
  %v101 = vld [vmem:[%s0 + $0x2a0] sm:$0xff]
  %v102 = vld [vmem:[%s0 + $0x2a8] sm:$0xff]
  %v103 = vld [vmem:[%s0 + $0x2b0] sm:$0xff]
  %v104 = vld [vmem:[%s0 + $0x2b8] sm:$0xff]
  %v105 = vld [vmem:[%s0 + $0x2c0] sm:$0xff]
  %v106 = vld [vmem:[%s0 + $0x2c8] sm:$0xff]
  %v107 = vld [vmem:[%s0 + $0x2d0] sm:$0xff]
  %v108 = vld [vmem:[%s0 + $0x2d8] sm:$0xff]
  %v109 = vld [vmem:[%s0 + $0x2e0] sm:$0xff]
  %v110 = vld [vmem:[%s0 + $0x2e8] sm:$0xff]
  %v111 = vld [vmem:[%s0 + $0x2f0] sm:$0xff]
  %v112 = vld [vmem:[%s0 + $0x2f8] sm:$0xff]
  %v113 = vld [vmem:[%s1] sm:$0xff]
  %v114 = vld [vmem:[%s1 + $0x8] sm:$0xff]
  %v115 = vld [vmem:[%s1 + $0x10] sm:$0xff]
  %v116 = vld [vmem:[%s1 + $0x18] sm:$0xff]
  %v117 = vld [vmem:[%s1 + $0x20] sm:$0xff]
  %v118 = vld [vmem:[%s1 + $0x28] sm:$0xff]
  %v119 = vld [vmem:[%s1 + $0x30] sm:$0xff]
  %v120 = vld [vmem:[%s1 + $0x38] sm:$0xff]
  %v121 = vld [vmem:[%s1 + $0x40] sm:$0xff]
  %v122 = vld [vmem:[%s1 + $0x48] sm:$0xff]
  %v123 = vld [vmem:[%s1 + $0x50] sm:$0xff]
  %v124 = vld [vmem:[%s1 + $0x58] sm:$0xff]
  %v125 = vld [vmem:[%s1 + $0x60] sm:$0xff]
  %v126 = vld [vmem:[%s1 + $0x68] sm:$0xff]
  %v127 = vld [vmem:[%s1 + $0x70] sm:$0xff]
  %v128 = vld [vmem:[%s1 + $0x78] sm:$0xff]
  %v129 = vld [vmem:[%s1 + $0x80] sm:$0xff]
  %v130 = vld [vmem:[%s1 + $0x88] sm:$0xff]
  %v131 = vld [vmem:[%s1 + $0x90] sm:$0xff]
  %v132 = vld [vmem:[%s1 + $0x98] sm:$0xff]
  %v133 = vld [vmem:[%s1 + $0xa0] sm:$0xff]
  %v134 = vld [vmem:[%s1 + $0xa8] sm:$0xff]
  %v135 = vld [vmem:[%s1 + $0xb0] sm:$0xff]
  %v136 = vld [vmem:[%s1 + $0xb8] sm:$0xff]
  %v137 = vld [vmem:[%s1 + $0xc0] sm:$0xff]
  %v138 = vld [vmem:[%s1 + $0xc8] sm:$0xff]
  %v139 = vld [vmem:[%s1 + $0xd0] sm:$0xff]
  %v140 = vld [vmem:[%s1 + $0xd8] sm:$0xff]
  %v141 = vld [vmem:[%s1 + $0xe0] sm:$0xff]
  %v142 = vld [vmem:[%s1 + $0xe8] sm:$0xff]
  %v143 = vld [vmem:[%s1 + $0xf0] sm:$0xff]
  %v144 = vld [vmem:[%s1 + $0xf8] sm:$0xff]
  %v145 = vld [vmem:[%s1 + $0x100] sm:$0xff]
  %v146 = vld [vmem:[%s1 + $0x108] sm:$0xff]
  %v147 = vld [vmem:[%s1 + $0x110] sm:$0xff]
  %v148 = vld [vmem:[%s1 + $0x118] sm:$0xff]
  %v149 = vld [vmem:[%s1 + $0x120] sm:$0xff]
  %v150 = vld [vmem:[%s1 + $0x128] sm:$0xff]
  %v151 = vld [vmem:[%s1 + $0x130] sm:$0xff]
  %v152 = vld [vmem:[%s1 + $0x138] sm:$0xff]
  %v153 = vld [vmem:[%s1 + $0x140] sm:$0xff]
  %v154 = vld [vmem:[%s1 + $0x148] sm:$0xff]
  %v155 = vld [vmem:[%s1 + $0x150] sm:$0xff]
  %v156 = vld [vmem:[%s1 + $0x158] sm:$0xff]
  %v157 = vld [vmem:[%s1 + $0x160] sm:$0xff]
  %v158 = vld [vmem:[%s1 + $0x168] sm:$0xff]
  %v159 = vld [vmem:[%s1 + $0x170] sm:$0xff]
  %v160 = vld [vmem:[%s1 + $0x178] sm:$0xff]
  %v161 = vld [vmem:[%s1 + $0x180] sm:$0xff]
  %v162 = vld [vmem:[%s1 + $0x188] sm:$0xff]
  %v163 = vld [vmem:[%s1 + $0x190] sm:$0xff]
  %v164 = vld [vmem:[%s1 + $0x198] sm:$0xff]
  %v165 = vld [vmem:[%s1 + $0x1a0] sm:$0xff]
  %v166 = vld [vmem:[%s1 + $0x1a8] sm:$0xff]
  %v167 = vld [vmem:[%s1 + $0x1b0] sm:$0xff]
  %v168 = vld [vmem:[%s1 + $0x1b8] sm:$0xff]
  %v169 = vld [vmem:[%s1 + $0x1c0] sm:$0xff]
  %v170 = vld [vmem:[%s1 + $0x1c8] sm:$0xff]
  %v171 = vld [vmem:[%s1 + $0x1d0] sm:$0xff]
  %v172 = vld [vmem:[%s1 + $0x1d8] sm:$0xff]
  %v173 = vld [vmem:[%s1 + $0x1e0] sm:$0xff]
  %v174 = vld [vmem:[%s1 + $0x1e8] sm:$0xff]
  %v175 = vld [vmem:[%s1 + $0x1f0] sm:$0xff]
  %v176 = vld [vmem:[%s1 + $0x1f8] sm:$0xff]
  %v177 = vld [vmem:[%s1 + $0x200] sm:$0xff]
  %v178 = vld [vmem:[%s1 + $0x208] sm:$0xff]
  %v179 = vld [vmem:[%s1 + $0x210] sm:$0xff]
  %v180 = vld [vmem:[%s1 + $0x218] sm:$0xff]
  %v181 = vld [vmem:[%s1 + $0x220] sm:$0xff]
  %v182 = vld [vmem:[%s1 + $0x228] sm:$0xff]
  %v183 = vld [vmem:[%s1 + $0x230] sm:$0xff]
  %v184 = vld [vmem:[%s1 + $0x238] sm:$0xff]
  %v185 = vld [vmem:[%s1 + $0x240] sm:$0xff]
  %v186 = vld [vmem:[%s1 + $0x248] sm:$0xff]
  %v187 = vld [vmem:[%s1 + $0x250] sm:$0xff]
  %v188 = vld [vmem:[%s1 + $0x258] sm:$0xff]
  %v189 = vld [vmem:[%s1 + $0x260] sm:$0xff]
  %v190 = vld [vmem:[%s1 + $0x268] sm:$0xff]
  %v191 = vld [vmem:[%s1 + $0x270] sm:$0xff]
  %v192 = vld [vmem:[%s1 + $0x278] sm:$0xff]
  %v193 = vld [vmem:[%s1 + $0x280] sm:$0xff]
  %v194 = vld [vmem:[%s1 + $0x288] sm:$0xff]
  %v195 = vld [vmem:[%s1 + $0x290] sm:$0xff]
  %v196 = vld [vmem:[%s1 + $0x298] sm:$0xff]
  %v197 = vld [vmem:[%s1 + $0x2a0] sm:$0xff]
  %v198 = vld [vmem:[%s1 + $0x2a8] sm:$0xff]
  %v199 = vld [vmem:[%s1 + $0x2b0] sm:$0xff]
  %v200 = vld [vmem:[%s1 + $0x2b8] sm:$0xff]
  %v201 = vld [vmem:[%s1 + $0x2c0] sm:$0xff]
  %v202 = vld [vmem:[%s1 + $0x2c8] sm:$0xff]
  %v203 = vld [vmem:[%s1 + $0x2d0] sm:$0xff]
  %v204 = vld [vmem:[%s1 + $0x2d8] sm:$0xff]
  %v205 = vld [vmem:[%s1 + $0x2e0] sm:$0xff]
  %v206 = vld [vmem:[%s1 + $0x2e8] sm:$0xff]
  %v207 = vld [vmem:[%s1 + $0x2f0] sm:$0xff]
  %v208 = vld [vmem:[%s1 + $0x2f8] sm:$0xff]
  %v209 = vld [vmem:[%s2] sm:$0x1]
  %v211 = vlaneseq
  %v212 = vshrl.u32 %v211, 7
  %v213 = vsub.s32 0, %v212
  %v214 = vrot.slane %v209, %v213
  %216 = vmatprep.subr.mxu0 0.0
  %217 = vmatpush1.msra.mxu0 %v113
  %218 = vmatprep.subr.mxu0 0.0
  %219 = vmatpush1.msra.mxu0 %v114
  %220 = vmatprep.subr.mxu0 0.0
  %221 = vmatpush1.msra.mxu0 %v115
  %222 = vmatprep.subr.mxu0 0.0
  %223 = vmatpush1.msra.mxu0 %v116
  %224 = vmatprep.subr.mxu0 0.0
  %225 = vmatpush1.msra.mxu0 %v117
  %226 = vmatprep.subr.mxu0 0.0
  %227 = vmatpush1.msra.mxu0 %v118
  %228 = vmatprep.subr.mxu0 0.0
  %229 = vmatpush1.msra.mxu0 %v119
  %230 = vmatprep.subr.mxu0 0.0
  %231 = vmatpush1.msra.mxu0 %v120
  %232 = vmatprep.subr.mxu0 0.0
  %233 = vmatpush1.msra.mxu0 %v121
  %234 = vmatprep.subr.mxu0 0.0
  %235 = vmatpush1.msra.mxu0 %v122
  %236 = vmatprep.subr.mxu0 0.0
  %237 = vmatpush1.msra.mxu0 %v123
  %238 = vmatprep.subr.mxu0 0.0
  %239 = vmatpush1.msra.mxu0 %v124
  %240 = vmatprep.subr.mxu0 0.0
  %241 = vmatpush1.msra.mxu0 %v125
  %242 = vmatprep.subr.mxu0 0.0
  %243 = vmatpush1.msra.mxu0 %v126
  %244 = vmatprep.subr.mxu0 0.0
  %245 = vmatpush1.msra.mxu0 %v127
  %246 = vmatprep.subr.mxu0 0.0
  %247 = vmatpush1.msra.mxu0 %v128
  %248 = vmatprep.subr.mxu0 0.0
  %249 = vmatpush1.msra.mxu0 %v129
  %250 = vmatprep.subr.mxu0 0.0
  %251 = vmatpush1.msra.mxu0 %v130
  %252 = vmatprep.subr.mxu0 0.0
  %253 = vmatpush1.msra.mxu0 %v131
  %254 = vmatprep.subr.mxu0 0.0
  %255 = vmatpush1.msra.mxu0 %v132
  %256 = vmatprep.subr.mxu0 0.0
  %257 = vmatpush1.msra.mxu0 %v133
  %258 = vmatprep.subr.mxu0 0.0
  %259 = vmatpush1.msra.mxu0 %v134
  %260 = vmatprep.subr.mxu0 0.0
  %261 = vmatpush1.msra.mxu0 %v135
  %262 = vmatprep.subr.mxu0 0.0
  %263 = vmatpush1.msra.mxu0 %v136
  %264 = vmatprep.subr.mxu0 0.0
  %265 = vmatpush1.msra.mxu0 %v137
  %266 = vmatprep.subr.mxu0 0.0
  %267 = vmatpush1.msra.mxu0 %v138
  %268 = vmatprep.subr.mxu0 0.0
  %269 = vmatpush1.msra.mxu0 %v139
  %270 = vmatprep.subr.mxu0 0.0
  %271 = vmatpush1.msra.mxu0 %v140
  %272 = vmatprep.subr.mxu0 0.0
  %273 = vmatpush1.msra.mxu0 %v141
  %274 = vmatprep.subr.mxu0 0.0
  %275 = vmatpush1.msra.mxu0 %v142
  %276 = vmatprep.subr.mxu0 0.0
  %277 = vmatpush1.msra.mxu0 %v143
  %278 = vmatprep.subr.mxu0 0.0
  %279 = vmatpush1.msra.mxu0 %v144
  %280 = vmatprep.mubr.f32.mxu0 %v18
  %281 = vmatmul.mubr.f32.gmra.mrb[0].mxu0 %v17
  %v282 = vpop.f32.mrb[0].mxu0
  %v283 = vadd.f32 %v214, %v282
  %v284 = vpop.f32.mrb[0].mxu0
  %285 = vmatprep.mubr.f32.mxu0 %v24
  %286 = vmatmul.mubr.f32.gmra.mrb[0].mxu0 %v23
  %v287 = vpop.f32.mrb[0].mxu0
  %v288 = vadd.f32 %v214, %v287
  %v289 = vpop.f32.mrb[0].mxu0
  %290 = vmatprep.mubr.f32.mxu0 %v30
  %291 = vmatmul.mubr.f32.gmra.mrb[0].mxu0 %v29
  %v292 = vpop.f32.mrb[0].mxu0
  %v293 = vadd.f32 %v214, %v292
  %v294 = vpop.f32.mrb[0].mxu0
  %295 = vmatprep.mubr.f32.mxu0 %v36
  %296 = vmatmul.mubr.f32.gmra.mrb[0].mxu0 %v35
  %v297 = vpop.f32.mrb[0].mxu0
  %v298 = vadd.f32 %v214, %v297
  %v299 = vpop.f32.mrb[0].mxu0
  %300 = vmatprep.mubr.f32.mxu0 %v42
  %301 = vmatmul.mubr.f32.gmra.mrb[0].mxu0 %v41
  %v302 = vpop.f32.mrb[0].mxu0
  %v303 = vadd.f32 %v214, %v302
  %v304 = vpop.f32.mrb[0].mxu0
  %305 = vmatprep.mubr.f32.mxu0 %v48
  %306 = vmatmul.mubr.f32.gmra.mrb[0].mxu0 %v47
  %v307 = vpop.f32.mrb[0].mxu0
  %v308 = vadd.f32 %v214, %v307
  %v309 = vpop.f32.mrb[0].mxu0
  %310 = vmatprep.mubr.f32.mxu0 %v54
  %311 = vmatmul.mubr.f32.gmra.mrb[0].mxu0 %v53
  %v312 = vpop.f32.mrb[0].mxu0
  %v313 = vadd.f32 %v214, %v312
  %v314 = vpop.f32.mrb[0].mxu0
  %315 = vmatprep.mubr.f32.mxu0 %v60
  %316 = vmatmul.mubr.f32.gmra.mrb[0].mxu0 %v59
  %v317 = vpop.f32.mrb[0].mxu0
  %v318 = vadd.f32 %v214, %v317
  %v319 = vpop.f32.mrb[0].mxu0
  %320 = vmatprep.mubr.f32.mxu0 %v66
  %321 = vmatmul.mubr.f32.gmra.mrb[0].mxu0 %v65
  %v322 = vpop.f32.mrb[0].mxu0
  %v323 = vadd.f32 %v214, %v322
  %v324 = vpop.f32.mrb[0].mxu0
  %325 = vmatprep.mubr.f32.mxu0 %v72
  %326 = vmatmul.mubr.f32.gmra.mrb[0].mxu0 %v71
  %v327 = vpop.f32.mrb[0].mxu0
  %v328 = vadd.f32 %v214, %v327
  %v329 = vpop.f32.mrb[0].mxu0
  %330 = vmatprep.mubr.f32.mxu0 %v78
  %331 = vmatmul.mubr.f32.gmra.mrb[0].mxu0 %v77
  %v332 = vpop.f32.mrb[0].mxu0
  %v333 = vadd.f32 %v214, %v332
  %v334 = vpop.f32.mrb[0].mxu0
  %335 = vmatprep.mubr.f32.mxu0 %v84
  %336 = vmatmul.mubr.f32.gmra.mrb[0].mxu0 %v83
  %v337 = vpop.f32.mrb[0].mxu0
  %v338 = vadd.f32 %v214, %v337
  %v339 = vpop.f32.mrb[0].mxu0
  %340 = vmatprep.mubr.f32.mxu0 %v90
  %341 = vmatmul.mubr.f32.gmra.mrb[0].mxu0 %v89
  %v342 = vpop.f32.mrb[0].mxu0
  %v343 = vadd.f32 %v214, %v342
  %v344 = vpop.f32.mrb[0].mxu0
  %345 = vmatprep.mubr.f32.mxu0 %v96
  %346 = vmatmul.mubr.f32.gmra.mrb[0].mxu0 %v95
  %v347 = vpop.f32.mrb[0].mxu0
  %v348 = vadd.f32 %v214, %v347
  %v349 = vpop.f32.mrb[0].mxu0
  %350 = vmatprep.mubr.f32.mxu0 %v102
  %351 = vmatmul.mubr.f32.gmra.mrb[0].mxu0 %v101
  %v352 = vpop.f32.mrb[0].mxu0
  %v353 = vadd.f32 %v214, %v352
  %v354 = vpop.f32.mrb[0].mxu0
  %355 = vmatprep.mubr.f32.mxu0 %v108
  %356 = vmatmul.mubr.f32.gmra.mrb[0].mxu0 %v107
  %v357 = vpop.f32.mrb[0].mxu0
  %v358 = vadd.f32 %v214, %v357
  %v359 = vpop.f32.mrb[0].mxu0
  %360 = vdwg.mxu0
  %361 = vmatprep.subr.mxu0 0.0
  %362 = vmatpush1.msra.mxu0 %v145
  %363 = vmatprep.subr.mxu0 0.0
  %364 = vmatpush1.msra.mxu0 %v146
  %365 = vmatprep.subr.mxu0 0.0
  %366 = vmatpush1.msra.mxu0 %v147
  %367 = vmatprep.subr.mxu0 0.0
  %368 = vmatpush1.msra.mxu0 %v148
  %369 = vmatprep.subr.mxu0 0.0
  %370 = vmatpush1.msra.mxu0 %v149
  %371 = vmatprep.subr.mxu0 0.0
  %372 = vmatpush1.msra.mxu0 %v150
  %373 = vmatprep.subr.mxu0 0.0
  %374 = vmatpush1.msra.mxu0 %v151
  %375 = vmatprep.subr.mxu0 0.0
  %376 = vmatpush1.msra.mxu0 %v152
  %377 = vmatprep.subr.mxu0 0.0
  %378 = vmatpush1.msra.mxu0 %v153
  %379 = vmatprep.subr.mxu0 0.0
  %380 = vmatpush1.msra.mxu0 %v154
  %381 = vmatprep.subr.mxu0 0.0
  %382 = vmatpush1.msra.mxu0 %v155
  %383 = vmatprep.subr.mxu0 0.0
  %384 = vmatpush1.msra.mxu0 %v156
  %385 = vmatprep.subr.mxu0 0.0
  %386 = vmatpush1.msra.mxu0 %v157
  %387 = vmatprep.subr.mxu0 0.0
  %388 = vmatpush1.msra.mxu0 %v158
  %389 = vmatprep.subr.mxu0 0.0
  %390 = vmatpush1.msra.mxu0 %v159
  %391 = vmatprep.subr.mxu0 0.0
  %392 = vmatpush1.msra.mxu0 %v160
  %393 = vmatprep.subr.mxu0 0.0
  %394 = vmatpush1.msra.mxu0 %v161
  %395 = vmatprep.subr.mxu0 0.0
  %396 = vmatpush1.msra.mxu0 %v162
  %397 = vmatprep.subr.mxu0 0.0
  %398 = vmatpush1.msra.mxu0 %v163
  %399 = vmatprep.subr.mxu0 0.0
  %400 = vmatpush1.msra.mxu0 %v164
  %401 = vmatprep.subr.mxu0 0.0
  %402 = vmatpush1.msra.mxu0 %v165
  %403 = vmatprep.subr.mxu0 0.0
  %404 = vmatpush1.msra.mxu0 %v166
  %405 = vmatprep.subr.mxu0 0.0
  %406 = vmatpush1.msra.mxu0 %v167
  %407 = vmatprep.subr.mxu0 0.0
  %408 = vmatpush1.msra.mxu0 %v168
  %409 = vmatprep.subr.mxu0 0.0
  %410 = vmatpush1.msra.mxu0 %v169
  %411 = vmatprep.subr.mxu0 0.0
  %412 = vmatpush1.msra.mxu0 %v170
  %413 = vmatprep.subr.mxu0 0.0
  %414 = vmatpush1.msra.mxu0 %v171
  %415 = vmatprep.subr.mxu0 0.0
  %416 = vmatpush1.msra.mxu0 %v172
  %417 = vmatprep.subr.mxu0 0.0
  %418 = vmatpush1.msra.mxu0 %v173
  %419 = vmatprep.subr.mxu0 0.0
  %420 = vmatpush1.msra.mxu0 %v174
  %421 = vmatprep.subr.mxu0 0.0
  %422 = vmatpush1.msra.mxu0 %v175
  %423 = vmatprep.subr.mxu0 0.0
  %424 = vmatpush1.msra.mxu0 %v176
  %425 = vmatprep.mubr.f32.mxu0 %v20
  %426 = vmatmul.mubr.f32.gmra.mrb[0].mxu0 %v19
  %v427 = vpop.f32.mrb[0].mxu0
  %v428 = vadd.f32 %v283, %v427
  %v429 = vpop.f32.mrb[0].mxu0
  %430 = vmatprep.mubr.f32.mxu0 %v26
  %431 = vmatmul.mubr.f32.gmra.mrb[0].mxu0 %v25
  %v432 = vpop.f32.mrb[0].mxu0
  %v433 = vadd.f32 %v288, %v432
  %v434 = vpop.f32.mrb[0].mxu0
  %435 = vmatprep.mubr.f32.mxu0 %v32
  %436 = vmatmul.mubr.f32.gmra.mrb[0].mxu0 %v31
  %v437 = vpop.f32.mrb[0].mxu0
  %v438 = vadd.f32 %v293, %v437
  %v439 = vpop.f32.mrb[0].mxu0
  %440 = vmatprep.mubr.f32.mxu0 %v38
  %441 = vmatmul.mubr.f32.gmra.mrb[0].mxu0 %v37
  %v442 = vpop.f32.mrb[0].mxu0
  %v443 = vadd.f32 %v298, %v442
  %v444 = vpop.f32.mrb[0].mxu0
  %445 = vmatprep.mubr.f32.mxu0 %v44
  %446 = vmatmul.mubr.f32.gmra.mrb[0].mxu0 %v43
  %v447 = vpop.f32.mrb[0].mxu0
  %v448 = vadd.f32 %v303, %v447
  %v449 = vpop.f32.mrb[0].mxu0
  %450 = vmatprep.mubr.f32.mxu0 %v50
  %451 = vmatmul.mubr.f32.gmra.mrb[0].mxu0 %v49
  %v452 = vpop.f32.mrb[0].mxu0
  %v453 = vadd.f32 %v308, %v452
  %v454 = vpop.f32.mrb[0].mxu0
  %455 = vmatprep.mubr.f32.mxu0 %v56
  %456 = vmatmul.mubr.f32.gmra.mrb[0].mxu0 %v55
  %v457 = vpop.f32.mrb[0].mxu0
  %v458 = vadd.f32 %v313, %v457
  %v459 = vpop.f32.mrb[0].mxu0
  %460 = vmatprep.mubr.f32.mxu0 %v62
  %461 = vmatmul.mubr.f32.gmra.mrb[0].mxu0 %v61
  %v462 = vpop.f32.mrb[0].mxu0
  %v463 = vadd.f32 %v318, %v462
  %v464 = vpop.f32.mrb[0].mxu0
  %465 = vmatprep.mubr.f32.mxu0 %v68
  %466 = vmatmul.mubr.f32.gmra.mrb[0].mxu0 %v67
  %v467 = vpop.f32.mrb[0].mxu0
  %v468 = vadd.f32 %v323, %v467
  %v469 = vpop.f32.mrb[0].mxu0
  %470 = vmatprep.mubr.f32.mxu0 %v74
  %471 = vmatmul.mubr.f32.gmra.mrb[0].mxu0 %v73
  %v472 = vpop.f32.mrb[0].mxu0
  %v473 = vadd.f32 %v328, %v472
  %v474 = vpop.f32.mrb[0].mxu0
  %475 = vmatprep.mubr.f32.mxu0 %v80
  %476 = vmatmul.mubr.f32.gmra.mrb[0].mxu0 %v79
  %v477 = vpop.f32.mrb[0].mxu0
  %v478 = vadd.f32 %v333, %v477
  %v479 = vpop.f32.mrb[0].mxu0
  %480 = vmatprep.mubr.f32.mxu0 %v86
  %481 = vmatmul.mubr.f32.gmra.mrb[0].mxu0 %v85
  %v482 = vpop.f32.mrb[0].mxu0
  %v483 = vadd.f32 %v338, %v482
  %v484 = vpop.f32.mrb[0].mxu0
  %485 = vmatprep.mubr.f32.mxu0 %v92
  %486 = vmatmul.mubr.f32.gmra.mrb[0].mxu0 %v91
  %v487 = vpop.f32.mrb[0].mxu0
  %v488 = vadd.f32 %v343, %v487
  %v489 = vpop.f32.mrb[0].mxu0
  %490 = vmatprep.mubr.f32.mxu0 %v98
  %491 = vmatmul.mubr.f32.gmra.mrb[0].mxu0 %v97
  %v492 = vpop.f32.mrb[0].mxu0
  %v493 = vadd.f32 %v348, %v492
  %v494 = vpop.f32.mrb[0].mxu0
  %495 = vmatprep.mubr.f32.mxu0 %v104
  %496 = vmatmul.mubr.f32.gmra.mrb[0].mxu0 %v103
  %v497 = vpop.f32.mrb[0].mxu0
  %v498 = vadd.f32 %v353, %v497
  %v499 = vpop.f32.mrb[0].mxu0
  %500 = vmatprep.mubr.f32.mxu0 %v110
  %501 = vmatmul.mubr.f32.gmra.mrb[0].mxu0 %v109
  %v502 = vpop.f32.mrb[0].mxu0
  %v503 = vadd.f32 %v358, %v502
  %v504 = vpop.f32.mrb[0].mxu0
  %505 = vdwg.mxu0
  %506 = vmatprep.subr.mxu0 0.0
  %507 = vmatpush1.msra.mxu0 %v177
  %508 = vmatprep.subr.mxu0 0.0
  %509 = vmatpush1.msra.mxu0 %v178
  %510 = vmatprep.subr.mxu0 0.0
  %511 = vmatpush1.msra.mxu0 %v179
  %512 = vmatprep.subr.mxu0 0.0
  %513 = vmatpush1.msra.mxu0 %v180
  %514 = vmatprep.subr.mxu0 0.0
  %515 = vmatpush1.msra.mxu0 %v181
  %516 = vmatprep.subr.mxu0 0.0
  %517 = vmatpush1.msra.mxu0 %v182
  %518 = vmatprep.subr.mxu0 0.0
  %519 = vmatpush1.msra.mxu0 %v183
  %520 = vmatprep.subr.mxu0 0.0
  %521 = vmatpush1.msra.mxu0 %v184
  %522 = vmatprep.subr.mxu0 0.0
  %523 = vmatpush1.msra.mxu0 %v185
  %524 = vmatprep.subr.mxu0 0.0
  %525 = vmatpush1.msra.mxu0 %v186
  %526 = vmatprep.subr.mxu0 0.0
  %527 = vmatpush1.msra.mxu0 %v187
  %528 = vmatprep.subr.mxu0 0.0
  %529 = vmatpush1.msra.mxu0 %v188
  %530 = vmatprep.subr.mxu0 0.0
  %531 = vmatpush1.msra.mxu0 %v189
  %532 = vmatprep.subr.mxu0 0.0
  %533 = vmatpush1.msra.mxu0 %v190
  %534 = vmatprep.subr.mxu0 0.0
  %535 = vmatpush1.msra.mxu0 %v191
  %536 = vmatprep.subr.mxu0 0.0
  %537 = vmatpush1.msra.mxu0 %v192
  %538 = vmatprep.subr.mxu0 0.0
  %539 = vmatpush1.msra.mxu0 %v193
  %540 = vmatprep.subr.mxu0 0.0
  %541 = vmatpush1.msra.mxu0 %v194
  %542 = vmatprep.subr.mxu0 0.0
  %543 = vmatpush1.msra.mxu0 %v195
  %544 = vmatprep.subr.mxu0 0.0
  %545 = vmatpush1.msra.mxu0 %v196
  %546 = vmatprep.subr.mxu0 0.0
  %547 = vmatpush1.msra.mxu0 %v197
  %548 = vmatprep.subr.mxu0 0.0
  %549 = vmatpush1.msra.mxu0 %v198
  %550 = vmatprep.subr.mxu0 0.0
  %551 = vmatpush1.msra.mxu0 %v199
  %552 = vmatprep.subr.mxu0 0.0
  %553 = vmatpush1.msra.mxu0 %v200
  %554 = vmatprep.subr.mxu0 0.0
  %555 = vmatpush1.msra.mxu0 %v201
  %556 = vmatprep.subr.mxu0 0.0
  %557 = vmatpush1.msra.mxu0 %v202
  %558 = vmatprep.subr.mxu0 0.0
  %559 = vmatpush1.msra.mxu0 %v203
  %560 = vmatprep.subr.mxu0 0.0
  %561 = vmatpush1.msra.mxu0 %v204
  %562 = vmatprep.subr.mxu0 0.0
  %563 = vmatpush1.msra.mxu0 %v205
  %564 = vmatprep.subr.mxu0 0.0
  %565 = vmatpush1.msra.mxu0 %v206
  %566 = vmatprep.subr.mxu0 0.0
  %567 = vmatpush1.msra.mxu0 %v207
  %568 = vmatprep.subr.mxu0 0.0
  %569 = vmatpush1.msra.mxu0 %v208
  %570 = vmatprep.mubr.f32.mxu0 %v22
  %571 = vmatmul.mubr.f32.gmra.mrb[0].mxu0 %v21
  %v572 = vpop.f32.mrb[0].mxu0
  %v573 = vadd.f32 %v428, %v572
  %v574 = vpop.f32.mrb[0].mxu0
  %575 = vmatprep.mubr.f32.mxu0 %v28
  %576 = vmatmul.mubr.f32.gmra.mrb[0].mxu0 %v27
  %v577 = vpop.f32.mrb[0].mxu0
  %v578 = vadd.f32 %v433, %v577
  %v579 = vpop.f32.mrb[0].mxu0
  %580 = vmatprep.mubr.f32.mxu0 %v34
  %581 = vmatmul.mubr.f32.gmra.mrb[0].mxu0 %v33
  %v582 = vpop.f32.mrb[0].mxu0
  %v583 = vadd.f32 %v438, %v582
  %v584 = vpop.f32.mrb[0].mxu0
  %585 = vmatprep.mubr.f32.mxu0 %v40
  %586 = vmatmul.mubr.f32.gmra.mrb[0].mxu0 %v39
  %v587 = vpop.f32.mrb[0].mxu0
  %v588 = vadd.f32 %v443, %v587
  %v589 = vpop.f32.mrb[0].mxu0
  %590 = vmatprep.mubr.f32.mxu0 %v46
  %591 = vmatmul.mubr.f32.gmra.mrb[0].mxu0 %v45
  %v592 = vpop.f32.mrb[0].mxu0
  %v593 = vadd.f32 %v448, %v592
  %v594 = vpop.f32.mrb[0].mxu0
  %595 = vmatprep.mubr.f32.mxu0 %v52
  %596 = vmatmul.mubr.f32.gmra.mrb[0].mxu0 %v51
  %v597 = vpop.f32.mrb[0].mxu0
  %v598 = vadd.f32 %v453, %v597
  %v599 = vpop.f32.mrb[0].mxu0
  %600 = vmatprep.mubr.f32.mxu0 %v58
  %601 = vmatmul.mubr.f32.gmra.mrb[0].mxu0 %v57
  %v602 = vpop.f32.mrb[0].mxu0
  %v603 = vadd.f32 %v458, %v602
  %v604 = vpop.f32.mrb[0].mxu0
  %605 = vmatprep.mubr.f32.mxu0 %v64
  %606 = vmatmul.mubr.f32.gmra.mrb[0].mxu0 %v63
  %v607 = vpop.f32.mrb[0].mxu0
  %v608 = vadd.f32 %v463, %v607
  %v609 = vpop.f32.mrb[0].mxu0
  %610 = vmatprep.mubr.f32.mxu0 %v70
  %611 = vmatmul.mubr.f32.gmra.mrb[0].mxu0 %v69
  %v612 = vpop.f32.mrb[0].mxu0
  %v613 = vadd.f32 %v468, %v612
  %v614 = vpop.f32.mrb[0].mxu0
  %615 = vmatprep.mubr.f32.mxu0 %v76
  %616 = vmatmul.mubr.f32.gmra.mrb[0].mxu0 %v75
  %v617 = vpop.f32.mrb[0].mxu0
  %v618 = vadd.f32 %v473, %v617
  %v619 = vpop.f32.mrb[0].mxu0
  %620 = vmatprep.mubr.f32.mxu0 %v82
  %621 = vmatmul.mubr.f32.gmra.mrb[0].mxu0 %v81
  %v622 = vpop.f32.mrb[0].mxu0
  %v623 = vadd.f32 %v478, %v622
  %v624 = vpop.f32.mrb[0].mxu0
  %625 = vmatprep.mubr.f32.mxu0 %v88
  %626 = vmatmul.mubr.f32.gmra.mrb[0].mxu0 %v87
  %v627 = vpop.f32.mrb[0].mxu0
  %v628 = vadd.f32 %v483, %v627
  %v629 = vpop.f32.mrb[0].mxu0
  %630 = vmatprep.mubr.f32.mxu0 %v94
  %631 = vmatmul.mubr.f32.gmra.mrb[0].mxu0 %v93
  %v632 = vpop.f32.mrb[0].mxu0
  %v633 = vadd.f32 %v488, %v632
  %v634 = vpop.f32.mrb[0].mxu0
  %635 = vmatprep.mubr.f32.mxu0 %v100
  %636 = vmatmul.mubr.f32.gmra.mrb[0].mxu0 %v99
  %v637 = vpop.f32.mrb[0].mxu0
  %v638 = vadd.f32 %v493, %v637
  %v639 = vpop.f32.mrb[0].mxu0
  %640 = vmatprep.mubr.f32.mxu0 %v106
  %641 = vmatmul.mubr.f32.gmra.mrb[0].mxu0 %v105
  %v642 = vpop.f32.mrb[0].mxu0
  %v643 = vadd.f32 %v498, %v642
  %v644 = vpop.f32.mrb[0].mxu0
  %645 = vmatprep.mubr.f32.mxu0 %v112
  %646 = vmatmul.mubr.f32.gmra.mrb[0].mxu0 %v111
  %v647 = vpop.f32.mrb[0].mxu0
  %v648 = vadd.f32 %v503, %v647
  %v649 = vpop.f32.mrb[0].mxu0
  %650 = vdwg.mxu0
  %v651 = vld [vmem:[%s3] sm:$0xff]
  %v652 = vld [vmem:[%s3 + $0x8] sm:$0xff]
  %v653 = vld [vmem:[%s3 + $0x10] sm:$0xff]
  %v654 = vld [vmem:[%s3 + $0x18] sm:$0xff]
  %v655 = vld [vmem:[%s3 + $0x20] sm:$0xff]
  %v656 = vld [vmem:[%s3 + $0x28] sm:$0xff]
  %v657 = vld [vmem:[%s3 + $0x30] sm:$0xff]
  %v658 = vld [vmem:[%s3 + $0x38] sm:$0xff]
  %v659 = vld [vmem:[%s3 + $0x40] sm:$0xff]
  %v660 = vld [vmem:[%s3 + $0x48] sm:$0xff]
  %v661 = vld [vmem:[%s3 + $0x50] sm:$0xff]
  %v662 = vld [vmem:[%s3 + $0x58] sm:$0xff]
  %v663 = vld [vmem:[%s3 + $0x60] sm:$0xff]
  %v664 = vld [vmem:[%s3 + $0x68] sm:$0xff]
  %v665 = vld [vmem:[%s3 + $0x70] sm:$0xff]
  %v666 = vld [vmem:[%s3 + $0x78] sm:$0xff]
  %v667 = vadd.f32 %v573, %v651
  %v668 = vadd.f32 %v578, %v652
  %v669 = vadd.f32 %v583, %v653
  %v670 = vadd.f32 %v588, %v654
  %v671 = vadd.f32 %v593, %v655
  %v672 = vadd.f32 %v598, %v656
  %v673 = vadd.f32 %v603, %v657
  %v674 = vadd.f32 %v608, %v658
  %v675 = vadd.f32 %v613, %v659
  %v676 = vadd.f32 %v618, %v660
  %v677 = vadd.f32 %v623, %v661
  %v678 = vadd.f32 %v628, %v662
  %v679 = vadd.f32 %v633, %v663
  %v680 = vadd.f32 %v638, %v664
  %v681 = vadd.f32 %v643, %v665
  %v682 = vadd.f32 %v648, %v666
  %vm683 = vcmask 261120
  %684 = vst.msk [vmem:[%s4] sm:$0xff] %vm683, %v667
  %685 = vst.msk [vmem:[%s4 + $0x8] sm:$0xff] %vm683, %v668
  %686 = vst.msk [vmem:[%s4 + $0x10] sm:$0xff] %vm683, %v669
  %687 = vst.msk [vmem:[%s4 + $0x18] sm:$0xff] %vm683, %v670
  %688 = vst.msk [vmem:[%s4 + $0x20] sm:$0xff] %vm683, %v671
  %689 = vst.msk [vmem:[%s4 + $0x28] sm:$0xff] %vm683, %v672
  %690 = vst.msk [vmem:[%s4 + $0x30] sm:$0xff] %vm683, %v673
  %691 = vst.msk [vmem:[%s4 + $0x38] sm:$0xff] %vm683, %v674
  %692 = vst.msk [vmem:[%s4 + $0x40] sm:$0xff] %vm683, %v675
  %693 = vst.msk [vmem:[%s4 + $0x48] sm:$0xff] %vm683, %v676
  %694 = vst.msk [vmem:[%s4 + $0x50] sm:$0xff] %vm683, %v677
  %695 = vst.msk [vmem:[%s4 + $0x58] sm:$0xff] %vm683, %v678
  %696 = vst.msk [vmem:[%s4 + $0x60] sm:$0xff] %vm683, %v679
  %697 = vst.msk [vmem:[%s4 + $0x68] sm:$0xff] %vm683, %v680
  %698 = vst.msk [vmem:[%s4 + $0x70] sm:$0xff] %vm683, %v681
  %699 = vst.msk [vmem:[%s4 + $0x78] sm:$0xff] %vm683, %v682
  // Predicated region
  $region18: #{custom_dpt_forward.2} parent=0 // pred_check
    _
  $region19: #{custom_dpt_forward.2} parent=0 // pred_check_branch
    %701 = sbr.rel (0) target = $region21
  $region20: #{custom_dpt_forward.2} parent=0 // pred_region
    _
  $region21: #{custom_dpt_forward.2} parent=0 // pred_fallthru
    _
  // Predicated region
  $region22: #{custom_dpt_forward.2} parent=0 // pred_check
    _
  $region23: #{custom_dpt_forward.2} parent=0 // pred_check_branch
    %703 = sbr.rel (0) target = $region25
  $region24: #{custom_dpt_forward.2} parent=0 // pred_region
    _
  $region25: #{custom_dpt_forward.2} parent=0 // pred_fallthru
    _

// kernel: custom_dpt_forward.3
$region0: #{custom_dpt_forward.3}
  #allocation0 [shape = 'u32[]', space=smem, size = 0x4, offset = 0x4, fixed_abs, tag = 'smem constant byte address 0x4 - core index']
  #allocation1 [shape = 'u32[144,128]{1,0:T(1,128)}', space=vmem, size = 0x12000, scoped, tag = 'internal scratch']
  %s0 = inlined_call_operand.vmem [shape: f32[2,256,8], index: 0, kind: input, shape index: {}]
  %s1 = inlined_call_operand.vmem [shape: f32[3,40,256], index: 1, kind: input, shape index: {}]
  %s2 = inlined_call_operand.vmem [shape: f32[3,40,1], index: 2, kind: input, shape index: {}]
  %s3 = inlined_call_operand.vmem [shape: f32[512,8], index: 3, kind: input, shape index: {}]
  %s4 = inlined_call_operand.vmem [shape: f32[8,512], index: 4, kind: input, shape index: {}]
  %s5 = inlined_call_operand.hbm [shape: f32[2,15,512,512], index: 5, kind: output, shape index: {}]
  %s6 = sld [smem:[#allocation0]]
  $region53: #{custom_dpt_forward.3} parent=0
    _
  %s8 = ssub.s32 1, %s6
  %s9 = scalar_select 0, %s8, %s6
  $region1: #{custom_dpt_forward.3} parent=0
    #allocation2 [shape = 'u8[10485760]{0}', space=vmem, size = 0xa00000, scoped, tag = 'output window, operand 0']
    #allocation3 [shape = 's32[2]{0}', space=sflag, size = 0x8, scoped, tag = 'scoped memory for custom_dpt_forward.3']
    %10 = vsyncpa [#allocation3], 0
    %s11 = scalar_lea.sflag [#allocation3], 1
    %12 = vsyncpa %s11, 0
    loop: start=0, step=1, limit=8
    $region2: #{custom_dpt_forward.3} parent=1 // loop_pre_header
      _
    $region3: #{custom_dpt_forward.3} parent=1 // loop_header
      %s14 = sphi 0, %s18
      %p15 = scmp.ge.s32.totalorder %s14, 8
      %s21 = sphi 0, %s33
      %s22 = sphi 0, %s29
      %s23 = sphi 0, %s21
      %s24 = sphi 0, %s22
      %s25 = sphi 0, %s23
      %s26 = sphi 0, %s24
      %s36 = sphi 0, %s38
      %s39 = sphi 0, %s36
      %s40 = sphi 0, %s39
      %s56 = sphi 0, %s40
      %s62 = sphi 0, %s64
      %s65 = sphi 0, %s62
      %s66 = sphi 0, %s65
      %s82 = sphi 0, %s66
      %s88 = sphi 0, %s90
      %s91 = sphi 0, %s88
      %s92 = sphi 0, %s91
      %s108 = sphi 0, %s92
      %s112 = sphi 0, %s112
      %s114 = sphi 0, %s112
      %s115 = sphi 0, %s114
      %s129 = sphi 0, %s115
      %s133 = sphi 0, %s133
      %s135 = sphi 0, %s133
      %s136 = sphi 0, %s135
      %s150 = sphi 0, %s136
      %s158 = sphi 0, %s160
      %s161 = sphi 0, %s158
      %s162 = sphi 0, %s161
      %s178 = sphi 0, %s162
    $region4: #{custom_dpt_forward.3} parent=1 // loop_header_branch
      %17 = sbr.rel (%p15) target = $region8
    $region5: #{custom_dpt_forward.3} parent=1 // loop_body
      %s19 = ssub.s32 %s14, 1
      %s20 = ssub.s32 %s14, 2
      %s27 = sadd.s32 1, %s22
      %p28 = scmp.ge.s32.totalorder %s27, 3
      %s29 = scalar_select %p28, 0, %s27
      %s30 = sadd.s32 1, %s21
      %s31 = scalar_select %p28, %s30, %s21
      %p32 = scmp.ge.s32.totalorder %s31, 2
      %s33 = scalar_select %p32, 0, %s31
      %s34 = ssub.s32 %s21, %s33
      %p35 = scmp.eq.s32.totalorder %s34, 0
      %s37 = sadd.s32 %s36, 1
      %s38 = scalar_select %p35, %s36, %s37
      %p41 = pneg %p35
      %p42 = scmp.eq.s32.totalorder %s14, 5
      %p43 = por %p41, %p42
      %p44 = scmp.ne.s32.totalorder %s36, %s39
      %p45 = scmp.eq.s32.totalorder %s14, 0
      %p46 = por %p44, %p45
      %p47 = scmp.ne.s32.totalorder %s36, %s39
      %p48 = scmp.eq.s32.totalorder %s19, 5
      %p49 = por %p47, %p48
      %p50 = scmp.ne.s32.totalorder %s39, %s40
      %p51 = scmp.eq.s32.totalorder %s19, 0
      %p52 = por %p50, %p51
      %p53 = scmp.ne.s32.totalorder %s39, %s40
      %p54 = scmp.eq.s32.totalorder %s20, 5
      %p55 = por %p53, %p54
      %p57 = scmp.ne.s32.totalorder %s40, %s56
      %p58 = scmp.eq.s32.totalorder %s20, 0
      %p59 = por %p57, %p58
      %s60 = ssub.s32 %s22, %s29
      %p61 = scmp.eq.s32.totalorder %s60, 0
      %s63 = sadd.s32 %s62, 1
      %s64 = scalar_select %p61, %s62, %s63
      %p67 = pneg %p61
      %p68 = scmp.eq.s32.totalorder %s14, 5
      %p69 = por %p67, %p68
      %p70 = scmp.ne.s32.totalorder %s62, %s65
      %p71 = scmp.eq.s32.totalorder %s14, 0
      %p72 = por %p70, %p71
      %p73 = scmp.ne.s32.totalorder %s62, %s65
      %p74 = scmp.eq.s32.totalorder %s19, 5
      %p75 = por %p73, %p74
      %p76 = scmp.ne.s32.totalorder %s65, %s66
      %p77 = scmp.eq.s32.totalorder %s19, 0
      %p78 = por %p76, %p77
      %p79 = scmp.ne.s32.totalorder %s65, %s66
      %p80 = scmp.eq.s32.totalorder %s20, 5
      %p81 = por %p79, %p80
      %p83 = scmp.ne.s32.totalorder %s66, %s82
      %p84 = scmp.eq.s32.totalorder %s20, 0
      %p85 = por %p83, %p84
      %s86 = ssub.s32 %s22, %s29
      %p87 = scmp.eq.s32.totalorder %s86, 0
      %s89 = sadd.s32 %s88, 1
      %s90 = scalar_select %p87, %s88, %s89
      %p93 = pneg %p87
      %p94 = scmp.eq.s32.totalorder %s14, 5
      %p95 = por %p93, %p94
      %p96 = scmp.ne.s32.totalorder %s88, %s91
      %p97 = scmp.eq.s32.totalorder %s14, 0
      %p98 = por %p96, %p97
      %p99 = scmp.ne.s32.totalorder %s88, %s91
      %p100 = scmp.eq.s32.totalorder %s19, 5
      %p101 = por %p99, %p100
      %p102 = scmp.ne.s32.totalorder %s91, %s92
      %p103 = scmp.eq.s32.totalorder %s19, 0
      %p104 = por %p102, %p103
      %p105 = scmp.ne.s32.totalorder %s91, %s92
      %p106 = scmp.eq.s32.totalorder %s20, 5
      %p107 = por %p105, %p106
      %p109 = scmp.ne.s32.totalorder %s92, %s108
      %p110 = scmp.eq.s32.totalorder %s20, 0
      %p111 = por %p109, %p110
      %s113 = sadd.s32 %s112, 1
      %p116 = scmp.eq.s32.totalorder %s14, 5
      %p117 = scmp.ne.s32.totalorder %s112, %s114
      %p118 = scmp.eq.s32.totalorder %s14, 0
      %p119 = por %p117, %p118
      %p120 = scmp.ne.s32.totalorder %s112, %s114
      %p121 = scmp.eq.s32.totalorder %s19, 5
      %p122 = por %p120, %p121
      %p123 = scmp.ne.s32.totalorder %s114, %s115
      %p124 = scmp.eq.s32.totalorder %s19, 0
      %p125 = por %p123, %p124
      %p126 = scmp.ne.s32.totalorder %s114, %s115
      %p127 = scmp.eq.s32.totalorder %s20, 5
      %p128 = por %p126, %p127
      %p130 = scmp.ne.s32.totalorder %s115, %s129
      %p131 = scmp.eq.s32.totalorder %s20, 0
      %p132 = por %p130, %p131
      %s134 = sadd.s32 %s133, 1
      %p137 = scmp.eq.s32.totalorder %s14, 5
      %p138 = scmp.ne.s32.totalorder %s133, %s135
      %p139 = scmp.eq.s32.totalorder %s14, 0
      %p140 = por %p138, %p139
      %p141 = scmp.ne.s32.totalorder %s133, %s135
      %p142 = scmp.eq.s32.totalorder %s19, 5
      %p143 = por %p141, %p142
      %p144 = scmp.ne.s32.totalorder %s135, %s136
      %p145 = scmp.eq.s32.totalorder %s19, 0
      %p146 = por %p144, %p145
      %p147 = scmp.ne.s32.totalorder %s135, %s136
      %p148 = scmp.eq.s32.totalorder %s20, 5
      %p149 = por %p147, %p148
      %p151 = scmp.ne.s32.totalorder %s136, %s150
      %p152 = scmp.eq.s32.totalorder %s20, 0
      %p153 = por %p151, %p152
      %s154 = ssub.s32 %s21, %s33
      %s155 = ssub.s32 %s22, %s29
      %s156 = sor.u32 %s154, %s155
      %p157 = scmp.eq.s32.totalorder %s156, 0
      %s159 = sadd.s32 %s158, 1
      %s160 = scalar_select %p157, %s158, %s159
      %p163 = pneg %p157
      %p164 = scmp.eq.s32.totalorder %s14, 5
      %p165 = por %p163, %p164
      %p166 = scmp.ne.s32.totalorder %s158, %s161
      %p167 = scmp.eq.s32.totalorder %s14, 0
      %p168 = por %p166, %p167
      %p169 = scmp.ne.s32.totalorder %s158, %s161
      %p170 = scmp.eq.s32.totalorder %s19, 5
      %p171 = por %p169, %p170
      %p172 = scmp.ne.s32.totalorder %s161, %s162
      %p173 = scmp.eq.s32.totalorder %s19, 0
      %p174 = por %p172, %p173
      %p175 = scmp.ne.s32.totalorder %s161, %s162
      %p176 = scmp.eq.s32.totalorder %s20, 5
      %p177 = por %p175, %p176
      %p179 = scmp.ne.s32.totalorder %s162, %s178
      %p180 = scmp.eq.s32.totalorder %s20, 0
      %p181 = por %p179, %p180
      %p182 = scmp.le.s32.totalorder 1, %s14
      %p183 = scmp.lt.s32.totalorder %s14, 7
      %p184 = pnand %p182, %p183
      %p185 = pneg %p184
      // Predicated region
      $region9: #{custom_dpt_forward.3} parent=5 // pred_check
        _
      $region10: #{custom_dpt_forward.3} parent=5 // pred_check_branch
        %187 = sbr.rel (%p184) target = $region12
      $region11: #{custom_dpt_forward.3} parent=5 // pred_region
        %s188 = ssub.s32 %s14, 1
        // Predicated region
        $region13: #{custom_dpt_forward.3} parent=11 // pred_check
          %p189 = pneg %p125
        $region14: #{custom_dpt_forward.3} parent=11 // pred_check_branch
          %191 = sbr.rel (%p189) target = $region16
        $region15: #{custom_dpt_forward.3} parent=11 // pred_region
          _
        $region16: #{custom_dpt_forward.3} parent=11 // pred_fallthru
          _
        // Predicated region
        $region17: #{custom_dpt_forward.3} parent=11 // pred_check
          %p192 = pneg %p146
        $region18: #{custom_dpt_forward.3} parent=11 // pred_check_branch
          %194 = sbr.rel (%p192) target = $region20
        $region19: #{custom_dpt_forward.3} parent=11 // pred_region
          _
        $region20: #{custom_dpt_forward.3} parent=11 // pred_fallthru
          _
      $region12: #{custom_dpt_forward.3} parent=5 // pred_fallthru
        _
      %p195 = scmp.lt.s32.totalorder %s14, 6
      // Predicated region
      $region21: #{custom_dpt_forward.3} parent=5 // pred_check
        %p196 = pneg %p195
      $region22: #{custom_dpt_forward.3} parent=5 // pred_check_branch
        %198 = sbr.rel (%p196) target = $region24
      $region23: #{custom_dpt_forward.3} parent=5 // pred_region
        // Predicated region
        $region25: #{custom_dpt_forward.3} parent=23 // pred_check
          %p199 = pneg %p46
        $region26: #{custom_dpt_forward.3} parent=23 // pred_check_branch
          %201 = sbr.rel (%p199) target = $region28
        $region27: #{custom_dpt_forward.3} parent=23 // pred_region
          %p202 = scmp.lt.s32.totalorder %s21, 1
          %s203 = scalar_select %p202, %s21, 1
          %s204 = smul.addr %s203, 32
          %s205 = smul.addr %s204, 8
          %s206 = scalar_lea.vmem %s0, %s205
        $region28: #{custom_dpt_forward.3} parent=23 // pred_fallthru
          _
        // Predicated region
        $region29: #{custom_dpt_forward.3} parent=23 // pred_check
          %p207 = pneg %p72
        $region30: #{custom_dpt_forward.3} parent=23 // pred_check_branch
          %209 = sbr.rel (%p207) target = $region32
        $region31: #{custom_dpt_forward.3} parent=23 // pred_region
          %p210 = scmp.lt.s32.totalorder %s22, 2
          %s211 = scalar_select %p210, %s22, 2
          %s212 = smul.addr %s211, 10
          %s213 = smul.addr %s212, 8
          %s214 = scalar_lea.vmem %s1, %s213
        $region32: #{custom_dpt_forward.3} parent=23 // pred_fallthru
          _
        // Predicated region
        $region33: #{custom_dpt_forward.3} parent=23 // pred_check
          %p215 = pneg %p98
        $region34: #{custom_dpt_forward.3} parent=23 // pred_check_branch
          %217 = sbr.rel (%p215) target = $region36
        $region35: #{custom_dpt_forward.3} parent=23 // pred_region
          %p218 = scmp.lt.s32.totalorder %s22, 2
          %s219 = scalar_select %p218, %s22, 2
          %s220 = smul.addr %s219, 5
          %s221 = smul.addr %s220, 8
          %s222 = scalar_lea.vmem %s2, %s221
        $region36: #{custom_dpt_forward.3} parent=23 // pred_fallthru
          _
      $region24: #{custom_dpt_forward.3} parent=5 // pred_fallthru
        _
      %p223 = scmp.le.s32.totalorder 1, %s14
      %p224 = scmp.lt.s32.totalorder %s14, 7
      %p225 = pnand %p223, %p224
      %p226 = pneg %p225
      // Predicated region
      $region37: #{custom_dpt_forward.3} parent=5 // pred_check
        _
      $region38: #{custom_dpt_forward.3} parent=5 // pred_check_branch
        %228 = sbr.rel (%p225) target = $region40
      $region39: #{custom_dpt_forward.3} parent=5 // pred_region
        %s229 = ssub.s32 %s14, 1
        %p230 = scmp.lt.s32.totalorder %s23, 1
        %s231 = scalar_select %p230, %s23, 1
        %s232 = smul.addr %s231, 32
        %s233 = smul.addr %s232, 8
        %s234 = scalar_lea.vmem %s0, %s233
        %p235 = pneg %p52
        %p236 = pneg %p49
        %p237 = scmp.lt.s32.totalorder %s24, 2
        %s238 = scalar_select %p237, %s24, 2
        %s239 = smul.addr %s238, 10
        %s240 = smul.addr %s239, 8
        %s241 = scalar_lea.vmem %s1, %s240
        %p242 = pneg %p78
        %p243 = pneg %p75
        %p244 = scmp.lt.s32.totalorder %s24, 2
        %s245 = scalar_select %p244, %s24, 2
        %s246 = smul.addr %s245, 5
        %s247 = smul.addr %s246, 8
        %s248 = scalar_lea.vmem %s2, %s247
        %p249 = pneg %p104
        %p250 = pneg %p101
        %p251 = pneg %p125
        %p252 = pneg %p122
        %p253 = pneg %p146
        %p254 = pneg %p143
        %p255 = pneg %p174
        %p256 = pneg %p171
        %s257 = sand.u32 %s161, 1
        %s258 = scalar_lea.sflag [#allocation3], %s257
        %s259 = sand.u32 %s161, 1
        %s260 = smul.addr %s259, 10240
        %s261 = scalar_lea.vmem [#allocation2], %s260
        %p262 = scmp.lt.s32.totalorder %s23, 1
        %s263 = scalar_select %p262, %s23, 1
        %s264 = smul.addr %s263, 32
        %s265 = smul.addr %s264, 8
        %s266 = scalar_lea.vmem %s0, %s265
        %p267 = scmp.lt.s32.totalorder %s24, 2
        %s268 = scalar_select %p267, %s24, 2
        %s269 = smul.addr %s268, 10
        %s270 = smul.addr %s269, 8
        %s271 = scalar_lea.vmem %s1, %s270
        %p272 = scmp.lt.s32.totalorder %s24, 2
        %s273 = scalar_select %p272, %s24, 2
        %s274 = smul.addr %s273, 5
        %s275 = smul.addr %s274, 8
        %s276 = scalar_lea.vmem %s2, %s275
        %s277 = smul.u32 5, %s24
        %v278 = vld [vmem:[%s271] sm:$0xff]
        %v279 = vld [vmem:[%s271 + $0x8] sm:$0xff]
        %v280 = vld [vmem:[%s271 + $0x10] sm:$0xff]
        %v281 = vld [vmem:[%s271 + $0x18] sm:$0xff]
        %v282 = vld [vmem:[%s271 + $0x20] sm:$0xff]
        %v283 = vld [vmem:[%s271 + $0x28] sm:$0xff]
        %v284 = vld [vmem:[%s271 + $0x30] sm:$0xff]
        %v285 = vld [vmem:[%s271 + $0x38] sm:$0xff]
        %v286 = vld [vmem:[%s271 + $0x40] sm:$0xff]
        %v287 = vld [vmem:[%s271 + $0x48] sm:$0xff]
        %v288 = vld [vmem:[%s266] sm:$0xff]
        %v289 = vld [vmem:[%s266 + $0x8] sm:$0xff]
        %v290 = vld [vmem:[%s266 + $0x10] sm:$0xff]
        %v291 = vld [vmem:[%s266 + $0x18] sm:$0xff]
        %v292 = vld [vmem:[%s266 + $0x20] sm:$0xff]
        %v293 = vld [vmem:[%s266 + $0x28] sm:$0xff]
        %v294 = vld [vmem:[%s266 + $0x30] sm:$0xff]
        %v295 = vld [vmem:[%s266 + $0x38] sm:$0xff]
        %v296 = vld [vmem:[%s266 + $0x40] sm:$0xff]
        %v297 = vld [vmem:[%s266 + $0x48] sm:$0xff]
        %v298 = vld [vmem:[%s266 + $0x50] sm:$0xff]
        %v299 = vld [vmem:[%s266 + $0x58] sm:$0xff]
        %v300 = vld [vmem:[%s266 + $0x60] sm:$0xff]
        %v301 = vld [vmem:[%s266 + $0x68] sm:$0xff]
        %v302 = vld [vmem:[%s266 + $0x70] sm:$0xff]
        %v303 = vld [vmem:[%s266 + $0x78] sm:$0xff]
        %v304 = vld [vmem:[%s266 + $0x80] sm:$0xff]
        %v305 = vld [vmem:[%s266 + $0x88] sm:$0xff]
        %v306 = vld [vmem:[%s266 + $0x90] sm:$0xff]
        %v307 = vld [vmem:[%s266 + $0x98] sm:$0xff]
        %v308 = vld [vmem:[%s266 + $0xa0] sm:$0xff]
        %v309 = vld [vmem:[%s266 + $0xa8] sm:$0xff]
        %v310 = vld [vmem:[%s266 + $0xb0] sm:$0xff]
        %v311 = vld [vmem:[%s266 + $0xb8] sm:$0xff]
        %v312 = vld [vmem:[%s266 + $0xc0] sm:$0xff]
        %v313 = vld [vmem:[%s266 + $0xc8] sm:$0xff]
        %v314 = vld [vmem:[%s266 + $0xd0] sm:$0xff]
        %v315 = vld [vmem:[%s266 + $0xd8] sm:$0xff]
        %v316 = vld [vmem:[%s266 + $0xe0] sm:$0xff]
        %v317 = vld [vmem:[%s266 + $0xe8] sm:$0xff]
        %v318 = vld [vmem:[%s266 + $0xf0] sm:$0xff]
        %v319 = vld [vmem:[%s266 + $0xf8] sm:$0xff]
        %v320 = vld [vmem:[%s276] sm:$0xff]
        %v321 = vld [vmem:[%s276 + $0x8] sm:$0xff]
        %v322 = vld [vmem:[%s276 + $0x10] sm:$0xff]
        %v323 = vld [vmem:[%s276 + $0x18] sm:$0xff]
        %v324 = vld [vmem:[%s276 + $0x20] sm:$0xff]
        %326 = vset.pattern.permute.xlu0 0
        %327 = vperm.xlu0 %326, %v320
        %v328 = vpop.permute.xlu0 %327
        %331 = vset.pattern.permute.xlu0 0
        %332 = vperm.xlu0 %331, %v321
        %v333 = vpop.permute.xlu0 %332
        %336 = vset.pattern.permute.xlu0 0
        %337 = vperm.xlu0 %336, %v322
        %v338 = vpop.permute.xlu0 %337
        %341 = vset.pattern.permute.xlu0 0
        %342 = vperm.xlu0 %341, %v323
        %v343 = vpop.permute.xlu0 %342
        %346 = vset.pattern.permute.xlu0 0
        %347 = vperm.xlu0 %346, %v324
        %v348 = vpop.permute.xlu0 %347
        %350 = vmatprep.subr.mxu0 0.0
        %351 = vmatpush1.msra.mxu0 %v288
        %352 = vmatprep.subr.mxu0 0.0
        %353 = vmatpush1.msra.mxu0 %v289
        %354 = vmatprep.subr.mxu0 0.0
        %355 = vmatpush1.msra.mxu0 %v290
        %356 = vmatprep.subr.mxu0 0.0
        %357 = vmatpush1.msra.mxu0 %v291
        %358 = vmatprep.subr.mxu0 0.0
        %359 = vmatpush1.msra.mxu0 %v292
        %360 = vmatprep.subr.mxu0 0.0
        %361 = vmatpush1.msra.mxu0 %v293
        %362 = vmatprep.subr.mxu0 0.0
        %363 = vmatpush1.msra.mxu0 %v294
        %364 = vmatprep.subr.mxu0 0.0
        %365 = vmatpush1.msra.mxu0 %v295
        %366 = vmatprep.subr.mxu0 0.0
        %367 = vmatpush1.msra.mxu0 %v296
        %368 = vmatprep.subr.mxu0 0.0
        %369 = vmatpush1.msra.mxu0 %v297
        %370 = vmatprep.subr.mxu0 0.0
        %371 = vmatpush1.msra.mxu0 %v298
        %372 = vmatprep.subr.mxu0 0.0
        %373 = vmatpush1.msra.mxu0 %v299
        %374 = vmatprep.subr.mxu0 0.0
        %375 = vmatpush1.msra.mxu0 %v300
        %376 = vmatprep.subr.mxu0 0.0
        %377 = vmatpush1.msra.mxu0 %v301
        %378 = vmatprep.subr.mxu0 0.0
        %379 = vmatpush1.msra.mxu0 %v302
        %380 = vmatprep.subr.mxu0 0.0
        %381 = vmatpush1.msra.mxu0 %v303
        %382 = vmatprep.subr.mxu0 0.0
        %383 = vmatpush1.msra.mxu0 %v304
        %384 = vmatprep.subr.mxu0 0.0
        %385 = vmatpush1.msra.mxu0 %v305
        %386 = vmatprep.subr.mxu0 0.0
        %387 = vmatpush1.msra.mxu0 %v306
        %388 = vmatprep.subr.mxu0 0.0
        %389 = vmatpush1.msra.mxu0 %v307
        %390 = vmatprep.subr.mxu0 0.0
        %391 = vmatpush1.msra.mxu0 %v308
        %392 = vmatprep.subr.mxu0 0.0
        %393 = vmatpush1.msra.mxu0 %v309
        %394 = vmatprep.subr.mxu0 0.0
        %395 = vmatpush1.msra.mxu0 %v310
        %396 = vmatprep.subr.mxu0 0.0
        %397 = vmatpush1.msra.mxu0 %v311
        %398 = vmatprep.subr.mxu0 0.0
        %399 = vmatpush1.msra.mxu0 %v312
        %400 = vmatprep.subr.mxu0 0.0
        %401 = vmatpush1.msra.mxu0 %v313
        %402 = vmatprep.subr.mxu0 0.0
        %403 = vmatpush1.msra.mxu0 %v314
        %404 = vmatprep.subr.mxu0 0.0
        %405 = vmatpush1.msra.mxu0 %v315
        %406 = vmatprep.subr.mxu0 0.0
        %407 = vmatpush1.msra.mxu0 %v316
        %408 = vmatprep.subr.mxu0 0.0
        %409 = vmatpush1.msra.mxu0 %v317
        %410 = vmatprep.subr.mxu0 0.0
        %411 = vmatpush1.msra.mxu0 %v318
        %412 = vmatprep.subr.mxu0 0.0
        %413 = vmatpush1.msra.mxu0 %v319
        %414 = vmatprep.mubr.f32.mxu0 %v279
        %415 = vmatmul.mubr.f32.gmra.mrb[0].mxu0 %v278
        %v416 = vpop.f32.mrb[0].mxu0
        %v417 = vadd.f32 %v328, %v416
        %v418 = vpop.f32.mrb[0].mxu0
        %419 = vmatprep.mubr.f32.mxu0 %v281
        %420 = vmatmul.mubr.f32.gmra.mrb[0].mxu0 %v280
        %v421 = vpop.f32.mrb[0].mxu0
        %v422 = vadd.f32 %v333, %v421
        %v423 = vpop.f32.mrb[0].mxu0
        %424 = vmatprep.mubr.f32.mxu0 %v283
        %425 = vmatmul.mubr.f32.gmra.mrb[0].mxu0 %v282
        %v426 = vpop.f32.mrb[0].mxu0
        %v427 = vadd.f32 %v338, %v426
        %v428 = vpop.f32.mrb[0].mxu0
        %429 = vmatprep.mubr.f32.mxu0 %v285
        %430 = vmatmul.mubr.f32.gmra.mrb[0].mxu0 %v284
        %v431 = vpop.f32.mrb[0].mxu0
        %v432 = vadd.f32 %v343, %v431
        %v433 = vpop.f32.mrb[0].mxu0
        %434 = vmatprep.mubr.f32.mxu0 %v287
        %435 = vmatmul.mubr.f32.gmra.mrb[0].mxu0 %v286
        %v436 = vpop.f32.mrb[0].mxu0
        %v437 = vadd.f32 %v348, %v436
        %v438 = vpop.f32.mrb[0].mxu0
        %439 = vdwg.mxu0
        %v440 = vld [vmem:[%s4] sm:$0xff]
        %v441 = vld [vmem:[%s4 + $0x8] sm:$0xff]
        %v442 = vld [vmem:[%s4 + $0x10] sm:$0xff]
        %v443 = vld [vmem:[%s4 + $0x18] sm:$0xff]
        %vm444 = vcmask 64512
        %v446 = vsel %vm444, %v417, 0
        %v449 = vsel %vm444, %v422, 0
        %v452 = vsel %vm444, %v427, 0
        %v455 = vsel %vm444, %v432, 0
        %v458 = vsel %vm444, %v437, 0
        %460 = vmatprep.subr.mxu0 %v441
        %461 = vmatpush1.msra.mxu0 %v440
        %462 = vmatprep.subr.mxu0 0.0
        %463 = vmatpush1.msra.mxu0 0.0
        %464 = vmatprep.subr.mxu0 0.0
        %465 = vmatpush1.msra.mxu0 0.0
        %466 = vmatprep.subr.mxu0 0.0
        %467 = vmatpush1.msra.mxu0 0.0
        %468 = vmatprep.subr.mxu0 0.0
        %469 = vmatpush1.msra.mxu0 0.0
        %470 = vmatprep.subr.mxu0 0.0
        %471 = vmatpush1.msra.mxu0 0.0
        %472 = vmatprep.subr.mxu0 0.0
        %473 = vmatpush1.msra.mxu0 0.0
        %474 = vmatprep.subr.mxu0 0.0
        %475 = vmatpush1.msra.mxu0 0.0
        %476 = vmatprep.subr.mxu0 0.0
        %477 = vmatpush1.msra.mxu0 0.0
        %478 = vmatprep.subr.mxu0 0.0
        %479 = vmatpush1.msra.mxu0 0.0
        %480 = vmatprep.subr.mxu0 0.0
        %481 = vmatpush1.msra.mxu0 0.0
        %482 = vmatprep.subr.mxu0 0.0
        %483 = vmatpush1.msra.mxu0 0.0
        %484 = vmatprep.subr.mxu0 0.0
        %485 = vmatpush1.msra.mxu0 0.0
        %486 = vmatprep.subr.mxu0 0.0
        %487 = vmatpush1.msra.mxu0 0.0
        %488 = vmatprep.subr.mxu0 0.0
        %489 = vmatpush1.msra.mxu0 0.0
        %490 = vmatprep.subr.mxu0 0.0
        %491 = vmatpush1.msra.mxu0 0.0
        %492 = vmatprep.subr.mxu0 0.0
        %493 = vmatpush1.msra.mxu0 0.0
        %494 = vmatprep.subr.mxu0 0.0
        %495 = vmatpush1.msra.mxu0 0.0
        %496 = vmatprep.subr.mxu0 0.0
        %497 = vmatpush1.msra.mxu0 0.0
        %498 = vmatprep.subr.mxu0 0.0
        %499 = vmatpush1.msra.mxu0 0.0
        %500 = vmatprep.subr.mxu0 0.0
        %501 = vmatpush1.msra.mxu0 0.0
        %502 = vmatprep.subr.mxu0 0.0
        %503 = vmatpush1.msra.mxu0 0.0
        %504 = vmatprep.subr.mxu0 0.0
        %505 = vmatpush1.msra.mxu0 0.0
        %506 = vmatprep.subr.mxu0 0.0
        %507 = vmatpush1.msra.mxu0 0.0
        %508 = vmatprep.subr.mxu0 0.0
        %509 = vmatpush1.msra.mxu0 0.0
        %510 = vmatprep.subr.mxu0 0.0
        %511 = vmatpush1.msra.mxu0 0.0
        %512 = vmatprep.subr.mxu0 0.0
        %513 = vmatpush1.msra.mxu0 0.0
        %514 = vmatprep.subr.mxu0 0.0
        %515 = vmatpush1.msra.mxu0 0.0
        %516 = vmatprep.subr.mxu0 0.0
        %517 = vmatpush1.msra.mxu0 0.0
        %518 = vmatprep.subr.mxu0 0.0
        %519 = vmatpush1.msra.mxu0 0.0
        %520 = vmatprep.subr.mxu0 0.0
        %521 = vmatpush1.msra.mxu0 0.0
        %522 = vmatprep.subr.mxu0 0.0
        %523 = vmatpush1.msra.mxu0 0.0
        %524 = vmatprep.mubr.f32.mxu0 0.0
        %525 = vmatmul.mubr.f32.gmra.mrb[0].mxu0 %v446
        %v526 = vpop.f32.mrb[0].mxu0
        %v527 = vadd.f32 0.0, %v526
        %v528 = vpop.f32.mrb[0].mxu0
        %v529 = vadd.f32 0.0, %v528
        %530 = vmatprep.mubr.f32.mxu0 0.0
        %531 = vmatmul.mubr.f32.gmra.mrb[0].mxu0 %v449
        %v532 = vpop.f32.mrb[0].mxu0
        %v533 = vadd.f32 0.0, %v532
        %v534 = vpop.f32.mrb[0].mxu0
        %v535 = vadd.f32 0.0, %v534
        %536 = vmatprep.mubr.f32.mxu0 0.0
        %537 = vmatmul.mubr.f32.gmra.mrb[0].mxu0 %v452
        %v538 = vpop.f32.mrb[0].mxu0
        %v539 = vadd.f32 0.0, %v538
        %v540 = vpop.f32.mrb[0].mxu0
        %v541 = vadd.f32 0.0, %v540
        %542 = vmatprep.mubr.f32.mxu0 0.0
        %543 = vmatmul.mubr.f32.gmra.mrb[0].mxu0 %v455
        %v544 = vpop.f32.mrb[0].mxu0
        %v545 = vadd.f32 0.0, %v544
        %v546 = vpop.f32.mrb[0].mxu0
        %v547 = vadd.f32 0.0, %v546
        %548 = vmatprep.mubr.f32.mxu0 0.0
        %549 = vmatmul.mubr.f32.gmra.mrb[0].mxu0 %v458
        %v550 = vpop.f32.mrb[0].mxu0
        %v551 = vadd.f32 0.0, %v550
        %v552 = vpop.f32.mrb[0].mxu0
        %v553 = vadd.f32 0.0, %v552
        %554 = vdwg.mxu0
        %555 = vmatprep.subr.mxu0 %v443
        %556 = vmatpush1.msra.mxu0 %v442
        %557 = vmatprep.subr.mxu0 0.0
        %558 = vmatpush1.msra.mxu0 0.0
        %559 = vmatprep.subr.mxu0 0.0
        %560 = vmatpush1.msra.mxu0 0.0
        %561 = vmatprep.subr.mxu0 0.0
        %562 = vmatpush1.msra.mxu0 0.0
        %563 = vmatprep.subr.mxu0 0.0
        %564 = vmatpush1.msra.mxu0 0.0
        %565 = vmatprep.subr.mxu0 0.0
        %566 = vmatpush1.msra.mxu0 0.0
        %567 = vmatprep.subr.mxu0 0.0
        %568 = vmatpush1.msra.mxu0 0.0
        %569 = vmatprep.subr.mxu0 0.0
        %570 = vmatpush1.msra.mxu0 0.0
        %571 = vmatprep.subr.mxu0 0.0
        %572 = vmatpush1.msra.mxu0 0.0
        %573 = vmatprep.subr.mxu0 0.0
        %574 = vmatpush1.msra.mxu0 0.0
        %575 = vmatprep.subr.mxu0 0.0
        %576 = vmatpush1.msra.mxu0 0.0
        %577 = vmatprep.subr.mxu0 0.0
        %578 = vmatpush1.msra.mxu0 0.0
        %579 = vmatprep.subr.mxu0 0.0
        %580 = vmatpush1.msra.mxu0 0.0
        %581 = vmatprep.subr.mxu0 0.0
        %582 = vmatpush1.msra.mxu0 0.0
        %583 = vmatprep.subr.mxu0 0.0
        %584 = vmatpush1.msra.mxu0 0.0
        %585 = vmatprep.subr.mxu0 0.0
        %586 = vmatpush1.msra.mxu0 0.0
        %587 = vmatprep.subr.mxu0 0.0
        %588 = vmatpush1.msra.mxu0 0.0
        %589 = vmatprep.subr.mxu0 0.0
        %590 = vmatpush1.msra.mxu0 0.0
        %591 = vmatprep.subr.mxu0 0.0
        %592 = vmatpush1.msra.mxu0 0.0
        %593 = vmatprep.subr.mxu0 0.0
        %594 = vmatpush1.msra.mxu0 0.0
        %595 = vmatprep.subr.mxu0 0.0
        %596 = vmatpush1.msra.mxu0 0.0
        %597 = vmatprep.subr.mxu0 0.0
        %598 = vmatpush1.msra.mxu0 0.0
        %599 = vmatprep.subr.mxu0 0.0
        %600 = vmatpush1.msra.mxu0 0.0
        %601 = vmatprep.subr.mxu0 0.0
        %602 = vmatpush1.msra.mxu0 0.0
        %603 = vmatprep.subr.mxu0 0.0
        %604 = vmatpush1.msra.mxu0 0.0
        %605 = vmatprep.subr.mxu0 0.0
        %606 = vmatpush1.msra.mxu0 0.0
        %607 = vmatprep.subr.mxu0 0.0
        %608 = vmatpush1.msra.mxu0 0.0
        %609 = vmatprep.subr.mxu0 0.0
        %610 = vmatpush1.msra.mxu0 0.0
        %611 = vmatprep.subr.mxu0 0.0
        %612 = vmatpush1.msra.mxu0 0.0
        %613 = vmatprep.subr.mxu0 0.0
        %614 = vmatpush1.msra.mxu0 0.0
        %615 = vmatprep.subr.mxu0 0.0
        %616 = vmatpush1.msra.mxu0 0.0
        %617 = vmatprep.subr.mxu0 0.0
        %618 = vmatpush1.msra.mxu0 0.0
        %619 = vmatprep.mubr.f32.mxu0 0.0
        %620 = vmatmul.mubr.f32.gmra.mrb[0].mxu0 %v446
        %v621 = vpop.f32.mrb[0].mxu0
        %v622 = vadd.f32 0.0, %v621
        %v623 = vpop.f32.mrb[0].mxu0
        %v624 = vadd.f32 0.0, %v623
        %625 = vmatprep.mubr.f32.mxu0 0.0
        %626 = vmatmul.mubr.f32.gmra.mrb[0].mxu0 %v449
        %v627 = vpop.f32.mrb[0].mxu0
        %v628 = vadd.f32 0.0, %v627
        %v629 = vpop.f32.mrb[0].mxu0
        %v630 = vadd.f32 0.0, %v629
        %631 = vmatprep.mubr.f32.mxu0 0.0
        %632 = vmatmul.mubr.f32.gmra.mrb[0].mxu0 %v452
        %v633 = vpop.f32.mrb[0].mxu0
        %v634 = vadd.f32 0.0, %v633
        %v635 = vpop.f32.mrb[0].mxu0
        %v636 = vadd.f32 0.0, %v635
        %637 = vmatprep.mubr.f32.mxu0 0.0
        %638 = vmatmul.mubr.f32.gmra.mrb[0].mxu0 %v455
        %v639 = vpop.f32.mrb[0].mxu0
        %v640 = vadd.f32 0.0, %v639
        %v641 = vpop.f32.mrb[0].mxu0
        %v642 = vadd.f32 0.0, %v641
        %643 = vmatprep.mubr.f32.mxu0 0.0
        %644 = vmatmul.mubr.f32.gmra.mrb[0].mxu0 %v458
        %v645 = vpop.f32.mrb[0].mxu0
        %v646 = vadd.f32 0.0, %v645
        %v647 = vpop.f32.mrb[0].mxu0
        %v648 = vadd.f32 0.0, %v647
        %649 = vdwg.mxu0
        %v650 = vld [vmem:[%s3] sm:$0xff]
        %v651 = vld [vmem:[%s3 + $0x8] sm:$0xff]
        %v652 = vld [vmem:[%s3 + $0x10] sm:$0xff]
        %v653 = vld [vmem:[%s3 + $0x18] sm:$0xff]
        %v654 = vld [vmem:[%s3 + $0x20] sm:$0xff]
        %v655 = vld [vmem:[%s3 + $0x28] sm:$0xff]
        %v656 = vld [vmem:[%s3 + $0x30] sm:$0xff]
        %v657 = vld [vmem:[%s3 + $0x38] sm:$0xff]
        %v658 = vld [vmem:[%s3 + $0x40] sm:$0xff]
        %v659 = vld [vmem:[%s3 + $0x48] sm:$0xff]
        %v660 = vld [vmem:[%s3 + $0x50] sm:$0xff]
        %v661 = vld [vmem:[%s3 + $0x58] sm:$0xff]
        %v662 = vld [vmem:[%s3 + $0x60] sm:$0xff]
        %v663 = vld [vmem:[%s3 + $0x68] sm:$0xff]
        %v664 = vld [vmem:[%s3 + $0x70] sm:$0xff]
        %v665 = vld [vmem:[%s3 + $0x78] sm:$0xff]
        %v666 = vld [vmem:[%s3 + $0x80] sm:$0xff]
        %v667 = vld [vmem:[%s3 + $0x88] sm:$0xff]
        %v668 = vld [vmem:[%s3 + $0x90] sm:$0xff]
        %v669 = vld [vmem:[%s3 + $0x98] sm:$0xff]
        %v670 = vld [vmem:[%s3 + $0xa0] sm:$0xff]
        %v671 = vld [vmem:[%s3 + $0xa8] sm:$0xff]
        %v672 = vld [vmem:[%s3 + $0xb0] sm:$0xff]
        %v673 = vld [vmem:[%s3 + $0xb8] sm:$0xff]
        %v674 = vld [vmem:[%s3 + $0xc0] sm:$0xff]
        %v675 = vld [vmem:[%s3 + $0xc8] sm:$0xff]
        %v676 = vld [vmem:[%s3 + $0xd0] sm:$0xff]
        %v677 = vld [vmem:[%s3 + $0xd8] sm:$0xff]
        %v678 = vld [vmem:[%s3 + $0xe0] sm:$0xff]
        %v679 = vld [vmem:[%s3 + $0xe8] sm:$0xff]
        %v680 = vld [vmem:[%s3 + $0xf0] sm:$0xff]
        %v681 = vld [vmem:[%s3 + $0xf8] sm:$0xff]
        %v682 = vld [vmem:[%s3 + $0x100] sm:$0xff]
        %v683 = vld [vmem:[%s3 + $0x108] sm:$0xff]
        %v684 = vld [vmem:[%s3 + $0x110] sm:$0xff]
        %v685 = vld [vmem:[%s3 + $0x118] sm:$0xff]
        %v686 = vld [vmem:[%s3 + $0x120] sm:$0xff]
        %v687 = vld [vmem:[%s3 + $0x128] sm:$0xff]
        %v688 = vld [vmem:[%s3 + $0x130] sm:$0xff]
        %v689 = vld [vmem:[%s3 + $0x138] sm:$0xff]
        %v690 = vld [vmem:[%s3 + $0x140] sm:$0xff]
        %v691 = vld [vmem:[%s3 + $0x148] sm:$0xff]
        %v692 = vld [vmem:[%s3 + $0x150] sm:$0xff]
        %v693 = vld [vmem:[%s3 + $0x158] sm:$0xff]
        %v694 = vld [vmem:[%s3 + $0x160] sm:$0xff]
        %v695 = vld [vmem:[%s3 + $0x168] sm:$0xff]
        %v696 = vld [vmem:[%s3 + $0x170] sm:$0xff]
        %v697 = vld [vmem:[%s3 + $0x178] sm:$0xff]
        %v698 = vld [vmem:[%s3 + $0x180] sm:$0xff]
        %v699 = vld [vmem:[%s3 + $0x188] sm:$0xff]
        %v700 = vld [vmem:[%s3 + $0x190] sm:$0xff]
        %v701 = vld [vmem:[%s3 + $0x198] sm:$0xff]
        %v702 = vld [vmem:[%s3 + $0x1a0] sm:$0xff]
        %v703 = vld [vmem:[%s3 + $0x1a8] sm:$0xff]
        %v704 = vld [vmem:[%s3 + $0x1b0] sm:$0xff]
        %v705 = vld [vmem:[%s3 + $0x1b8] sm:$0xff]
        %v706 = vld [vmem:[%s3 + $0x1c0] sm:$0xff]
        %v707 = vld [vmem:[%s3 + $0x1c8] sm:$0xff]
        %v708 = vld [vmem:[%s3 + $0x1d0] sm:$0xff]
        %v709 = vld [vmem:[%s3 + $0x1d8] sm:$0xff]
        %v710 = vld [vmem:[%s3 + $0x1e0] sm:$0xff]
        %v711 = vld [vmem:[%s3 + $0x1e8] sm:$0xff]
        %v712 = vld [vmem:[%s3 + $0x1f0] sm:$0xff]
        %v713 = vld [vmem:[%s3 + $0x1f8] sm:$0xff]
        %v715 = vsel %vm444, %v650, 0
        %v718 = vsel %vm444, %v651, 0
        %v721 = vsel %vm444, %v652, 0
        %v724 = vsel %vm444, %v653, 0
        %v727 = vsel %vm444, %v654, 0
        %v730 = vsel %vm444, %v655, 0
        %v733 = vsel %vm444, %v656, 0
        %v736 = vsel %vm444, %v657, 0
        %v739 = vsel %vm444, %v658, 0
        %v742 = vsel %vm444, %v659, 0
        %v745 = vsel %vm444, %v660, 0
        %v748 = vsel %vm444, %v661, 0
        %v751 = vsel %vm444, %v662, 0
        %v754 = vsel %vm444, %v663, 0
        %v757 = vsel %vm444, %v664, 0
        %v760 = vsel %vm444, %v665, 0
        %v763 = vsel %vm444, %v666, 0
        %v766 = vsel %vm444, %v667, 0
        %v769 = vsel %vm444, %v668, 0
        %v772 = vsel %vm444, %v669, 0
        %v775 = vsel %vm444, %v670, 0
        %v778 = vsel %vm444, %v671, 0
        %v781 = vsel %vm444, %v672, 0
        %v784 = vsel %vm444, %v673, 0
        %v787 = vsel %vm444, %v674, 0
        %v790 = vsel %vm444, %v675, 0
        %v793 = vsel %vm444, %v676, 0
        %v796 = vsel %vm444, %v677, 0
        %v799 = vsel %vm444, %v678, 0
        %v802 = vsel %vm444, %v679, 0
        %v805 = vsel %vm444, %v680, 0
        %v808 = vsel %vm444, %v681, 0
        %v811 = vsel %vm444, %v682, 0
        %v814 = vsel %vm444, %v683, 0
        %v817 = vsel %vm444, %v684, 0
        %v820 = vsel %vm444, %v685, 0
        %v823 = vsel %vm444, %v686, 0
        %v826 = vsel %vm444, %v687, 0
        %v829 = vsel %vm444, %v688, 0
        %v832 = vsel %vm444, %v689, 0
        %v835 = vsel %vm444, %v690, 0
        %v838 = vsel %vm444, %v691, 0
        %v841 = vsel %vm444, %v692, 0
        %v844 = vsel %vm444, %v693, 0
        %v847 = vsel %vm444, %v694, 0
        %v850 = vsel %vm444, %v695, 0
        %v853 = vsel %vm444, %v696, 0
        %v856 = vsel %vm444, %v697, 0
        %v859 = vsel %vm444, %v698, 0
        %v862 = vsel %vm444, %v699, 0
        %v865 = vsel %vm444, %v700, 0
        %v868 = vsel %vm444, %v701, 0
        %v871 = vsel %vm444, %v702, 0
        %v874 = vsel %vm444, %v703, 0
        %v877 = vsel %vm444, %v704, 0
        %v880 = vsel %vm444, %v705, 0
        %v883 = vsel %vm444, %v706, 0
        %v886 = vsel %vm444, %v707, 0
        %v889 = vsel %vm444, %v708, 0
        %v892 = vsel %vm444, %v709, 0
        %v895 = vsel %vm444, %v710, 0
        %v898 = vsel %vm444, %v711, 0
        %v901 = vsel %vm444, %v712, 0
        %v904 = vsel %vm444, %v713, 0
        %906 = vmatprep.subr.mxu0 %v529
        %907 = vmatpush1.msra.mxu0 %v527
        %908 = vmatprep.subr.mxu0 0.0
        %909 = vmatpush1.msra.mxu0 0.0
        %910 = vmatprep.subr.mxu0 0.0
        %911 = vmatpush1.msra.mxu0 0.0
        %912 = vmatprep.subr.mxu0 0.0
        %913 = vmatpush1.msra.mxu0 0.0
        %914 = vmatprep.subr.mxu0 0.0
        %915 = vmatpush1.msra.mxu0 0.0
        %916 = vmatprep.subr.mxu0 0.0
        %917 = vmatpush1.msra.mxu0 0.0
        %918 = vmatprep.subr.mxu0 0.0
        %919 = vmatpush1.msra.mxu0 0.0
        %920 = vmatprep.subr.mxu0 0.0
        %921 = vmatpush1.msra.mxu0 0.0
        %922 = vmatprep.subr.mxu0 0.0
        %923 = vmatpush1.msra.mxu0 0.0
        %924 = vmatprep.subr.mxu0 0.0
        %925 = vmatpush1.msra.mxu0 0.0
        %926 = vmatprep.subr.mxu0 0.0
        %927 = vmatpush1.msra.mxu0 0.0
        %928 = vmatprep.subr.mxu0 0.0
        %929 = vmatpush1.msra.mxu0 0.0
        %930 = vmatprep.subr.mxu0 0.0
        %931 = vmatpush1.msra.mxu0 0.0
        %932 = vmatprep.subr.mxu0 0.0
        %933 = vmatpush1.msra.mxu0 0.0
        %934 = vmatprep.subr.mxu0 0.0
        %935 = vmatpush1.msra.mxu0 0.0
        %936 = vmatprep.subr.mxu0 0.0
        %937 = vmatpush1.msra.mxu0 0.0
        %938 = vmatprep.subr.mxu0 0.0
        %939 = vmatpush1.msra.mxu0 0.0
        %940 = vmatprep.subr.mxu0 0.0
        %941 = vmatpush1.msra.mxu0 0.0
        %942 = vmatprep.subr.mxu0 0.0
        %943 = vmatpush1.msra.mxu0 0.0
        %944 = vmatprep.subr.mxu0 0.0
        %945 = vmatpush1.msra.mxu0 0.0
        %946 = vmatprep.subr.mxu0 0.0
        %947 = vmatpush1.msra.mxu0 0.0
        %948 = vmatprep.subr.mxu0 0.0
        %949 = vmatpush1.msra.mxu0 0.0
        %950 = vmatprep.subr.mxu0 0.0
        %951 = vmatpush1.msra.mxu0 0.0
        %952 = vmatprep.subr.mxu0 0.0
        %953 = vmatpush1.msra.mxu0 0.0
        %954 = vmatprep.subr.mxu0 0.0
        %955 = vmatpush1.msra.mxu0 0.0
        %956 = vmatprep.subr.mxu0 0.0
        %957 = vmatpush1.msra.mxu0 0.0
        %958 = vmatprep.subr.mxu0 0.0
        %959 = vmatpush1.msra.mxu0 0.0
        %960 = vmatprep.subr.mxu0 0.0
        %961 = vmatpush1.msra.mxu0 0.0
        %962 = vmatprep.subr.mxu0 0.0
        %963 = vmatpush1.msra.mxu0 0.0
        %964 = vmatprep.subr.mxu0 0.0
        %965 = vmatpush1.msra.mxu0 0.0
        %966 = vmatprep.subr.mxu0 0.0
        %967 = vmatpush1.msra.mxu0 0.0
        %968 = vmatprep.subr.mxu0 0.0
        %969 = vmatpush1.msra.mxu0 0.0
        %970 = vmatprep.mubr.f32.mxu0 0.0
        %971 = vmatmul.mubr.f32.gmra.mrb[0].mxu0 %v715
        %v972 = vpop.f32.mrb[0].mxu0
        %v973 = vadd.f32 0.0, %v972
        %v974 = vpop.f32.mrb[0].mxu0
        %v975 = vadd.f32 0.0, %v974
        %976 = vmatprep.mubr.f32.mxu0 0.0
        %977 = vmatmul.mubr.f32.gmra.mrb[0].mxu0 %v718
        %v978 = vpop.f32.mrb[0].mxu0
        %v979 = vadd.f32 0.0, %v978
        %v980 = vpop.f32.mrb[0].mxu0
        %v981 = vadd.f32 0.0, %v980
        %982 = vmatprep.mubr.f32.mxu0 0.0
        %983 = vmatmul.mubr.f32.gmra.mrb[0].mxu0 %v721
        %v984 = vpop.f32.mrb[0].mxu0
        %v985 = vadd.f32 0.0, %v984
        %v986 = vpop.f32.mrb[0].mxu0
        %v987 = vadd.f32 0.0, %v986
        %988 = vmatprep.mubr.f32.mxu0 0.0
        %989 = vmatmul.mubr.f32.gmra.mrb[0].mxu0 %v724
        %v990 = vpop.f32.mrb[0].mxu0
        %v991 = vadd.f32 0.0, %v990
        %v992 = vpop.f32.mrb[0].mxu0
        %v993 = vadd.f32 0.0, %v992
        %994 = vmatprep.mubr.f32.mxu0 0.0
        %995 = vmatmul.mubr.f32.gmra.mrb[0].mxu0 %v727
        %v996 = vpop.f32.mrb[0].mxu0
        %v997 = vadd.f32 0.0, %v996
        %v998 = vpop.f32.mrb[0].mxu0
        %v999 = vadd.f32 0.0, %v998
        %1000 = vmatprep.mubr.f32.mxu0 0.0
        %1001 = vmatmul.mubr.f32.gmra.mrb[0].mxu0 %v730
        %v1002 = vpop.f32.mrb[0].mxu0
        %v1003 = vadd.f32 0.0, %v1002
        %v1004 = vpop.f32.mrb[0].mxu0
        %v1005 = vadd.f32 0.0, %v1004
        %1006 = vmatprep.mubr.f32.mxu0 0.0
        %1007 = vmatmul.mubr.f32.gmra.mrb[0].mxu0 %v733
        %v1008 = vpop.f32.mrb[0].mxu0
        %v1009 = vadd.f32 0.0, %v1008
        %v1010 = vpop.f32.mrb[0].mxu0
        %v1011 = vadd.f32 0.0, %v1010
        %1012 = vmatprep.mubr.f32.mxu0 0.0
        %1013 = vmatmul.mubr.f32.gmra.mrb[0].mxu0 %v736
        %v1014 = vpop.f32.mrb[0].mxu0
        %v1015 = vadd.f32 0.0, %v1014
        %v1016 = vpop.f32.mrb[0].mxu0
        %v1017 = vadd.f32 0.0, %v1016
        %1018 = vmatprep.mubr.f32.mxu0 0.0
        %1019 = vmatmul.mubr.f32.gmra.mrb[0].mxu0 %v739
        %v1020 = vpop.f32.mrb[0].mxu0
        %v1021 = vadd.f32 0.0, %v1020
        %v1022 = vpop.f32.mrb[0].mxu0
        %v1023 = vadd.f32 0.0, %v1022
        %1024 = vmatprep.mubr.f32.mxu0 0.0
        %1025 = vmatmul.mubr.f32.gmra.mrb[0].mxu0 %v742
        %v1026 = vpop.f32.mrb[0].mxu0
        %v1027 = vadd.f32 0.0, %v1026
        %v1028 = vpop.f32.mrb[0].mxu0
        %v1029 = vadd.f32 0.0, %v1028
        %1030 = vmatprep.mubr.f32.mxu0 0.0
        %1031 = vmatmul.mubr.f32.gmra.mrb[0].mxu0 %v745
        %v1032 = vpop.f32.mrb[0].mxu0
        %v1033 = vadd.f32 0.0, %v1032
        %v1034 = vpop.f32.mrb[0].mxu0
        %v1035 = vadd.f32 0.0, %v1034
        %1036 = vmatprep.mubr.f32.mxu0 0.0
        %1037 = vmatmul.mubr.f32.gmra.mrb[0].mxu0 %v748
        %v1038 = vpop.f32.mrb[0].mxu0
        %v1039 = vadd.f32 0.0, %v1038
        %v1040 = vpop.f32.mrb[0].mxu0
        %v1041 = vadd.f32 0.0, %v1040
        %1042 = vmatprep.mubr.f32.mxu0 0.0
        %1043 = vmatmul.mubr.f32.gmra.mrb[0].mxu0 %v751
        %v1044 = vpop.f32.mrb[0].mxu0
        %v1045 = vadd.f32 0.0, %v1044
        %v1046 = vpop.f32.mrb[0].mxu0
        %v1047 = vadd.f32 0.0, %v1046
        %1048 = vmatprep.mubr.f32.mxu0 0.0
        %1049 = vmatmul.mubr.f32.gmra.mrb[0].mxu0 %v754
        %v1050 = vpop.f32.mrb[0].mxu0
        %v1051 = vadd.f32 0.0, %v1050
        %v1052 = vpop.f32.mrb[0].mxu0
        %v1053 = vadd.f32 0.0, %v1052
        %1054 = vmatprep.mubr.f32.mxu0 0.0
        %1055 = vmatmul.mubr.f32.gmra.mrb[0].mxu0 %v757
        %v1056 = vpop.f32.mrb[0].mxu0
        %v1057 = vadd.f32 0.0, %v1056
        %v1058 = vpop.f32.mrb[0].mxu0
        %v1059 = vadd.f32 0.0, %v1058
        %1060 = vmatprep.mubr.f32.mxu0 0.0
        %1061 = vmatmul.mubr.f32.gmra.mrb[0].mxu0 %v760
        %v1062 = vpop.f32.mrb[0].mxu0
        %v1063 = vadd.f32 0.0, %v1062
        %v1064 = vpop.f32.mrb[0].mxu0
        %v1065 = vadd.f32 0.0, %v1064
        %1066 = vmatprep.mubr.f32.mxu0 0.0
        %1067 = vmatmul.mubr.f32.gmra.mrb[0].mxu0 %v763
        %v1068 = vpop.f32.mrb[0].mxu0
        %v1069 = vadd.f32 0.0, %v1068
        %v1070 = vpop.f32.mrb[0].mxu0
        %v1071 = vadd.f32 0.0, %v1070
        %1072 = vmatprep.mubr.f32.mxu0 0.0
        %1073 = vmatmul.mubr.f32.gmra.mrb[0].mxu0 %v766
        %v1074 = vpop.f32.mrb[0].mxu0
        %v1075 = vadd.f32 0.0, %v1074
        %v1076 = vpop.f32.mrb[0].mxu0
        %v1077 = vadd.f32 0.0, %v1076
        %1078 = vmatprep.mubr.f32.mxu0 0.0
        %1079 = vmatmul.mubr.f32.gmra.mrb[0].mxu0 %v769
        %v1080 = vpop.f32.mrb[0].mxu0
        %v1081 = vadd.f32 0.0, %v1080
        %v1082 = vpop.f32.mrb[0].mxu0
        %v1083 = vadd.f32 0.0, %v1082
        %1084 = vmatprep.mubr.f32.mxu0 0.0
        %1085 = vmatmul.mubr.f32.gmra.mrb[0].mxu0 %v772
        %v1086 = vpop.f32.mrb[0].mxu0
        %v1087 = vadd.f32 0.0, %v1086
        %v1088 = vpop.f32.mrb[0].mxu0
        %v1089 = vadd.f32 0.0, %v1088
        %1090 = vmatprep.mubr.f32.mxu0 0.0
        %1091 = vmatmul.mubr.f32.gmra.mrb[0].mxu0 %v775
        %v1092 = vpop.f32.mrb[0].mxu0
        %v1093 = vadd.f32 0.0, %v1092
        %v1094 = vpop.f32.mrb[0].mxu0
        %v1095 = vadd.f32 0.0, %v1094
        %1096 = vmatprep.mubr.f32.mxu0 0.0
        %1097 = vmatmul.mubr.f32.gmra.mrb[0].mxu0 %v778
        %v1098 = vpop.f32.mrb[0].mxu0
        %v1099 = vadd.f32 0.0, %v1098
        %v1100 = vpop.f32.mrb[0].mxu0
        %v1101 = vadd.f32 0.0, %v1100
        %1102 = vmatprep.mubr.f32.mxu0 0.0
        %1103 = vmatmul.mubr.f32.gmra.mrb[0].mxu0 %v781
        %v1104 = vpop.f32.mrb[0].mxu0
        %v1105 = vadd.f32 0.0, %v1104
        %v1106 = vpop.f32.mrb[0].mxu0
        %v1107 = vadd.f32 0.0, %v1106
        %1108 = vmatprep.mubr.f32.mxu0 0.0
        %1109 = vmatmul.mubr.f32.gmra.mrb[0].mxu0 %v784
        %v1110 = vpop.f32.mrb[0].mxu0
        %v1111 = vadd.f32 0.0, %v1110
        %v1112 = vpop.f32.mrb[0].mxu0
        %v1113 = vadd.f32 0.0, %v1112
        %1114 = vmatprep.mubr.f32.mxu0 0.0
        %1115 = vmatmul.mubr.f32.gmra.mrb[0].mxu0 %v787
        %v1116 = vpop.f32.mrb[0].mxu0
        %v1117 = vadd.f32 0.0, %v1116
        %v1118 = vpop.f32.mrb[0].mxu0
        %v1119 = vadd.f32 0.0, %v1118
        %1120 = vmatprep.mubr.f32.mxu0 0.0
        %1121 = vmatmul.mubr.f32.gmra.mrb[0].mxu0 %v790
        %v1122 = vpop.f32.mrb[0].mxu0
        %v1123 = vadd.f32 0.0, %v1122
        %v1124 = vpop.f32.mrb[0].mxu0
        %v1125 = vadd.f32 0.0, %v1124
        %1126 = vmatprep.mubr.f32.mxu0 0.0
        %1127 = vmatmul.mubr.f32.gmra.mrb[0].mxu0 %v793
        %v1128 = vpop.f32.mrb[0].mxu0
        %v1129 = vadd.f32 0.0, %v1128
        %v1130 = vpop.f32.mrb[0].mxu0
        %v1131 = vadd.f32 0.0, %v1130
        %1132 = vmatprep.mubr.f32.mxu0 0.0
        %1133 = vmatmul.mubr.f32.gmra.mrb[0].mxu0 %v796
        %v1134 = vpop.f32.mrb[0].mxu0
        %v1135 = vadd.f32 0.0, %v1134
        %v1136 = vpop.f32.mrb[0].mxu0
        %v1137 = vadd.f32 0.0, %v1136
        %1138 = vmatprep.mubr.f32.mxu0 0.0
        %1139 = vmatmul.mubr.f32.gmra.mrb[0].mxu0 %v799
        %v1140 = vpop.f32.mrb[0].mxu0
        %v1141 = vadd.f32 0.0, %v1140
        %v1142 = vpop.f32.mrb[0].mxu0
        %v1143 = vadd.f32 0.0, %v1142
        %1144 = vmatprep.mubr.f32.mxu0 0.0
        %1145 = vmatmul.mubr.f32.gmra.mrb[0].mxu0 %v802
        %v1146 = vpop.f32.mrb[0].mxu0
        %v1147 = vadd.f32 0.0, %v1146
        %v1148 = vpop.f32.mrb[0].mxu0
        %v1149 = vadd.f32 0.0, %v1148
        %1150 = vmatprep.mubr.f32.mxu0 0.0
        %1151 = vmatmul.mubr.f32.gmra.mrb[0].mxu0 %v805
        %v1152 = vpop.f32.mrb[0].mxu0
        %v1153 = vadd.f32 0.0, %v1152
        %v1154 = vpop.f32.mrb[0].mxu0
        %v1155 = vadd.f32 0.0, %v1154
        %1156 = vmatprep.mubr.f32.mxu0 0.0
        %1157 = vmatmul.mubr.f32.gmra.mrb[0].mxu0 %v808
        %v1158 = vpop.f32.mrb[0].mxu0
        %v1159 = vadd.f32 0.0, %v1158
        %v1160 = vpop.f32.mrb[0].mxu0
        %v1161 = vadd.f32 0.0, %v1160
        %1162 = vmatprep.mubr.f32.mxu0 0.0
        %1163 = vmatmul.mubr.f32.gmra.mrb[0].mxu0 %v811
        %v1164 = vpop.f32.mrb[0].mxu0
        %v1165 = vadd.f32 0.0, %v1164
        %v1166 = vpop.f32.mrb[0].mxu0
        %v1167 = vadd.f32 0.0, %v1166
        %1168 = vmatprep.mubr.f32.mxu0 0.0
        %1169 = vmatmul.mubr.f32.gmra.mrb[0].mxu0 %v814
        %v1170 = vpop.f32.mrb[0].mxu0
        %v1171 = vadd.f32 0.0, %v1170
        %v1172 = vpop.f32.mrb[0].mxu0
        %v1173 = vadd.f32 0.0, %v1172
        %1174 = vmatprep.mubr.f32.mxu0 0.0
        %1175 = vmatmul.mubr.f32.gmra.mrb[0].mxu0 %v817
        %v1176 = vpop.f32.mrb[0].mxu0
        %v1177 = vadd.f32 0.0, %v1176
        %v1178 = vpop.f32.mrb[0].mxu0
        %v1179 = vadd.f32 0.0, %v1178
        %1180 = vmatprep.mubr.f32.mxu0 0.0
        %1181 = vmatmul.mubr.f32.gmra.mrb[0].mxu0 %v820
        %v1182 = vpop.f32.mrb[0].mxu0
        %v1183 = vadd.f32 0.0, %v1182
        %v1184 = vpop.f32.mrb[0].mxu0
        %v1185 = vadd.f32 0.0, %v1184
        %1186 = vmatprep.mubr.f32.mxu0 0.0
        %1187 = vmatmul.mubr.f32.gmra.mrb[0].mxu0 %v823
        %v1188 = vpop.f32.mrb[0].mxu0
        %v1189 = vadd.f32 0.0, %v1188
        %v1190 = vpop.f32.mrb[0].mxu0
        %v1191 = vadd.f32 0.0, %v1190
        %1192 = vmatprep.mubr.f32.mxu0 0.0
        %1193 = vmatmul.mubr.f32.gmra.mrb[0].mxu0 %v826
        %v1194 = vpop.f32.mrb[0].mxu0
        %v1195 = vadd.f32 0.0, %v1194
        %v1196 = vpop.f32.mrb[0].mxu0
        %v1197 = vadd.f32 0.0, %v1196
        %1198 = vmatprep.mubr.f32.mxu0 0.0
        %1199 = vmatmul.mubr.f32.gmra.mrb[0].mxu0 %v829
        %v1200 = vpop.f32.mrb[0].mxu0
        %v1201 = vadd.f32 0.0, %v1200
        %v1202 = vpop.f32.mrb[0].mxu0
        %v1203 = vadd.f32 0.0, %v1202
        %1204 = vmatprep.mubr.f32.mxu0 0.0
        %1205 = vmatmul.mubr.f32.gmra.mrb[0].mxu0 %v832
        %v1206 = vpop.f32.mrb[0].mxu0
        %v1207 = vadd.f32 0.0, %v1206
        %v1208 = vpop.f32.mrb[0].mxu0
        %v1209 = vadd.f32 0.0, %v1208
        %1210 = vmatprep.mubr.f32.mxu0 0.0
        %1211 = vmatmul.mubr.f32.gmra.mrb[0].mxu0 %v835
        %v1212 = vpop.f32.mrb[0].mxu0
        %v1213 = vadd.f32 0.0, %v1212
        %v1214 = vpop.f32.mrb[0].mxu0
        %v1215 = vadd.f32 0.0, %v1214
        %1216 = vmatprep.mubr.f32.mxu0 0.0
        %1217 = vmatmul.mubr.f32.gmra.mrb[0].mxu0 %v838
        %v1218 = vpop.f32.mrb[0].mxu0
        %v1219 = vadd.f32 0.0, %v1218
        %v1220 = vpop.f32.mrb[0].mxu0
        %v1221 = vadd.f32 0.0, %v1220
        %1222 = vmatprep.mubr.f32.mxu0 0.0
        %1223 = vmatmul.mubr.f32.gmra.mrb[0].mxu0 %v841
        %v1224 = vpop.f32.mrb[0].mxu0
        %v1225 = vadd.f32 0.0, %v1224
        %v1226 = vpop.f32.mrb[0].mxu0
        %v1227 = vadd.f32 0.0, %v1226
        %1228 = vmatprep.mubr.f32.mxu0 0.0
        %1229 = vmatmul.mubr.f32.gmra.mrb[0].mxu0 %v844
        %v1230 = vpop.f32.mrb[0].mxu0
        %v1231 = vadd.f32 0.0, %v1230
        %v1232 = vpop.f32.mrb[0].mxu0
        %v1233 = vadd.f32 0.0, %v1232
        %1234 = vmatprep.mubr.f32.mxu0 0.0
        %1235 = vmatmul.mubr.f32.gmra.mrb[0].mxu0 %v847
        %v1236 = vpop.f32.mrb[0].mxu0
        %v1237 = vadd.f32 0.0, %v1236
        %v1238 = vpop.f32.mrb[0].mxu0
        %v1239 = vadd.f32 0.0, %v1238
        %1240 = vmatprep.mubr.f32.mxu0 0.0
        %1241 = vmatmul.mubr.f32.gmra.mrb[0].mxu0 %v850
        %v1242 = vpop.f32.mrb[0].mxu0
        %v1243 = vadd.f32 0.0, %v1242
        %v1244 = vpop.f32.mrb[0].mxu0
        %v1245 = vadd.f32 0.0, %v1244
        %1246 = vmatprep.mubr.f32.mxu0 0.0
        %1247 = vmatmul.mubr.f32.gmra.mrb[0].mxu0 %v853
        %v1248 = vpop.f32.mrb[0].mxu0
        %v1249 = vadd.f32 0.0, %v1248
        %v1250 = vpop.f32.mrb[0].mxu0
        %v1251 = vadd.f32 0.0, %v1250
        %1252 = vmatprep.mubr.f32.mxu0 0.0
        %1253 = vmatmul.mubr.f32.gmra.mrb[0].mxu0 %v856
        %v1254 = vpop.f32.mrb[0].mxu0
        %v1255 = vadd.f32 0.0, %v1254
        %v1256 = vpop.f32.mrb[0].mxu0
        %v1257 = vadd.f32 0.0, %v1256
        %1258 = vmatprep.mubr.f32.mxu0 0.0
        %1259 = vmatmul.mubr.f32.gmra.mrb[0].mxu0 %v859
        %v1260 = vpop.f32.mrb[0].mxu0
        %v1261 = vadd.f32 0.0, %v1260
        %v1262 = vpop.f32.mrb[0].mxu0
        %v1263 = vadd.f32 0.0, %v1262
        %1264 = vmatprep.mubr.f32.mxu0 0.0
        %1265 = vmatmul.mubr.f32.gmra.mrb[0].mxu0 %v862
        %v1266 = vpop.f32.mrb[0].mxu0
        %v1267 = vadd.f32 0.0, %v1266
        %v1268 = vpop.f32.mrb[0].mxu0
        %v1269 = vadd.f32 0.0, %v1268
        %1270 = vmatprep.mubr.f32.mxu0 0.0
        %1271 = vmatmul.mubr.f32.gmra.mrb[0].mxu0 %v865
        %v1272 = vpop.f32.mrb[0].mxu0
        %v1273 = vadd.f32 0.0, %v1272
        %v1274 = vpop.f32.mrb[0].mxu0
        %v1275 = vadd.f32 0.0, %v1274
        %1276 = vmatprep.mubr.f32.mxu0 0.0
        %1277 = vmatmul.mubr.f32.gmra.mrb[0].mxu0 %v868
        %v1278 = vpop.f32.mrb[0].mxu0
        %v1279 = vadd.f32 0.0, %v1278
        %v1280 = vpop.f32.mrb[0].mxu0
        %v1281 = vadd.f32 0.0, %v1280
        %1282 = vmatprep.mubr.f32.mxu0 0.0
        %1283 = vmatmul.mubr.f32.gmra.mrb[0].mxu0 %v871
        %v1284 = vpop.f32.mrb[0].mxu0
        %v1285 = vadd.f32 0.0, %v1284
        %v1286 = vpop.f32.mrb[0].mxu0
        %v1287 = vadd.f32 0.0, %v1286
        %1288 = vmatprep.mubr.f32.mxu0 0.0
        %1289 = vmatmul.mubr.f32.gmra.mrb[0].mxu0 %v874
        %v1290 = vpop.f32.mrb[0].mxu0
        %v1291 = vadd.f32 0.0, %v1290
        %v1292 = vpop.f32.mrb[0].mxu0
        %v1293 = vadd.f32 0.0, %v1292
        %1294 = vmatprep.mubr.f32.mxu0 0.0
        %1295 = vmatmul.mubr.f32.gmra.mrb[0].mxu0 %v877
        %v1296 = vpop.f32.mrb[0].mxu0
        %v1297 = vadd.f32 0.0, %v1296
        %v1298 = vpop.f32.mrb[0].mxu0
        %v1299 = vadd.f32 0.0, %v1298
        %1300 = vmatprep.mubr.f32.mxu0 0.0
        %1301 = vmatmul.mubr.f32.gmra.mrb[0].mxu0 %v880
        %v1302 = vpop.f32.mrb[0].mxu0
        %v1303 = vadd.f32 0.0, %v1302
        %v1304 = vpop.f32.mrb[0].mxu0
        %v1305 = vadd.f32 0.0, %v1304
        %1306 = vmatprep.mubr.f32.mxu0 0.0
        %1307 = vmatmul.mubr.f32.gmra.mrb[0].mxu0 %v883
        %v1308 = vpop.f32.mrb[0].mxu0
        %v1309 = vadd.f32 0.0, %v1308
        %v1310 = vpop.f32.mrb[0].mxu0
        %v1311 = vadd.f32 0.0, %v1310
        %1312 = vmatprep.mubr.f32.mxu0 0.0
        %1313 = vmatmul.mubr.f32.gmra.mrb[0].mxu0 %v886
        %v1314 = vpop.f32.mrb[0].mxu0
        %v1315 = vadd.f32 0.0, %v1314
        %v1316 = vpop.f32.mrb[0].mxu0
        %v1317 = vadd.f32 0.0, %v1316
        %1318 = vmatprep.mubr.f32.mxu0 0.0
        %1319 = vmatmul.mubr.f32.gmra.mrb[0].mxu0 %v889
        %v1320 = vpop.f32.mrb[0].mxu0
        %v1321 = vadd.f32 0.0, %v1320
        %v1322 = vpop.f32.mrb[0].mxu0
        %v1323 = vadd.f32 0.0, %v1322
        %1324 = vmatprep.mubr.f32.mxu0 0.0
        %1325 = vmatmul.mubr.f32.gmra.mrb[0].mxu0 %v892
        %v1326 = vpop.f32.mrb[0].mxu0
        %v1327 = vadd.f32 0.0, %v1326
        %v1328 = vpop.f32.mrb[0].mxu0
        %v1329 = vadd.f32 0.0, %v1328
        %1330 = vmatprep.mubr.f32.mxu0 0.0
        %1331 = vmatmul.mubr.f32.gmra.mrb[0].mxu0 %v895
        %v1332 = vpop.f32.mrb[0].mxu0
        %v1333 = vadd.f32 0.0, %v1332
        %v1334 = vpop.f32.mrb[0].mxu0
        %v1335 = vadd.f32 0.0, %v1334
        %1336 = vmatprep.mubr.f32.mxu0 0.0
        %1337 = vmatmul.mubr.f32.gmra.mrb[0].mxu0 %v898
        %v1338 = vpop.f32.mrb[0].mxu0
        %v1339 = vadd.f32 0.0, %v1338
        %v1340 = vpop.f32.mrb[0].mxu0
        %v1341 = vadd.f32 0.0, %v1340
        %1342 = vmatprep.mubr.f32.mxu0 0.0
        %1343 = vmatmul.mubr.f32.gmra.mrb[0].mxu0 %v901
        %v1344 = vpop.f32.mrb[0].mxu0
        %v1345 = vadd.f32 0.0, %v1344
        %v1346 = vpop.f32.mrb[0].mxu0
        %v1347 = vadd.f32 0.0, %v1346
        %1348 = vmatprep.mubr.f32.mxu0 0.0
        %1349 = vmatmul.mubr.f32.gmra.mrb[0].mxu0 %v904
        %v1350 = vpop.f32.mrb[0].mxu0
        %v1351 = vadd.f32 0.0, %v1350
        %v1352 = vpop.f32.mrb[0].mxu0
        %v1353 = vadd.f32 0.0, %v1352
        %1354 = vdwg.mxu0
        %1355 = vmatprep.subr.mxu0 %v624
        %1356 = vmatpush1.msra.mxu0 %v622
        %1357 = vmatprep.subr.mxu0 0.0
        %1358 = vmatpush1.msra.mxu0 0.0
        %1359 = vmatprep.subr.mxu0 0.0
        %1360 = vmatpush1.msra.mxu0 0.0
        %1361 = vmatprep.subr.mxu0 0.0
        %1362 = vmatpush1.msra.mxu0 0.0
        %1363 = vmatprep.subr.mxu0 0.0
        %1364 = vmatpush1.msra.mxu0 0.0
        %1365 = vmatprep.subr.mxu0 0.0
        %1366 = vmatpush1.msra.mxu0 0.0
        %1367 = vmatprep.subr.mxu0 0.0
        %1368 = vmatpush1.msra.mxu0 0.0
        %1369 = vmatprep.subr.mxu0 0.0
        %1370 = vmatpush1.msra.mxu0 0.0
        %1371 = vmatprep.subr.mxu0 0.0
        %1372 = vmatpush1.msra.mxu0 0.0
        %1373 = vmatprep.subr.mxu0 0.0
        %1374 = vmatpush1.msra.mxu0 0.0
        %1375 = vmatprep.subr.mxu0 0.0
        %1376 = vmatpush1.msra.mxu0 0.0
        %1377 = vmatprep.subr.mxu0 0.0
        %1378 = vmatpush1.msra.mxu0 0.0
        %1379 = vmatprep.subr.mxu0 0.0
        %1380 = vmatpush1.msra.mxu0 0.0
        %1381 = vmatprep.subr.mxu0 0.0
        %1382 = vmatpush1.msra.mxu0 0.0
        %1383 = vmatprep.subr.mxu0 0.0
        %1384 = vmatpush1.msra.mxu0 0.0
        %1385 = vmatprep.subr.mxu0 0.0
        %1386 = vmatpush1.msra.mxu0 0.0
        %1387 = vmatprep.subr.mxu0 0.0
        %1388 = vmatpush1.msra.mxu0 0.0
        %1389 = vmatprep.subr.mxu0 0.0
        %1390 = vmatpush1.msra.mxu0 0.0
        %1391 = vmatprep.subr.mxu0 0.0
        %1392 = vmatpush1.msra.mxu0 0.0
        %1393 = vmatprep.subr.mxu0 0.0
        %1394 = vmatpush1.msra.mxu0 0.0
        %1395 = vmatprep.subr.mxu0 0.0
        %1396 = vmatpush1.msra.mxu0 0.0
        %1397 = vmatprep.subr.mxu0 0.0
        %1398 = vmatpush1.msra.mxu0 0.0
        %1399 = vmatprep.subr.mxu0 0.0
        %1400 = vmatpush1.msra.mxu0 0.0
        %1401 = vmatprep.subr.mxu0 0.0
        %1402 = vmatpush1.msra.mxu0 0.0
        %1403 = vmatprep.subr.mxu0 0.0
        %1404 = vmatpush1.msra.mxu0 0.0
        %1405 = vmatprep.subr.mxu0 0.0
        %1406 = vmatpush1.msra.mxu0 0.0
        %1407 = vmatprep.subr.mxu0 0.0
        %1408 = vmatpush1.msra.mxu0 0.0
        %1409 = vmatprep.subr.mxu0 0.0
        %1410 = vmatpush1.msra.mxu0 0.0
        %1411 = vmatprep.subr.mxu0 0.0
        %1412 = vmatpush1.msra.mxu0 0.0
        %1413 = vmatprep.subr.mxu0 0.0
        %1414 = vmatpush1.msra.mxu0 0.0
        %1415 = vmatprep.subr.mxu0 0.0
        %1416 = vmatpush1.msra.mxu0 0.0
        %1417 = vmatprep.subr.mxu0 0.0
        %1418 = vmatpush1.msra.mxu0 0.0
        %1419 = vmatprep.mubr.f32.mxu0 0.0
        %1420 = vmatmul.mubr.f32.gmra.mrb[0].mxu0 %v715
        %v1421 = vpop.f32.mrb[0].mxu0
        %v1422 = vadd.f32 0.0, %v1421
        %v1423 = vpop.f32.mrb[0].mxu0
        %v1424 = vadd.f32 0.0, %v1423
        %1425 = vmatprep.mubr.f32.mxu0 0.0
        %1426 = vmatmul.mubr.f32.gmra.mrb[0].mxu0 %v718
        %v1427 = vpop.f32.mrb[0].mxu0
        %v1428 = vadd.f32 0.0, %v1427
        %v1429 = vpop.f32.mrb[0].mxu0
        %v1430 = vadd.f32 0.0, %v1429
        %1431 = vmatprep.mubr.f32.mxu0 0.0
        %1432 = vmatmul.mubr.f32.gmra.mrb[0].mxu0 %v721
        %v1433 = vpop.f32.mrb[0].mxu0
        %v1434 = vadd.f32 0.0, %v1433
        %v1435 = vpop.f32.mrb[0].mxu0
        %v1436 = vadd.f32 0.0, %v1435
        %1437 = vmatprep.mubr.f32.mxu0 0.0
        %1438 = vmatmul.mubr.f32.gmra.mrb[0].mxu0 %v724
        %v1439 = vpop.f32.mrb[0].mxu0
        %v1440 = vadd.f32 0.0, %v1439
        %v1441 = vpop.f32.mrb[0].mxu0
        %v1442 = vadd.f32 0.0, %v1441
        %1443 = vmatprep.mubr.f32.mxu0 0.0
        %1444 = vmatmul.mubr.f32.gmra.mrb[0].mxu0 %v727
        %v1445 = vpop.f32.mrb[0].mxu0
        %v1446 = vadd.f32 0.0, %v1445
        %v1447 = vpop.f32.mrb[0].mxu0
        %v1448 = vadd.f32 0.0, %v1447
        %1449 = vmatprep.mubr.f32.mxu0 0.0
        %1450 = vmatmul.mubr.f32.gmra.mrb[0].mxu0 %v730
        %v1451 = vpop.f32.mrb[0].mxu0
        %v1452 = vadd.f32 0.0, %v1451
        %v1453 = vpop.f32.mrb[0].mxu0
        %v1454 = vadd.f32 0.0, %v1453
        %1455 = vmatprep.mubr.f32.mxu0 0.0
        %1456 = vmatmul.mubr.f32.gmra.mrb[0].mxu0 %v733
        %v1457 = vpop.f32.mrb[0].mxu0
        %v1458 = vadd.f32 0.0, %v1457
        %v1459 = vpop.f32.mrb[0].mxu0
        %v1460 = vadd.f32 0.0, %v1459
        %1461 = vmatprep.mubr.f32.mxu0 0.0
        %1462 = vmatmul.mubr.f32.gmra.mrb[0].mxu0 %v736
        %v1463 = vpop.f32.mrb[0].mxu0
        %v1464 = vadd.f32 0.0, %v1463
        %v1465 = vpop.f32.mrb[0].mxu0
        %v1466 = vadd.f32 0.0, %v1465
        %1467 = vmatprep.mubr.f32.mxu0 0.0
        %1468 = vmatmul.mubr.f32.gmra.mrb[0].mxu0 %v739
        %v1469 = vpop.f32.mrb[0].mxu0
        %v1470 = vadd.f32 0.0, %v1469
        %v1471 = vpop.f32.mrb[0].mxu0
        %v1472 = vadd.f32 0.0, %v1471
        %1473 = vmatprep.mubr.f32.mxu0 0.0
        %1474 = vmatmul.mubr.f32.gmra.mrb[0].mxu0 %v742
        %v1475 = vpop.f32.mrb[0].mxu0
        %v1476 = vadd.f32 0.0, %v1475
        %v1477 = vpop.f32.mrb[0].mxu0
        %v1478 = vadd.f32 0.0, %v1477
        %1479 = vmatprep.mubr.f32.mxu0 0.0
        %1480 = vmatmul.mubr.f32.gmra.mrb[0].mxu0 %v745
        %v1481 = vpop.f32.mrb[0].mxu0
        %v1482 = vadd.f32 0.0, %v1481
        %v1483 = vpop.f32.mrb[0].mxu0
        %v1484 = vadd.f32 0.0, %v1483
        %1485 = vmatprep.mubr.f32.mxu0 0.0
        %1486 = vmatmul.mubr.f32.gmra.mrb[0].mxu0 %v748
        %v1487 = vpop.f32.mrb[0].mxu0
        %v1488 = vadd.f32 0.0, %v1487
        %v1489 = vpop.f32.mrb[0].mxu0
        %v1490 = vadd.f32 0.0, %v1489
        %1491 = vmatprep.mubr.f32.mxu0 0.0
        %1492 = vmatmul.mubr.f32.gmra.mrb[0].mxu0 %v751
        %v1493 = vpop.f32.mrb[0].mxu0
        %v1494 = vadd.f32 0.0, %v1493
        %v1495 = vpop.f32.mrb[0].mxu0
        %v1496 = vadd.f32 0.0, %v1495
        %1497 = vmatprep.mubr.f32.mxu0 0.0
        %1498 = vmatmul.mubr.f32.gmra.mrb[0].mxu0 %v754
        %v1499 = vpop.f32.mrb[0].mxu0
        %v1500 = vadd.f32 0.0, %v1499
        %v1501 = vpop.f32.mrb[0].mxu0
        %v1502 = vadd.f32 0.0, %v1501
        %1503 = vmatprep.mubr.f32.mxu0 0.0
        %1504 = vmatmul.mubr.f32.gmra.mrb[0].mxu0 %v757
        %v1505 = vpop.f32.mrb[0].mxu0
        %v1506 = vadd.f32 0.0, %v1505
        %v1507 = vpop.f32.mrb[0].mxu0
        %v1508 = vadd.f32 0.0, %v1507
        %1509 = vmatprep.mubr.f32.mxu0 0.0
        %1510 = vmatmul.mubr.f32.gmra.mrb[0].mxu0 %v760
        %v1511 = vpop.f32.mrb[0].mxu0
        %v1512 = vadd.f32 0.0, %v1511
        %v1513 = vpop.f32.mrb[0].mxu0
        %v1514 = vadd.f32 0.0, %v1513
        %1515 = vmatprep.mubr.f32.mxu0 0.0
        %1516 = vmatmul.mubr.f32.gmra.mrb[0].mxu0 %v763
        %v1517 = vpop.f32.mrb[0].mxu0
        %v1518 = vadd.f32 0.0, %v1517
        %v1519 = vpop.f32.mrb[0].mxu0
        %v1520 = vadd.f32 0.0, %v1519
        %1521 = vmatprep.mubr.f32.mxu0 0.0
        %1522 = vmatmul.mubr.f32.gmra.mrb[0].mxu0 %v766
        %v1523 = vpop.f32.mrb[0].mxu0
        %v1524 = vadd.f32 0.0, %v1523
        %v1525 = vpop.f32.mrb[0].mxu0
        %v1526 = vadd.f32 0.0, %v1525
        %1527 = vmatprep.mubr.f32.mxu0 0.0
        %1528 = vmatmul.mubr.f32.gmra.mrb[0].mxu0 %v769
        %v1529 = vpop.f32.mrb[0].mxu0
        %v1530 = vadd.f32 0.0, %v1529
        %v1531 = vpop.f32.mrb[0].mxu0
        %v1532 = vadd.f32 0.0, %v1531
        %1533 = vmatprep.mubr.f32.mxu0 0.0
        %1534 = vmatmul.mubr.f32.gmra.mrb[0].mxu0 %v772
        %v1535 = vpop.f32.mrb[0].mxu0
        %v1536 = vadd.f32 0.0, %v1535
        %v1537 = vpop.f32.mrb[0].mxu0
        %v1538 = vadd.f32 0.0, %v1537
        %1539 = vmatprep.mubr.f32.mxu0 0.0
        %1540 = vmatmul.mubr.f32.gmra.mrb[0].mxu0 %v775
        %v1541 = vpop.f32.mrb[0].mxu0
        %v1542 = vadd.f32 0.0, %v1541
        %v1543 = vpop.f32.mrb[0].mxu0
        %v1544 = vadd.f32 0.0, %v1543
        %1545 = vmatprep.mubr.f32.mxu0 0.0
        %1546 = vmatmul.mubr.f32.gmra.mrb[0].mxu0 %v778
        %v1547 = vpop.f32.mrb[0].mxu0
        %v1548 = vadd.f32 0.0, %v1547
        %v1549 = vpop.f32.mrb[0].mxu0
        %v1550 = vadd.f32 0.0, %v1549
        %1551 = vmatprep.mubr.f32.mxu0 0.0
        %1552 = vmatmul.mubr.f32.gmra.mrb[0].mxu0 %v781
        %v1553 = vpop.f32.mrb[0].mxu0
        %v1554 = vadd.f32 0.0, %v1553
        %v1555 = vpop.f32.mrb[0].mxu0
        %v1556 = vadd.f32 0.0, %v1555
        %1557 = vmatprep.mubr.f32.mxu0 0.0
        %1558 = vmatmul.mubr.f32.gmra.mrb[0].mxu0 %v784
        %v1559 = vpop.f32.mrb[0].mxu0
        %v1560 = vadd.f32 0.0, %v1559
        %v1561 = vpop.f32.mrb[0].mxu0
        %v1562 = vadd.f32 0.0, %v1561
        %1563 = vmatprep.mubr.f32.mxu0 0.0
        %1564 = vmatmul.mubr.f32.gmra.mrb[0].mxu0 %v787
        %v1565 = vpop.f32.mrb[0].mxu0
        %v1566 = vadd.f32 0.0, %v1565
        %v1567 = vpop.f32.mrb[0].mxu0
        %v1568 = vadd.f32 0.0, %v1567
        %1569 = vmatprep.mubr.f32.mxu0 0.0
        %1570 = vmatmul.mubr.f32.gmra.mrb[0].mxu0 %v790
        %v1571 = vpop.f32.mrb[0].mxu0
        %v1572 = vadd.f32 0.0, %v1571
        %v1573 = vpop.f32.mrb[0].mxu0
        %v1574 = vadd.f32 0.0, %v1573
        %1575 = vmatprep.mubr.f32.mxu0 0.0
        %1576 = vmatmul.mubr.f32.gmra.mrb[0].mxu0 %v793
        %v1577 = vpop.f32.mrb[0].mxu0
        %v1578 = vadd.f32 0.0, %v1577
        %v1579 = vpop.f32.mrb[0].mxu0
        %v1580 = vadd.f32 0.0, %v1579
        %1581 = vmatprep.mubr.f32.mxu0 0.0
        %1582 = vmatmul.mubr.f32.gmra.mrb[0].mxu0 %v796
        %v1583 = vpop.f32.mrb[0].mxu0
        %v1584 = vadd.f32 0.0, %v1583
        %v1585 = vpop.f32.mrb[0].mxu0
        %v1586 = vadd.f32 0.0, %v1585
        %1587 = vmatprep.mubr.f32.mxu0 0.0
        %1588 = vmatmul.mubr.f32.gmra.mrb[0].mxu0 %v799
        %v1589 = vpop.f32.mrb[0].mxu0
        %v1590 = vadd.f32 0.0, %v1589
        %v1591 = vpop.f32.mrb[0].mxu0
        %v1592 = vadd.f32 0.0, %v1591
        %1593 = vmatprep.mubr.f32.mxu0 0.0
        %1594 = vmatmul.mubr.f32.gmra.mrb[0].mxu0 %v802
        %v1595 = vpop.f32.mrb[0].mxu0
        %v1596 = vadd.f32 0.0, %v1595
        %v1597 = vpop.f32.mrb[0].mxu0
        %v1598 = vadd.f32 0.0, %v1597
        %1599 = vmatprep.mubr.f32.mxu0 0.0
        %1600 = vmatmul.mubr.f32.gmra.mrb[0].mxu0 %v805
        %v1601 = vpop.f32.mrb[0].mxu0
        %v1602 = vadd.f32 0.0, %v1601
        %v1603 = vpop.f32.mrb[0].mxu0
        %v1604 = vadd.f32 0.0, %v1603
        %1605 = vmatprep.mubr.f32.mxu0 0.0
        %1606 = vmatmul.mubr.f32.gmra.mrb[0].mxu0 %v808
        %v1607 = vpop.f32.mrb[0].mxu0
        %v1608 = vadd.f32 0.0, %v1607
        %v1609 = vpop.f32.mrb[0].mxu0
        %v1610 = vadd.f32 0.0, %v1609
        %1611 = vmatprep.mubr.f32.mxu0 0.0
        %1612 = vmatmul.mubr.f32.gmra.mrb[0].mxu0 %v811
        %v1613 = vpop.f32.mrb[0].mxu0
        %v1614 = vadd.f32 0.0, %v1613
        %v1615 = vpop.f32.mrb[0].mxu0
        %v1616 = vadd.f32 0.0, %v1615
        %1617 = vmatprep.mubr.f32.mxu0 0.0
        %1618 = vmatmul.mubr.f32.gmra.mrb[0].mxu0 %v814
        %v1619 = vpop.f32.mrb[0].mxu0
        %v1620 = vadd.f32 0.0, %v1619
        %v1621 = vpop.f32.mrb[0].mxu0
        %v1622 = vadd.f32 0.0, %v1621
        %1623 = vmatprep.mubr.f32.mxu0 0.0
        %1624 = vmatmul.mubr.f32.gmra.mrb[0].mxu0 %v817
        %v1625 = vpop.f32.mrb[0].mxu0
        %v1626 = vadd.f32 0.0, %v1625
        %v1627 = vpop.f32.mrb[0].mxu0
        %v1628 = vadd.f32 0.0, %v1627
        %1629 = vmatprep.mubr.f32.mxu0 0.0
        %1630 = vmatmul.mubr.f32.gmra.mrb[0].mxu0 %v820
        %v1631 = vpop.f32.mrb[0].mxu0
        %v1632 = vadd.f32 0.0, %v1631
        %v1633 = vpop.f32.mrb[0].mxu0
        %v1634 = vadd.f32 0.0, %v1633
        %1635 = vmatprep.mubr.f32.mxu0 0.0
        %1636 = vmatmul.mubr.f32.gmra.mrb[0].mxu0 %v823
        %v1637 = vpop.f32.mrb[0].mxu0
        %v1638 = vadd.f32 0.0, %v1637
        %v1639 = vpop.f32.mrb[0].mxu0
        %v1640 = vadd.f32 0.0, %v1639
        %1641 = vmatprep.mubr.f32.mxu0 0.0
        %1642 = vmatmul.mubr.f32.gmra.mrb[0].mxu0 %v826
        %v1643 = vpop.f32.mrb[0].mxu0
        %v1644 = vadd.f32 0.0, %v1643
        %v1645 = vpop.f32.mrb[0].mxu0
        %v1646 = vadd.f32 0.0, %v1645
        %1647 = vmatprep.mubr.f32.mxu0 0.0
        %1648 = vmatmul.mubr.f32.gmra.mrb[0].mxu0 %v829
        %v1649 = vpop.f32.mrb[0].mxu0
        %v1650 = vadd.f32 0.0, %v1649
        %v1651 = vpop.f32.mrb[0].mxu0
        %v1652 = vadd.f32 0.0, %v1651
        %1653 = vmatprep.mubr.f32.mxu0 0.0
        %1654 = vmatmul.mubr.f32.gmra.mrb[0].mxu0 %v832
        %v1655 = vpop.f32.mrb[0].mxu0
        %v1656 = vadd.f32 0.0, %v1655
        %v1657 = vpop.f32.mrb[0].mxu0
        %v1658 = vadd.f32 0.0, %v1657
        %1659 = vmatprep.mubr.f32.mxu0 0.0
        %1660 = vmatmul.mubr.f32.gmra.mrb[0].mxu0 %v835
        %v1661 = vpop.f32.mrb[0].mxu0
        %v1662 = vadd.f32 0.0, %v1661
        %v1663 = vpop.f32.mrb[0].mxu0
        %v1664 = vadd.f32 0.0, %v1663
        %1665 = vmatprep.mubr.f32.mxu0 0.0
        %1666 = vmatmul.mubr.f32.gmra.mrb[0].mxu0 %v838
        %v1667 = vpop.f32.mrb[0].mxu0
        %v1668 = vadd.f32 0.0, %v1667
        %v1669 = vpop.f32.mrb[0].mxu0
        %v1670 = vadd.f32 0.0, %v1669
        %1671 = vmatprep.mubr.f32.mxu0 0.0
        %1672 = vmatmul.mubr.f32.gmra.mrb[0].mxu0 %v841
        %v1673 = vpop.f32.mrb[0].mxu0
        %v1674 = vadd.f32 0.0, %v1673
        %v1675 = vpop.f32.mrb[0].mxu0
        %v1676 = vadd.f32 0.0, %v1675
        %1677 = vmatprep.mubr.f32.mxu0 0.0
        %1678 = vmatmul.mubr.f32.gmra.mrb[0].mxu0 %v844
        %v1679 = vpop.f32.mrb[0].mxu0
        %v1680 = vadd.f32 0.0, %v1679
        %v1681 = vpop.f32.mrb[0].mxu0
        %v1682 = vadd.f32 0.0, %v1681
        %1683 = vmatprep.mubr.f32.mxu0 0.0
        %1684 = vmatmul.mubr.f32.gmra.mrb[0].mxu0 %v847
        %v1685 = vpop.f32.mrb[0].mxu0
        %v1686 = vadd.f32 0.0, %v1685
        %v1687 = vpop.f32.mrb[0].mxu0
        %v1688 = vadd.f32 0.0, %v1687
        %1689 = vmatprep.mubr.f32.mxu0 0.0
        %1690 = vmatmul.mubr.f32.gmra.mrb[0].mxu0 %v850
        %v1691 = vpop.f32.mrb[0].mxu0
        %v1692 = vadd.f32 0.0, %v1691
        %v1693 = vpop.f32.mrb[0].mxu0
        %v1694 = vadd.f32 0.0, %v1693
        %1695 = vmatprep.mubr.f32.mxu0 0.0
        %1696 = vmatmul.mubr.f32.gmra.mrb[0].mxu0 %v853
        %v1697 = vpop.f32.mrb[0].mxu0
        %v1698 = vadd.f32 0.0, %v1697
        %v1699 = vpop.f32.mrb[0].mxu0
        %v1700 = vadd.f32 0.0, %v1699
        %1701 = vmatprep.mubr.f32.mxu0 0.0
        %1702 = vmatmul.mubr.f32.gmra.mrb[0].mxu0 %v856
        %v1703 = vpop.f32.mrb[0].mxu0
        %v1704 = vadd.f32 0.0, %v1703
        %v1705 = vpop.f32.mrb[0].mxu0
        %v1706 = vadd.f32 0.0, %v1705
        %1707 = vmatprep.mubr.f32.mxu0 0.0
        %1708 = vmatmul.mubr.f32.gmra.mrb[0].mxu0 %v859
        %v1709 = vpop.f32.mrb[0].mxu0
        %v1710 = vadd.f32 0.0, %v1709
        %v1711 = vpop.f32.mrb[0].mxu0
        %v1712 = vadd.f32 0.0, %v1711
        %1713 = vmatprep.mubr.f32.mxu0 0.0
        %1714 = vmatmul.mubr.f32.gmra.mrb[0].mxu0 %v862
        %v1715 = vpop.f32.mrb[0].mxu0
        %v1716 = vadd.f32 0.0, %v1715
        %v1717 = vpop.f32.mrb[0].mxu0
        %v1718 = vadd.f32 0.0, %v1717
        %1719 = vmatprep.mubr.f32.mxu0 0.0
        %1720 = vmatmul.mubr.f32.gmra.mrb[0].mxu0 %v865
        %v1721 = vpop.f32.mrb[0].mxu0
        %v1722 = vadd.f32 0.0, %v1721
        %v1723 = vpop.f32.mrb[0].mxu0
        %v1724 = vadd.f32 0.0, %v1723
        %1725 = vmatprep.mubr.f32.mxu0 0.0
        %1726 = vmatmul.mubr.f32.gmra.mrb[0].mxu0 %v868
        %v1727 = vpop.f32.mrb[0].mxu0
        %v1728 = vadd.f32 0.0, %v1727
        %v1729 = vpop.f32.mrb[0].mxu0
        %v1730 = vadd.f32 0.0, %v1729
        %1731 = vmatprep.mubr.f32.mxu0 0.0
        %1732 = vmatmul.mubr.f32.gmra.mrb[0].mxu0 %v871
        %v1733 = vpop.f32.mrb[0].mxu0
        %v1734 = vadd.f32 0.0, %v1733
        %v1735 = vpop.f32.mrb[0].mxu0
        %v1736 = vadd.f32 0.0, %v1735
        %1737 = vmatprep.mubr.f32.mxu0 0.0
        %1738 = vmatmul.mubr.f32.gmra.mrb[0].mxu0 %v874
        %v1739 = vpop.f32.mrb[0].mxu0
        %v1740 = vadd.f32 0.0, %v1739
        %v1741 = vpop.f32.mrb[0].mxu0
        %v1742 = vadd.f32 0.0, %v1741
        %1743 = vmatprep.mubr.f32.mxu0 0.0
        %1744 = vmatmul.mubr.f32.gmra.mrb[0].mxu0 %v877
        %v1745 = vpop.f32.mrb[0].mxu0
        %v1746 = vadd.f32 0.0, %v1745
        %v1747 = vpop.f32.mrb[0].mxu0
        %v1748 = vadd.f32 0.0, %v1747
        %1749 = vmatprep.mubr.f32.mxu0 0.0
        %1750 = vmatmul.mubr.f32.gmra.mrb[0].mxu0 %v880
        %v1751 = vpop.f32.mrb[0].mxu0
        %v1752 = vadd.f32 0.0, %v1751
        %v1753 = vpop.f32.mrb[0].mxu0
        %v1754 = vadd.f32 0.0, %v1753
        %1755 = vmatprep.mubr.f32.mxu0 0.0
        %1756 = vmatmul.mubr.f32.gmra.mrb[0].mxu0 %v883
        %v1757 = vpop.f32.mrb[0].mxu0
        %v1758 = vadd.f32 0.0, %v1757
        %v1759 = vpop.f32.mrb[0].mxu0
        %v1760 = vadd.f32 0.0, %v1759
        %1761 = vmatprep.mubr.f32.mxu0 0.0
        %1762 = vmatmul.mubr.f32.gmra.mrb[0].mxu0 %v886
        %v1763 = vpop.f32.mrb[0].mxu0
        %v1764 = vadd.f32 0.0, %v1763
        %v1765 = vpop.f32.mrb[0].mxu0
        %v1766 = vadd.f32 0.0, %v1765
        %1767 = vmatprep.mubr.f32.mxu0 0.0
        %1768 = vmatmul.mubr.f32.gmra.mrb[0].mxu0 %v889
        %v1769 = vpop.f32.mrb[0].mxu0
        %v1770 = vadd.f32 0.0, %v1769
        %v1771 = vpop.f32.mrb[0].mxu0
        %v1772 = vadd.f32 0.0, %v1771
        %1773 = vmatprep.mubr.f32.mxu0 0.0
        %1774 = vmatmul.mubr.f32.gmra.mrb[0].mxu0 %v892
        %v1775 = vpop.f32.mrb[0].mxu0
        %v1776 = vadd.f32 0.0, %v1775
        %v1777 = vpop.f32.mrb[0].mxu0
        %v1778 = vadd.f32 0.0, %v1777
        %1779 = vmatprep.mubr.f32.mxu0 0.0
        %1780 = vmatmul.mubr.f32.gmra.mrb[0].mxu0 %v895
        %v1781 = vpop.f32.mrb[0].mxu0
        %v1782 = vadd.f32 0.0, %v1781
        %v1783 = vpop.f32.mrb[0].mxu0
        %v1784 = vadd.f32 0.0, %v1783
        %1785 = vmatprep.mubr.f32.mxu0 0.0
        %1786 = vmatmul.mubr.f32.gmra.mrb[0].mxu0 %v898
        %v1787 = vpop.f32.mrb[0].mxu0
        %v1788 = vadd.f32 0.0, %v1787
        %v1789 = vpop.f32.mrb[0].mxu0
        %v1790 = vadd.f32 0.0, %v1789
        %1791 = vmatprep.mubr.f32.mxu0 0.0
        %1792 = vmatmul.mubr.f32.gmra.mrb[0].mxu0 %v901
        %v1793 = vpop.f32.mrb[0].mxu0
        %v1794 = vadd.f32 0.0, %v1793
        %v1795 = vpop.f32.mrb[0].mxu0
        %v1796 = vadd.f32 0.0, %v1795
        %1797 = vmatprep.mubr.f32.mxu0 0.0
        %1798 = vmatmul.mubr.f32.gmra.mrb[0].mxu0 %v904
        %v1799 = vpop.f32.mrb[0].mxu0
        %v1800 = vadd.f32 0.0, %v1799
        %v1801 = vpop.f32.mrb[0].mxu0
        %v1802 = vadd.f32 0.0, %v1801
        %1803 = vdwg.mxu0
        %1804 = vst [vmem:[%s261] sm:$0xff] %v973
        %1805 = vst [vmem:[%s261 + $0x8] sm:$0xff] %v975
        %1806 = vst [vmem:[%s261 + $0x10] sm:$0xff] %v1422
        %1807 = vst [vmem:[%s261 + $0x18] sm:$0xff] %v1424
        %1808 = vst [vmem:[%s261 + $0x20] sm:$0xff] %v979
        %1809 = vst [vmem:[%s261 + $0x28] sm:$0xff] %v981
        %1810 = vst [vmem:[%s261 + $0x30] sm:$0xff] %v1428
        %1811 = vst [vmem:[%s261 + $0x38] sm:$0xff] %v1430
        %1812 = vst [vmem:[%s261 + $0x40] sm:$0xff] %v985
        %1813 = vst [vmem:[%s261 + $0x48] sm:$0xff] %v987
        %1814 = vst [vmem:[%s261 + $0x50] sm:$0xff] %v1434
        %1815 = vst [vmem:[%s261 + $0x58] sm:$0xff] %v1436
        %1816 = vst [vmem:[%s261 + $0x60] sm:$0xff] %v991
        %1817 = vst [vmem:[%s261 + $0x68] sm:$0xff] %v993
        %1818 = vst [vmem:[%s261 + $0x70] sm:$0xff] %v1440
        %1819 = vst [vmem:[%s261 + $0x78] sm:$0xff] %v1442
        %1820 = vst [vmem:[%s261 + $0x80] sm:$0xff] %v997
        %1821 = vst [vmem:[%s261 + $0x88] sm:$0xff] %v999
        %1822 = vst [vmem:[%s261 + $0x90] sm:$0xff] %v1446
        %1823 = vst [vmem:[%s261 + $0x98] sm:$0xff] %v1448
        %1824 = vst [vmem:[%s261 + $0xa0] sm:$0xff] %v1003
        %1825 = vst [vmem:[%s261 + $0xa8] sm:$0xff] %v1005
        %1826 = vst [vmem:[%s261 + $0xb0] sm:$0xff] %v1452
        %1827 = vst [vmem:[%s261 + $0xb8] sm:$0xff] %v1454
        %1828 = vst [vmem:[%s261 + $0xc0] sm:$0xff] %v1009
        %1829 = vst [vmem:[%s261 + $0xc8] sm:$0xff] %v1011
        %1830 = vst [vmem:[%s261 + $0xd0] sm:$0xff] %v1458
        %1831 = vst [vmem:[%s261 + $0xd8] sm:$0xff] %v1460
        %1832 = vst [vmem:[%s261 + $0xe0] sm:$0xff] %v1015
        %1833 = vst [vmem:[%s261 + $0xe8] sm:$0xff] %v1017
        %1834 = vst [vmem:[%s261 + $0xf0] sm:$0xff] %v1464
        %1835 = vst [vmem:[%s261 + $0xf8] sm:$0xff] %v1466
        %1836 = vst [vmem:[%s261 + $0x100] sm:$0xff] %v1021
        %1837 = vst [vmem:[%s261 + $0x108] sm:$0xff] %v1023
        %1838 = vst [vmem:[%s261 + $0x110] sm:$0xff] %v1470
        %1839 = vst [vmem:[%s261 + $0x118] sm:$0xff] %v1472
        %1840 = vst [vmem:[%s261 + $0x120] sm:$0xff] %v1027
        %1841 = vst [vmem:[%s261 + $0x128] sm:$0xff] %v1029
        %1842 = vst [vmem:[%s261 + $0x130] sm:$0xff] %v1476
        %1843 = vst [vmem:[%s261 + $0x138] sm:$0xff] %v1478
        %1844 = vst [vmem:[%s261 + $0x140] sm:$0xff] %v1033
        %1845 = vst [vmem:[%s261 + $0x148] sm:$0xff] %v1035
        %1846 = vst [vmem:[%s261 + $0x150] sm:$0xff] %v1482
        %1847 = vst [vmem:[%s261 + $0x158] sm:$0xff] %v1484
        %1848 = vst [vmem:[%s261 + $0x160] sm:$0xff] %v1039
        %1849 = vst [vmem:[%s261 + $0x168] sm:$0xff] %v1041
        %1850 = vst [vmem:[%s261 + $0x170] sm:$0xff] %v1488
        %1851 = vst [vmem:[%s261 + $0x178] sm:$0xff] %v1490
        %1852 = vst [vmem:[%s261 + $0x180] sm:$0xff] %v1045
        %1853 = vst [vmem:[%s261 + $0x188] sm:$0xff] %v1047
        %1854 = vst [vmem:[%s261 + $0x190] sm:$0xff] %v1494
        %1855 = vst [vmem:[%s261 + $0x198] sm:$0xff] %v1496
        %1856 = vst [vmem:[%s261 + $0x1a0] sm:$0xff] %v1051
        %1857 = vst [vmem:[%s261 + $0x1a8] sm:$0xff] %v1053
        %1858 = vst [vmem:[%s261 + $0x1b0] sm:$0xff] %v1500
        %1859 = vst [vmem:[%s261 + $0x1b8] sm:$0xff] %v1502
        %1860 = vst [vmem:[%s261 + $0x1c0] sm:$0xff] %v1057
        %1861 = vst [vmem:[%s261 + $0x1c8] sm:$0xff] %v1059
        %1862 = vst [vmem:[%s261 + $0x1d0] sm:$0xff] %v1506
        %1863 = vst [vmem:[%s261 + $0x1d8] sm:$0xff] %v1508
        %1864 = vst [vmem:[%s261 + $0x1e0] sm:$0xff] %v1063
        %1865 = vst [vmem:[%s261 + $0x1e8] sm:$0xff] %v1065
        %1866 = vst [vmem:[%s261 + $0x1f0] sm:$0xff] %v1512
        %1867 = vst [vmem:[%s261 + $0x1f8] sm:$0xff] %v1514
        %1868 = vst [vmem:[%s261 + $0x200] sm:$0xff] %v1069
        %1869 = vst [vmem:[%s261 + $0x208] sm:$0xff] %v1071
        %1870 = vst [vmem:[%s261 + $0x210] sm:$0xff] %v1518
        %1871 = vst [vmem:[%s261 + $0x218] sm:$0xff] %v1520
        %1872 = vst [vmem:[%s261 + $0x220] sm:$0xff] %v1075
        %1873 = vst [vmem:[%s261 + $0x228] sm:$0xff] %v1077
        %1874 = vst [vmem:[%s261 + $0x230] sm:$0xff] %v1524
        %1875 = vst [vmem:[%s261 + $0x238] sm:$0xff] %v1526
        %1876 = vst [vmem:[%s261 + $0x240] sm:$0xff] %v1081
        %1877 = vst [vmem:[%s261 + $0x248] sm:$0xff] %v1083
        %1878 = vst [vmem:[%s261 + $0x250] sm:$0xff] %v1530
        %1879 = vst [vmem:[%s261 + $0x258] sm:$0xff] %v1532
        %1880 = vst [vmem:[%s261 + $0x260] sm:$0xff] %v1087
        %1881 = vst [vmem:[%s261 + $0x268] sm:$0xff] %v1089
        %1882 = vst [vmem:[%s261 + $0x270] sm:$0xff] %v1536
        %1883 = vst [vmem:[%s261 + $0x278] sm:$0xff] %v1538
        %1884 = vst [vmem:[%s261 + $0x280] sm:$0xff] %v1093
        %1885 = vst [vmem:[%s261 + $0x288] sm:$0xff] %v1095
        %1886 = vst [vmem:[%s261 + $0x290] sm:$0xff] %v1542
        %1887 = vst [vmem:[%s261 + $0x298] sm:$0xff] %v1544
        %1888 = vst [vmem:[%s261 + $0x2a0] sm:$0xff] %v1099
        %1889 = vst [vmem:[%s261 + $0x2a8] sm:$0xff] %v1101
        %1890 = vst [vmem:[%s261 + $0x2b0] sm:$0xff] %v1548
        %1891 = vst [vmem:[%s261 + $0x2b8] sm:$0xff] %v1550
        %1892 = vst [vmem:[%s261 + $0x2c0] sm:$0xff] %v1105
        %1893 = vst [vmem:[%s261 + $0x2c8] sm:$0xff] %v1107
        %1894 = vst [vmem:[%s261 + $0x2d0] sm:$0xff] %v1554
        %1895 = vst [vmem:[%s261 + $0x2d8] sm:$0xff] %v1556
        %1896 = vst [vmem:[%s261 + $0x2e0] sm:$0xff] %v1111
        %1897 = vst [vmem:[%s261 + $0x2e8] sm:$0xff] %v1113
        %1898 = vst [vmem:[%s261 + $0x2f0] sm:$0xff] %v1560
        %1899 = vst [vmem:[%s261 + $0x2f8] sm:$0xff] %v1562
        %1900 = vst [vmem:[%s261 + $0x300] sm:$0xff] %v1117
        %1901 = vst [vmem:[%s261 + $0x308] sm:$0xff] %v1119
        %1902 = vst [vmem:[%s261 + $0x310] sm:$0xff] %v1566
        %1903 = vst [vmem:[%s261 + $0x318] sm:$0xff] %v1568
        %1904 = vst [vmem:[%s261 + $0x320] sm:$0xff] %v1123
        %1905 = vst [vmem:[%s261 + $0x328] sm:$0xff] %v1125
        %1906 = vst [vmem:[%s261 + $0x330] sm:$0xff] %v1572
        %1907 = vst [vmem:[%s261 + $0x338] sm:$0xff] %v1574
        %1908 = vst [vmem:[%s261 + $0x340] sm:$0xff] %v1129
        %1909 = vst [vmem:[%s261 + $0x348] sm:$0xff] %v1131
        %1910 = vst [vmem:[%s261 + $0x350] sm:$0xff] %v1578
        %1911 = vst [vmem:[%s261 + $0x358] sm:$0xff] %v1580
        %1912 = vst [vmem:[%s261 + $0x360] sm:$0xff] %v1135
        %1913 = vst [vmem:[%s261 + $0x368] sm:$0xff] %v1137
        %1914 = vst [vmem:[%s261 + $0x370] sm:$0xff] %v1584
        %1915 = vst [vmem:[%s261 + $0x378] sm:$0xff] %v1586
        %1916 = vst [vmem:[%s261 + $0x380] sm:$0xff] %v1141
        %1917 = vst [vmem:[%s261 + $0x388] sm:$0xff] %v1143
        %1918 = vst [vmem:[%s261 + $0x390] sm:$0xff] %v1590
        %1919 = vst [vmem:[%s261 + $0x398] sm:$0xff] %v1592
        %1920 = vst [vmem:[%s261 + $0x3a0] sm:$0xff] %v1147
        %1921 = vst [vmem:[%s261 + $0x3a8] sm:$0xff] %v1149
        %1922 = vst [vmem:[%s261 + $0x3b0] sm:$0xff] %v1596
        %1923 = vst [vmem:[%s261 + $0x3b8] sm:$0xff] %v1598
        %1924 = vst [vmem:[%s261 + $0x3c0] sm:$0xff] %v1153
        %1925 = vst [vmem:[%s261 + $0x3c8] sm:$0xff] %v1155
        %1926 = vst [vmem:[%s261 + $0x3d0] sm:$0xff] %v1602
        %1927 = vst [vmem:[%s261 + $0x3d8] sm:$0xff] %v1604
        %1928 = vst [vmem:[%s261 + $0x3e0] sm:$0xff] %v1159
        %1929 = vst [vmem:[%s261 + $0x3e8] sm:$0xff] %v1161
        %1930 = vst [vmem:[%s261 + $0x3f0] sm:$0xff] %v1608
        %1931 = vst [vmem:[%s261 + $0x3f8] sm:$0xff] %v1610
        %1932 = vst [vmem:[%s261 + $0x400] sm:$0xff] %v1165
        %1933 = vst [vmem:[%s261 + $0x408] sm:$0xff] %v1167
        %1934 = vst [vmem:[%s261 + $0x410] sm:$0xff] %v1614
        %1935 = vst [vmem:[%s261 + $0x418] sm:$0xff] %v1616
        %1936 = vst [vmem:[%s261 + $0x420] sm:$0xff] %v1171
        %1937 = vst [vmem:[%s261 + $0x428] sm:$0xff] %v1173
        %1938 = vst [vmem:[%s261 + $0x430] sm:$0xff] %v1620
        %1939 = vst [vmem:[%s261 + $0x438] sm:$0xff] %v1622
        %1940 = vst [vmem:[%s261 + $0x440] sm:$0xff] %v1177
        %1941 = vst [vmem:[%s261 + $0x448] sm:$0xff] %v1179
        %1942 = vst [vmem:[%s261 + $0x450] sm:$0xff] %v1626
        %1943 = vst [vmem:[%s261 + $0x458] sm:$0xff] %v1628
        %1944 = vst [vmem:[%s261 + $0x460] sm:$0xff] %v1183
        %1945 = vst [vmem:[%s261 + $0x468] sm:$0xff] %v1185
        %1946 = vst [vmem:[%s261 + $0x470] sm:$0xff] %v1632
        %1947 = vst [vmem:[%s261 + $0x478] sm:$0xff] %v1634
        %1948 = vst [vmem:[%s261 + $0x480] sm:$0xff] %v1189
        %1949 = vst [vmem:[%s261 + $0x488] sm:$0xff] %v1191
        %1950 = vst [vmem:[%s261 + $0x490] sm:$0xff] %v1638
        %1951 = vst [vmem:[%s261 + $0x498] sm:$0xff] %v1640
        %1952 = vst [vmem:[%s261 + $0x4a0] sm:$0xff] %v1195
        %1953 = vst [vmem:[%s261 + $0x4a8] sm:$0xff] %v1197
        %1954 = vst [vmem:[%s261 + $0x4b0] sm:$0xff] %v1644
        %1955 = vst [vmem:[%s261 + $0x4b8] sm:$0xff] %v1646
        %1956 = vst [vmem:[%s261 + $0x4c0] sm:$0xff] %v1201
        %1957 = vst [vmem:[%s261 + $0x4c8] sm:$0xff] %v1203
        %1958 = vst [vmem:[%s261 + $0x4d0] sm:$0xff] %v1650
        %1959 = vst [vmem:[%s261 + $0x4d8] sm:$0xff] %v1652
        %1960 = vst [vmem:[%s261 + $0x4e0] sm:$0xff] %v1207
        %1961 = vst [vmem:[%s261 + $0x4e8] sm:$0xff] %v1209
        %1962 = vst [vmem:[%s261 + $0x4f0] sm:$0xff] %v1656
        %1963 = vst [vmem:[%s261 + $0x4f8] sm:$0xff] %v1658
        %1964 = vst [vmem:[%s261 + $0x500] sm:$0xff] %v1213
        %1965 = vst [vmem:[%s261 + $0x508] sm:$0xff] %v1215
        %1966 = vst [vmem:[%s261 + $0x510] sm:$0xff] %v1662
        %1967 = vst [vmem:[%s261 + $0x518] sm:$0xff] %v1664
        %1968 = vst [vmem:[%s261 + $0x520] sm:$0xff] %v1219
        %1969 = vst [vmem:[%s261 + $0x528] sm:$0xff] %v1221
        %1970 = vst [vmem:[%s261 + $0x530] sm:$0xff] %v1668
        %1971 = vst [vmem:[%s261 + $0x538] sm:$0xff] %v1670
        %1972 = vst [vmem:[%s261 + $0x540] sm:$0xff] %v1225
        %1973 = vst [vmem:[%s261 + $0x548] sm:$0xff] %v1227
        %1974 = vst [vmem:[%s261 + $0x550] sm:$0xff] %v1674
        %1975 = vst [vmem:[%s261 + $0x558] sm:$0xff] %v1676
        %1976 = vst [vmem:[%s261 + $0x560] sm:$0xff] %v1231
        %1977 = vst [vmem:[%s261 + $0x568] sm:$0xff] %v1233
        %1978 = vst [vmem:[%s261 + $0x570] sm:$0xff] %v1680
        %1979 = vst [vmem:[%s261 + $0x578] sm:$0xff] %v1682
        %1980 = vst [vmem:[%s261 + $0x580] sm:$0xff] %v1237
        %1981 = vst [vmem:[%s261 + $0x588] sm:$0xff] %v1239
        %1982 = vst [vmem:[%s261 + $0x590] sm:$0xff] %v1686
        %1983 = vst [vmem:[%s261 + $0x598] sm:$0xff] %v1688
        %1984 = vst [vmem:[%s261 + $0x5a0] sm:$0xff] %v1243
        %1985 = vst [vmem:[%s261 + $0x5a8] sm:$0xff] %v1245
        %1986 = vst [vmem:[%s261 + $0x5b0] sm:$0xff] %v1692
        %1987 = vst [vmem:[%s261 + $0x5b8] sm:$0xff] %v1694
        %1988 = vst [vmem:[%s261 + $0x5c0] sm:$0xff] %v1249
        %1989 = vst [vmem:[%s261 + $0x5c8] sm:$0xff] %v1251
        %1990 = vst [vmem:[%s261 + $0x5d0] sm:$0xff] %v1698
        %1991 = vst [vmem:[%s261 + $0x5d8] sm:$0xff] %v1700
        %1992 = vst [vmem:[%s261 + $0x5e0] sm:$0xff] %v1255
        %1993 = vst [vmem:[%s261 + $0x5e8] sm:$0xff] %v1257
        %1994 = vst [vmem:[%s261 + $0x5f0] sm:$0xff] %v1704
        %1995 = vst [vmem:[%s261 + $0x5f8] sm:$0xff] %v1706
        %1996 = vst [vmem:[%s261 + $0x600] sm:$0xff] %v1261
        %1997 = vst [vmem:[%s261 + $0x608] sm:$0xff] %v1263
        %1998 = vst [vmem:[%s261 + $0x610] sm:$0xff] %v1710
        %1999 = vst [vmem:[%s261 + $0x618] sm:$0xff] %v1712
        %2000 = vst [vmem:[%s261 + $0x620] sm:$0xff] %v1267
        %2001 = vst [vmem:[%s261 + $0x628] sm:$0xff] %v1269
        %2002 = vst [vmem:[%s261 + $0x630] sm:$0xff] %v1716
        %2003 = vst [vmem:[%s261 + $0x638] sm:$0xff] %v1718
        %2004 = vst [vmem:[%s261 + $0x640] sm:$0xff] %v1273
        %2005 = vst [vmem:[%s261 + $0x648] sm:$0xff] %v1275
        %2006 = vst [vmem:[%s261 + $0x650] sm:$0xff] %v1722
        %2007 = vst [vmem:[%s261 + $0x658] sm:$0xff] %v1724
        %2008 = vst [vmem:[%s261 + $0x660] sm:$0xff] %v1279
        %2009 = vst [vmem:[%s261 + $0x668] sm:$0xff] %v1281
        %2010 = vst [vmem:[%s261 + $0x670] sm:$0xff] %v1728
        %2011 = vst [vmem:[%s261 + $0x678] sm:$0xff] %v1730
        %2012 = vst [vmem:[%s261 + $0x680] sm:$0xff] %v1285
        %2013 = vst [vmem:[%s261 + $0x688] sm:$0xff] %v1287
        %2014 = vst [vmem:[%s261 + $0x690] sm:$0xff] %v1734
        %2015 = vst [vmem:[%s261 + $0x698] sm:$0xff] %v1736
        %2016 = vst [vmem:[%s261 + $0x6a0] sm:$0xff] %v1291
        %2017 = vst [vmem:[%s261 + $0x6a8] sm:$0xff] %v1293
        %2018 = vst [vmem:[%s261 + $0x6b0] sm:$0xff] %v1740
        %2019 = vst [vmem:[%s261 + $0x6b8] sm:$0xff] %v1742
        %2020 = vst [vmem:[%s261 + $0x6c0] sm:$0xff] %v1297
        %2021 = vst [vmem:[%s261 + $0x6c8] sm:$0xff] %v1299
        %2022 = vst [vmem:[%s261 + $0x6d0] sm:$0xff] %v1746
        %2023 = vst [vmem:[%s261 + $0x6d8] sm:$0xff] %v1748
        %2024 = vst [vmem:[%s261 + $0x6e0] sm:$0xff] %v1303
        %2025 = vst [vmem:[%s261 + $0x6e8] sm:$0xff] %v1305
        %2026 = vst [vmem:[%s261 + $0x6f0] sm:$0xff] %v1752
        %2027 = vst [vmem:[%s261 + $0x6f8] sm:$0xff] %v1754
        %2028 = vst [vmem:[%s261 + $0x700] sm:$0xff] %v1309
        %2029 = vst [vmem:[%s261 + $0x708] sm:$0xff] %v1311
        %2030 = vst [vmem:[%s261 + $0x710] sm:$0xff] %v1758
        %2031 = vst [vmem:[%s261 + $0x718] sm:$0xff] %v1760
        %2032 = vst [vmem:[%s261 + $0x720] sm:$0xff] %v1315
        %2033 = vst [vmem:[%s261 + $0x728] sm:$0xff] %v1317
        %2034 = vst [vmem:[%s261 + $0x730] sm:$0xff] %v1764
        %2035 = vst [vmem:[%s261 + $0x738] sm:$0xff] %v1766
        %2036 = vst [vmem:[%s261 + $0x740] sm:$0xff] %v1321
        %2037 = vst [vmem:[%s261 + $0x748] sm:$0xff] %v1323
        %2038 = vst [vmem:[%s261 + $0x750] sm:$0xff] %v1770
        %2039 = vst [vmem:[%s261 + $0x758] sm:$0xff] %v1772
        %2040 = vst [vmem:[%s261 + $0x760] sm:$0xff] %v1327
        %2041 = vst [vmem:[%s261 + $0x768] sm:$0xff] %v1329
        %2042 = vst [vmem:[%s261 + $0x770] sm:$0xff] %v1776
        %2043 = vst [vmem:[%s261 + $0x778] sm:$0xff] %v1778
        %2044 = vst [vmem:[%s261 + $0x780] sm:$0xff] %v1333
        %2045 = vst [vmem:[%s261 + $0x788] sm:$0xff] %v1335
        %2046 = vst [vmem:[%s261 + $0x790] sm:$0xff] %v1782
        %2047 = vst [vmem:[%s261 + $0x798] sm:$0xff] %v1784
        %2048 = vst [vmem:[%s261 + $0x7a0] sm:$0xff] %v1339
        %2049 = vst [vmem:[%s261 + $0x7a8] sm:$0xff] %v1341
        %2050 = vst [vmem:[%s261 + $0x7b0] sm:$0xff] %v1788
        %2051 = vst [vmem:[%s261 + $0x7b8] sm:$0xff] %v1790
        %2052 = vst [vmem:[%s261 + $0x7c0] sm:$0xff] %v1345
        %2053 = vst [vmem:[%s261 + $0x7c8] sm:$0xff] %v1347
        %2054 = vst [vmem:[%s261 + $0x7d0] sm:$0xff] %v1794
        %2055 = vst [vmem:[%s261 + $0x7d8] sm:$0xff] %v1796
        %2056 = vst [vmem:[%s261 + $0x7e0] sm:$0xff] %v1351
        %2057 = vst [vmem:[%s261 + $0x7e8] sm:$0xff] %v1353
        %2058 = vst [vmem:[%s261 + $0x7f0] sm:$0xff] %v1800
        %2059 = vst [vmem:[%s261 + $0x7f8] sm:$0xff] %v1802
        %v2060 = vld [vmem:[%s3] sm:$0xff]
        %v2061 = vld [vmem:[%s3 + $0x8] sm:$0xff]
        %v2062 = vld [vmem:[%s3 + $0x10] sm:$0xff]
        %v2063 = vld [vmem:[%s3 + $0x18] sm:$0xff]
        %v2064 = vld [vmem:[%s3 + $0x20] sm:$0xff]
        %v2065 = vld [vmem:[%s3 + $0x28] sm:$0xff]
        %v2066 = vld [vmem:[%s3 + $0x30] sm:$0xff]
        %v2067 = vld [vmem:[%s3 + $0x38] sm:$0xff]
        %v2068 = vld [vmem:[%s3 + $0x40] sm:$0xff]
        %v2069 = vld [vmem:[%s3 + $0x48] sm:$0xff]
        %v2070 = vld [vmem:[%s3 + $0x50] sm:$0xff]
        %v2071 = vld [vmem:[%s3 + $0x58] sm:$0xff]
        %v2072 = vld [vmem:[%s3 + $0x60] sm:$0xff]
        %v2073 = vld [vmem:[%s3 + $0x68] sm:$0xff]
        %v2074 = vld [vmem:[%s3 + $0x70] sm:$0xff]
        %v2075 = vld [vmem:[%s3 + $0x78] sm:$0xff]
        %v2076 = vld [vmem:[%s3 + $0x80] sm:$0xff]
        %v2077 = vld [vmem:[%s3 + $0x88] sm:$0xff]
        %v2078 = vld [vmem:[%s3 + $0x90] sm:$0xff]
        %v2079 = vld [vmem:[%s3 + $0x98] sm:$0xff]
        %v2080 = vld [vmem:[%s3 + $0xa0] sm:$0xff]
        %v2081 = vld [vmem:[%s3 + $0xa8] sm:$0xff]
        %v2082 = vld [vmem:[%s3 + $0xb0] sm:$0xff]
        %v2083 = vld [vmem:[%s3 + $0xb8] sm:$0xff]
        %v2084 = vld [vmem:[%s3 + $0xc0] sm:$0xff]
        %v2085 = vld [vmem:[%s3 + $0xc8] sm:$0xff]
        %v2086 = vld [vmem:[%s3 + $0xd0] sm:$0xff]
        %v2087 = vld [vmem:[%s3 + $0xd8] sm:$0xff]
        %v2088 = vld [vmem:[%s3 + $0xe0] sm:$0xff]
        %v2089 = vld [vmem:[%s3 + $0xe8] sm:$0xff]
        %v2090 = vld [vmem:[%s3 + $0xf0] sm:$0xff]
        %v2091 = vld [vmem:[%s3 + $0xf8] sm:$0xff]
        %v2092 = vld [vmem:[%s3 + $0x100] sm:$0xff]
        %v2093 = vld [vmem:[%s3 + $0x108] sm:$0xff]
        %v2094 = vld [vmem:[%s3 + $0x110] sm:$0xff]
        %v2095 = vld [vmem:[%s3 + $0x118] sm:$0xff]
        %v2096 = vld [vmem:[%s3 + $0x120] sm:$0xff]
        %v2097 = vld [vmem:[%s3 + $0x128] sm:$0xff]
        %v2098 = vld [vmem:[%s3 + $0x130] sm:$0xff]
        %v2099 = vld [vmem:[%s3 + $0x138] sm:$0xff]
        %v2100 = vld [vmem:[%s3 + $0x140] sm:$0xff]
        %v2101 = vld [vmem:[%s3 + $0x148] sm:$0xff]
        %v2102 = vld [vmem:[%s3 + $0x150] sm:$0xff]
        %v2103 = vld [vmem:[%s3 + $0x158] sm:$0xff]
        %v2104 = vld [vmem:[%s3 + $0x160] sm:$0xff]
        %v2105 = vld [vmem:[%s3 + $0x168] sm:$0xff]
        %v2106 = vld [vmem:[%s3 + $0x170] sm:$0xff]
        %v2107 = vld [vmem:[%s3 + $0x178] sm:$0xff]
        %v2108 = vld [vmem:[%s3 + $0x180] sm:$0xff]
        %v2109 = vld [vmem:[%s3 + $0x188] sm:$0xff]
        %v2110 = vld [vmem:[%s3 + $0x190] sm:$0xff]
        %v2111 = vld [vmem:[%s3 + $0x198] sm:$0xff]
        %v2112 = vld [vmem:[%s3 + $0x1a0] sm:$0xff]
        %v2113 = vld [vmem:[%s3 + $0x1a8] sm:$0xff]
        %v2114 = vld [vmem:[%s3 + $0x1b0] sm:$0xff]
        %v2115 = vld [vmem:[%s3 + $0x1b8] sm:$0xff]
        %v2116 = vld [vmem:[%s3 + $0x1c0] sm:$0xff]
        %v2117 = vld [vmem:[%s3 + $0x1c8] sm:$0xff]
        %v2118 = vld [vmem:[%s3 + $0x1d0] sm:$0xff]
        %v2119 = vld [vmem:[%s3 + $0x1d8] sm:$0xff]
        %v2120 = vld [vmem:[%s3 + $0x1e0] sm:$0xff]
        %v2121 = vld [vmem:[%s3 + $0x1e8] sm:$0xff]
        %v2122 = vld [vmem:[%s3 + $0x1f0] sm:$0xff]
        %v2123 = vld [vmem:[%s3 + $0x1f8] sm:$0xff]
        %v2125 = vsel %vm444, %v2060, 0
        %v2128 = vsel %vm444, %v2061, 0
        %v2131 = vsel %vm444, %v2062, 0
        %v2134 = vsel %vm444, %v2063, 0
        %v2137 = vsel %vm444, %v2064, 0
        %v2140 = vsel %vm444, %v2065, 0
        %v2143 = vsel %vm444, %v2066, 0
        %v2146 = vsel %vm444, %v2067, 0
        %v2149 = vsel %vm444, %v2068, 0
        %v2152 = vsel %vm444, %v2069, 0
        %v2155 = vsel %vm444, %v2070, 0
        %v2158 = vsel %vm444, %v2071, 0
        %v2161 = vsel %vm444, %v2072, 0
        %v2164 = vsel %vm444, %v2073, 0
        %v2167 = vsel %vm444, %v2074, 0
        %v2170 = vsel %vm444, %v2075, 0
        %v2173 = vsel %vm444, %v2076, 0
        %v2176 = vsel %vm444, %v2077, 0
        %v2179 = vsel %vm444, %v2078, 0
        %v2182 = vsel %vm444, %v2079, 0
        %v2185 = vsel %vm444, %v2080, 0
        %v2188 = vsel %vm444, %v2081, 0
        %v2191 = vsel %vm444, %v2082, 0
        %v2194 = vsel %vm444, %v2083, 0
        %v2197 = vsel %vm444, %v2084, 0
        %v2200 = vsel %vm444, %v2085, 0
        %v2203 = vsel %vm444, %v2086, 0
        %v2206 = vsel %vm444, %v2087, 0
        %v2209 = vsel %vm444, %v2088, 0
        %v2212 = vsel %vm444, %v2089, 0
        %v2215 = vsel %vm444, %v2090, 0
        %v2218 = vsel %vm444, %v2091, 0
        %v2221 = vsel %vm444, %v2092, 0
        %v2224 = vsel %vm444, %v2093, 0
        %v2227 = vsel %vm444, %v2094, 0
        %v2230 = vsel %vm444, %v2095, 0
        %v2233 = vsel %vm444, %v2096, 0
        %v2236 = vsel %vm444, %v2097, 0
        %v2239 = vsel %vm444, %v2098, 0
        %v2242 = vsel %vm444, %v2099, 0
        %v2245 = vsel %vm444, %v2100, 0
        %v2248 = vsel %vm444, %v2101, 0
        %v2251 = vsel %vm444, %v2102, 0
        %v2254 = vsel %vm444, %v2103, 0
        %v2257 = vsel %vm444, %v2104, 0
        %v2260 = vsel %vm444, %v2105, 0
        %v2263 = vsel %vm444, %v2106, 0
        %v2266 = vsel %vm444, %v2107, 0
        %v2269 = vsel %vm444, %v2108, 0
        %v2272 = vsel %vm444, %v2109, 0
        %v2275 = vsel %vm444, %v2110, 0
        %v2278 = vsel %vm444, %v2111, 0
        %v2281 = vsel %vm444, %v2112, 0
        %v2284 = vsel %vm444, %v2113, 0
        %v2287 = vsel %vm444, %v2114, 0
        %v2290 = vsel %vm444, %v2115, 0
        %v2293 = vsel %vm444, %v2116, 0
        %v2296 = vsel %vm444, %v2117, 0
        %v2299 = vsel %vm444, %v2118, 0
        %v2302 = vsel %vm444, %v2119, 0
        %v2305 = vsel %vm444, %v2120, 0
        %v2308 = vsel %vm444, %v2121, 0
        %v2311 = vsel %vm444, %v2122, 0
        %v2314 = vsel %vm444, %v2123, 0
        %2316 = vmatprep.subr.mxu0 %v535
        %2317 = vmatpush1.msra.mxu0 %v533
        %2318 = vmatprep.subr.mxu0 0.0
        %2319 = vmatpush1.msra.mxu0 0.0
        %2320 = vmatprep.subr.mxu0 0.0
        %2321 = vmatpush1.msra.mxu0 0.0
        %2322 = vmatprep.subr.mxu0 0.0
        %2323 = vmatpush1.msra.mxu0 0.0
        %2324 = vmatprep.subr.mxu0 0.0
        %2325 = vmatpush1.msra.mxu0 0.0
        %2326 = vmatprep.subr.mxu0 0.0
        %2327 = vmatpush1.msra.mxu0 0.0
        %2328 = vmatprep.subr.mxu0 0.0
        %2329 = vmatpush1.msra.mxu0 0.0
        %2330 = vmatprep.subr.mxu0 0.0
        %2331 = vmatpush1.msra.mxu0 0.0
        %2332 = vmatprep.subr.mxu0 0.0
        %2333 = vmatpush1.msra.mxu0 0.0
        %2334 = vmatprep.subr.mxu0 0.0
        %2335 = vmatpush1.msra.mxu0 0.0
        %2336 = vmatprep.subr.mxu0 0.0
        %2337 = vmatpush1.msra.mxu0 0.0
        %2338 = vmatprep.subr.mxu0 0.0
        %2339 = vmatpush1.msra.mxu0 0.0
        %2340 = vmatprep.subr.mxu0 0.0
        %2341 = vmatpush1.msra.mxu0 0.0
        %2342 = vmatprep.subr.mxu0 0.0
        %2343 = vmatpush1.msra.mxu0 0.0
        %2344 = vmatprep.subr.mxu0 0.0
        %2345 = vmatpush1.msra.mxu0 0.0
        %2346 = vmatprep.subr.mxu0 0.0
        %2347 = vmatpush1.msra.mxu0 0.0
        %2348 = vmatprep.subr.mxu0 0.0
        %2349 = vmatpush1.msra.mxu0 0.0
        %2350 = vmatprep.subr.mxu0 0.0
        %2351 = vmatpush1.msra.mxu0 0.0
        %2352 = vmatprep.subr.mxu0 0.0
        %2353 = vmatpush1.msra.mxu0 0.0
        %2354 = vmatprep.subr.mxu0 0.0
        %2355 = vmatpush1.msra.mxu0 0.0
        %2356 = vmatprep.subr.mxu0 0.0
        %2357 = vmatpush1.msra.mxu0 0.0
        %2358 = vmatprep.subr.mxu0 0.0
        %2359 = vmatpush1.msra.mxu0 0.0
        %2360 = vmatprep.subr.mxu0 0.0
        %2361 = vmatpush1.msra.mxu0 0.0
        %2362 = vmatprep.subr.mxu0 0.0
        %2363 = vmatpush1.msra.mxu0 0.0
        %2364 = vmatprep.subr.mxu0 0.0
        %2365 = vmatpush1.msra.mxu0 0.0
        %2366 = vmatprep.subr.mxu0 0.0
        %2367 = vmatpush1.msra.mxu0 0.0
        %2368 = vmatprep.subr.mxu0 0.0
        %2369 = vmatpush1.msra.mxu0 0.0
        %2370 = vmatprep.subr.mxu0 0.0
        %2371 = vmatpush1.msra.mxu0 0.0
        %2372 = vmatprep.subr.mxu0 0.0
        %2373 = vmatpush1.msra.mxu0 0.0
        %2374 = vmatprep.subr.mxu0 0.0
        %2375 = vmatpush1.msra.mxu0 0.0
        %2376 = vmatprep.subr.mxu0 0.0
        %2377 = vmatpush1.msra.mxu0 0.0
        %2378 = vmatprep.subr.mxu0 0.0
        %2379 = vmatpush1.msra.mxu0 0.0
        %2380 = vmatprep.mubr.f32.mxu0 0.0
        %2381 = vmatmul.mubr.f32.gmra.mrb[0].mxu0 %v2125
        %v2382 = vpop.f32.mrb[0].mxu0
        %v2383 = vadd.f32 0.0, %v2382
        %v2384 = vpop.f32.mrb[0].mxu0
        %v2385 = vadd.f32 0.0, %v2384
        %2386 = vmatprep.mubr.f32.mxu0 0.0
        %2387 = vmatmul.mubr.f32.gmra.mrb[0].mxu0 %v2128
        %v2388 = vpop.f32.mrb[0].mxu0
        %v2389 = vadd.f32 0.0, %v2388
        %v2390 = vpop.f32.mrb[0].mxu0
        %v2391 = vadd.f32 0.0, %v2390
        %2392 = vmatprep.mubr.f32.mxu0 0.0
        %2393 = vmatmul.mubr.f32.gmra.mrb[0].mxu0 %v2131
        %v2394 = vpop.f32.mrb[0].mxu0
        %v2395 = vadd.f32 0.0, %v2394
        %v2396 = vpop.f32.mrb[0].mxu0
        %v2397 = vadd.f32 0.0, %v2396
        %2398 = vmatprep.mubr.f32.mxu0 0.0
        %2399 = vmatmul.mubr.f32.gmra.mrb[0].mxu0 %v2134
        %v2400 = vpop.f32.mrb[0].mxu0
        %v2401 = vadd.f32 0.0, %v2400
        %v2402 = vpop.f32.mrb[0].mxu0
        %v2403 = vadd.f32 0.0, %v2402
        %2404 = vmatprep.mubr.f32.mxu0 0.0
        %2405 = vmatmul.mubr.f32.gmra.mrb[0].mxu0 %v2137
        %v2406 = vpop.f32.mrb[0].mxu0
        %v2407 = vadd.f32 0.0, %v2406
        %v2408 = vpop.f32.mrb[0].mxu0
        %v2409 = vadd.f32 0.0, %v2408
        %2410 = vmatprep.mubr.f32.mxu0 0.0
        %2411 = vmatmul.mubr.f32.gmra.mrb[0].mxu0 %v2140
        %v2412 = vpop.f32.mrb[0].mxu0
        %v2413 = vadd.f32 0.0, %v2412
        %v2414 = vpop.f32.mrb[0].mxu0
        %v2415 = vadd.f32 0.0, %v2414
        %2416 = vmatprep.mubr.f32.mxu0 0.0
        %2417 = vmatmul.mubr.f32.gmra.mrb[0].mxu0 %v2143
        %v2418 = vpop.f32.mrb[0].mxu0
        %v2419 = vadd.f32 0.0, %v2418
        %v2420 = vpop.f32.mrb[0].mxu0
        %v2421 = vadd.f32 0.0, %v2420
        %2422 = vmatprep.mubr.f32.mxu0 0.0
        %2423 = vmatmul.mubr.f32.gmra.mrb[0].mxu0 %v2146
        %v2424 = vpop.f32.mrb[0].mxu0
        %v2425 = vadd.f32 0.0, %v2424
        %v2426 = vpop.f32.mrb[0].mxu0
        %v2427 = vadd.f32 0.0, %v2426
        %2428 = vmatprep.mubr.f32.mxu0 0.0
        %2429 = vmatmul.mubr.f32.gmra.mrb[0].mxu0 %v2149
        %v2430 = vpop.f32.mrb[0].mxu0
        %v2431 = vadd.f32 0.0, %v2430
        %v2432 = vpop.f32.mrb[0].mxu0
        %v2433 = vadd.f32 0.0, %v2432
        %2434 = vmatprep.mubr.f32.mxu0 0.0
        %2435 = vmatmul.mubr.f32.gmra.mrb[0].mxu0 %v2152
        %v2436 = vpop.f32.mrb[0].mxu0
        %v2437 = vadd.f32 0.0, %v2436
        %v2438 = vpop.f32.mrb[0].mxu0
        %v2439 = vadd.f32 0.0, %v2438
        %2440 = vmatprep.mubr.f32.mxu0 0.0
        %2441 = vmatmul.mubr.f32.gmra.mrb[0].mxu0 %v2155
        %v2442 = vpop.f32.mrb[0].mxu0
        %v2443 = vadd.f32 0.0, %v2442
        %v2444 = vpop.f32.mrb[0].mxu0
        %v2445 = vadd.f32 0.0, %v2444
        %2446 = vmatprep.mubr.f32.mxu0 0.0
        %2447 = vmatmul.mubr.f32.gmra.mrb[0].mxu0 %v2158
        %v2448 = vpop.f32.mrb[0].mxu0
        %v2449 = vadd.f32 0.0, %v2448
        %v2450 = vpop.f32.mrb[0].mxu0
        %v2451 = vadd.f32 0.0, %v2450
        %2452 = vmatprep.mubr.f32.mxu0 0.0
        %2453 = vmatmul.mubr.f32.gmra.mrb[0].mxu0 %v2161
        %v2454 = vpop.f32.mrb[0].mxu0
        %v2455 = vadd.f32 0.0, %v2454
        %v2456 = vpop.f32.mrb[0].mxu0
        %v2457 = vadd.f32 0.0, %v2456
        %2458 = vmatprep.mubr.f32.mxu0 0.0
        %2459 = vmatmul.mubr.f32.gmra.mrb[0].mxu0 %v2164
        %v2460 = vpop.f32.mrb[0].mxu0
        %v2461 = vadd.f32 0.0, %v2460
        %v2462 = vpop.f32.mrb[0].mxu0
        %v2463 = vadd.f32 0.0, %v2462
        %2464 = vmatprep.mubr.f32.mxu0 0.0
        %2465 = vmatmul.mubr.f32.gmra.mrb[0].mxu0 %v2167
        %v2466 = vpop.f32.mrb[0].mxu0
        %v2467 = vadd.f32 0.0, %v2466
        %v2468 = vpop.f32.mrb[0].mxu0
        %v2469 = vadd.f32 0.0, %v2468
        %2470 = vmatprep.mubr.f32.mxu0 0.0
        %2471 = vmatmul.mubr.f32.gmra.mrb[0].mxu0 %v2170
        %v2472 = vpop.f32.mrb[0].mxu0
        %v2473 = vadd.f32 0.0, %v2472
        %v2474 = vpop.f32.mrb[0].mxu0
        %v2475 = vadd.f32 0.0, %v2474
        %2476 = vmatprep.mubr.f32.mxu0 0.0
        %2477 = vmatmul.mubr.f32.gmra.mrb[0].mxu0 %v2173
        %v2478 = vpop.f32.mrb[0].mxu0
        %v2479 = vadd.f32 0.0, %v2478
        %v2480 = vpop.f32.mrb[0].mxu0
        %v2481 = vadd.f32 0.0, %v2480
        %2482 = vmatprep.mubr.f32.mxu0 0.0
        %2483 = vmatmul.mubr.f32.gmra.mrb[0].mxu0 %v2176
        %v2484 = vpop.f32.mrb[0].mxu0
        %v2485 = vadd.f32 0.0, %v2484
        %v2486 = vpop.f32.mrb[0].mxu0
        %v2487 = vadd.f32 0.0, %v2486
        %2488 = vmatprep.mubr.f32.mxu0 0.0
        %2489 = vmatmul.mubr.f32.gmra.mrb[0].mxu0 %v2179
        %v2490 = vpop.f32.mrb[0].mxu0
        %v2491 = vadd.f32 0.0, %v2490
        %v2492 = vpop.f32.mrb[0].mxu0
        %v2493 = vadd.f32 0.0, %v2492
        %2494 = vmatprep.mubr.f32.mxu0 0.0
        %2495 = vmatmul.mubr.f32.gmra.mrb[0].mxu0 %v2182
        %v2496 = vpop.f32.mrb[0].mxu0
        %v2497 = vadd.f32 0.0, %v2496
        %v2498 = vpop.f32.mrb[0].mxu0
        %v2499 = vadd.f32 0.0, %v2498
        %2500 = vmatprep.mubr.f32.mxu0 0.0
        %2501 = vmatmul.mubr.f32.gmra.mrb[0].mxu0 %v2185
        %v2502 = vpop.f32.mrb[0].mxu0
        %v2503 = vadd.f32 0.0, %v2502
        %v2504 = vpop.f32.mrb[0].mxu0
        %v2505 = vadd.f32 0.0, %v2504
        %2506 = vmatprep.mubr.f32.mxu0 0.0
        %2507 = vmatmul.mubr.f32.gmra.mrb[0].mxu0 %v2188
        %v2508 = vpop.f32.mrb[0].mxu0
        %v2509 = vadd.f32 0.0, %v2508
        %v2510 = vpop.f32.mrb[0].mxu0
        %v2511 = vadd.f32 0.0, %v2510
        %2512 = vmatprep.mubr.f32.mxu0 0.0
        %2513 = vmatmul.mubr.f32.gmra.mrb[0].mxu0 %v2191
        %v2514 = vpop.f32.mrb[0].mxu0
        %v2515 = vadd.f32 0.0, %v2514
        %v2516 = vpop.f32.mrb[0].mxu0
        %v2517 = vadd.f32 0.0, %v2516
        %2518 = vmatprep.mubr.f32.mxu0 0.0
        %2519 = vmatmul.mubr.f32.gmra.mrb[0].mxu0 %v2194
        %v2520 = vpop.f32.mrb[0].mxu0
        %v2521 = vadd.f32 0.0, %v2520
        %v2522 = vpop.f32.mrb[0].mxu0
        %v2523 = vadd.f32 0.0, %v2522
        %2524 = vmatprep.mubr.f32.mxu0 0.0
        %2525 = vmatmul.mubr.f32.gmra.mrb[0].mxu0 %v2197
        %v2526 = vpop.f32.mrb[0].mxu0
        %v2527 = vadd.f32 0.0, %v2526
        %v2528 = vpop.f32.mrb[0].mxu0
        %v2529 = vadd.f32 0.0, %v2528
        %2530 = vmatprep.mubr.f32.mxu0 0.0
        %2531 = vmatmul.mubr.f32.gmra.mrb[0].mxu0 %v2200
        %v2532 = vpop.f32.mrb[0].mxu0
        %v2533 = vadd.f32 0.0, %v2532
        %v2534 = vpop.f32.mrb[0].mxu0
        %v2535 = vadd.f32 0.0, %v2534
        %2536 = vmatprep.mubr.f32.mxu0 0.0
        %2537 = vmatmul.mubr.f32.gmra.mrb[0].mxu0 %v2203
        %v2538 = vpop.f32.mrb[0].mxu0
        %v2539 = vadd.f32 0.0, %v2538
        %v2540 = vpop.f32.mrb[0].mxu0
        %v2541 = vadd.f32 0.0, %v2540
        %2542 = vmatprep.mubr.f32.mxu0 0.0
        %2543 = vmatmul.mubr.f32.gmra.mrb[0].mxu0 %v2206
        %v2544 = vpop.f32.mrb[0].mxu0
        %v2545 = vadd.f32 0.0, %v2544
        %v2546 = vpop.f32.mrb[0].mxu0
        %v2547 = vadd.f32 0.0, %v2546
        %2548 = vmatprep.mubr.f32.mxu0 0.0
        %2549 = vmatmul.mubr.f32.gmra.mrb[0].mxu0 %v2209
        %v2550 = vpop.f32.mrb[0].mxu0
        %v2551 = vadd.f32 0.0, %v2550
        %v2552 = vpop.f32.mrb[0].mxu0
        %v2553 = vadd.f32 0.0, %v2552
        %2554 = vmatprep.mubr.f32.mxu0 0.0
        %2555 = vmatmul.mubr.f32.gmra.mrb[0].mxu0 %v2212
        %v2556 = vpop.f32.mrb[0].mxu0
        %v2557 = vadd.f32 0.0, %v2556
        %v2558 = vpop.f32.mrb[0].mxu0
        %v2559 = vadd.f32 0.0, %v2558
        %2560 = vmatprep.mubr.f32.mxu0 0.0
        %2561 = vmatmul.mubr.f32.gmra.mrb[0].mxu0 %v2215
        %v2562 = vpop.f32.mrb[0].mxu0
        %v2563 = vadd.f32 0.0, %v2562
        %v2564 = vpop.f32.mrb[0].mxu0
        %v2565 = vadd.f32 0.0, %v2564
        %2566 = vmatprep.mubr.f32.mxu0 0.0
        %2567 = vmatmul.mubr.f32.gmra.mrb[0].mxu0 %v2218
        %v2568 = vpop.f32.mrb[0].mxu0
        %v2569 = vadd.f32 0.0, %v2568
        %v2570 = vpop.f32.mrb[0].mxu0
        %v2571 = vadd.f32 0.0, %v2570
        %2572 = vmatprep.mubr.f32.mxu0 0.0
        %2573 = vmatmul.mubr.f32.gmra.mrb[0].mxu0 %v2221
        %v2574 = vpop.f32.mrb[0].mxu0
        %v2575 = vadd.f32 0.0, %v2574
        %v2576 = vpop.f32.mrb[0].mxu0
        %v2577 = vadd.f32 0.0, %v2576
        %2578 = vmatprep.mubr.f32.mxu0 0.0
        %2579 = vmatmul.mubr.f32.gmra.mrb[0].mxu0 %v2224
        %v2580 = vpop.f32.mrb[0].mxu0
        %v2581 = vadd.f32 0.0, %v2580
        %v2582 = vpop.f32.mrb[0].mxu0
        %v2583 = vadd.f32 0.0, %v2582
        %2584 = vmatprep.mubr.f32.mxu0 0.0
        %2585 = vmatmul.mubr.f32.gmra.mrb[0].mxu0 %v2227
        %v2586 = vpop.f32.mrb[0].mxu0
        %v2587 = vadd.f32 0.0, %v2586
        %v2588 = vpop.f32.mrb[0].mxu0
        %v2589 = vadd.f32 0.0, %v2588
        %2590 = vmatprep.mubr.f32.mxu0 0.0
        %2591 = vmatmul.mubr.f32.gmra.mrb[0].mxu0 %v2230
        %v2592 = vpop.f32.mrb[0].mxu0
        %v2593 = vadd.f32 0.0, %v2592
        %v2594 = vpop.f32.mrb[0].mxu0
        %v2595 = vadd.f32 0.0, %v2594
        %2596 = vmatprep.mubr.f32.mxu0 0.0
        %2597 = vmatmul.mubr.f32.gmra.mrb[0].mxu0 %v2233
        %v2598 = vpop.f32.mrb[0].mxu0
        %v2599 = vadd.f32 0.0, %v2598
        %v2600 = vpop.f32.mrb[0].mxu0
        %v2601 = vadd.f32 0.0, %v2600
        %2602 = vmatprep.mubr.f32.mxu0 0.0
        %2603 = vmatmul.mubr.f32.gmra.mrb[0].mxu0 %v2236
        %v2604 = vpop.f32.mrb[0].mxu0
        %v2605 = vadd.f32 0.0, %v2604
        %v2606 = vpop.f32.mrb[0].mxu0
        %v2607 = vadd.f32 0.0, %v2606
        %2608 = vmatprep.mubr.f32.mxu0 0.0
        %2609 = vmatmul.mubr.f32.gmra.mrb[0].mxu0 %v2239
        %v2610 = vpop.f32.mrb[0].mxu0
        %v2611 = vadd.f32 0.0, %v2610
        %v2612 = vpop.f32.mrb[0].mxu0
        %v2613 = vadd.f32 0.0, %v2612
        %2614 = vmatprep.mubr.f32.mxu0 0.0
        %2615 = vmatmul.mubr.f32.gmra.mrb[0].mxu0 %v2242
        %v2616 = vpop.f32.mrb[0].mxu0
        %v2617 = vadd.f32 0.0, %v2616
        %v2618 = vpop.f32.mrb[0].mxu0
        %v2619 = vadd.f32 0.0, %v2618
        %2620 = vmatprep.mubr.f32.mxu0 0.0
        %2621 = vmatmul.mubr.f32.gmra.mrb[0].mxu0 %v2245
        %v2622 = vpop.f32.mrb[0].mxu0
        %v2623 = vadd.f32 0.0, %v2622
        %v2624 = vpop.f32.mrb[0].mxu0
        %v2625 = vadd.f32 0.0, %v2624
        %2626 = vmatprep.mubr.f32.mxu0 0.0
        %2627 = vmatmul.mubr.f32.gmra.mrb[0].mxu0 %v2248
        %v2628 = vpop.f32.mrb[0].mxu0
        %v2629 = vadd.f32 0.0, %v2628
        %v2630 = vpop.f32.mrb[0].mxu0
        %v2631 = vadd.f32 0.0, %v2630
        %2632 = vmatprep.mubr.f32.mxu0 0.0
        %2633 = vmatmul.mubr.f32.gmra.mrb[0].mxu0 %v2251
        %v2634 = vpop.f32.mrb[0].mxu0
        %v2635 = vadd.f32 0.0, %v2634
        %v2636 = vpop.f32.mrb[0].mxu0
        %v2637 = vadd.f32 0.0, %v2636
        %2638 = vmatprep.mubr.f32.mxu0 0.0
        %2639 = vmatmul.mubr.f32.gmra.mrb[0].mxu0 %v2254
        %v2640 = vpop.f32.mrb[0].mxu0
        %v2641 = vadd.f32 0.0, %v2640
        %v2642 = vpop.f32.mrb[0].mxu0
        %v2643 = vadd.f32 0.0, %v2642
        %2644 = vmatprep.mubr.f32.mxu0 0.0
        %2645 = vmatmul.mubr.f32.gmra.mrb[0].mxu0 %v2257
        %v2646 = vpop.f32.mrb[0].mxu0
        %v2647 = vadd.f32 0.0, %v2646
        %v2648 = vpop.f32.mrb[0].mxu0
        %v2649 = vadd.f32 0.0, %v2648
        %2650 = vmatprep.mubr.f32.mxu0 0.0
        %2651 = vmatmul.mubr.f32.gmra.mrb[0].mxu0 %v2260
        %v2652 = vpop.f32.mrb[0].mxu0
        %v2653 = vadd.f32 0.0, %v2652
        %v2654 = vpop.f32.mrb[0].mxu0
        %v2655 = vadd.f32 0.0, %v2654
        %2656 = vmatprep.mubr.f32.mxu0 0.0
        %2657 = vmatmul.mubr.f32.gmra.mrb[0].mxu0 %v2263
        %v2658 = vpop.f32.mrb[0].mxu0
        %v2659 = vadd.f32 0.0, %v2658
        %v2660 = vpop.f32.mrb[0].mxu0
        %v2661 = vadd.f32 0.0, %v2660
        %2662 = vmatprep.mubr.f32.mxu0 0.0
        %2663 = vmatmul.mubr.f32.gmra.mrb[0].mxu0 %v2266
        %v2664 = vpop.f32.mrb[0].mxu0
        %v2665 = vadd.f32 0.0, %v2664
        %v2666 = vpop.f32.mrb[0].mxu0
        %v2667 = vadd.f32 0.0, %v2666
        %2668 = vmatprep.mubr.f32.mxu0 0.0
        %2669 = vmatmul.mubr.f32.gmra.mrb[0].mxu0 %v2269
        %v2670 = vpop.f32.mrb[0].mxu0
        %v2671 = vadd.f32 0.0, %v2670
        %v2672 = vpop.f32.mrb[0].mxu0
        %v2673 = vadd.f32 0.0, %v2672
        %2674 = vmatprep.mubr.f32.mxu0 0.0
        %2675 = vmatmul.mubr.f32.gmra.mrb[0].mxu0 %v2272
        %v2676 = vpop.f32.mrb[0].mxu0
        %v2677 = vadd.f32 0.0, %v2676
        %v2678 = vpop.f32.mrb[0].mxu0
        %v2679 = vadd.f32 0.0, %v2678
        %2680 = vmatprep.mubr.f32.mxu0 0.0
        %2681 = vmatmul.mubr.f32.gmra.mrb[0].mxu0 %v2275
        %v2682 = vpop.f32.mrb[0].mxu0
        %v2683 = vadd.f32 0.0, %v2682
        %v2684 = vpop.f32.mrb[0].mxu0
        %v2685 = vadd.f32 0.0, %v2684
        %2686 = vmatprep.mubr.f32.mxu0 0.0
        %2687 = vmatmul.mubr.f32.gmra.mrb[0].mxu0 %v2278
        %v2688 = vpop.f32.mrb[0].mxu0
        %v2689 = vadd.f32 0.0, %v2688
        %v2690 = vpop.f32.mrb[0].mxu0
        %v2691 = vadd.f32 0.0, %v2690
        %2692 = vmatprep.mubr.f32.mxu0 0.0
        %2693 = vmatmul.mubr.f32.gmra.mrb[0].mxu0 %v2281
        %v2694 = vpop.f32.mrb[0].mxu0
        %v2695 = vadd.f32 0.0, %v2694
        %v2696 = vpop.f32.mrb[0].mxu0
        %v2697 = vadd.f32 0.0, %v2696
        %2698 = vmatprep.mubr.f32.mxu0 0.0
        %2699 = vmatmul.mubr.f32.gmra.mrb[0].mxu0 %v2284
        %v2700 = vpop.f32.mrb[0].mxu0
        %v2701 = vadd.f32 0.0, %v2700
        %v2702 = vpop.f32.mrb[0].mxu0
        %v2703 = vadd.f32 0.0, %v2702
        %2704 = vmatprep.mubr.f32.mxu0 0.0
        %2705 = vmatmul.mubr.f32.gmra.mrb[0].mxu0 %v2287
        %v2706 = vpop.f32.mrb[0].mxu0
        %v2707 = vadd.f32 0.0, %v2706
        %v2708 = vpop.f32.mrb[0].mxu0
        %v2709 = vadd.f32 0.0, %v2708
        %2710 = vmatprep.mubr.f32.mxu0 0.0
        %2711 = vmatmul.mubr.f32.gmra.mrb[0].mxu0 %v2290
        %v2712 = vpop.f32.mrb[0].mxu0
        %v2713 = vadd.f32 0.0, %v2712
        %v2714 = vpop.f32.mrb[0].mxu0
        %v2715 = vadd.f32 0.0, %v2714
        %2716 = vmatprep.mubr.f32.mxu0 0.0
        %2717 = vmatmul.mubr.f32.gmra.mrb[0].mxu0 %v2293
        %v2718 = vpop.f32.mrb[0].mxu0
        %v2719 = vadd.f32 0.0, %v2718
        %v2720 = vpop.f32.mrb[0].mxu0
        %v2721 = vadd.f32 0.0, %v2720
        %2722 = vmatprep.mubr.f32.mxu0 0.0
        %2723 = vmatmul.mubr.f32.gmra.mrb[0].mxu0 %v2296
        %v2724 = vpop.f32.mrb[0].mxu0
        %v2725 = vadd.f32 0.0, %v2724
        %v2726 = vpop.f32.mrb[0].mxu0
        %v2727 = vadd.f32 0.0, %v2726
        %2728 = vmatprep.mubr.f32.mxu0 0.0
        %2729 = vmatmul.mubr.f32.gmra.mrb[0].mxu0 %v2299
        %v2730 = vpop.f32.mrb[0].mxu0
        %v2731 = vadd.f32 0.0, %v2730
        %v2732 = vpop.f32.mrb[0].mxu0
        %v2733 = vadd.f32 0.0, %v2732
        %2734 = vmatprep.mubr.f32.mxu0 0.0
        %2735 = vmatmul.mubr.f32.gmra.mrb[0].mxu0 %v2302
        %v2736 = vpop.f32.mrb[0].mxu0
        %v2737 = vadd.f32 0.0, %v2736
        %v2738 = vpop.f32.mrb[0].mxu0
        %v2739 = vadd.f32 0.0, %v2738
        %2740 = vmatprep.mubr.f32.mxu0 0.0
        %2741 = vmatmul.mubr.f32.gmra.mrb[0].mxu0 %v2305
        %v2742 = vpop.f32.mrb[0].mxu0
        %v2743 = vadd.f32 0.0, %v2742
        %v2744 = vpop.f32.mrb[0].mxu0
        %v2745 = vadd.f32 0.0, %v2744
        %2746 = vmatprep.mubr.f32.mxu0 0.0
        %2747 = vmatmul.mubr.f32.gmra.mrb[0].mxu0 %v2308
        %v2748 = vpop.f32.mrb[0].mxu0
        %v2749 = vadd.f32 0.0, %v2748
        %v2750 = vpop.f32.mrb[0].mxu0
        %v2751 = vadd.f32 0.0, %v2750
        %2752 = vmatprep.mubr.f32.mxu0 0.0
        %2753 = vmatmul.mubr.f32.gmra.mrb[0].mxu0 %v2311
        %v2754 = vpop.f32.mrb[0].mxu0
        %v2755 = vadd.f32 0.0, %v2754
        %v2756 = vpop.f32.mrb[0].mxu0
        %v2757 = vadd.f32 0.0, %v2756
        %2758 = vmatprep.mubr.f32.mxu0 0.0
        %2759 = vmatmul.mubr.f32.gmra.mrb[0].mxu0 %v2314
        %v2760 = vpop.f32.mrb[0].mxu0
        %v2761 = vadd.f32 0.0, %v2760
        %v2762 = vpop.f32.mrb[0].mxu0
        %v2763 = vadd.f32 0.0, %v2762
        %2764 = vdwg.mxu0
        %2765 = vmatprep.subr.mxu0 %v630
        %2766 = vmatpush1.msra.mxu0 %v628
        %2767 = vmatprep.subr.mxu0 0.0
        %2768 = vmatpush1.msra.mxu0 0.0
        %2769 = vmatprep.subr.mxu0 0.0
        %2770 = vmatpush1.msra.mxu0 0.0
        %2771 = vmatprep.subr.mxu0 0.0
        %2772 = vmatpush1.msra.mxu0 0.0
        %2773 = vmatprep.subr.mxu0 0.0
        %2774 = vmatpush1.msra.mxu0 0.0
        %2775 = vmatprep.subr.mxu0 0.0
        %2776 = vmatpush1.msra.mxu0 0.0
        %2777 = vmatprep.subr.mxu0 0.0
        %2778 = vmatpush1.msra.mxu0 0.0
        %2779 = vmatprep.subr.mxu0 0.0
        %2780 = vmatpush1.msra.mxu0 0.0
        %2781 = vmatprep.subr.mxu0 0.0
        %2782 = vmatpush1.msra.mxu0 0.0
        %2783 = vmatprep.subr.mxu0 0.0
        %2784 = vmatpush1.msra.mxu0 0.0
        %2785 = vmatprep.subr.mxu0 0.0
        %2786 = vmatpush1.msra.mxu0 0.0
        %2787 = vmatprep.subr.mxu0 0.0
        %2788 = vmatpush1.msra.mxu0 0.0
        %2789 = vmatprep.subr.mxu0 0.0
        %2790 = vmatpush1.msra.mxu0 0.0
        %2791 = vmatprep.subr.mxu0 0.0
        %2792 = vmatpush1.msra.mxu0 0.0
        %2793 = vmatprep.subr.mxu0 0.0
        %2794 = vmatpush1.msra.mxu0 0.0
        %2795 = vmatprep.subr.mxu0 0.0
        %2796 = vmatpush1.msra.mxu0 0.0
        %2797 = vmatprep.subr.mxu0 0.0
        %2798 = vmatpush1.msra.mxu0 0.0
        %2799 = vmatprep.subr.mxu0 0.0
        %2800 = vmatpush1.msra.mxu0 0.0
        %2801 = vmatprep.subr.mxu0 0.0
        %2802 = vmatpush1.msra.mxu0 0.0
        %2803 = vmatprep.subr.mxu0 0.0
        %2804 = vmatpush1.msra.mxu0 0.0
        %2805 = vmatprep.subr.mxu0 0.0
        %2806 = vmatpush1.msra.mxu0 0.0
        %2807 = vmatprep.subr.mxu0 0.0
        %2808 = vmatpush1.msra.mxu0 0.0
        %2809 = vmatprep.subr.mxu0 0.0
        %2810 = vmatpush1.msra.mxu0 0.0
        %2811 = vmatprep.subr.mxu0 0.0
        %2812 = vmatpush1.msra.mxu0 0.0
        %2813 = vmatprep.subr.mxu0 0.0
        %2814 = vmatpush1.msra.mxu0 0.0
        %2815 = vmatprep.subr.mxu0 0.0
        %2816 = vmatpush1.msra.mxu0 0.0
        %2817 = vmatprep.subr.mxu0 0.0
        %2818 = vmatpush1.msra.mxu0 0.0
        %2819 = vmatprep.subr.mxu0 0.0
        %2820 = vmatpush1.msra.mxu0 0.0
        %2821 = vmatprep.subr.mxu0 0.0
        %2822 = vmatpush1.msra.mxu0 0.0
        %2823 = vmatprep.subr.mxu0 0.0
        %2824 = vmatpush1.msra.mxu0 0.0
        %2825 = vmatprep.subr.mxu0 0.0
        %2826 = vmatpush1.msra.mxu0 0.0
        %2827 = vmatprep.subr.mxu0 0.0
        %2828 = vmatpush1.msra.mxu0 0.0
        %2829 = vmatprep.mubr.f32.mxu0 0.0
        %2830 = vmatmul.mubr.f32.gmra.mrb[0].mxu0 %v2125
        %v2831 = vpop.f32.mrb[0].mxu0
        %v2832 = vadd.f32 0.0, %v2831
        %v2833 = vpop.f32.mrb[0].mxu0
        %v2834 = vadd.f32 0.0, %v2833
        %2835 = vmatprep.mubr.f32.mxu0 0.0
        %2836 = vmatmul.mubr.f32.gmra.mrb[0].mxu0 %v2128
        %v2837 = vpop.f32.mrb[0].mxu0
        %v2838 = vadd.f32 0.0, %v2837
        %v2839 = vpop.f32.mrb[0].mxu0
        %v2840 = vadd.f32 0.0, %v2839
        %2841 = vmatprep.mubr.f32.mxu0 0.0
        %2842 = vmatmul.mubr.f32.gmra.mrb[0].mxu0 %v2131
        %v2843 = vpop.f32.mrb[0].mxu0
        %v2844 = vadd.f32 0.0, %v2843
        %v2845 = vpop.f32.mrb[0].mxu0
        %v2846 = vadd.f32 0.0, %v2845
        %2847 = vmatprep.mubr.f32.mxu0 0.0
        %2848 = vmatmul.mubr.f32.gmra.mrb[0].mxu0 %v2134
        %v2849 = vpop.f32.mrb[0].mxu0
        %v2850 = vadd.f32 0.0, %v2849
        %v2851 = vpop.f32.mrb[0].mxu0
        %v2852 = vadd.f32 0.0, %v2851
        %2853 = vmatprep.mubr.f32.mxu0 0.0
        %2854 = vmatmul.mubr.f32.gmra.mrb[0].mxu0 %v2137
        %v2855 = vpop.f32.mrb[0].mxu0
        %v2856 = vadd.f32 0.0, %v2855
        %v2857 = vpop.f32.mrb[0].mxu0
        %v2858 = vadd.f32 0.0, %v2857
        %2859 = vmatprep.mubr.f32.mxu0 0.0
        %2860 = vmatmul.mubr.f32.gmra.mrb[0].mxu0 %v2140
        %v2861 = vpop.f32.mrb[0].mxu0
        %v2862 = vadd.f32 0.0, %v2861
        %v2863 = vpop.f32.mrb[0].mxu0
        %v2864 = vadd.f32 0.0, %v2863
        %2865 = vmatprep.mubr.f32.mxu0 0.0
        %2866 = vmatmul.mubr.f32.gmra.mrb[0].mxu0 %v2143
        %v2867 = vpop.f32.mrb[0].mxu0
        %v2868 = vadd.f32 0.0, %v2867
        %v2869 = vpop.f32.mrb[0].mxu0
        %v2870 = vadd.f32 0.0, %v2869
        %2871 = vmatprep.mubr.f32.mxu0 0.0
        %2872 = vmatmul.mubr.f32.gmra.mrb[0].mxu0 %v2146
        %v2873 = vpop.f32.mrb[0].mxu0
        %v2874 = vadd.f32 0.0, %v2873
        %v2875 = vpop.f32.mrb[0].mxu0
        %v2876 = vadd.f32 0.0, %v2875
        %2877 = vmatprep.mubr.f32.mxu0 0.0
        %2878 = vmatmul.mubr.f32.gmra.mrb[0].mxu0 %v2149
        %v2879 = vpop.f32.mrb[0].mxu0
        %v2880 = vadd.f32 0.0, %v2879
        %v2881 = vpop.f32.mrb[0].mxu0
        %v2882 = vadd.f32 0.0, %v2881
        %2883 = vmatprep.mubr.f32.mxu0 0.0
        %2884 = vmatmul.mubr.f32.gmra.mrb[0].mxu0 %v2152
        %v2885 = vpop.f32.mrb[0].mxu0
        %v2886 = vadd.f32 0.0, %v2885
        %v2887 = vpop.f32.mrb[0].mxu0
        %v2888 = vadd.f32 0.0, %v2887
        %2889 = vmatprep.mubr.f32.mxu0 0.0
        %2890 = vmatmul.mubr.f32.gmra.mrb[0].mxu0 %v2155
        %v2891 = vpop.f32.mrb[0].mxu0
        %v2892 = vadd.f32 0.0, %v2891
        %v2893 = vpop.f32.mrb[0].mxu0
        %v2894 = vadd.f32 0.0, %v2893
        %2895 = vmatprep.mubr.f32.mxu0 0.0
        %2896 = vmatmul.mubr.f32.gmra.mrb[0].mxu0 %v2158
        %v2897 = vpop.f32.mrb[0].mxu0
        %v2898 = vadd.f32 0.0, %v2897
        %v2899 = vpop.f32.mrb[0].mxu0
        %v2900 = vadd.f32 0.0, %v2899
        %2901 = vmatprep.mubr.f32.mxu0 0.0
        %2902 = vmatmul.mubr.f32.gmra.mrb[0].mxu0 %v2161
        %v2903 = vpop.f32.mrb[0].mxu0
        %v2904 = vadd.f32 0.0, %v2903
        %v2905 = vpop.f32.mrb[0].mxu0
        %v2906 = vadd.f32 0.0, %v2905
        %2907 = vmatprep.mubr.f32.mxu0 0.0
        %2908 = vmatmul.mubr.f32.gmra.mrb[0].mxu0 %v2164
        %v2909 = vpop.f32.mrb[0].mxu0
        %v2910 = vadd.f32 0.0, %v2909
        %v2911 = vpop.f32.mrb[0].mxu0
        %v2912 = vadd.f32 0.0, %v2911
        %2913 = vmatprep.mubr.f32.mxu0 0.0
        %2914 = vmatmul.mubr.f32.gmra.mrb[0].mxu0 %v2167
        %v2915 = vpop.f32.mrb[0].mxu0
        %v2916 = vadd.f32 0.0, %v2915
        %v2917 = vpop.f32.mrb[0].mxu0
        %v2918 = vadd.f32 0.0, %v2917
        %2919 = vmatprep.mubr.f32.mxu0 0.0
        %2920 = vmatmul.mubr.f32.gmra.mrb[0].mxu0 %v2170
        %v2921 = vpop.f32.mrb[0].mxu0
        %v2922 = vadd.f32 0.0, %v2921
        %v2923 = vpop.f32.mrb[0].mxu0
        %v2924 = vadd.f32 0.0, %v2923
        %2925 = vmatprep.mubr.f32.mxu0 0.0
        %2926 = vmatmul.mubr.f32.gmra.mrb[0].mxu0 %v2173
        %v2927 = vpop.f32.mrb[0].mxu0
        %v2928 = vadd.f32 0.0, %v2927
        %v2929 = vpop.f32.mrb[0].mxu0
        %v2930 = vadd.f32 0.0, %v2929
        %2931 = vmatprep.mubr.f32.mxu0 0.0
        %2932 = vmatmul.mubr.f32.gmra.mrb[0].mxu0 %v2176
        %v2933 = vpop.f32.mrb[0].mxu0
        %v2934 = vadd.f32 0.0, %v2933
        %v2935 = vpop.f32.mrb[0].mxu0
        %v2936 = vadd.f32 0.0, %v2935
        %2937 = vmatprep.mubr.f32.mxu0 0.0
        %2938 = vmatmul.mubr.f32.gmra.mrb[0].mxu0 %v2179
        %v2939 = vpop.f32.mrb[0].mxu0
        %v2940 = vadd.f32 0.0, %v2939
        %v2941 = vpop.f32.mrb[0].mxu0
        %v2942 = vadd.f32 0.0, %v2941
        %2943 = vmatprep.mubr.f32.mxu0 0.0
        %2944 = vmatmul.mubr.f32.gmra.mrb[0].mxu0 %v2182
        %v2945 = vpop.f32.mrb[0].mxu0
        %v2946 = vadd.f32 0.0, %v2945
        %v2947 = vpop.f32.mrb[0].mxu0
        %v2948 = vadd.f32 0.0, %v2947
        %2949 = vmatprep.mubr.f32.mxu0 0.0
        %2950 = vmatmul.mubr.f32.gmra.mrb[0].mxu0 %v2185
        %v2951 = vpop.f32.mrb[0].mxu0
        %v2952 = vadd.f32 0.0, %v2951
        %v2953 = vpop.f32.mrb[0].mxu0
        %v2954 = vadd.f32 0.0, %v2953
        %2955 = vmatprep.mubr.f32.mxu0 0.0
        %2956 = vmatmul.mubr.f32.gmra.mrb[0].mxu0 %v2188
        %v2957 = vpop.f32.mrb[0].mxu0
        %v2958 = vadd.f32 0.0, %v2957
        %v2959 = vpop.f32.mrb[0].mxu0
        %v2960 = vadd.f32 0.0, %v2959
        %2961 = vmatprep.mubr.f32.mxu0 0.0
        %2962 = vmatmul.mubr.f32.gmra.mrb[0].mxu0 %v2191
        %v2963 = vpop.f32.mrb[0].mxu0
        %v2964 = vadd.f32 0.0, %v2963
        %v2965 = vpop.f32.mrb[0].mxu0
        %v2966 = vadd.f32 0.0, %v2965
        %2967 = vmatprep.mubr.f32.mxu0 0.0
        %2968 = vmatmul.mubr.f32.gmra.mrb[0].mxu0 %v2194
        %v2969 = vpop.f32.mrb[0].mxu0
        %v2970 = vadd.f32 0.0, %v2969
        %v2971 = vpop.f32.mrb[0].mxu0
        %v2972 = vadd.f32 0.0, %v2971
        %2973 = vmatprep.mubr.f32.mxu0 0.0
        %2974 = vmatmul.mubr.f32.gmra.mrb[0].mxu0 %v2197
        %v2975 = vpop.f32.mrb[0].mxu0
        %v2976 = vadd.f32 0.0, %v2975
        %v2977 = vpop.f32.mrb[0].mxu0
        %v2978 = vadd.f32 0.0, %v2977
        %2979 = vmatprep.mubr.f32.mxu0 0.0
        %2980 = vmatmul.mubr.f32.gmra.mrb[0].mxu0 %v2200
        %v2981 = vpop.f32.mrb[0].mxu0
        %v2982 = vadd.f32 0.0, %v2981
        %v2983 = vpop.f32.mrb[0].mxu0
        %v2984 = vadd.f32 0.0, %v2983
        %2985 = vmatprep.mubr.f32.mxu0 0.0
        %2986 = vmatmul.mubr.f32.gmra.mrb[0].mxu0 %v2203
        %v2987 = vpop.f32.mrb[0].mxu0
        %v2988 = vadd.f32 0.0, %v2987
        %v2989 = vpop.f32.mrb[0].mxu0
        %v2990 = vadd.f32 0.0, %v2989
        %2991 = vmatprep.mubr.f32.mxu0 0.0
        %2992 = vmatmul.mubr.f32.gmra.mrb[0].mxu0 %v2206
        %v2993 = vpop.f32.mrb[0].mxu0
        %v2994 = vadd.f32 0.0, %v2993
        %v2995 = vpop.f32.mrb[0].mxu0
        %v2996 = vadd.f32 0.0, %v2995
        %2997 = vmatprep.mubr.f32.mxu0 0.0
        %2998 = vmatmul.mubr.f32.gmra.mrb[0].mxu0 %v2209
        %v2999 = vpop.f32.mrb[0].mxu0
        %v3000 = vadd.f32 0.0, %v2999
        %v3001 = vpop.f32.mrb[0].mxu0
        %v3002 = vadd.f32 0.0, %v3001
        %3003 = vmatprep.mubr.f32.mxu0 0.0
        %3004 = vmatmul.mubr.f32.gmra.mrb[0].mxu0 %v2212
        %v3005 = vpop.f32.mrb[0].mxu0
        %v3006 = vadd.f32 0.0, %v3005
        %v3007 = vpop.f32.mrb[0].mxu0
        %v3008 = vadd.f32 0.0, %v3007
        %3009 = vmatprep.mubr.f32.mxu0 0.0
        %3010 = vmatmul.mubr.f32.gmra.mrb[0].mxu0 %v2215
        %v3011 = vpop.f32.mrb[0].mxu0
        %v3012 = vadd.f32 0.0, %v3011
        %v3013 = vpop.f32.mrb[0].mxu0
        %v3014 = vadd.f32 0.0, %v3013
        %3015 = vmatprep.mubr.f32.mxu0 0.0
        %3016 = vmatmul.mubr.f32.gmra.mrb[0].mxu0 %v2218
        %v3017 = vpop.f32.mrb[0].mxu0
        %v3018 = vadd.f32 0.0, %v3017
        %v3019 = vpop.f32.mrb[0].mxu0
        %v3020 = vadd.f32 0.0, %v3019
        %3021 = vmatprep.mubr.f32.mxu0 0.0
        %3022 = vmatmul.mubr.f32.gmra.mrb[0].mxu0 %v2221
        %v3023 = vpop.f32.mrb[0].mxu0
        %v3024 = vadd.f32 0.0, %v3023
        %v3025 = vpop.f32.mrb[0].mxu0
        %v3026 = vadd.f32 0.0, %v3025
        %3027 = vmatprep.mubr.f32.mxu0 0.0
        %3028 = vmatmul.mubr.f32.gmra.mrb[0].mxu0 %v2224
        %v3029 = vpop.f32.mrb[0].mxu0
        %v3030 = vadd.f32 0.0, %v3029
        %v3031 = vpop.f32.mrb[0].mxu0
        %v3032 = vadd.f32 0.0, %v3031
        %3033 = vmatprep.mubr.f32.mxu0 0.0
        %3034 = vmatmul.mubr.f32.gmra.mrb[0].mxu0 %v2227
        %v3035 = vpop.f32.mrb[0].mxu0
        %v3036 = vadd.f32 0.0, %v3035
        %v3037 = vpop.f32.mrb[0].mxu0
        %v3038 = vadd.f32 0.0, %v3037
        %3039 = vmatprep.mubr.f32.mxu0 0.0
        %3040 = vmatmul.mubr.f32.gmra.mrb[0].mxu0 %v2230
        %v3041 = vpop.f32.mrb[0].mxu0
        %v3042 = vadd.f32 0.0, %v3041
        %v3043 = vpop.f32.mrb[0].mxu0
        %v3044 = vadd.f32 0.0, %v3043
        %3045 = vmatprep.mubr.f32.mxu0 0.0
        %3046 = vmatmul.mubr.f32.gmra.mrb[0].mxu0 %v2233
        %v3047 = vpop.f32.mrb[0].mxu0
        %v3048 = vadd.f32 0.0, %v3047
        %v3049 = vpop.f32.mrb[0].mxu0
        %v3050 = vadd.f32 0.0, %v3049
        %3051 = vmatprep.mubr.f32.mxu0 0.0
        %3052 = vmatmul.mubr.f32.gmra.mrb[0].mxu0 %v2236
        %v3053 = vpop.f32.mrb[0].mxu0
        %v3054 = vadd.f32 0.0, %v3053
        %v3055 = vpop.f32.mrb[0].mxu0
        %v3056 = vadd.f32 0.0, %v3055
        %3057 = vmatprep.mubr.f32.mxu0 0.0
        %3058 = vmatmul.mubr.f32.gmra.mrb[0].mxu0 %v2239
        %v3059 = vpop.f32.mrb[0].mxu0
        %v3060 = vadd.f32 0.0, %v3059
        %v3061 = vpop.f32.mrb[0].mxu0
        %v3062 = vadd.f32 0.0, %v3061
        %3063 = vmatprep.mubr.f32.mxu0 0.0
        %3064 = vmatmul.mubr.f32.gmra.mrb[0].mxu0 %v2242
        %v3065 = vpop.f32.mrb[0].mxu0
        %v3066 = vadd.f32 0.0, %v3065
        %v3067 = vpop.f32.mrb[0].mxu0
        %v3068 = vadd.f32 0.0, %v3067
        %3069 = vmatprep.mubr.f32.mxu0 0.0
        %3070 = vmatmul.mubr.f32.gmra.mrb[0].mxu0 %v2245
        %v3071 = vpop.f32.mrb[0].mxu0
        %v3072 = vadd.f32 0.0, %v3071
        %v3073 = vpop.f32.mrb[0].mxu0
        %v3074 = vadd.f32 0.0, %v3073
        %3075 = vmatprep.mubr.f32.mxu0 0.0
        %3076 = vmatmul.mubr.f32.gmra.mrb[0].mxu0 %v2248
        %v3077 = vpop.f32.mrb[0].mxu0
        %v3078 = vadd.f32 0.0, %v3077
        %v3079 = vpop.f32.mrb[0].mxu0
        %v3080 = vadd.f32 0.0, %v3079
        %3081 = vmatprep.mubr.f32.mxu0 0.0
        %3082 = vmatmul.mubr.f32.gmra.mrb[0].mxu0 %v2251
        %v3083 = vpop.f32.mrb[0].mxu0
        %v3084 = vadd.f32 0.0, %v3083
        %v3085 = vpop.f32.mrb[0].mxu0
        %v3086 = vadd.f32 0.0, %v3085
        %3087 = vmatprep.mubr.f32.mxu0 0.0
        %3088 = vmatmul.mubr.f32.gmra.mrb[0].mxu0 %v2254
        %v3089 = vpop.f32.mrb[0].mxu0
        %v3090 = vadd.f32 0.0, %v3089
        %v3091 = vpop.f32.mrb[0].mxu0
        %v3092 = vadd.f32 0.0, %v3091
        %3093 = vmatprep.mubr.f32.mxu0 0.0
        %3094 = vmatmul.mubr.f32.gmra.mrb[0].mxu0 %v2257
        %v3095 = vpop.f32.mrb[0].mxu0
        %v3096 = vadd.f32 0.0, %v3095
        %v3097 = vpop.f32.mrb[0].mxu0
        %v3098 = vadd.f32 0.0, %v3097
        %3099 = vmatprep.mubr.f32.mxu0 0.0
        %3100 = vmatmul.mubr.f32.gmra.mrb[0].mxu0 %v2260
        %v3101 = vpop.f32.mrb[0].mxu0
        %v3102 = vadd.f32 0.0, %v3101
        %v3103 = vpop.f32.mrb[0].mxu0
        %v3104 = vadd.f32 0.0, %v3103
        %3105 = vmatprep.mubr.f32.mxu0 0.0
        %3106 = vmatmul.mubr.f32.gmra.mrb[0].mxu0 %v2263
        %v3107 = vpop.f32.mrb[0].mxu0
        %v3108 = vadd.f32 0.0, %v3107
        %v3109 = vpop.f32.mrb[0].mxu0
        %v3110 = vadd.f32 0.0, %v3109
        %3111 = vmatprep.mubr.f32.mxu0 0.0
        %3112 = vmatmul.mubr.f32.gmra.mrb[0].mxu0 %v2266
        %v3113 = vpop.f32.mrb[0].mxu0
        %v3114 = vadd.f32 0.0, %v3113
        %v3115 = vpop.f32.mrb[0].mxu0
        %v3116 = vadd.f32 0.0, %v3115
        %3117 = vmatprep.mubr.f32.mxu0 0.0
        %3118 = vmatmul.mubr.f32.gmra.mrb[0].mxu0 %v2269
        %v3119 = vpop.f32.mrb[0].mxu0
        %v3120 = vadd.f32 0.0, %v3119
        %v3121 = vpop.f32.mrb[0].mxu0
        %v3122 = vadd.f32 0.0, %v3121
        %3123 = vmatprep.mubr.f32.mxu0 0.0
        %3124 = vmatmul.mubr.f32.gmra.mrb[0].mxu0 %v2272
        %v3125 = vpop.f32.mrb[0].mxu0
        %v3126 = vadd.f32 0.0, %v3125
        %v3127 = vpop.f32.mrb[0].mxu0
        %v3128 = vadd.f32 0.0, %v3127
        %3129 = vmatprep.mubr.f32.mxu0 0.0
        %3130 = vmatmul.mubr.f32.gmra.mrb[0].mxu0 %v2275
        %v3131 = vpop.f32.mrb[0].mxu0
        %v3132 = vadd.f32 0.0, %v3131
        %v3133 = vpop.f32.mrb[0].mxu0
        %v3134 = vadd.f32 0.0, %v3133
        %3135 = vmatprep.mubr.f32.mxu0 0.0
        %3136 = vmatmul.mubr.f32.gmra.mrb[0].mxu0 %v2278
        %v3137 = vpop.f32.mrb[0].mxu0
        %v3138 = vadd.f32 0.0, %v3137
        %v3139 = vpop.f32.mrb[0].mxu0
        %v3140 = vadd.f32 0.0, %v3139
        %3141 = vmatprep.mubr.f32.mxu0 0.0
        %3142 = vmatmul.mubr.f32.gmra.mrb[0].mxu0 %v2281
        %v3143 = vpop.f32.mrb[0].mxu0
        %v3144 = vadd.f32 0.0, %v3143
        %v3145 = vpop.f32.mrb[0].mxu0
        %v3146 = vadd.f32 0.0, %v3145
        %3147 = vmatprep.mubr.f32.mxu0 0.0
        %3148 = vmatmul.mubr.f32.gmra.mrb[0].mxu0 %v2284
        %v3149 = vpop.f32.mrb[0].mxu0
        %v3150 = vadd.f32 0.0, %v3149
        %v3151 = vpop.f32.mrb[0].mxu0
        %v3152 = vadd.f32 0.0, %v3151
        %3153 = vmatprep.mubr.f32.mxu0 0.0
        %3154 = vmatmul.mubr.f32.gmra.mrb[0].mxu0 %v2287
        %v3155 = vpop.f32.mrb[0].mxu0
        %v3156 = vadd.f32 0.0, %v3155
        %v3157 = vpop.f32.mrb[0].mxu0
        %v3158 = vadd.f32 0.0, %v3157
        %3159 = vmatprep.mubr.f32.mxu0 0.0
        %3160 = vmatmul.mubr.f32.gmra.mrb[0].mxu0 %v2290
        %v3161 = vpop.f32.mrb[0].mxu0
        %v3162 = vadd.f32 0.0, %v3161
        %v3163 = vpop.f32.mrb[0].mxu0
        %v3164 = vadd.f32 0.0, %v3163
        %3165 = vmatprep.mubr.f32.mxu0 0.0
        %3166 = vmatmul.mubr.f32.gmra.mrb[0].mxu0 %v2293
        %v3167 = vpop.f32.mrb[0].mxu0
        %v3168 = vadd.f32 0.0, %v3167
        %v3169 = vpop.f32.mrb[0].mxu0
        %v3170 = vadd.f32 0.0, %v3169
        %3171 = vmatprep.mubr.f32.mxu0 0.0
        %3172 = vmatmul.mubr.f32.gmra.mrb[0].mxu0 %v2296
        %v3173 = vpop.f32.mrb[0].mxu0
        %v3174 = vadd.f32 0.0, %v3173
        %v3175 = vpop.f32.mrb[0].mxu0
        %v3176 = vadd.f32 0.0, %v3175
        %3177 = vmatprep.mubr.f32.mxu0 0.0
        %3178 = vmatmul.mubr.f32.gmra.mrb[0].mxu0 %v2299
        %v3179 = vpop.f32.mrb[0].mxu0
        %v3180 = vadd.f32 0.0, %v3179
        %v3181 = vpop.f32.mrb[0].mxu0
        %v3182 = vadd.f32 0.0, %v3181
        %3183 = vmatprep.mubr.f32.mxu0 0.0
        %3184 = vmatmul.mubr.f32.gmra.mrb[0].mxu0 %v2302
        %v3185 = vpop.f32.mrb[0].mxu0
        %v3186 = vadd.f32 0.0, %v3185
        %v3187 = vpop.f32.mrb[0].mxu0
        %v3188 = vadd.f32 0.0, %v3187
        %3189 = vmatprep.mubr.f32.mxu0 0.0
        %3190 = vmatmul.mubr.f32.gmra.mrb[0].mxu0 %v2305
        %v3191 = vpop.f32.mrb[0].mxu0
        %v3192 = vadd.f32 0.0, %v3191
        %v3193 = vpop.f32.mrb[0].mxu0
        %v3194 = vadd.f32 0.0, %v3193
        %3195 = vmatprep.mubr.f32.mxu0 0.0
        %3196 = vmatmul.mubr.f32.gmra.mrb[0].mxu0 %v2308
        %v3197 = vpop.f32.mrb[0].mxu0
        %v3198 = vadd.f32 0.0, %v3197
        %v3199 = vpop.f32.mrb[0].mxu0
        %v3200 = vadd.f32 0.0, %v3199
        %3201 = vmatprep.mubr.f32.mxu0 0.0
        %3202 = vmatmul.mubr.f32.gmra.mrb[0].mxu0 %v2311
        %v3203 = vpop.f32.mrb[0].mxu0
        %v3204 = vadd.f32 0.0, %v3203
        %v3205 = vpop.f32.mrb[0].mxu0
        %v3206 = vadd.f32 0.0, %v3205
        %3207 = vmatprep.mubr.f32.mxu0 0.0
        %3208 = vmatmul.mubr.f32.gmra.mrb[0].mxu0 %v2314
        %v3209 = vpop.f32.mrb[0].mxu0
        %v3210 = vadd.f32 0.0, %v3209
        %v3211 = vpop.f32.mrb[0].mxu0
        %v3212 = vadd.f32 0.0, %v3211
        %3213 = vdwg.mxu0
        %s3214 = scalar_lea.vmem %s261, 2048 [#allocation2]
        %3215 = vst [vmem:[%s3214] sm:$0xff] %v2383
        %3216 = vst [vmem:[%s3214 + $0x8] sm:$0xff] %v2385
        %3217 = vst [vmem:[%s3214 + $0x10] sm:$0xff] %v2832
        %3218 = vst [vmem:[%s3214 + $0x18] sm:$0xff] %v2834
        %3219 = vst [vmem:[%s3214 + $0x20] sm:$0xff] %v2389
        %3220 = vst [vmem:[%s3214 + $0x28] sm:$0xff] %v2391
        %3221 = vst [vmem:[%s3214 + $0x30] sm:$0xff] %v2838
        %3222 = vst [vmem:[%s3214 + $0x38] sm:$0xff] %v2840
        %3223 = vst [vmem:[%s3214 + $0x40] sm:$0xff] %v2395
        %3224 = vst [vmem:[%s3214 + $0x48] sm:$0xff] %v2397
        %3225 = vst [vmem:[%s3214 + $0x50] sm:$0xff] %v2844
        %3226 = vst [vmem:[%s3214 + $0x58] sm:$0xff] %v2846
        %3227 = vst [vmem:[%s3214 + $0x60] sm:$0xff] %v2401
        %3228 = vst [vmem:[%s3214 + $0x68] sm:$0xff] %v2403
        %3229 = vst [vmem:[%s3214 + $0x70] sm:$0xff] %v2850
        %3230 = vst [vmem:[%s3214 + $0x78] sm:$0xff] %v2852
        %3231 = vst [vmem:[%s3214 + $0x80] sm:$0xff] %v2407
        %3232 = vst [vmem:[%s3214 + $0x88] sm:$0xff] %v2409
        %3233 = vst [vmem:[%s3214 + $0x90] sm:$0xff] %v2856
        %3234 = vst [vmem:[%s3214 + $0x98] sm:$0xff] %v2858
        %3235 = vst [vmem:[%s3214 + $0xa0] sm:$0xff] %v2413
        %3236 = vst [vmem:[%s3214 + $0xa8] sm:$0xff] %v2415
        %3237 = vst [vmem:[%s3214 + $0xb0] sm:$0xff] %v2862
        %3238 = vst [vmem:[%s3214 + $0xb8] sm:$0xff] %v2864
        %3239 = vst [vmem:[%s3214 + $0xc0] sm:$0xff] %v2419
        %3240 = vst [vmem:[%s3214 + $0xc8] sm:$0xff] %v2421
        %3241 = vst [vmem:[%s3214 + $0xd0] sm:$0xff] %v2868
        %3242 = vst [vmem:[%s3214 + $0xd8] sm:$0xff] %v2870
        %3243 = vst [vmem:[%s3214 + $0xe0] sm:$0xff] %v2425
        %3244 = vst [vmem:[%s3214 + $0xe8] sm:$0xff] %v2427
        %3245 = vst [vmem:[%s3214 + $0xf0] sm:$0xff] %v2874
        %3246 = vst [vmem:[%s3214 + $0xf8] sm:$0xff] %v2876
        %3247 = vst [vmem:[%s3214 + $0x100] sm:$0xff] %v2431
        %3248 = vst [vmem:[%s3214 + $0x108] sm:$0xff] %v2433
        %3249 = vst [vmem:[%s3214 + $0x110] sm:$0xff] %v2880
        %3250 = vst [vmem:[%s3214 + $0x118] sm:$0xff] %v2882
        %3251 = vst [vmem:[%s3214 + $0x120] sm:$0xff] %v2437
        %3252 = vst [vmem:[%s3214 + $0x128] sm:$0xff] %v2439
        %3253 = vst [vmem:[%s3214 + $0x130] sm:$0xff] %v2886
        %3254 = vst [vmem:[%s3214 + $0x138] sm:$0xff] %v2888
        %3255 = vst [vmem:[%s3214 + $0x140] sm:$0xff] %v2443
        %3256 = vst [vmem:[%s3214 + $0x148] sm:$0xff] %v2445
        %3257 = vst [vmem:[%s3214 + $0x150] sm:$0xff] %v2892
        %3258 = vst [vmem:[%s3214 + $0x158] sm:$0xff] %v2894
        %3259 = vst [vmem:[%s3214 + $0x160] sm:$0xff] %v2449
        %3260 = vst [vmem:[%s3214 + $0x168] sm:$0xff] %v2451
        %3261 = vst [vmem:[%s3214 + $0x170] sm:$0xff] %v2898
        %3262 = vst [vmem:[%s3214 + $0x178] sm:$0xff] %v2900
        %3263 = vst [vmem:[%s3214 + $0x180] sm:$0xff] %v2455
        %3264 = vst [vmem:[%s3214 + $0x188] sm:$0xff] %v2457
        %3265 = vst [vmem:[%s3214 + $0x190] sm:$0xff] %v2904
        %3266 = vst [vmem:[%s3214 + $0x198] sm:$0xff] %v2906
        %3267 = vst [vmem:[%s3214 + $0x1a0] sm:$0xff] %v2461
        %3268 = vst [vmem:[%s3214 + $0x1a8] sm:$0xff] %v2463
        %3269 = vst [vmem:[%s3214 + $0x1b0] sm:$0xff] %v2910
        %3270 = vst [vmem:[%s3214 + $0x1b8] sm:$0xff] %v2912
        %3271 = vst [vmem:[%s3214 + $0x1c0] sm:$0xff] %v2467
        %3272 = vst [vmem:[%s3214 + $0x1c8] sm:$0xff] %v2469
        %3273 = vst [vmem:[%s3214 + $0x1d0] sm:$0xff] %v2916
        %3274 = vst [vmem:[%s3214 + $0x1d8] sm:$0xff] %v2918
        %3275 = vst [vmem:[%s3214 + $0x1e0] sm:$0xff] %v2473
        %3276 = vst [vmem:[%s3214 + $0x1e8] sm:$0xff] %v2475
        %3277 = vst [vmem:[%s3214 + $0x1f0] sm:$0xff] %v2922
        %3278 = vst [vmem:[%s3214 + $0x1f8] sm:$0xff] %v2924
        %3279 = vst [vmem:[%s3214 + $0x200] sm:$0xff] %v2479
        %3280 = vst [vmem:[%s3214 + $0x208] sm:$0xff] %v2481
        %3281 = vst [vmem:[%s3214 + $0x210] sm:$0xff] %v2928
        %3282 = vst [vmem:[%s3214 + $0x218] sm:$0xff] %v2930
        %3283 = vst [vmem:[%s3214 + $0x220] sm:$0xff] %v2485
        %3284 = vst [vmem:[%s3214 + $0x228] sm:$0xff] %v2487
        %3285 = vst [vmem:[%s3214 + $0x230] sm:$0xff] %v2934
        %3286 = vst [vmem:[%s3214 + $0x238] sm:$0xff] %v2936
        %3287 = vst [vmem:[%s3214 + $0x240] sm:$0xff] %v2491
        %3288 = vst [vmem:[%s3214 + $0x248] sm:$0xff] %v2493
        %3289 = vst [vmem:[%s3214 + $0x250] sm:$0xff] %v2940
        %3290 = vst [vmem:[%s3214 + $0x258] sm:$0xff] %v2942
        %3291 = vst [vmem:[%s3214 + $0x260] sm:$0xff] %v2497
        %3292 = vst [vmem:[%s3214 + $0x268] sm:$0xff] %v2499
        %3293 = vst [vmem:[%s3214 + $0x270] sm:$0xff] %v2946
        %3294 = vst [vmem:[%s3214 + $0x278] sm:$0xff] %v2948
        %3295 = vst [vmem:[%s3214 + $0x280] sm:$0xff] %v2503
        %3296 = vst [vmem:[%s3214 + $0x288] sm:$0xff] %v2505
        %3297 = vst [vmem:[%s3214 + $0x290] sm:$0xff] %v2952
        %3298 = vst [vmem:[%s3214 + $0x298] sm:$0xff] %v2954
        %3299 = vst [vmem:[%s3214 + $0x2a0] sm:$0xff] %v2509
        %3300 = vst [vmem:[%s3214 + $0x2a8] sm:$0xff] %v2511
        %3301 = vst [vmem:[%s3214 + $0x2b0] sm:$0xff] %v2958
        %3302 = vst [vmem:[%s3214 + $0x2b8] sm:$0xff] %v2960
        %3303 = vst [vmem:[%s3214 + $0x2c0] sm:$0xff] %v2515
        %3304 = vst [vmem:[%s3214 + $0x2c8] sm:$0xff] %v2517
        %3305 = vst [vmem:[%s3214 + $0x2d0] sm:$0xff] %v2964
        %3306 = vst [vmem:[%s3214 + $0x2d8] sm:$0xff] %v2966
        %3307 = vst [vmem:[%s3214 + $0x2e0] sm:$0xff] %v2521
        %3308 = vst [vmem:[%s3214 + $0x2e8] sm:$0xff] %v2523
        %3309 = vst [vmem:[%s3214 + $0x2f0] sm:$0xff] %v2970
        %3310 = vst [vmem:[%s3214 + $0x2f8] sm:$0xff] %v2972
        %3311 = vst [vmem:[%s3214 + $0x300] sm:$0xff] %v2527
        %3312 = vst [vmem:[%s3214 + $0x308] sm:$0xff] %v2529
        %3313 = vst [vmem:[%s3214 + $0x310] sm:$0xff] %v2976
        %3314 = vst [vmem:[%s3214 + $0x318] sm:$0xff] %v2978
        %3315 = vst [vmem:[%s3214 + $0x320] sm:$0xff] %v2533
        %3316 = vst [vmem:[%s3214 + $0x328] sm:$0xff] %v2535
        %3317 = vst [vmem:[%s3214 + $0x330] sm:$0xff] %v2982
        %3318 = vst [vmem:[%s3214 + $0x338] sm:$0xff] %v2984
        %3319 = vst [vmem:[%s3214 + $0x340] sm:$0xff] %v2539
        %3320 = vst [vmem:[%s3214 + $0x348] sm:$0xff] %v2541
        %3321 = vst [vmem:[%s3214 + $0x350] sm:$0xff] %v2988
        %3322 = vst [vmem:[%s3214 + $0x358] sm:$0xff] %v2990
        %3323 = vst [vmem:[%s3214 + $0x360] sm:$0xff] %v2545
        %3324 = vst [vmem:[%s3214 + $0x368] sm:$0xff] %v2547
        %3325 = vst [vmem:[%s3214 + $0x370] sm:$0xff] %v2994
        %3326 = vst [vmem:[%s3214 + $0x378] sm:$0xff] %v2996
        %3327 = vst [vmem:[%s3214 + $0x380] sm:$0xff] %v2551
        %3328 = vst [vmem:[%s3214 + $0x388] sm:$0xff] %v2553
        %3329 = vst [vmem:[%s3214 + $0x390] sm:$0xff] %v3000
        %3330 = vst [vmem:[%s3214 + $0x398] sm:$0xff] %v3002
        %3331 = vst [vmem:[%s3214 + $0x3a0] sm:$0xff] %v2557
        %3332 = vst [vmem:[%s3214 + $0x3a8] sm:$0xff] %v2559
        %3333 = vst [vmem:[%s3214 + $0x3b0] sm:$0xff] %v3006
        %3334 = vst [vmem:[%s3214 + $0x3b8] sm:$0xff] %v3008
        %3335 = vst [vmem:[%s3214 + $0x3c0] sm:$0xff] %v2563
        %3336 = vst [vmem:[%s3214 + $0x3c8] sm:$0xff] %v2565
        %3337 = vst [vmem:[%s3214 + $0x3d0] sm:$0xff] %v3012
        %3338 = vst [vmem:[%s3214 + $0x3d8] sm:$0xff] %v3014
        %3339 = vst [vmem:[%s3214 + $0x3e0] sm:$0xff] %v2569
        %3340 = vst [vmem:[%s3214 + $0x3e8] sm:$0xff] %v2571
        %3341 = vst [vmem:[%s3214 + $0x3f0] sm:$0xff] %v3018
        %3342 = vst [vmem:[%s3214 + $0x3f8] sm:$0xff] %v3020
        %3343 = vst [vmem:[%s3214 + $0x400] sm:$0xff] %v2575
        %3344 = vst [vmem:[%s3214 + $0x408] sm:$0xff] %v2577
        %3345 = vst [vmem:[%s3214 + $0x410] sm:$0xff] %v3024
        %3346 = vst [vmem:[%s3214 + $0x418] sm:$0xff] %v3026
        %3347 = vst [vmem:[%s3214 + $0x420] sm:$0xff] %v2581
        %3348 = vst [vmem:[%s3214 + $0x428] sm:$0xff] %v2583
        %3349 = vst [vmem:[%s3214 + $0x430] sm:$0xff] %v3030
        %3350 = vst [vmem:[%s3214 + $0x438] sm:$0xff] %v3032
        %3351 = vst [vmem:[%s3214 + $0x440] sm:$0xff] %v2587
        %3352 = vst [vmem:[%s3214 + $0x448] sm:$0xff] %v2589
        %3353 = vst [vmem:[%s3214 + $0x450] sm:$0xff] %v3036
        %3354 = vst [vmem:[%s3214 + $0x458] sm:$0xff] %v3038
        %3355 = vst [vmem:[%s3214 + $0x460] sm:$0xff] %v2593
        %3356 = vst [vmem:[%s3214 + $0x468] sm:$0xff] %v2595
        %3357 = vst [vmem:[%s3214 + $0x470] sm:$0xff] %v3042
        %3358 = vst [vmem:[%s3214 + $0x478] sm:$0xff] %v3044
        %3359 = vst [vmem:[%s3214 + $0x480] sm:$0xff] %v2599
        %3360 = vst [vmem:[%s3214 + $0x488] sm:$0xff] %v2601
        %3361 = vst [vmem:[%s3214 + $0x490] sm:$0xff] %v3048
        %3362 = vst [vmem:[%s3214 + $0x498] sm:$0xff] %v3050
        %3363 = vst [vmem:[%s3214 + $0x4a0] sm:$0xff] %v2605
        %3364 = vst [vmem:[%s3214 + $0x4a8] sm:$0xff] %v2607
        %3365 = vst [vmem:[%s3214 + $0x4b0] sm:$0xff] %v3054
        %3366 = vst [vmem:[%s3214 + $0x4b8] sm:$0xff] %v3056
        %3367 = vst [vmem:[%s3214 + $0x4c0] sm:$0xff] %v2611
        %3368 = vst [vmem:[%s3214 + $0x4c8] sm:$0xff] %v2613
        %3369 = vst [vmem:[%s3214 + $0x4d0] sm:$0xff] %v3060
        %3370 = vst [vmem:[%s3214 + $0x4d8] sm:$0xff] %v3062
        %3371 = vst [vmem:[%s3214 + $0x4e0] sm:$0xff] %v2617
        %3372 = vst [vmem:[%s3214 + $0x4e8] sm:$0xff] %v2619
        %3373 = vst [vmem:[%s3214 + $0x4f0] sm:$0xff] %v3066
        %3374 = vst [vmem:[%s3214 + $0x4f8] sm:$0xff] %v3068
        %3375 = vst [vmem:[%s3214 + $0x500] sm:$0xff] %v2623
        %3376 = vst [vmem:[%s3214 + $0x508] sm:$0xff] %v2625
        %3377 = vst [vmem:[%s3214 + $0x510] sm:$0xff] %v3072
        %3378 = vst [vmem:[%s3214 + $0x518] sm:$0xff] %v3074
        %3379 = vst [vmem:[%s3214 + $0x520] sm:$0xff] %v2629
        %3380 = vst [vmem:[%s3214 + $0x528] sm:$0xff] %v2631
        %3381 = vst [vmem:[%s3214 + $0x530] sm:$0xff] %v3078
        %3382 = vst [vmem:[%s3214 + $0x538] sm:$0xff] %v3080
        %3383 = vst [vmem:[%s3214 + $0x540] sm:$0xff] %v2635
        %3384 = vst [vmem:[%s3214 + $0x548] sm:$0xff] %v2637
        %3385 = vst [vmem:[%s3214 + $0x550] sm:$0xff] %v3084
        %3386 = vst [vmem:[%s3214 + $0x558] sm:$0xff] %v3086
        %3387 = vst [vmem:[%s3214 + $0x560] sm:$0xff] %v2641
        %3388 = vst [vmem:[%s3214 + $0x568] sm:$0xff] %v2643
        %3389 = vst [vmem:[%s3214 + $0x570] sm:$0xff] %v3090
        %3390 = vst [vmem:[%s3214 + $0x578] sm:$0xff] %v3092
        %3391 = vst [vmem:[%s3214 + $0x580] sm:$0xff] %v2647
        %3392 = vst [vmem:[%s3214 + $0x588] sm:$0xff] %v2649
        %3393 = vst [vmem:[%s3214 + $0x590] sm:$0xff] %v3096
        %3394 = vst [vmem:[%s3214 + $0x598] sm:$0xff] %v3098
        %3395 = vst [vmem:[%s3214 + $0x5a0] sm:$0xff] %v2653
        %3396 = vst [vmem:[%s3214 + $0x5a8] sm:$0xff] %v2655
        %3397 = vst [vmem:[%s3214 + $0x5b0] sm:$0xff] %v3102
        %3398 = vst [vmem:[%s3214 + $0x5b8] sm:$0xff] %v3104
        %3399 = vst [vmem:[%s3214 + $0x5c0] sm:$0xff] %v2659
        %3400 = vst [vmem:[%s3214 + $0x5c8] sm:$0xff] %v2661
        %3401 = vst [vmem:[%s3214 + $0x5d0] sm:$0xff] %v3108
        %3402 = vst [vmem:[%s3214 + $0x5d8] sm:$0xff] %v3110
        %3403 = vst [vmem:[%s3214 + $0x5e0] sm:$0xff] %v2665
        %3404 = vst [vmem:[%s3214 + $0x5e8] sm:$0xff] %v2667
        %3405 = vst [vmem:[%s3214 + $0x5f0] sm:$0xff] %v3114
        %3406 = vst [vmem:[%s3214 + $0x5f8] sm:$0xff] %v3116
        %3407 = vst [vmem:[%s3214 + $0x600] sm:$0xff] %v2671
        %3408 = vst [vmem:[%s3214 + $0x608] sm:$0xff] %v2673
        %3409 = vst [vmem:[%s3214 + $0x610] sm:$0xff] %v3120
        %3410 = vst [vmem:[%s3214 + $0x618] sm:$0xff] %v3122
        %3411 = vst [vmem:[%s3214 + $0x620] sm:$0xff] %v2677
        %3412 = vst [vmem:[%s3214 + $0x628] sm:$0xff] %v2679
        %3413 = vst [vmem:[%s3214 + $0x630] sm:$0xff] %v3126
        %3414 = vst [vmem:[%s3214 + $0x638] sm:$0xff] %v3128
        %3415 = vst [vmem:[%s3214 + $0x640] sm:$0xff] %v2683
        %3416 = vst [vmem:[%s3214 + $0x648] sm:$0xff] %v2685
        %3417 = vst [vmem:[%s3214 + $0x650] sm:$0xff] %v3132
        %3418 = vst [vmem:[%s3214 + $0x658] sm:$0xff] %v3134
        %3419 = vst [vmem:[%s3214 + $0x660] sm:$0xff] %v2689
        %3420 = vst [vmem:[%s3214 + $0x668] sm:$0xff] %v2691
        %3421 = vst [vmem:[%s3214 + $0x670] sm:$0xff] %v3138
        %3422 = vst [vmem:[%s3214 + $0x678] sm:$0xff] %v3140
        %3423 = vst [vmem:[%s3214 + $0x680] sm:$0xff] %v2695
        %3424 = vst [vmem:[%s3214 + $0x688] sm:$0xff] %v2697
        %3425 = vst [vmem:[%s3214 + $0x690] sm:$0xff] %v3144
        %3426 = vst [vmem:[%s3214 + $0x698] sm:$0xff] %v3146
        %3427 = vst [vmem:[%s3214 + $0x6a0] sm:$0xff] %v2701
        %3428 = vst [vmem:[%s3214 + $0x6a8] sm:$0xff] %v2703
        %3429 = vst [vmem:[%s3214 + $0x6b0] sm:$0xff] %v3150
        %3430 = vst [vmem:[%s3214 + $0x6b8] sm:$0xff] %v3152
        %3431 = vst [vmem:[%s3214 + $0x6c0] sm:$0xff] %v2707
        %3432 = vst [vmem:[%s3214 + $0x6c8] sm:$0xff] %v2709
        %3433 = vst [vmem:[%s3214 + $0x6d0] sm:$0xff] %v3156
        %3434 = vst [vmem:[%s3214 + $0x6d8] sm:$0xff] %v3158
        %3435 = vst [vmem:[%s3214 + $0x6e0] sm:$0xff] %v2713
        %3436 = vst [vmem:[%s3214 + $0x6e8] sm:$0xff] %v2715
        %3437 = vst [vmem:[%s3214 + $0x6f0] sm:$0xff] %v3162
        %3438 = vst [vmem:[%s3214 + $0x6f8] sm:$0xff] %v3164
        %3439 = vst [vmem:[%s3214 + $0x700] sm:$0xff] %v2719
        %3440 = vst [vmem:[%s3214 + $0x708] sm:$0xff] %v2721
        %3441 = vst [vmem:[%s3214 + $0x710] sm:$0xff] %v3168
        %3442 = vst [vmem:[%s3214 + $0x718] sm:$0xff] %v3170
        %3443 = vst [vmem:[%s3214 + $0x720] sm:$0xff] %v2725
        %3444 = vst [vmem:[%s3214 + $0x728] sm:$0xff] %v2727
        %3445 = vst [vmem:[%s3214 + $0x730] sm:$0xff] %v3174
        %3446 = vst [vmem:[%s3214 + $0x738] sm:$0xff] %v3176
        %3447 = vst [vmem:[%s3214 + $0x740] sm:$0xff] %v2731
        %3448 = vst [vmem:[%s3214 + $0x748] sm:$0xff] %v2733
        %3449 = vst [vmem:[%s3214 + $0x750] sm:$0xff] %v3180
        %3450 = vst [vmem:[%s3214 + $0x758] sm:$0xff] %v3182
        %3451 = vst [vmem:[%s3214 + $0x760] sm:$0xff] %v2737
        %3452 = vst [vmem:[%s3214 + $0x768] sm:$0xff] %v2739
        %3453 = vst [vmem:[%s3214 + $0x770] sm:$0xff] %v3186
        %3454 = vst [vmem:[%s3214 + $0x778] sm:$0xff] %v3188
        %3455 = vst [vmem:[%s3214 + $0x780] sm:$0xff] %v2743
        %3456 = vst [vmem:[%s3214 + $0x788] sm:$0xff] %v2745
        %3457 = vst [vmem:[%s3214 + $0x790] sm:$0xff] %v3192
        %3458 = vst [vmem:[%s3214 + $0x798] sm:$0xff] %v3194
        %3459 = vst [vmem:[%s3214 + $0x7a0] sm:$0xff] %v2749
        %3460 = vst [vmem:[%s3214 + $0x7a8] sm:$0xff] %v2751
        %3461 = vst [vmem:[%s3214 + $0x7b0] sm:$0xff] %v3198
        %3462 = vst [vmem:[%s3214 + $0x7b8] sm:$0xff] %v3200
        %3463 = vst [vmem:[%s3214 + $0x7c0] sm:$0xff] %v2755
        %3464 = vst [vmem:[%s3214 + $0x7c8] sm:$0xff] %v2757
        %3465 = vst [vmem:[%s3214 + $0x7d0] sm:$0xff] %v3204
        %3466 = vst [vmem:[%s3214 + $0x7d8] sm:$0xff] %v3206
        %3467 = vst [vmem:[%s3214 + $0x7e0] sm:$0xff] %v2761
        %3468 = vst [vmem:[%s3214 + $0x7e8] sm:$0xff] %v2763
        %3469 = vst [vmem:[%s3214 + $0x7f0] sm:$0xff] %v3210
        %3470 = vst [vmem:[%s3214 + $0x7f8] sm:$0xff] %v3212
        %v3471 = vld [vmem:[%s3] sm:$0xff]
        %v3472 = vld [vmem:[%s3 + $0x8] sm:$0xff]
        %v3473 = vld [vmem:[%s3 + $0x10] sm:$0xff]
        %v3474 = vld [vmem:[%s3 + $0x18] sm:$0xff]
        %v3475 = vld [vmem:[%s3 + $0x20] sm:$0xff]
        %v3476 = vld [vmem:[%s3 + $0x28] sm:$0xff]
        %v3477 = vld [vmem:[%s3 + $0x30] sm:$0xff]
        %v3478 = vld [vmem:[%s3 + $0x38] sm:$0xff]
        %v3479 = vld [vmem:[%s3 + $0x40] sm:$0xff]
        %v3480 = vld [vmem:[%s3 + $0x48] sm:$0xff]
        %v3481 = vld [vmem:[%s3 + $0x50] sm:$0xff]
        %v3482 = vld [vmem:[%s3 + $0x58] sm:$0xff]
        %v3483 = vld [vmem:[%s3 + $0x60] sm:$0xff]
        %v3484 = vld [vmem:[%s3 + $0x68] sm:$0xff]
        %v3485 = vld [vmem:[%s3 + $0x70] sm:$0xff]
        %v3486 = vld [vmem:[%s3 + $0x78] sm:$0xff]
        %v3487 = vld [vmem:[%s3 + $0x80] sm:$0xff]
        %v3488 = vld [vmem:[%s3 + $0x88] sm:$0xff]
        %v3489 = vld [vmem:[%s3 + $0x90] sm:$0xff]
        %v3490 = vld [vmem:[%s3 + $0x98] sm:$0xff]
        %v3491 = vld [vmem:[%s3 + $0xa0] sm:$0xff]
        %v3492 = vld [vmem:[%s3 + $0xa8] sm:$0xff]
        %v3493 = vld [vmem:[%s3 + $0xb0] sm:$0xff]
        %v3494 = vld [vmem:[%s3 + $0xb8] sm:$0xff]
        %v3495 = vld [vmem:[%s3 + $0xc0] sm:$0xff]
        %v3496 = vld [vmem:[%s3 + $0xc8] sm:$0xff]
        %v3497 = vld [vmem:[%s3 + $0xd0] sm:$0xff]
        %v3498 = vld [vmem:[%s3 + $0xd8] sm:$0xff]
        %v3499 = vld [vmem:[%s3 + $0xe0] sm:$0xff]
        %v3500 = vld [vmem:[%s3 + $0xe8] sm:$0xff]
        %v3501 = vld [vmem:[%s3 + $0xf0] sm:$0xff]
        %v3502 = vld [vmem:[%s3 + $0xf8] sm:$0xff]
        %v3503 = vld [vmem:[%s3 + $0x100] sm:$0xff]
        %v3504 = vld [vmem:[%s3 + $0x108] sm:$0xff]
        %v3505 = vld [vmem:[%s3 + $0x110] sm:$0xff]
        %v3506 = vld [vmem:[%s3 + $0x118] sm:$0xff]
        %v3507 = vld [vmem:[%s3 + $0x120] sm:$0xff]
        %v3508 = vld [vmem:[%s3 + $0x128] sm:$0xff]
        %v3509 = vld [vmem:[%s3 + $0x130] sm:$0xff]
        %v3510 = vld [vmem:[%s3 + $0x138] sm:$0xff]
        %v3511 = vld [vmem:[%s3 + $0x140] sm:$0xff]
        %v3512 = vld [vmem:[%s3 + $0x148] sm:$0xff]
        %v3513 = vld [vmem:[%s3 + $0x150] sm:$0xff]
        %v3514 = vld [vmem:[%s3 + $0x158] sm:$0xff]
        %v3515 = vld [vmem:[%s3 + $0x160] sm:$0xff]
        %v3516 = vld [vmem:[%s3 + $0x168] sm:$0xff]
        %v3517 = vld [vmem:[%s3 + $0x170] sm:$0xff]
        %v3518 = vld [vmem:[%s3 + $0x178] sm:$0xff]
        %v3519 = vld [vmem:[%s3 + $0x180] sm:$0xff]
        %v3520 = vld [vmem:[%s3 + $0x188] sm:$0xff]
        %v3521 = vld [vmem:[%s3 + $0x190] sm:$0xff]
        %v3522 = vld [vmem:[%s3 + $0x198] sm:$0xff]
        %v3523 = vld [vmem:[%s3 + $0x1a0] sm:$0xff]
        %v3524 = vld [vmem:[%s3 + $0x1a8] sm:$0xff]
        %v3525 = vld [vmem:[%s3 + $0x1b0] sm:$0xff]
        %v3526 = vld [vmem:[%s3 + $0x1b8] sm:$0xff]
        %v3527 = vld [vmem:[%s3 + $0x1c0] sm:$0xff]
        %v3528 = vld [vmem:[%s3 + $0x1c8] sm:$0xff]
        %v3529 = vld [vmem:[%s3 + $0x1d0] sm:$0xff]
        %v3530 = vld [vmem:[%s3 + $0x1d8] sm:$0xff]
        %v3531 = vld [vmem:[%s3 + $0x1e0] sm:$0xff]
        %v3532 = vld [vmem:[%s3 + $0x1e8] sm:$0xff]
        %v3533 = vld [vmem:[%s3 + $0x1f0] sm:$0xff]
        %v3534 = vld [vmem:[%s3 + $0x1f8] sm:$0xff]
        %v3536 = vsel %vm444, %v3471, 0
        %v3539 = vsel %vm444, %v3472, 0
        %v3542 = vsel %vm444, %v3473, 0
        %v3545 = vsel %vm444, %v3474, 0
        %v3548 = vsel %vm444, %v3475, 0
        %v3551 = vsel %vm444, %v3476, 0
        %v3554 = vsel %vm444, %v3477, 0
        %v3557 = vsel %vm444, %v3478, 0
        %v3560 = vsel %vm444, %v3479, 0
        %v3563 = vsel %vm444, %v3480, 0
        %v3566 = vsel %vm444, %v3481, 0
        %v3569 = vsel %vm444, %v3482, 0
        %v3572 = vsel %vm444, %v3483, 0
        %v3575 = vsel %vm444, %v3484, 0
        %v3578 = vsel %vm444, %v3485, 0
        %v3581 = vsel %vm444, %v3486, 0
        %v3584 = vsel %vm444, %v3487, 0
        %v3587 = vsel %vm444, %v3488, 0
        %v3590 = vsel %vm444, %v3489, 0
        %v3593 = vsel %vm444, %v3490, 0
        %v3596 = vsel %vm444, %v3491, 0
        %v3599 = vsel %vm444, %v3492, 0
        %v3602 = vsel %vm444, %v3493, 0
        %v3605 = vsel %vm444, %v3494, 0
        %v3608 = vsel %vm444, %v3495, 0
        %v3611 = vsel %vm444, %v3496, 0
        %v3614 = vsel %vm444, %v3497, 0
        %v3617 = vsel %vm444, %v3498, 0
        %v3620 = vsel %vm444, %v3499, 0
        %v3623 = vsel %vm444, %v3500, 0
        %v3626 = vsel %vm444, %v3501, 0
        %v3629 = vsel %vm444, %v3502, 0
        %v3632 = vsel %vm444, %v3503, 0
        %v3635 = vsel %vm444, %v3504, 0
        %v3638 = vsel %vm444, %v3505, 0
        %v3641 = vsel %vm444, %v3506, 0
        %v3644 = vsel %vm444, %v3507, 0
        %v3647 = vsel %vm444, %v3508, 0
        %v3650 = vsel %vm444, %v3509, 0
        %v3653 = vsel %vm444, %v3510, 0
        %v3656 = vsel %vm444, %v3511, 0
        %v3659 = vsel %vm444, %v3512, 0
        %v3662 = vsel %vm444, %v3513, 0
        %v3665 = vsel %vm444, %v3514, 0
        %v3668 = vsel %vm444, %v3515, 0
        %v3671 = vsel %vm444, %v3516, 0
        %v3674 = vsel %vm444, %v3517, 0
        %v3677 = vsel %vm444, %v3518, 0
        %v3680 = vsel %vm444, %v3519, 0
        %v3683 = vsel %vm444, %v3520, 0
        %v3686 = vsel %vm444, %v3521, 0
        %v3689 = vsel %vm444, %v3522, 0
        %v3692 = vsel %vm444, %v3523, 0
        %v3695 = vsel %vm444, %v3524, 0
        %v3698 = vsel %vm444, %v3525, 0
        %v3701 = vsel %vm444, %v3526, 0
        %v3704 = vsel %vm444, %v3527, 0
        %v3707 = vsel %vm444, %v3528, 0
        %v3710 = vsel %vm444, %v3529, 0
        %v3713 = vsel %vm444, %v3530, 0
        %v3716 = vsel %vm444, %v3531, 0
        %v3719 = vsel %vm444, %v3532, 0
        %v3722 = vsel %vm444, %v3533, 0
        %v3725 = vsel %vm444, %v3534, 0
        %3727 = vmatprep.subr.mxu0 %v541
        %3728 = vmatpush1.msra.mxu0 %v539
        %3729 = vmatprep.subr.mxu0 0.0
        %3730 = vmatpush1.msra.mxu0 0.0
        %3731 = vmatprep.subr.mxu0 0.0
        %3732 = vmatpush1.msra.mxu0 0.0
        %3733 = vmatprep.subr.mxu0 0.0
        %3734 = vmatpush1.msra.mxu0 0.0
        %3735 = vmatprep.subr.mxu0 0.0
        %3736 = vmatpush1.msra.mxu0 0.0
        %3737 = vmatprep.subr.mxu0 0.0
        %3738 = vmatpush1.msra.mxu0 0.0
        %3739 = vmatprep.subr.mxu0 0.0
        %3740 = vmatpush1.msra.mxu0 0.0
        %3741 = vmatprep.subr.mxu0 0.0
        %3742 = vmatpush1.msra.mxu0 0.0
        %3743 = vmatprep.subr.mxu0 0.0
        %3744 = vmatpush1.msra.mxu0 0.0
        %3745 = vmatprep.subr.mxu0 0.0
        %3746 = vmatpush1.msra.mxu0 0.0
        %3747 = vmatprep.subr.mxu0 0.0
        %3748 = vmatpush1.msra.mxu0 0.0
        %3749 = vmatprep.subr.mxu0 0.0
        %3750 = vmatpush1.msra.mxu0 0.0
        %3751 = vmatprep.subr.mxu0 0.0
        %3752 = vmatpush1.msra.mxu0 0.0
        %3753 = vmatprep.subr.mxu0 0.0
        %3754 = vmatpush1.msra.mxu0 0.0
        %3755 = vmatprep.subr.mxu0 0.0
        %3756 = vmatpush1.msra.mxu0 0.0
        %3757 = vmatprep.subr.mxu0 0.0
        %3758 = vmatpush1.msra.mxu0 0.0
        %3759 = vmatprep.subr.mxu0 0.0
        %3760 = vmatpush1.msra.mxu0 0.0
        %3761 = vmatprep.subr.mxu0 0.0
        %3762 = vmatpush1.msra.mxu0 0.0
        %3763 = vmatprep.subr.mxu0 0.0
        %3764 = vmatpush1.msra.mxu0 0.0
        %3765 = vmatprep.subr.mxu0 0.0
        %3766 = vmatpush1.msra.mxu0 0.0
        %3767 = vmatprep.subr.mxu0 0.0
        %3768 = vmatpush1.msra.mxu0 0.0
        %3769 = vmatprep.subr.mxu0 0.0
        %3770 = vmatpush1.msra.mxu0 0.0
        %3771 = vmatprep.subr.mxu0 0.0
        %3772 = vmatpush1.msra.mxu0 0.0
        %3773 = vmatprep.subr.mxu0 0.0
        %3774 = vmatpush1.msra.mxu0 0.0
        %3775 = vmatprep.subr.mxu0 0.0
        %3776 = vmatpush1.msra.mxu0 0.0
        %3777 = vmatprep.subr.mxu0 0.0
        %3778 = vmatpush1.msra.mxu0 0.0
        %3779 = vmatprep.subr.mxu0 0.0
        %3780 = vmatpush1.msra.mxu0 0.0
        %3781 = vmatprep.subr.mxu0 0.0
        %3782 = vmatpush1.msra.mxu0 0.0
        %3783 = vmatprep.subr.mxu0 0.0
        %3784 = vmatpush1.msra.mxu0 0.0
        %3785 = vmatprep.subr.mxu0 0.0
        %3786 = vmatpush1.msra.mxu0 0.0
        %3787 = vmatprep.subr.mxu0 0.0
        %3788 = vmatpush1.msra.mxu0 0.0
        %3789 = vmatprep.subr.mxu0 0.0
        %3790 = vmatpush1.msra.mxu0 0.0
        %3791 = vmatprep.mubr.f32.mxu0 0.0
        %3792 = vmatmul.mubr.f32.gmra.mrb[0].mxu0 %v3536
        %v3793 = vpop.f32.mrb[0].mxu0
        %v3794 = vadd.f32 0.0, %v3793
        %v3795 = vpop.f32.mrb[0].mxu0
        %v3796 = vadd.f32 0.0, %v3795
        %3797 = vmatprep.mubr.f32.mxu0 0.0
        %3798 = vmatmul.mubr.f32.gmra.mrb[0].mxu0 %v3539
        %v3799 = vpop.f32.mrb[0].mxu0
        %v3800 = vadd.f32 0.0, %v3799
        %v3801 = vpop.f32.mrb[0].mxu0
        %v3802 = vadd.f32 0.0, %v3801
        %3803 = vmatprep.mubr.f32.mxu0 0.0
        %3804 = vmatmul.mubr.f32.gmra.mrb[0].mxu0 %v3542
        %v3805 = vpop.f32.mrb[0].mxu0
        %v3806 = vadd.f32 0.0, %v3805
        %v3807 = vpop.f32.mrb[0].mxu0
        %v3808 = vadd.f32 0.0, %v3807
        %3809 = vmatprep.mubr.f32.mxu0 0.0
        %3810 = vmatmul.mubr.f32.gmra.mrb[0].mxu0 %v3545
        %v3811 = vpop.f32.mrb[0].mxu0
        %v3812 = vadd.f32 0.0, %v3811
        %v3813 = vpop.f32.mrb[0].mxu0
        %v3814 = vadd.f32 0.0, %v3813
        %3815 = vmatprep.mubr.f32.mxu0 0.0
        %3816 = vmatmul.mubr.f32.gmra.mrb[0].mxu0 %v3548
        %v3817 = vpop.f32.mrb[0].mxu0
        %v3818 = vadd.f32 0.0, %v3817
        %v3819 = vpop.f32.mrb[0].mxu0
        %v3820 = vadd.f32 0.0, %v3819
        %3821 = vmatprep.mubr.f32.mxu0 0.0
        %3822 = vmatmul.mubr.f32.gmra.mrb[0].mxu0 %v3551
        %v3823 = vpop.f32.mrb[0].mxu0
        %v3824 = vadd.f32 0.0, %v3823
        %v3825 = vpop.f32.mrb[0].mxu0
        %v3826 = vadd.f32 0.0, %v3825
        %3827 = vmatprep.mubr.f32.mxu0 0.0
        %3828 = vmatmul.mubr.f32.gmra.mrb[0].mxu0 %v3554
        %v3829 = vpop.f32.mrb[0].mxu0
        %v3830 = vadd.f32 0.0, %v3829
        %v3831 = vpop.f32.mrb[0].mxu0
        %v3832 = vadd.f32 0.0, %v3831
        %3833 = vmatprep.mubr.f32.mxu0 0.0
        %3834 = vmatmul.mubr.f32.gmra.mrb[0].mxu0 %v3557
        %v3835 = vpop.f32.mrb[0].mxu0
        %v3836 = vadd.f32 0.0, %v3835
        %v3837 = vpop.f32.mrb[0].mxu0
        %v3838 = vadd.f32 0.0, %v3837
        %3839 = vmatprep.mubr.f32.mxu0 0.0
        %3840 = vmatmul.mubr.f32.gmra.mrb[0].mxu0 %v3560
        %v3841 = vpop.f32.mrb[0].mxu0
        %v3842 = vadd.f32 0.0, %v3841
        %v3843 = vpop.f32.mrb[0].mxu0
        %v3844 = vadd.f32 0.0, %v3843
        %3845 = vmatprep.mubr.f32.mxu0 0.0
        %3846 = vmatmul.mubr.f32.gmra.mrb[0].mxu0 %v3563
        %v3847 = vpop.f32.mrb[0].mxu0
        %v3848 = vadd.f32 0.0, %v3847
        %v3849 = vpop.f32.mrb[0].mxu0
        %v3850 = vadd.f32 0.0, %v3849
        %3851 = vmatprep.mubr.f32.mxu0 0.0
        %3852 = vmatmul.mubr.f32.gmra.mrb[0].mxu0 %v3566
        %v3853 = vpop.f32.mrb[0].mxu0
        %v3854 = vadd.f32 0.0, %v3853
        %v3855 = vpop.f32.mrb[0].mxu0
        %v3856 = vadd.f32 0.0, %v3855
        %3857 = vmatprep.mubr.f32.mxu0 0.0
        %3858 = vmatmul.mubr.f32.gmra.mrb[0].mxu0 %v3569
        %v3859 = vpop.f32.mrb[0].mxu0
        %v3860 = vadd.f32 0.0, %v3859
        %v3861 = vpop.f32.mrb[0].mxu0
        %v3862 = vadd.f32 0.0, %v3861
        %3863 = vmatprep.mubr.f32.mxu0 0.0
        %3864 = vmatmul.mubr.f32.gmra.mrb[0].mxu0 %v3572
        %v3865 = vpop.f32.mrb[0].mxu0
        %v3866 = vadd.f32 0.0, %v3865
        %v3867 = vpop.f32.mrb[0].mxu0
        %v3868 = vadd.f32 0.0, %v3867
        %3869 = vmatprep.mubr.f32.mxu0 0.0
        %3870 = vmatmul.mubr.f32.gmra.mrb[0].mxu0 %v3575
        %v3871 = vpop.f32.mrb[0].mxu0
        %v3872 = vadd.f32 0.0, %v3871
        %v3873 = vpop.f32.mrb[0].mxu0
        %v3874 = vadd.f32 0.0, %v3873
        %3875 = vmatprep.mubr.f32.mxu0 0.0
        %3876 = vmatmul.mubr.f32.gmra.mrb[0].mxu0 %v3578
        %v3877 = vpop.f32.mrb[0].mxu0
        %v3878 = vadd.f32 0.0, %v3877
        %v3879 = vpop.f32.mrb[0].mxu0
        %v3880 = vadd.f32 0.0, %v3879
        %3881 = vmatprep.mubr.f32.mxu0 0.0
        %3882 = vmatmul.mubr.f32.gmra.mrb[0].mxu0 %v3581
        %v3883 = vpop.f32.mrb[0].mxu0
        %v3884 = vadd.f32 0.0, %v3883
        %v3885 = vpop.f32.mrb[0].mxu0
        %v3886 = vadd.f32 0.0, %v3885
        %3887 = vmatprep.mubr.f32.mxu0 0.0
        %3888 = vmatmul.mubr.f32.gmra.mrb[0].mxu0 %v3584
        %v3889 = vpop.f32.mrb[0].mxu0
        %v3890 = vadd.f32 0.0, %v3889
        %v3891 = vpop.f32.mrb[0].mxu0
        %v3892 = vadd.f32 0.0, %v3891
        %3893 = vmatprep.mubr.f32.mxu0 0.0
        %3894 = vmatmul.mubr.f32.gmra.mrb[0].mxu0 %v3587
        %v3895 = vpop.f32.mrb[0].mxu0
        %v3896 = vadd.f32 0.0, %v3895
        %v3897 = vpop.f32.mrb[0].mxu0
        %v3898 = vadd.f32 0.0, %v3897
        %3899 = vmatprep.mubr.f32.mxu0 0.0
        %3900 = vmatmul.mubr.f32.gmra.mrb[0].mxu0 %v3590
        %v3901 = vpop.f32.mrb[0].mxu0
        %v3902 = vadd.f32 0.0, %v3901
        %v3903 = vpop.f32.mrb[0].mxu0
        %v3904 = vadd.f32 0.0, %v3903
        %3905 = vmatprep.mubr.f32.mxu0 0.0
        %3906 = vmatmul.mubr.f32.gmra.mrb[0].mxu0 %v3593
        %v3907 = vpop.f32.mrb[0].mxu0
        %v3908 = vadd.f32 0.0, %v3907
        %v3909 = vpop.f32.mrb[0].mxu0
        %v3910 = vadd.f32 0.0, %v3909
        %3911 = vmatprep.mubr.f32.mxu0 0.0
        %3912 = vmatmul.mubr.f32.gmra.mrb[0].mxu0 %v3596
        %v3913 = vpop.f32.mrb[0].mxu0
        %v3914 = vadd.f32 0.0, %v3913
        %v3915 = vpop.f32.mrb[0].mxu0
        %v3916 = vadd.f32 0.0, %v3915
        %3917 = vmatprep.mubr.f32.mxu0 0.0
        %3918 = vmatmul.mubr.f32.gmra.mrb[0].mxu0 %v3599
        %v3919 = vpop.f32.mrb[0].mxu0
        %v3920 = vadd.f32 0.0, %v3919
        %v3921 = vpop.f32.mrb[0].mxu0
        %v3922 = vadd.f32 0.0, %v3921
        %3923 = vmatprep.mubr.f32.mxu0 0.0
        %3924 = vmatmul.mubr.f32.gmra.mrb[0].mxu0 %v3602
        %v3925 = vpop.f32.mrb[0].mxu0
        %v3926 = vadd.f32 0.0, %v3925
        %v3927 = vpop.f32.mrb[0].mxu0
        %v3928 = vadd.f32 0.0, %v3927
        %3929 = vmatprep.mubr.f32.mxu0 0.0
        %3930 = vmatmul.mubr.f32.gmra.mrb[0].mxu0 %v3605
        %v3931 = vpop.f32.mrb[0].mxu0
        %v3932 = vadd.f32 0.0, %v3931
        %v3933 = vpop.f32.mrb[0].mxu0
        %v3934 = vadd.f32 0.0, %v3933
        %3935 = vmatprep.mubr.f32.mxu0 0.0
        %3936 = vmatmul.mubr.f32.gmra.mrb[0].mxu0 %v3608
        %v3937 = vpop.f32.mrb[0].mxu0
        %v3938 = vadd.f32 0.0, %v3937
        %v3939 = vpop.f32.mrb[0].mxu0
        %v3940 = vadd.f32 0.0, %v3939
        %3941 = vmatprep.mubr.f32.mxu0 0.0
        %3942 = vmatmul.mubr.f32.gmra.mrb[0].mxu0 %v3611
        %v3943 = vpop.f32.mrb[0].mxu0
        %v3944 = vadd.f32 0.0, %v3943
        %v3945 = vpop.f32.mrb[0].mxu0
        %v3946 = vadd.f32 0.0, %v3945
        %3947 = vmatprep.mubr.f32.mxu0 0.0
        %3948 = vmatmul.mubr.f32.gmra.mrb[0].mxu0 %v3614
        %v3949 = vpop.f32.mrb[0].mxu0
        %v3950 = vadd.f32 0.0, %v3949
        %v3951 = vpop.f32.mrb[0].mxu0
        %v3952 = vadd.f32 0.0, %v3951
        %3953 = vmatprep.mubr.f32.mxu0 0.0
        %3954 = vmatmul.mubr.f32.gmra.mrb[0].mxu0 %v3617
        %v3955 = vpop.f32.mrb[0].mxu0
        %v3956 = vadd.f32 0.0, %v3955
        %v3957 = vpop.f32.mrb[0].mxu0
        %v3958 = vadd.f32 0.0, %v3957
        %3959 = vmatprep.mubr.f32.mxu0 0.0
        %3960 = vmatmul.mubr.f32.gmra.mrb[0].mxu0 %v3620
        %v3961 = vpop.f32.mrb[0].mxu0
        %v3962 = vadd.f32 0.0, %v3961
        %v3963 = vpop.f32.mrb[0].mxu0
        %v3964 = vadd.f32 0.0, %v3963
        %3965 = vmatprep.mubr.f32.mxu0 0.0
        %3966 = vmatmul.mubr.f32.gmra.mrb[0].mxu0 %v3623
        %v3967 = vpop.f32.mrb[0].mxu0
        %v3968 = vadd.f32 0.0, %v3967
        %v3969 = vpop.f32.mrb[0].mxu0
        %v3970 = vadd.f32 0.0, %v3969
        %3971 = vmatprep.mubr.f32.mxu0 0.0
        %3972 = vmatmul.mubr.f32.gmra.mrb[0].mxu0 %v3626
        %v3973 = vpop.f32.mrb[0].mxu0
        %v3974 = vadd.f32 0.0, %v3973
        %v3975 = vpop.f32.mrb[0].mxu0
        %v3976 = vadd.f32 0.0, %v3975
        %3977 = vmatprep.mubr.f32.mxu0 0.0
        %3978 = vmatmul.mubr.f32.gmra.mrb[0].mxu0 %v3629
        %v3979 = vpop.f32.mrb[0].mxu0
        %v3980 = vadd.f32 0.0, %v3979
        %v3981 = vpop.f32.mrb[0].mxu0
        %v3982 = vadd.f32 0.0, %v3981
        %3983 = vmatprep.mubr.f32.mxu0 0.0
        %3984 = vmatmul.mubr.f32.gmra.mrb[0].mxu0 %v3632
        %v3985 = vpop.f32.mrb[0].mxu0
        %v3986 = vadd.f32 0.0, %v3985
        %v3987 = vpop.f32.mrb[0].mxu0
        %v3988 = vadd.f32 0.0, %v3987
        %3989 = vmatprep.mubr.f32.mxu0 0.0
        %3990 = vmatmul.mubr.f32.gmra.mrb[0].mxu0 %v3635
        %v3991 = vpop.f32.mrb[0].mxu0
        %v3992 = vadd.f32 0.0, %v3991
        %v3993 = vpop.f32.mrb[0].mxu0
        %v3994 = vadd.f32 0.0, %v3993
        %3995 = vmatprep.mubr.f32.mxu0 0.0
        %3996 = vmatmul.mubr.f32.gmra.mrb[0].mxu0 %v3638
        %v3997 = vpop.f32.mrb[0].mxu0
        %v3998 = vadd.f32 0.0, %v3997
        %v3999 = vpop.f32.mrb[0].mxu0
        %v4000 = vadd.f32 0.0, %v3999
        %4001 = vmatprep.mubr.f32.mxu0 0.0
        %4002 = vmatmul.mubr.f32.gmra.mrb[0].mxu0 %v3641
        %v4003 = vpop.f32.mrb[0].mxu0
        %v4004 = vadd.f32 0.0, %v4003
        %v4005 = vpop.f32.mrb[0].mxu0
        %v4006 = vadd.f32 0.0, %v4005
        %4007 = vmatprep.mubr.f32.mxu0 0.0
        %4008 = vmatmul.mubr.f32.gmra.mrb[0].mxu0 %v3644
        %v4009 = vpop.f32.mrb[0].mxu0
        %v4010 = vadd.f32 0.0, %v4009
        %v4011 = vpop.f32.mrb[0].mxu0
        %v4012 = vadd.f32 0.0, %v4011
        %4013 = vmatprep.mubr.f32.mxu0 0.0
        %4014 = vmatmul.mubr.f32.gmra.mrb[0].mxu0 %v3647
        %v4015 = vpop.f32.mrb[0].mxu0
        %v4016 = vadd.f32 0.0, %v4015
        %v4017 = vpop.f32.mrb[0].mxu0
        %v4018 = vadd.f32 0.0, %v4017
        %4019 = vmatprep.mubr.f32.mxu0 0.0
        %4020 = vmatmul.mubr.f32.gmra.mrb[0].mxu0 %v3650
        %v4021 = vpop.f32.mrb[0].mxu0
        %v4022 = vadd.f32 0.0, %v4021
        %v4023 = vpop.f32.mrb[0].mxu0
        %v4024 = vadd.f32 0.0, %v4023
        %4025 = vmatprep.mubr.f32.mxu0 0.0
        %4026 = vmatmul.mubr.f32.gmra.mrb[0].mxu0 %v3653
        %v4027 = vpop.f32.mrb[0].mxu0
        %v4028 = vadd.f32 0.0, %v4027
        %v4029 = vpop.f32.mrb[0].mxu0
        %v4030 = vadd.f32 0.0, %v4029
        %4031 = vmatprep.mubr.f32.mxu0 0.0
        %4032 = vmatmul.mubr.f32.gmra.mrb[0].mxu0 %v3656
        %v4033 = vpop.f32.mrb[0].mxu0
        %v4034 = vadd.f32 0.0, %v4033
        %v4035 = vpop.f32.mrb[0].mxu0
        %v4036 = vadd.f32 0.0, %v4035
        %4037 = vmatprep.mubr.f32.mxu0 0.0
        %4038 = vmatmul.mubr.f32.gmra.mrb[0].mxu0 %v3659
        %v4039 = vpop.f32.mrb[0].mxu0
        %v4040 = vadd.f32 0.0, %v4039
        %v4041 = vpop.f32.mrb[0].mxu0
        %v4042 = vadd.f32 0.0, %v4041
        %4043 = vmatprep.mubr.f32.mxu0 0.0
        %4044 = vmatmul.mubr.f32.gmra.mrb[0].mxu0 %v3662
        %v4045 = vpop.f32.mrb[0].mxu0
        %v4046 = vadd.f32 0.0, %v4045
        %v4047 = vpop.f32.mrb[0].mxu0
        %v4048 = vadd.f32 0.0, %v4047
        %4049 = vmatprep.mubr.f32.mxu0 0.0
        %4050 = vmatmul.mubr.f32.gmra.mrb[0].mxu0 %v3665
        %v4051 = vpop.f32.mrb[0].mxu0
        %v4052 = vadd.f32 0.0, %v4051
        %v4053 = vpop.f32.mrb[0].mxu0
        %v4054 = vadd.f32 0.0, %v4053
        %4055 = vmatprep.mubr.f32.mxu0 0.0
        %4056 = vmatmul.mubr.f32.gmra.mrb[0].mxu0 %v3668
        %v4057 = vpop.f32.mrb[0].mxu0
        %v4058 = vadd.f32 0.0, %v4057
        %v4059 = vpop.f32.mrb[0].mxu0
        %v4060 = vadd.f32 0.0, %v4059
        %4061 = vmatprep.mubr.f32.mxu0 0.0
        %4062 = vmatmul.mubr.f32.gmra.mrb[0].mxu0 %v3671
        %v4063 = vpop.f32.mrb[0].mxu0
        %v4064 = vadd.f32 0.0, %v4063
        %v4065 = vpop.f32.mrb[0].mxu0
        %v4066 = vadd.f32 0.0, %v4065
        %4067 = vmatprep.mubr.f32.mxu0 0.0
        %4068 = vmatmul.mubr.f32.gmra.mrb[0].mxu0 %v3674
        %v4069 = vpop.f32.mrb[0].mxu0
        %v4070 = vadd.f32 0.0, %v4069
        %v4071 = vpop.f32.mrb[0].mxu0
        %v4072 = vadd.f32 0.0, %v4071
        %4073 = vmatprep.mubr.f32.mxu0 0.0
        %4074 = vmatmul.mubr.f32.gmra.mrb[0].mxu0 %v3677
        %v4075 = vpop.f32.mrb[0].mxu0
        %v4076 = vadd.f32 0.0, %v4075
        %v4077 = vpop.f32.mrb[0].mxu0
        %v4078 = vadd.f32 0.0, %v4077
        %4079 = vmatprep.mubr.f32.mxu0 0.0
        %4080 = vmatmul.mubr.f32.gmra.mrb[0].mxu0 %v3680
        %v4081 = vpop.f32.mrb[0].mxu0
        %v4082 = vadd.f32 0.0, %v4081
        %v4083 = vpop.f32.mrb[0].mxu0
        %v4084 = vadd.f32 0.0, %v4083
        %4085 = vmatprep.mubr.f32.mxu0 0.0
        %4086 = vmatmul.mubr.f32.gmra.mrb[0].mxu0 %v3683
        %v4087 = vpop.f32.mrb[0].mxu0
        %v4088 = vadd.f32 0.0, %v4087
        %v4089 = vpop.f32.mrb[0].mxu0
        %v4090 = vadd.f32 0.0, %v4089
        %4091 = vmatprep.mubr.f32.mxu0 0.0
        %4092 = vmatmul.mubr.f32.gmra.mrb[0].mxu0 %v3686
        %v4093 = vpop.f32.mrb[0].mxu0
        %v4094 = vadd.f32 0.0, %v4093
        %v4095 = vpop.f32.mrb[0].mxu0
        %v4096 = vadd.f32 0.0, %v4095
        %4097 = vmatprep.mubr.f32.mxu0 0.0
        %4098 = vmatmul.mubr.f32.gmra.mrb[0].mxu0 %v3689
        %v4099 = vpop.f32.mrb[0].mxu0
        %v4100 = vadd.f32 0.0, %v4099
        %v4101 = vpop.f32.mrb[0].mxu0
        %v4102 = vadd.f32 0.0, %v4101
        %4103 = vmatprep.mubr.f32.mxu0 0.0
        %4104 = vmatmul.mubr.f32.gmra.mrb[0].mxu0 %v3692
        %v4105 = vpop.f32.mrb[0].mxu0
        %v4106 = vadd.f32 0.0, %v4105
        %v4107 = vpop.f32.mrb[0].mxu0
        %v4108 = vadd.f32 0.0, %v4107
        %4109 = vmatprep.mubr.f32.mxu0 0.0
        %4110 = vmatmul.mubr.f32.gmra.mrb[0].mxu0 %v3695
        %v4111 = vpop.f32.mrb[0].mxu0
        %v4112 = vadd.f32 0.0, %v4111
        %v4113 = vpop.f32.mrb[0].mxu0
        %v4114 = vadd.f32 0.0, %v4113
        %4115 = vmatprep.mubr.f32.mxu0 0.0
        %4116 = vmatmul.mubr.f32.gmra.mrb[0].mxu0 %v3698
        %v4117 = vpop.f32.mrb[0].mxu0
        %v4118 = vadd.f32 0.0, %v4117
        %v4119 = vpop.f32.mrb[0].mxu0
        %v4120 = vadd.f32 0.0, %v4119
        %4121 = vmatprep.mubr.f32.mxu0 0.0
        %4122 = vmatmul.mubr.f32.gmra.mrb[0].mxu0 %v3701
        %v4123 = vpop.f32.mrb[0].mxu0
        %v4124 = vadd.f32 0.0, %v4123
        %v4125 = vpop.f32.mrb[0].mxu0
        %v4126 = vadd.f32 0.0, %v4125
        %4127 = vmatprep.mubr.f32.mxu0 0.0
        %4128 = vmatmul.mubr.f32.gmra.mrb[0].mxu0 %v3704
        %v4129 = vpop.f32.mrb[0].mxu0
        %v4130 = vadd.f32 0.0, %v4129
        %v4131 = vpop.f32.mrb[0].mxu0
        %v4132 = vadd.f32 0.0, %v4131
        %4133 = vmatprep.mubr.f32.mxu0 0.0
        %4134 = vmatmul.mubr.f32.gmra.mrb[0].mxu0 %v3707
        %v4135 = vpop.f32.mrb[0].mxu0
        %v4136 = vadd.f32 0.0, %v4135
        %v4137 = vpop.f32.mrb[0].mxu0
        %v4138 = vadd.f32 0.0, %v4137
        %4139 = vmatprep.mubr.f32.mxu0 0.0
        %4140 = vmatmul.mubr.f32.gmra.mrb[0].mxu0 %v3710
        %v4141 = vpop.f32.mrb[0].mxu0
        %v4142 = vadd.f32 0.0, %v4141
        %v4143 = vpop.f32.mrb[0].mxu0
        %v4144 = vadd.f32 0.0, %v4143
        %4145 = vmatprep.mubr.f32.mxu0 0.0
        %4146 = vmatmul.mubr.f32.gmra.mrb[0].mxu0 %v3713
        %v4147 = vpop.f32.mrb[0].mxu0
        %v4148 = vadd.f32 0.0, %v4147
        %v4149 = vpop.f32.mrb[0].mxu0
        %v4150 = vadd.f32 0.0, %v4149
        %4151 = vmatprep.mubr.f32.mxu0 0.0
        %4152 = vmatmul.mubr.f32.gmra.mrb[0].mxu0 %v3716
        %v4153 = vpop.f32.mrb[0].mxu0
        %v4154 = vadd.f32 0.0, %v4153
        %v4155 = vpop.f32.mrb[0].mxu0
        %v4156 = vadd.f32 0.0, %v4155
        %4157 = vmatprep.mubr.f32.mxu0 0.0
        %4158 = vmatmul.mubr.f32.gmra.mrb[0].mxu0 %v3719
        %v4159 = vpop.f32.mrb[0].mxu0
        %v4160 = vadd.f32 0.0, %v4159
        %v4161 = vpop.f32.mrb[0].mxu0
        %v4162 = vadd.f32 0.0, %v4161
        %4163 = vmatprep.mubr.f32.mxu0 0.0
        %4164 = vmatmul.mubr.f32.gmra.mrb[0].mxu0 %v3722
        %v4165 = vpop.f32.mrb[0].mxu0
        %v4166 = vadd.f32 0.0, %v4165
        %v4167 = vpop.f32.mrb[0].mxu0
        %v4168 = vadd.f32 0.0, %v4167
        %4169 = vmatprep.mubr.f32.mxu0 0.0
        %4170 = vmatmul.mubr.f32.gmra.mrb[0].mxu0 %v3725
        %v4171 = vpop.f32.mrb[0].mxu0
        %v4172 = vadd.f32 0.0, %v4171
        %v4173 = vpop.f32.mrb[0].mxu0
        %v4174 = vadd.f32 0.0, %v4173
        %4175 = vdwg.mxu0
        %4176 = vmatprep.subr.mxu0 %v636
        %4177 = vmatpush1.msra.mxu0 %v634
        %4178 = vmatprep.subr.mxu0 0.0
        %4179 = vmatpush1.msra.mxu0 0.0
        %4180 = vmatprep.subr.mxu0 0.0
        %4181 = vmatpush1.msra.mxu0 0.0
        %4182 = vmatprep.subr.mxu0 0.0
        %4183 = vmatpush1.msra.mxu0 0.0
        %4184 = vmatprep.subr.mxu0 0.0
        %4185 = vmatpush1.msra.mxu0 0.0
        %4186 = vmatprep.subr.mxu0 0.0
        %4187 = vmatpush1.msra.mxu0 0.0
        %4188 = vmatprep.subr.mxu0 0.0
        %4189 = vmatpush1.msra.mxu0 0.0
        %4190 = vmatprep.subr.mxu0 0.0
        %4191 = vmatpush1.msra.mxu0 0.0
        %4192 = vmatprep.subr.mxu0 0.0
        %4193 = vmatpush1.msra.mxu0 0.0
        %4194 = vmatprep.subr.mxu0 0.0
        %4195 = vmatpush1.msra.mxu0 0.0
        %4196 = vmatprep.subr.mxu0 0.0
        %4197 = vmatpush1.msra.mxu0 0.0
        %4198 = vmatprep.subr.mxu0 0.0
        %4199 = vmatpush1.msra.mxu0 0.0
        %4200 = vmatprep.subr.mxu0 0.0
        %4201 = vmatpush1.msra.mxu0 0.0
        %4202 = vmatprep.subr.mxu0 0.0
        %4203 = vmatpush1.msra.mxu0 0.0
        %4204 = vmatprep.subr.mxu0 0.0
        %4205 = vmatpush1.msra.mxu0 0.0
        %4206 = vmatprep.subr.mxu0 0.0
        %4207 = vmatpush1.msra.mxu0 0.0
        %4208 = vmatprep.subr.mxu0 0.0
        %4209 = vmatpush1.msra.mxu0 0.0
        %4210 = vmatprep.subr.mxu0 0.0
        %4211 = vmatpush1.msra.mxu0 0.0
        %4212 = vmatprep.subr.mxu0 0.0
        %4213 = vmatpush1.msra.mxu0 0.0
        %4214 = vmatprep.subr.mxu0 0.0
        %4215 = vmatpush1.msra.mxu0 0.0
        %4216 = vmatprep.subr.mxu0 0.0
        %4217 = vmatpush1.msra.mxu0 0.0
        %4218 = vmatprep.subr.mxu0 0.0
        %4219 = vmatpush1.msra.mxu0 0.0
        %4220 = vmatprep.subr.mxu0 0.0
        %4221 = vmatpush1.msra.mxu0 0.0
        %4222 = vmatprep.subr.mxu0 0.0
        %4223 = vmatpush1.msra.mxu0 0.0
        %4224 = vmatprep.subr.mxu0 0.0
        %4225 = vmatpush1.msra.mxu0 0.0
        %4226 = vmatprep.subr.mxu0 0.0
        %4227 = vmatpush1.msra.mxu0 0.0
        %4228 = vmatprep.subr.mxu0 0.0
        %4229 = vmatpush1.msra.mxu0 0.0
        %4230 = vmatprep.subr.mxu0 0.0
        %4231 = vmatpush1.msra.mxu0 0.0
        %4232 = vmatprep.subr.mxu0 0.0
        %4233 = vmatpush1.msra.mxu0 0.0
        %4234 = vmatprep.subr.mxu0 0.0
        %4235 = vmatpush1.msra.mxu0 0.0
        %4236 = vmatprep.subr.mxu0 0.0
        %4237 = vmatpush1.msra.mxu0 0.0
        %4238 = vmatprep.subr.mxu0 0.0
        %4239 = vmatpush1.msra.mxu0 0.0
        %4240 = vmatprep.mubr.f32.mxu0 0.0
        %4241 = vmatmul.mubr.f32.gmra.mrb[0].mxu0 %v3536
        %v4242 = vpop.f32.mrb[0].mxu0
        %v4243 = vadd.f32 0.0, %v4242
        %v4244 = vpop.f32.mrb[0].mxu0
        %v4245 = vadd.f32 0.0, %v4244
        %4246 = vmatprep.mubr.f32.mxu0 0.0
        %4247 = vmatmul.mubr.f32.gmra.mrb[0].mxu0 %v3539
        %v4248 = vpop.f32.mrb[0].mxu0
        %v4249 = vadd.f32 0.0, %v4248
        %v4250 = vpop.f32.mrb[0].mxu0
        %v4251 = vadd.f32 0.0, %v4250
        %4252 = vmatprep.mubr.f32.mxu0 0.0
        %4253 = vmatmul.mubr.f32.gmra.mrb[0].mxu0 %v3542
        %v4254 = vpop.f32.mrb[0].mxu0
        %v4255 = vadd.f32 0.0, %v4254
        %v4256 = vpop.f32.mrb[0].mxu0
        %v4257 = vadd.f32 0.0, %v4256
        %4258 = vmatprep.mubr.f32.mxu0 0.0
        %4259 = vmatmul.mubr.f32.gmra.mrb[0].mxu0 %v3545
        %v4260 = vpop.f32.mrb[0].mxu0
        %v4261 = vadd.f32 0.0, %v4260
        %v4262 = vpop.f32.mrb[0].mxu0
        %v4263 = vadd.f32 0.0, %v4262
        %4264 = vmatprep.mubr.f32.mxu0 0.0
        %4265 = vmatmul.mubr.f32.gmra.mrb[0].mxu0 %v3548
        %v4266 = vpop.f32.mrb[0].mxu0
        %v4267 = vadd.f32 0.0, %v4266
        %v4268 = vpop.f32.mrb[0].mxu0
        %v4269 = vadd.f32 0.0, %v4268
        %4270 = vmatprep.mubr.f32.mxu0 0.0
        %4271 = vmatmul.mubr.f32.gmra.mrb[0].mxu0 %v3551
        %v4272 = vpop.f32.mrb[0].mxu0
        %v4273 = vadd.f32 0.0, %v4272
        %v4274 = vpop.f32.mrb[0].mxu0
        %v4275 = vadd.f32 0.0, %v4274
        %4276 = vmatprep.mubr.f32.mxu0 0.0
        %4277 = vmatmul.mubr.f32.gmra.mrb[0].mxu0 %v3554
        %v4278 = vpop.f32.mrb[0].mxu0
        %v4279 = vadd.f32 0.0, %v4278
        %v4280 = vpop.f32.mrb[0].mxu0
        %v4281 = vadd.f32 0.0, %v4280
        %4282 = vmatprep.mubr.f32.mxu0 0.0
        %4283 = vmatmul.mubr.f32.gmra.mrb[0].mxu0 %v3557
        %v4284 = vpop.f32.mrb[0].mxu0
        %v4285 = vadd.f32 0.0, %v4284
        %v4286 = vpop.f32.mrb[0].mxu0
        %v4287 = vadd.f32 0.0, %v4286
        %4288 = vmatprep.mubr.f32.mxu0 0.0
        %4289 = vmatmul.mubr.f32.gmra.mrb[0].mxu0 %v3560
        %v4290 = vpop.f32.mrb[0].mxu0
        %v4291 = vadd.f32 0.0, %v4290
        %v4292 = vpop.f32.mrb[0].mxu0
        %v4293 = vadd.f32 0.0, %v4292
        %4294 = vmatprep.mubr.f32.mxu0 0.0
        %4295 = vmatmul.mubr.f32.gmra.mrb[0].mxu0 %v3563
        %v4296 = vpop.f32.mrb[0].mxu0
        %v4297 = vadd.f32 0.0, %v4296
        %v4298 = vpop.f32.mrb[0].mxu0
        %v4299 = vadd.f32 0.0, %v4298
        %4300 = vmatprep.mubr.f32.mxu0 0.0
        %4301 = vmatmul.mubr.f32.gmra.mrb[0].mxu0 %v3566
        %v4302 = vpop.f32.mrb[0].mxu0
        %v4303 = vadd.f32 0.0, %v4302
        %v4304 = vpop.f32.mrb[0].mxu0
        %v4305 = vadd.f32 0.0, %v4304
        %4306 = vmatprep.mubr.f32.mxu0 0.0
        %4307 = vmatmul.mubr.f32.gmra.mrb[0].mxu0 %v3569
        %v4308 = vpop.f32.mrb[0].mxu0
        %v4309 = vadd.f32 0.0, %v4308
        %v4310 = vpop.f32.mrb[0].mxu0
        %v4311 = vadd.f32 0.0, %v4310
        %4312 = vmatprep.mubr.f32.mxu0 0.0
        %4313 = vmatmul.mubr.f32.gmra.mrb[0].mxu0 %v3572
        %v4314 = vpop.f32.mrb[0].mxu0
        %v4315 = vadd.f32 0.0, %v4314
        %v4316 = vpop.f32.mrb[0].mxu0
        %v4317 = vadd.f32 0.0, %v4316
        %4318 = vmatprep.mubr.f32.mxu0 0.0
        %4319 = vmatmul.mubr.f32.gmra.mrb[0].mxu0 %v3575
        %v4320 = vpop.f32.mrb[0].mxu0
        %v4321 = vadd.f32 0.0, %v4320
        %v4322 = vpop.f32.mrb[0].mxu0
        %v4323 = vadd.f32 0.0, %v4322
        %4324 = vmatprep.mubr.f32.mxu0 0.0
        %4325 = vmatmul.mubr.f32.gmra.mrb[0].mxu0 %v3578
        %v4326 = vpop.f32.mrb[0].mxu0
        %v4327 = vadd.f32 0.0, %v4326
        %v4328 = vpop.f32.mrb[0].mxu0
        %v4329 = vadd.f32 0.0, %v4328
        %4330 = vmatprep.mubr.f32.mxu0 0.0
        %4331 = vmatmul.mubr.f32.gmra.mrb[0].mxu0 %v3581
        %v4332 = vpop.f32.mrb[0].mxu0
        %v4333 = vadd.f32 0.0, %v4332
        %v4334 = vpop.f32.mrb[0].mxu0
        %v4335 = vadd.f32 0.0, %v4334
        %4336 = vmatprep.mubr.f32.mxu0 0.0
        %4337 = vmatmul.mubr.f32.gmra.mrb[0].mxu0 %v3584
        %v4338 = vpop.f32.mrb[0].mxu0
        %v4339 = vadd.f32 0.0, %v4338
        %v4340 = vpop.f32.mrb[0].mxu0
        %v4341 = vadd.f32 0.0, %v4340
        %4342 = vmatprep.mubr.f32.mxu0 0.0
        %4343 = vmatmul.mubr.f32.gmra.mrb[0].mxu0 %v3587
        %v4344 = vpop.f32.mrb[0].mxu0
        %v4345 = vadd.f32 0.0, %v4344
        %v4346 = vpop.f32.mrb[0].mxu0
        %v4347 = vadd.f32 0.0, %v4346
        %4348 = vmatprep.mubr.f32.mxu0 0.0
        %4349 = vmatmul.mubr.f32.gmra.mrb[0].mxu0 %v3590
        %v4350 = vpop.f32.mrb[0].mxu0
        %v4351 = vadd.f32 0.0, %v4350
        %v4352 = vpop.f32.mrb[0].mxu0
        %v4353 = vadd.f32 0.0, %v4352
        %4354 = vmatprep.mubr.f32.mxu0 0.0
        %4355 = vmatmul.mubr.f32.gmra.mrb[0].mxu0 %v3593
        %v4356 = vpop.f32.mrb[0].mxu0
        %v4357 = vadd.f32 0.0, %v4356
        %v4358 = vpop.f32.mrb[0].mxu0
        %v4359 = vadd.f32 0.0, %v4358
        %4360 = vmatprep.mubr.f32.mxu0 0.0
        %4361 = vmatmul.mubr.f32.gmra.mrb[0].mxu0 %v3596
        %v4362 = vpop.f32.mrb[0].mxu0
        %v4363 = vadd.f32 0.0, %v4362
        %v4364 = vpop.f32.mrb[0].mxu0
        %v4365 = vadd.f32 0.0, %v4364
        %4366 = vmatprep.mubr.f32.mxu0 0.0
        %4367 = vmatmul.mubr.f32.gmra.mrb[0].mxu0 %v3599
        %v4368 = vpop.f32.mrb[0].mxu0
        %v4369 = vadd.f32 0.0, %v4368
        %v4370 = vpop.f32.mrb[0].mxu0
        %v4371 = vadd.f32 0.0, %v4370
        %4372 = vmatprep.mubr.f32.mxu0 0.0
        %4373 = vmatmul.mubr.f32.gmra.mrb[0].mxu0 %v3602
        %v4374 = vpop.f32.mrb[0].mxu0
        %v4375 = vadd.f32 0.0, %v4374
        %v4376 = vpop.f32.mrb[0].mxu0
        %v4377 = vadd.f32 0.0, %v4376
        %4378 = vmatprep.mubr.f32.mxu0 0.0
        %4379 = vmatmul.mubr.f32.gmra.mrb[0].mxu0 %v3605
        %v4380 = vpop.f32.mrb[0].mxu0
        %v4381 = vadd.f32 0.0, %v4380
        %v4382 = vpop.f32.mrb[0].mxu0
        %v4383 = vadd.f32 0.0, %v4382
        %4384 = vmatprep.mubr.f32.mxu0 0.0
        %4385 = vmatmul.mubr.f32.gmra.mrb[0].mxu0 %v3608
        %v4386 = vpop.f32.mrb[0].mxu0
        %v4387 = vadd.f32 0.0, %v4386
        %v4388 = vpop.f32.mrb[0].mxu0
        %v4389 = vadd.f32 0.0, %v4388
        %4390 = vmatprep.mubr.f32.mxu0 0.0
        %4391 = vmatmul.mubr.f32.gmra.mrb[0].mxu0 %v3611
        %v4392 = vpop.f32.mrb[0].mxu0
        %v4393 = vadd.f32 0.0, %v4392
        %v4394 = vpop.f32.mrb[0].mxu0
        %v4395 = vadd.f32 0.0, %v4394
        %4396 = vmatprep.mubr.f32.mxu0 0.0
        %4397 = vmatmul.mubr.f32.gmra.mrb[0].mxu0 %v3614
        %v4398 = vpop.f32.mrb[0].mxu0
        %v4399 = vadd.f32 0.0, %v4398
        %v4400 = vpop.f32.mrb[0].mxu0
        %v4401 = vadd.f32 0.0, %v4400
        %4402 = vmatprep.mubr.f32.mxu0 0.0
        %4403 = vmatmul.mubr.f32.gmra.mrb[0].mxu0 %v3617
        %v4404 = vpop.f32.mrb[0].mxu0
        %v4405 = vadd.f32 0.0, %v4404
        %v4406 = vpop.f32.mrb[0].mxu0
        %v4407 = vadd.f32 0.0, %v4406
        %4408 = vmatprep.mubr.f32.mxu0 0.0
        %4409 = vmatmul.mubr.f32.gmra.mrb[0].mxu0 %v3620
        %v4410 = vpop.f32.mrb[0].mxu0
        %v4411 = vadd.f32 0.0, %v4410
        %v4412 = vpop.f32.mrb[0].mxu0
        %v4413 = vadd.f32 0.0, %v4412
        %4414 = vmatprep.mubr.f32.mxu0 0.0
        %4415 = vmatmul.mubr.f32.gmra.mrb[0].mxu0 %v3623
        %v4416 = vpop.f32.mrb[0].mxu0
        %v4417 = vadd.f32 0.0, %v4416
        %v4418 = vpop.f32.mrb[0].mxu0
        %v4419 = vadd.f32 0.0, %v4418
        %4420 = vmatprep.mubr.f32.mxu0 0.0
        %4421 = vmatmul.mubr.f32.gmra.mrb[0].mxu0 %v3626
        %v4422 = vpop.f32.mrb[0].mxu0
        %v4423 = vadd.f32 0.0, %v4422
        %v4424 = vpop.f32.mrb[0].mxu0
        %v4425 = vadd.f32 0.0, %v4424
        %4426 = vmatprep.mubr.f32.mxu0 0.0
        %4427 = vmatmul.mubr.f32.gmra.mrb[0].mxu0 %v3629
        %v4428 = vpop.f32.mrb[0].mxu0
        %v4429 = vadd.f32 0.0, %v4428
        %v4430 = vpop.f32.mrb[0].mxu0
        %v4431 = vadd.f32 0.0, %v4430
        %4432 = vmatprep.mubr.f32.mxu0 0.0
        %4433 = vmatmul.mubr.f32.gmra.mrb[0].mxu0 %v3632
        %v4434 = vpop.f32.mrb[0].mxu0
        %v4435 = vadd.f32 0.0, %v4434
        %v4436 = vpop.f32.mrb[0].mxu0
        %v4437 = vadd.f32 0.0, %v4436
        %4438 = vmatprep.mubr.f32.mxu0 0.0
        %4439 = vmatmul.mubr.f32.gmra.mrb[0].mxu0 %v3635
        %v4440 = vpop.f32.mrb[0].mxu0
        %v4441 = vadd.f32 0.0, %v4440
        %v4442 = vpop.f32.mrb[0].mxu0
        %v4443 = vadd.f32 0.0, %v4442
        %4444 = vmatprep.mubr.f32.mxu0 0.0
        %4445 = vmatmul.mubr.f32.gmra.mrb[0].mxu0 %v3638
        %v4446 = vpop.f32.mrb[0].mxu0
        %v4447 = vadd.f32 0.0, %v4446
        %v4448 = vpop.f32.mrb[0].mxu0
        %v4449 = vadd.f32 0.0, %v4448
        %4450 = vmatprep.mubr.f32.mxu0 0.0
        %4451 = vmatmul.mubr.f32.gmra.mrb[0].mxu0 %v3641
        %v4452 = vpop.f32.mrb[0].mxu0
        %v4453 = vadd.f32 0.0, %v4452
        %v4454 = vpop.f32.mrb[0].mxu0
        %v4455 = vadd.f32 0.0, %v4454
        %4456 = vmatprep.mubr.f32.mxu0 0.0
        %4457 = vmatmul.mubr.f32.gmra.mrb[0].mxu0 %v3644
        %v4458 = vpop.f32.mrb[0].mxu0
        %v4459 = vadd.f32 0.0, %v4458
        %v4460 = vpop.f32.mrb[0].mxu0
        %v4461 = vadd.f32 0.0, %v4460
        %4462 = vmatprep.mubr.f32.mxu0 0.0
        %4463 = vmatmul.mubr.f32.gmra.mrb[0].mxu0 %v3647
        %v4464 = vpop.f32.mrb[0].mxu0
        %v4465 = vadd.f32 0.0, %v4464
        %v4466 = vpop.f32.mrb[0].mxu0
        %v4467 = vadd.f32 0.0, %v4466
        %4468 = vmatprep.mubr.f32.mxu0 0.0
        %4469 = vmatmul.mubr.f32.gmra.mrb[0].mxu0 %v3650
        %v4470 = vpop.f32.mrb[0].mxu0
        %v4471 = vadd.f32 0.0, %v4470
        %v4472 = vpop.f32.mrb[0].mxu0
        %v4473 = vadd.f32 0.0, %v4472
        %4474 = vmatprep.mubr.f32.mxu0 0.0
        %4475 = vmatmul.mubr.f32.gmra.mrb[0].mxu0 %v3653
        %v4476 = vpop.f32.mrb[0].mxu0
        %v4477 = vadd.f32 0.0, %v4476
        %v4478 = vpop.f32.mrb[0].mxu0
        %v4479 = vadd.f32 0.0, %v4478
        %4480 = vmatprep.mubr.f32.mxu0 0.0
        %4481 = vmatmul.mubr.f32.gmra.mrb[0].mxu0 %v3656
        %v4482 = vpop.f32.mrb[0].mxu0
        %v4483 = vadd.f32 0.0, %v4482
        %v4484 = vpop.f32.mrb[0].mxu0
        %v4485 = vadd.f32 0.0, %v4484
        %4486 = vmatprep.mubr.f32.mxu0 0.0
        %4487 = vmatmul.mubr.f32.gmra.mrb[0].mxu0 %v3659
        %v4488 = vpop.f32.mrb[0].mxu0
        %v4489 = vadd.f32 0.0, %v4488
        %v4490 = vpop.f32.mrb[0].mxu0
        %v4491 = vadd.f32 0.0, %v4490
        %4492 = vmatprep.mubr.f32.mxu0 0.0
        %4493 = vmatmul.mubr.f32.gmra.mrb[0].mxu0 %v3662
        %v4494 = vpop.f32.mrb[0].mxu0
        %v4495 = vadd.f32 0.0, %v4494
        %v4496 = vpop.f32.mrb[0].mxu0
        %v4497 = vadd.f32 0.0, %v4496
        %4498 = vmatprep.mubr.f32.mxu0 0.0
        %4499 = vmatmul.mubr.f32.gmra.mrb[0].mxu0 %v3665
        %v4500 = vpop.f32.mrb[0].mxu0
        %v4501 = vadd.f32 0.0, %v4500
        %v4502 = vpop.f32.mrb[0].mxu0
        %v4503 = vadd.f32 0.0, %v4502
        %4504 = vmatprep.mubr.f32.mxu0 0.0
        %4505 = vmatmul.mubr.f32.gmra.mrb[0].mxu0 %v3668
        %v4506 = vpop.f32.mrb[0].mxu0
        %v4507 = vadd.f32 0.0, %v4506
        %v4508 = vpop.f32.mrb[0].mxu0
        %v4509 = vadd.f32 0.0, %v4508
        %4510 = vmatprep.mubr.f32.mxu0 0.0
        %4511 = vmatmul.mubr.f32.gmra.mrb[0].mxu0 %v3671
        %v4512 = vpop.f32.mrb[0].mxu0
        %v4513 = vadd.f32 0.0, %v4512
        %v4514 = vpop.f32.mrb[0].mxu0
        %v4515 = vadd.f32 0.0, %v4514
        %4516 = vmatprep.mubr.f32.mxu0 0.0
        %4517 = vmatmul.mubr.f32.gmra.mrb[0].mxu0 %v3674
        %v4518 = vpop.f32.mrb[0].mxu0
        %v4519 = vadd.f32 0.0, %v4518
        %v4520 = vpop.f32.mrb[0].mxu0
        %v4521 = vadd.f32 0.0, %v4520
        %4522 = vmatprep.mubr.f32.mxu0 0.0
        %4523 = vmatmul.mubr.f32.gmra.mrb[0].mxu0 %v3677
        %v4524 = vpop.f32.mrb[0].mxu0
        %v4525 = vadd.f32 0.0, %v4524
        %v4526 = vpop.f32.mrb[0].mxu0
        %v4527 = vadd.f32 0.0, %v4526
        %4528 = vmatprep.mubr.f32.mxu0 0.0
        %4529 = vmatmul.mubr.f32.gmra.mrb[0].mxu0 %v3680
        %v4530 = vpop.f32.mrb[0].mxu0
        %v4531 = vadd.f32 0.0, %v4530
        %v4532 = vpop.f32.mrb[0].mxu0
        %v4533 = vadd.f32 0.0, %v4532
        %4534 = vmatprep.mubr.f32.mxu0 0.0
        %4535 = vmatmul.mubr.f32.gmra.mrb[0].mxu0 %v3683
        %v4536 = vpop.f32.mrb[0].mxu0
        %v4537 = vadd.f32 0.0, %v4536
        %v4538 = vpop.f32.mrb[0].mxu0
        %v4539 = vadd.f32 0.0, %v4538
        %4540 = vmatprep.mubr.f32.mxu0 0.0
        %4541 = vmatmul.mubr.f32.gmra.mrb[0].mxu0 %v3686
        %v4542 = vpop.f32.mrb[0].mxu0
        %v4543 = vadd.f32 0.0, %v4542
        %v4544 = vpop.f32.mrb[0].mxu0
        %v4545 = vadd.f32 0.0, %v4544
        %4546 = vmatprep.mubr.f32.mxu0 0.0
        %4547 = vmatmul.mubr.f32.gmra.mrb[0].mxu0 %v3689
        %v4548 = vpop.f32.mrb[0].mxu0
        %v4549 = vadd.f32 0.0, %v4548
        %v4550 = vpop.f32.mrb[0].mxu0
        %v4551 = vadd.f32 0.0, %v4550
        %4552 = vmatprep.mubr.f32.mxu0 0.0
        %4553 = vmatmul.mubr.f32.gmra.mrb[0].mxu0 %v3692
        %v4554 = vpop.f32.mrb[0].mxu0
        %v4555 = vadd.f32 0.0, %v4554
        %v4556 = vpop.f32.mrb[0].mxu0
        %v4557 = vadd.f32 0.0, %v4556
        %4558 = vmatprep.mubr.f32.mxu0 0.0
        %4559 = vmatmul.mubr.f32.gmra.mrb[0].mxu0 %v3695
        %v4560 = vpop.f32.mrb[0].mxu0
        %v4561 = vadd.f32 0.0, %v4560
        %v4562 = vpop.f32.mrb[0].mxu0
        %v4563 = vadd.f32 0.0, %v4562
        %4564 = vmatprep.mubr.f32.mxu0 0.0
        %4565 = vmatmul.mubr.f32.gmra.mrb[0].mxu0 %v3698
        %v4566 = vpop.f32.mrb[0].mxu0
        %v4567 = vadd.f32 0.0, %v4566
        %v4568 = vpop.f32.mrb[0].mxu0
        %v4569 = vadd.f32 0.0, %v4568
        %4570 = vmatprep.mubr.f32.mxu0 0.0
        %4571 = vmatmul.mubr.f32.gmra.mrb[0].mxu0 %v3701
        %v4572 = vpop.f32.mrb[0].mxu0
        %v4573 = vadd.f32 0.0, %v4572
        %v4574 = vpop.f32.mrb[0].mxu0
        %v4575 = vadd.f32 0.0, %v4574
        %4576 = vmatprep.mubr.f32.mxu0 0.0
        %4577 = vmatmul.mubr.f32.gmra.mrb[0].mxu0 %v3704
        %v4578 = vpop.f32.mrb[0].mxu0
        %v4579 = vadd.f32 0.0, %v4578
        %v4580 = vpop.f32.mrb[0].mxu0
        %v4581 = vadd.f32 0.0, %v4580
        %4582 = vmatprep.mubr.f32.mxu0 0.0
        %4583 = vmatmul.mubr.f32.gmra.mrb[0].mxu0 %v3707
        %v4584 = vpop.f32.mrb[0].mxu0
        %v4585 = vadd.f32 0.0, %v4584
        %v4586 = vpop.f32.mrb[0].mxu0
        %v4587 = vadd.f32 0.0, %v4586
        %4588 = vmatprep.mubr.f32.mxu0 0.0
        %4589 = vmatmul.mubr.f32.gmra.mrb[0].mxu0 %v3710
        %v4590 = vpop.f32.mrb[0].mxu0
        %v4591 = vadd.f32 0.0, %v4590
        %v4592 = vpop.f32.mrb[0].mxu0
        %v4593 = vadd.f32 0.0, %v4592
        %4594 = vmatprep.mubr.f32.mxu0 0.0
        %4595 = vmatmul.mubr.f32.gmra.mrb[0].mxu0 %v3713
        %v4596 = vpop.f32.mrb[0].mxu0
        %v4597 = vadd.f32 0.0, %v4596
        %v4598 = vpop.f32.mrb[0].mxu0
        %v4599 = vadd.f32 0.0, %v4598
        %4600 = vmatprep.mubr.f32.mxu0 0.0
        %4601 = vmatmul.mubr.f32.gmra.mrb[0].mxu0 %v3716
        %v4602 = vpop.f32.mrb[0].mxu0
        %v4603 = vadd.f32 0.0, %v4602
        %v4604 = vpop.f32.mrb[0].mxu0
        %v4605 = vadd.f32 0.0, %v4604
        %4606 = vmatprep.mubr.f32.mxu0 0.0
        %4607 = vmatmul.mubr.f32.gmra.mrb[0].mxu0 %v3719
        %v4608 = vpop.f32.mrb[0].mxu0
        %v4609 = vadd.f32 0.0, %v4608
        %v4610 = vpop.f32.mrb[0].mxu0
        %v4611 = vadd.f32 0.0, %v4610
        %4612 = vmatprep.mubr.f32.mxu0 0.0
        %4613 = vmatmul.mubr.f32.gmra.mrb[0].mxu0 %v3722
        %v4614 = vpop.f32.mrb[0].mxu0
        %v4615 = vadd.f32 0.0, %v4614
        %v4616 = vpop.f32.mrb[0].mxu0
        %v4617 = vadd.f32 0.0, %v4616
        %4618 = vmatprep.mubr.f32.mxu0 0.0
        %4619 = vmatmul.mubr.f32.gmra.mrb[0].mxu0 %v3725
        %v4620 = vpop.f32.mrb[0].mxu0
        %v4621 = vadd.f32 0.0, %v4620
        %v4622 = vpop.f32.mrb[0].mxu0
        %v4623 = vadd.f32 0.0, %v4622
        %4624 = vdwg.mxu0
        %s4625 = scalar_lea.vmem %s261, 4096 [#allocation2]
        %4626 = vst [vmem:[%s4625] sm:$0xff] %v3794
        %4627 = vst [vmem:[%s4625 + $0x8] sm:$0xff] %v3796
        %4628 = vst [vmem:[%s4625 + $0x10] sm:$0xff] %v4243
        %4629 = vst [vmem:[%s4625 + $0x18] sm:$0xff] %v4245
        %4630 = vst [vmem:[%s4625 + $0x20] sm:$0xff] %v3800
        %4631 = vst [vmem:[%s4625 + $0x28] sm:$0xff] %v3802
        %4632 = vst [vmem:[%s4625 + $0x30] sm:$0xff] %v4249
        %4633 = vst [vmem:[%s4625 + $0x38] sm:$0xff] %v4251
        %4634 = vst [vmem:[%s4625 + $0x40] sm:$0xff] %v3806
        %4635 = vst [vmem:[%s4625 + $0x48] sm:$0xff] %v3808
        %4636 = vst [vmem:[%s4625 + $0x50] sm:$0xff] %v4255
        %4637 = vst [vmem:[%s4625 + $0x58] sm:$0xff] %v4257
        %4638 = vst [vmem:[%s4625 + $0x60] sm:$0xff] %v3812
        %4639 = vst [vmem:[%s4625 + $0x68] sm:$0xff] %v3814
        %4640 = vst [vmem:[%s4625 + $0x70] sm:$0xff] %v4261
        %4641 = vst [vmem:[%s4625 + $0x78] sm:$0xff] %v4263
        %4642 = vst [vmem:[%s4625 + $0x80] sm:$0xff] %v3818
        %4643 = vst [vmem:[%s4625 + $0x88] sm:$0xff] %v3820
        %4644 = vst [vmem:[%s4625 + $0x90] sm:$0xff] %v4267
        %4645 = vst [vmem:[%s4625 + $0x98] sm:$0xff] %v4269
        %4646 = vst [vmem:[%s4625 + $0xa0] sm:$0xff] %v3824
        %4647 = vst [vmem:[%s4625 + $0xa8] sm:$0xff] %v3826
        %4648 = vst [vmem:[%s4625 + $0xb0] sm:$0xff] %v4273
        %4649 = vst [vmem:[%s4625 + $0xb8] sm:$0xff] %v4275
        %4650 = vst [vmem:[%s4625 + $0xc0] sm:$0xff] %v3830
        %4651 = vst [vmem:[%s4625 + $0xc8] sm:$0xff] %v3832
        %4652 = vst [vmem:[%s4625 + $0xd0] sm:$0xff] %v4279
        %4653 = vst [vmem:[%s4625 + $0xd8] sm:$0xff] %v4281
        %4654 = vst [vmem:[%s4625 + $0xe0] sm:$0xff] %v3836
        %4655 = vst [vmem:[%s4625 + $0xe8] sm:$0xff] %v3838
        %4656 = vst [vmem:[%s4625 + $0xf0] sm:$0xff] %v4285
        %4657 = vst [vmem:[%s4625 + $0xf8] sm:$0xff] %v4287
        %4658 = vst [vmem:[%s4625 + $0x100] sm:$0xff] %v3842
        %4659 = vst [vmem:[%s4625 + $0x108] sm:$0xff] %v3844
        %4660 = vst [vmem:[%s4625 + $0x110] sm:$0xff] %v4291
        %4661 = vst [vmem:[%s4625 + $0x118] sm:$0xff] %v4293
        %4662 = vst [vmem:[%s4625 + $0x120] sm:$0xff] %v3848
        %4663 = vst [vmem:[%s4625 + $0x128] sm:$0xff] %v3850
        %4664 = vst [vmem:[%s4625 + $0x130] sm:$0xff] %v4297
        %4665 = vst [vmem:[%s4625 + $0x138] sm:$0xff] %v4299
        %4666 = vst [vmem:[%s4625 + $0x140] sm:$0xff] %v3854
        %4667 = vst [vmem:[%s4625 + $0x148] sm:$0xff] %v3856
        %4668 = vst [vmem:[%s4625 + $0x150] sm:$0xff] %v4303
        %4669 = vst [vmem:[%s4625 + $0x158] sm:$0xff] %v4305
        %4670 = vst [vmem:[%s4625 + $0x160] sm:$0xff] %v3860
        %4671 = vst [vmem:[%s4625 + $0x168] sm:$0xff] %v3862
        %4672 = vst [vmem:[%s4625 + $0x170] sm:$0xff] %v4309
        %4673 = vst [vmem:[%s4625 + $0x178] sm:$0xff] %v4311
        %4674 = vst [vmem:[%s4625 + $0x180] sm:$0xff] %v3866
        %4675 = vst [vmem:[%s4625 + $0x188] sm:$0xff] %v3868
        %4676 = vst [vmem:[%s4625 + $0x190] sm:$0xff] %v4315
        %4677 = vst [vmem:[%s4625 + $0x198] sm:$0xff] %v4317
        %4678 = vst [vmem:[%s4625 + $0x1a0] sm:$0xff] %v3872
        %4679 = vst [vmem:[%s4625 + $0x1a8] sm:$0xff] %v3874
        %4680 = vst [vmem:[%s4625 + $0x1b0] sm:$0xff] %v4321
        %4681 = vst [vmem:[%s4625 + $0x1b8] sm:$0xff] %v4323
        %4682 = vst [vmem:[%s4625 + $0x1c0] sm:$0xff] %v3878
        %4683 = vst [vmem:[%s4625 + $0x1c8] sm:$0xff] %v3880
        %4684 = vst [vmem:[%s4625 + $0x1d0] sm:$0xff] %v4327
        %4685 = vst [vmem:[%s4625 + $0x1d8] sm:$0xff] %v4329
        %4686 = vst [vmem:[%s4625 + $0x1e0] sm:$0xff] %v3884
        %4687 = vst [vmem:[%s4625 + $0x1e8] sm:$0xff] %v3886
        %4688 = vst [vmem:[%s4625 + $0x1f0] sm:$0xff] %v4333
        %4689 = vst [vmem:[%s4625 + $0x1f8] sm:$0xff] %v4335
        %4690 = vst [vmem:[%s4625 + $0x200] sm:$0xff] %v3890
        %4691 = vst [vmem:[%s4625 + $0x208] sm:$0xff] %v3892
        %4692 = vst [vmem:[%s4625 + $0x210] sm:$0xff] %v4339
        %4693 = vst [vmem:[%s4625 + $0x218] sm:$0xff] %v4341
        %4694 = vst [vmem:[%s4625 + $0x220] sm:$0xff] %v3896
        %4695 = vst [vmem:[%s4625 + $0x228] sm:$0xff] %v3898
        %4696 = vst [vmem:[%s4625 + $0x230] sm:$0xff] %v4345
        %4697 = vst [vmem:[%s4625 + $0x238] sm:$0xff] %v4347
        %4698 = vst [vmem:[%s4625 + $0x240] sm:$0xff] %v3902
        %4699 = vst [vmem:[%s4625 + $0x248] sm:$0xff] %v3904
        %4700 = vst [vmem:[%s4625 + $0x250] sm:$0xff] %v4351
        %4701 = vst [vmem:[%s4625 + $0x258] sm:$0xff] %v4353
        %4702 = vst [vmem:[%s4625 + $0x260] sm:$0xff] %v3908
        %4703 = vst [vmem:[%s4625 + $0x268] sm:$0xff] %v3910
        %4704 = vst [vmem:[%s4625 + $0x270] sm:$0xff] %v4357
        %4705 = vst [vmem:[%s4625 + $0x278] sm:$0xff] %v4359
        %4706 = vst [vmem:[%s4625 + $0x280] sm:$0xff] %v3914
        %4707 = vst [vmem:[%s4625 + $0x288] sm:$0xff] %v3916
        %4708 = vst [vmem:[%s4625 + $0x290] sm:$0xff] %v4363
        %4709 = vst [vmem:[%s4625 + $0x298] sm:$0xff] %v4365
        %4710 = vst [vmem:[%s4625 + $0x2a0] sm:$0xff] %v3920
        %4711 = vst [vmem:[%s4625 + $0x2a8] sm:$0xff] %v3922
        %4712 = vst [vmem:[%s4625 + $0x2b0] sm:$0xff] %v4369
        %4713 = vst [vmem:[%s4625 + $0x2b8] sm:$0xff] %v4371
        %4714 = vst [vmem:[%s4625 + $0x2c0] sm:$0xff] %v3926
        %4715 = vst [vmem:[%s4625 + $0x2c8] sm:$0xff] %v3928
        %4716 = vst [vmem:[%s4625 + $0x2d0] sm:$0xff] %v4375
        %4717 = vst [vmem:[%s4625 + $0x2d8] sm:$0xff] %v4377
        %4718 = vst [vmem:[%s4625 + $0x2e0] sm:$0xff] %v3932
        %4719 = vst [vmem:[%s4625 + $0x2e8] sm:$0xff] %v3934
        %4720 = vst [vmem:[%s4625 + $0x2f0] sm:$0xff] %v4381
        %4721 = vst [vmem:[%s4625 + $0x2f8] sm:$0xff] %v4383
        %4722 = vst [vmem:[%s4625 + $0x300] sm:$0xff] %v3938
        %4723 = vst [vmem:[%s4625 + $0x308] sm:$0xff] %v3940
        %4724 = vst [vmem:[%s4625 + $0x310] sm:$0xff] %v4387
        %4725 = vst [vmem:[%s4625 + $0x318] sm:$0xff] %v4389
        %4726 = vst [vmem:[%s4625 + $0x320] sm:$0xff] %v3944
        %4727 = vst [vmem:[%s4625 + $0x328] sm:$0xff] %v3946
        %4728 = vst [vmem:[%s4625 + $0x330] sm:$0xff] %v4393
        %4729 = vst [vmem:[%s4625 + $0x338] sm:$0xff] %v4395
        %4730 = vst [vmem:[%s4625 + $0x340] sm:$0xff] %v3950
        %4731 = vst [vmem:[%s4625 + $0x348] sm:$0xff] %v3952
        %4732 = vst [vmem:[%s4625 + $0x350] sm:$0xff] %v4399
        %4733 = vst [vmem:[%s4625 + $0x358] sm:$0xff] %v4401
        %4734 = vst [vmem:[%s4625 + $0x360] sm:$0xff] %v3956
        %4735 = vst [vmem:[%s4625 + $0x368] sm:$0xff] %v3958
        %4736 = vst [vmem:[%s4625 + $0x370] sm:$0xff] %v4405
        %4737 = vst [vmem:[%s4625 + $0x378] sm:$0xff] %v4407
        %4738 = vst [vmem:[%s4625 + $0x380] sm:$0xff] %v3962
        %4739 = vst [vmem:[%s4625 + $0x388] sm:$0xff] %v3964
        %4740 = vst [vmem:[%s4625 + $0x390] sm:$0xff] %v4411
        %4741 = vst [vmem:[%s4625 + $0x398] sm:$0xff] %v4413
        %4742 = vst [vmem:[%s4625 + $0x3a0] sm:$0xff] %v3968
        %4743 = vst [vmem:[%s4625 + $0x3a8] sm:$0xff] %v3970
        %4744 = vst [vmem:[%s4625 + $0x3b0] sm:$0xff] %v4417
        %4745 = vst [vmem:[%s4625 + $0x3b8] sm:$0xff] %v4419
        %4746 = vst [vmem:[%s4625 + $0x3c0] sm:$0xff] %v3974
        %4747 = vst [vmem:[%s4625 + $0x3c8] sm:$0xff] %v3976
        %4748 = vst [vmem:[%s4625 + $0x3d0] sm:$0xff] %v4423
        %4749 = vst [vmem:[%s4625 + $0x3d8] sm:$0xff] %v4425
        %4750 = vst [vmem:[%s4625 + $0x3e0] sm:$0xff] %v3980
        %4751 = vst [vmem:[%s4625 + $0x3e8] sm:$0xff] %v3982
        %4752 = vst [vmem:[%s4625 + $0x3f0] sm:$0xff] %v4429
        %4753 = vst [vmem:[%s4625 + $0x3f8] sm:$0xff] %v4431
        %4754 = vst [vmem:[%s4625 + $0x400] sm:$0xff] %v3986
        %4755 = vst [vmem:[%s4625 + $0x408] sm:$0xff] %v3988
        %4756 = vst [vmem:[%s4625 + $0x410] sm:$0xff] %v4435
        %4757 = vst [vmem:[%s4625 + $0x418] sm:$0xff] %v4437
        %4758 = vst [vmem:[%s4625 + $0x420] sm:$0xff] %v3992
        %4759 = vst [vmem:[%s4625 + $0x428] sm:$0xff] %v3994
        %4760 = vst [vmem:[%s4625 + $0x430] sm:$0xff] %v4441
        %4761 = vst [vmem:[%s4625 + $0x438] sm:$0xff] %v4443
        %4762 = vst [vmem:[%s4625 + $0x440] sm:$0xff] %v3998
        %4763 = vst [vmem:[%s4625 + $0x448] sm:$0xff] %v4000
        %4764 = vst [vmem:[%s4625 + $0x450] sm:$0xff] %v4447
        %4765 = vst [vmem:[%s4625 + $0x458] sm:$0xff] %v4449
        %4766 = vst [vmem:[%s4625 + $0x460] sm:$0xff] %v4004
        %4767 = vst [vmem:[%s4625 + $0x468] sm:$0xff] %v4006
        %4768 = vst [vmem:[%s4625 + $0x470] sm:$0xff] %v4453
        %4769 = vst [vmem:[%s4625 + $0x478] sm:$0xff] %v4455
        %4770 = vst [vmem:[%s4625 + $0x480] sm:$0xff] %v4010
        %4771 = vst [vmem:[%s4625 + $0x488] sm:$0xff] %v4012
        %4772 = vst [vmem:[%s4625 + $0x490] sm:$0xff] %v4459
        %4773 = vst [vmem:[%s4625 + $0x498] sm:$0xff] %v4461
        %4774 = vst [vmem:[%s4625 + $0x4a0] sm:$0xff] %v4016
        %4775 = vst [vmem:[%s4625 + $0x4a8] sm:$0xff] %v4018
        %4776 = vst [vmem:[%s4625 + $0x4b0] sm:$0xff] %v4465
        %4777 = vst [vmem:[%s4625 + $0x4b8] sm:$0xff] %v4467
        %4778 = vst [vmem:[%s4625 + $0x4c0] sm:$0xff] %v4022
        %4779 = vst [vmem:[%s4625 + $0x4c8] sm:$0xff] %v4024
        %4780 = vst [vmem:[%s4625 + $0x4d0] sm:$0xff] %v4471
        %4781 = vst [vmem:[%s4625 + $0x4d8] sm:$0xff] %v4473
        %4782 = vst [vmem:[%s4625 + $0x4e0] sm:$0xff] %v4028
        %4783 = vst [vmem:[%s4625 + $0x4e8] sm:$0xff] %v4030
        %4784 = vst [vmem:[%s4625 + $0x4f0] sm:$0xff] %v4477
        %4785 = vst [vmem:[%s4625 + $0x4f8] sm:$0xff] %v4479
        %4786 = vst [vmem:[%s4625 + $0x500] sm:$0xff] %v4034
        %4787 = vst [vmem:[%s4625 + $0x508] sm:$0xff] %v4036
        %4788 = vst [vmem:[%s4625 + $0x510] sm:$0xff] %v4483
        %4789 = vst [vmem:[%s4625 + $0x518] sm:$0xff] %v4485
        %4790 = vst [vmem:[%s4625 + $0x520] sm:$0xff] %v4040
        %4791 = vst [vmem:[%s4625 + $0x528] sm:$0xff] %v4042
        %4792 = vst [vmem:[%s4625 + $0x530] sm:$0xff] %v4489
        %4793 = vst [vmem:[%s4625 + $0x538] sm:$0xff] %v4491
        %4794 = vst [vmem:[%s4625 + $0x540] sm:$0xff] %v4046
        %4795 = vst [vmem:[%s4625 + $0x548] sm:$0xff] %v4048
        %4796 = vst [vmem:[%s4625 + $0x550] sm:$0xff] %v4495
        %4797 = vst [vmem:[%s4625 + $0x558] sm:$0xff] %v4497
        %4798 = vst [vmem:[%s4625 + $0x560] sm:$0xff] %v4052
        %4799 = vst [vmem:[%s4625 + $0x568] sm:$0xff] %v4054
        %4800 = vst [vmem:[%s4625 + $0x570] sm:$0xff] %v4501
        %4801 = vst [vmem:[%s4625 + $0x578] sm:$0xff] %v4503
        %4802 = vst [vmem:[%s4625 + $0x580] sm:$0xff] %v4058
        %4803 = vst [vmem:[%s4625 + $0x588] sm:$0xff] %v4060
        %4804 = vst [vmem:[%s4625 + $0x590] sm:$0xff] %v4507
        %4805 = vst [vmem:[%s4625 + $0x598] sm:$0xff] %v4509
        %4806 = vst [vmem:[%s4625 + $0x5a0] sm:$0xff] %v4064
        %4807 = vst [vmem:[%s4625 + $0x5a8] sm:$0xff] %v4066
        %4808 = vst [vmem:[%s4625 + $0x5b0] sm:$0xff] %v4513
        %4809 = vst [vmem:[%s4625 + $0x5b8] sm:$0xff] %v4515
        %4810 = vst [vmem:[%s4625 + $0x5c0] sm:$0xff] %v4070
        %4811 = vst [vmem:[%s4625 + $0x5c8] sm:$0xff] %v4072
        %4812 = vst [vmem:[%s4625 + $0x5d0] sm:$0xff] %v4519
        %4813 = vst [vmem:[%s4625 + $0x5d8] sm:$0xff] %v4521
        %4814 = vst [vmem:[%s4625 + $0x5e0] sm:$0xff] %v4076
        %4815 = vst [vmem:[%s4625 + $0x5e8] sm:$0xff] %v4078
        %4816 = vst [vmem:[%s4625 + $0x5f0] sm:$0xff] %v4525
        %4817 = vst [vmem:[%s4625 + $0x5f8] sm:$0xff] %v4527
        %4818 = vst [vmem:[%s4625 + $0x600] sm:$0xff] %v4082
        %4819 = vst [vmem:[%s4625 + $0x608] sm:$0xff] %v4084
        %4820 = vst [vmem:[%s4625 + $0x610] sm:$0xff] %v4531
        %4821 = vst [vmem:[%s4625 + $0x618] sm:$0xff] %v4533
        %4822 = vst [vmem:[%s4625 + $0x620] sm:$0xff] %v4088
        %4823 = vst [vmem:[%s4625 + $0x628] sm:$0xff] %v4090
        %4824 = vst [vmem:[%s4625 + $0x630] sm:$0xff] %v4537
        %4825 = vst [vmem:[%s4625 + $0x638] sm:$0xff] %v4539
        %4826 = vst [vmem:[%s4625 + $0x640] sm:$0xff] %v4094
        %4827 = vst [vmem:[%s4625 + $0x648] sm:$0xff] %v4096
        %4828 = vst [vmem:[%s4625 + $0x650] sm:$0xff] %v4543
        %4829 = vst [vmem:[%s4625 + $0x658] sm:$0xff] %v4545
        %4830 = vst [vmem:[%s4625 + $0x660] sm:$0xff] %v4100
        %4831 = vst [vmem:[%s4625 + $0x668] sm:$0xff] %v4102
        %4832 = vst [vmem:[%s4625 + $0x670] sm:$0xff] %v4549
        %4833 = vst [vmem:[%s4625 + $0x678] sm:$0xff] %v4551
        %4834 = vst [vmem:[%s4625 + $0x680] sm:$0xff] %v4106
        %4835 = vst [vmem:[%s4625 + $0x688] sm:$0xff] %v4108
        %4836 = vst [vmem:[%s4625 + $0x690] sm:$0xff] %v4555
        %4837 = vst [vmem:[%s4625 + $0x698] sm:$0xff] %v4557
        %4838 = vst [vmem:[%s4625 + $0x6a0] sm:$0xff] %v4112
        %4839 = vst [vmem:[%s4625 + $0x6a8] sm:$0xff] %v4114
        %4840 = vst [vmem:[%s4625 + $0x6b0] sm:$0xff] %v4561
        %4841 = vst [vmem:[%s4625 + $0x6b8] sm:$0xff] %v4563
        %4842 = vst [vmem:[%s4625 + $0x6c0] sm:$0xff] %v4118
        %4843 = vst [vmem:[%s4625 + $0x6c8] sm:$0xff] %v4120
        %4844 = vst [vmem:[%s4625 + $0x6d0] sm:$0xff] %v4567
        %4845 = vst [vmem:[%s4625 + $0x6d8] sm:$0xff] %v4569
        %4846 = vst [vmem:[%s4625 + $0x6e0] sm:$0xff] %v4124
        %4847 = vst [vmem:[%s4625 + $0x6e8] sm:$0xff] %v4126
        %4848 = vst [vmem:[%s4625 + $0x6f0] sm:$0xff] %v4573
        %4849 = vst [vmem:[%s4625 + $0x6f8] sm:$0xff] %v4575
        %4850 = vst [vmem:[%s4625 + $0x700] sm:$0xff] %v4130
        %4851 = vst [vmem:[%s4625 + $0x708] sm:$0xff] %v4132
        %4852 = vst [vmem:[%s4625 + $0x710] sm:$0xff] %v4579
        %4853 = vst [vmem:[%s4625 + $0x718] sm:$0xff] %v4581
        %4854 = vst [vmem:[%s4625 + $0x720] sm:$0xff] %v4136
        %4855 = vst [vmem:[%s4625 + $0x728] sm:$0xff] %v4138
        %4856 = vst [vmem:[%s4625 + $0x730] sm:$0xff] %v4585
        %4857 = vst [vmem:[%s4625 + $0x738] sm:$0xff] %v4587
        %4858 = vst [vmem:[%s4625 + $0x740] sm:$0xff] %v4142
        %4859 = vst [vmem:[%s4625 + $0x748] sm:$0xff] %v4144
        %4860 = vst [vmem:[%s4625 + $0x750] sm:$0xff] %v4591
        %4861 = vst [vmem:[%s4625 + $0x758] sm:$0xff] %v4593
        %4862 = vst [vmem:[%s4625 + $0x760] sm:$0xff] %v4148
        %4863 = vst [vmem:[%s4625 + $0x768] sm:$0xff] %v4150
        %4864 = vst [vmem:[%s4625 + $0x770] sm:$0xff] %v4597
        %4865 = vst [vmem:[%s4625 + $0x778] sm:$0xff] %v4599
        %4866 = vst [vmem:[%s4625 + $0x780] sm:$0xff] %v4154
        %4867 = vst [vmem:[%s4625 + $0x788] sm:$0xff] %v4156
        %4868 = vst [vmem:[%s4625 + $0x790] sm:$0xff] %v4603
        %4869 = vst [vmem:[%s4625 + $0x798] sm:$0xff] %v4605
        %4870 = vst [vmem:[%s4625 + $0x7a0] sm:$0xff] %v4160
        %4871 = vst [vmem:[%s4625 + $0x7a8] sm:$0xff] %v4162
        %4872 = vst [vmem:[%s4625 + $0x7b0] sm:$0xff] %v4609
        %4873 = vst [vmem:[%s4625 + $0x7b8] sm:$0xff] %v4611
        %4874 = vst [vmem:[%s4625 + $0x7c0] sm:$0xff] %v4166
        %4875 = vst [vmem:[%s4625 + $0x7c8] sm:$0xff] %v4168
        %4876 = vst [vmem:[%s4625 + $0x7d0] sm:$0xff] %v4615
        %4877 = vst [vmem:[%s4625 + $0x7d8] sm:$0xff] %v4617
        %4878 = vst [vmem:[%s4625 + $0x7e0] sm:$0xff] %v4172
        %4879 = vst [vmem:[%s4625 + $0x7e8] sm:$0xff] %v4174
        %4880 = vst [vmem:[%s4625 + $0x7f0] sm:$0xff] %v4621
        %4881 = vst [vmem:[%s4625 + $0x7f8] sm:$0xff] %v4623
        %v4882 = vld [vmem:[%s3] sm:$0xff]
        %v4883 = vld [vmem:[%s3 + $0x8] sm:$0xff]
        %v4884 = vld [vmem:[%s3 + $0x10] sm:$0xff]
        %v4885 = vld [vmem:[%s3 + $0x18] sm:$0xff]
        %v4886 = vld [vmem:[%s3 + $0x20] sm:$0xff]
        %v4887 = vld [vmem:[%s3 + $0x28] sm:$0xff]
        %v4888 = vld [vmem:[%s3 + $0x30] sm:$0xff]
        %v4889 = vld [vmem:[%s3 + $0x38] sm:$0xff]
        %v4890 = vld [vmem:[%s3 + $0x40] sm:$0xff]
        %v4891 = vld [vmem:[%s3 + $0x48] sm:$0xff]
        %v4892 = vld [vmem:[%s3 + $0x50] sm:$0xff]
        %v4893 = vld [vmem:[%s3 + $0x58] sm:$0xff]
        %v4894 = vld [vmem:[%s3 + $0x60] sm:$0xff]
        %v4895 = vld [vmem:[%s3 + $0x68] sm:$0xff]
        %v4896 = vld [vmem:[%s3 + $0x70] sm:$0xff]
        %v4897 = vld [vmem:[%s3 + $0x78] sm:$0xff]
        %v4898 = vld [vmem:[%s3 + $0x80] sm:$0xff]
        %v4899 = vld [vmem:[%s3 + $0x88] sm:$0xff]
        %v4900 = vld [vmem:[%s3 + $0x90] sm:$0xff]
        %v4901 = vld [vmem:[%s3 + $0x98] sm:$0xff]
        %v4902 = vld [vmem:[%s3 + $0xa0] sm:$0xff]
        %v4903 = vld [vmem:[%s3 + $0xa8] sm:$0xff]
        %v4904 = vld [vmem:[%s3 + $0xb0] sm:$0xff]
        %v4905 = vld [vmem:[%s3 + $0xb8] sm:$0xff]
        %v4906 = vld [vmem:[%s3 + $0xc0] sm:$0xff]
        %v4907 = vld [vmem:[%s3 + $0xc8] sm:$0xff]
        %v4908 = vld [vmem:[%s3 + $0xd0] sm:$0xff]
        %v4909 = vld [vmem:[%s3 + $0xd8] sm:$0xff]
        %v4910 = vld [vmem:[%s3 + $0xe0] sm:$0xff]
        %v4911 = vld [vmem:[%s3 + $0xe8] sm:$0xff]
        %v4912 = vld [vmem:[%s3 + $0xf0] sm:$0xff]
        %v4913 = vld [vmem:[%s3 + $0xf8] sm:$0xff]
        %v4914 = vld [vmem:[%s3 + $0x100] sm:$0xff]
        %v4915 = vld [vmem:[%s3 + $0x108] sm:$0xff]
        %v4916 = vld [vmem:[%s3 + $0x110] sm:$0xff]
        %v4917 = vld [vmem:[%s3 + $0x118] sm:$0xff]
        %v4918 = vld [vmem:[%s3 + $0x120] sm:$0xff]
        %v4919 = vld [vmem:[%s3 + $0x128] sm:$0xff]
        %v4920 = vld [vmem:[%s3 + $0x130] sm:$0xff]
        %v4921 = vld [vmem:[%s3 + $0x138] sm:$0xff]
        %v4922 = vld [vmem:[%s3 + $0x140] sm:$0xff]
        %v4923 = vld [vmem:[%s3 + $0x148] sm:$0xff]
        %v4924 = vld [vmem:[%s3 + $0x150] sm:$0xff]
        %v4925 = vld [vmem:[%s3 + $0x158] sm:$0xff]
        %v4926 = vld [vmem:[%s3 + $0x160] sm:$0xff]
        %v4927 = vld [vmem:[%s3 + $0x168] sm:$0xff]
        %v4928 = vld [vmem:[%s3 + $0x170] sm:$0xff]
        %v4929 = vld [vmem:[%s3 + $0x178] sm:$0xff]
        %v4930 = vld [vmem:[%s3 + $0x180] sm:$0xff]
        %v4931 = vld [vmem:[%s3 + $0x188] sm:$0xff]
        %v4932 = vld [vmem:[%s3 + $0x190] sm:$0xff]
        %v4933 = vld [vmem:[%s3 + $0x198] sm:$0xff]
        %v4934 = vld [vmem:[%s3 + $0x1a0] sm:$0xff]
        %v4935 = vld [vmem:[%s3 + $0x1a8] sm:$0xff]
        %v4936 = vld [vmem:[%s3 + $0x1b0] sm:$0xff]
        %v4937 = vld [vmem:[%s3 + $0x1b8] sm:$0xff]
        %v4938 = vld [vmem:[%s3 + $0x1c0] sm:$0xff]
        %v4939 = vld [vmem:[%s3 + $0x1c8] sm:$0xff]
        %v4940 = vld [vmem:[%s3 + $0x1d0] sm:$0xff]
        %v4941 = vld [vmem:[%s3 + $0x1d8] sm:$0xff]
        %v4942 = vld [vmem:[%s3 + $0x1e0] sm:$0xff]
        %v4943 = vld [vmem:[%s3 + $0x1e8] sm:$0xff]
        %v4944 = vld [vmem:[%s3 + $0x1f0] sm:$0xff]
        %v4945 = vld [vmem:[%s3 + $0x1f8] sm:$0xff]
        %v4947 = vsel %vm444, %v4882, 0
        %v4950 = vsel %vm444, %v4883, 0
        %v4953 = vsel %vm444, %v4884, 0
        %v4956 = vsel %vm444, %v4885, 0
        %v4959 = vsel %vm444, %v4886, 0
        %v4962 = vsel %vm444, %v4887, 0
        %v4965 = vsel %vm444, %v4888, 0
        %v4968 = vsel %vm444, %v4889, 0
        %v4971 = vsel %vm444, %v4890, 0
        %v4974 = vsel %vm444, %v4891, 0
        %v4977 = vsel %vm444, %v4892, 0
        %v4980 = vsel %vm444, %v4893, 0
        %v4983 = vsel %vm444, %v4894, 0
        %v4986 = vsel %vm444, %v4895, 0
        %v4989 = vsel %vm444, %v4896, 0
        %v4992 = vsel %vm444, %v4897, 0
        %v4995 = vsel %vm444, %v4898, 0
        %v4998 = vsel %vm444, %v4899, 0
        %v5001 = vsel %vm444, %v4900, 0
        %v5004 = vsel %vm444, %v4901, 0
        %v5007 = vsel %vm444, %v4902, 0
        %v5010 = vsel %vm444, %v4903, 0
        %v5013 = vsel %vm444, %v4904, 0
        %v5016 = vsel %vm444, %v4905, 0
        %v5019 = vsel %vm444, %v4906, 0
        %v5022 = vsel %vm444, %v4907, 0
        %v5025 = vsel %vm444, %v4908, 0
        %v5028 = vsel %vm444, %v4909, 0
        %v5031 = vsel %vm444, %v4910, 0
        %v5034 = vsel %vm444, %v4911, 0
        %v5037 = vsel %vm444, %v4912, 0
        %v5040 = vsel %vm444, %v4913, 0
        %v5043 = vsel %vm444, %v4914, 0
        %v5046 = vsel %vm444, %v4915, 0
        %v5049 = vsel %vm444, %v4916, 0
        %v5052 = vsel %vm444, %v4917, 0
        %v5055 = vsel %vm444, %v4918, 0
        %v5058 = vsel %vm444, %v4919, 0
        %v5061 = vsel %vm444, %v4920, 0
        %v5064 = vsel %vm444, %v4921, 0
        %v5067 = vsel %vm444, %v4922, 0
        %v5070 = vsel %vm444, %v4923, 0
        %v5073 = vsel %vm444, %v4924, 0
        %v5076 = vsel %vm444, %v4925, 0
        %v5079 = vsel %vm444, %v4926, 0
        %v5082 = vsel %vm444, %v4927, 0
        %v5085 = vsel %vm444, %v4928, 0
        %v5088 = vsel %vm444, %v4929, 0
        %v5091 = vsel %vm444, %v4930, 0
        %v5094 = vsel %vm444, %v4931, 0
        %v5097 = vsel %vm444, %v4932, 0
        %v5100 = vsel %vm444, %v4933, 0
        %v5103 = vsel %vm444, %v4934, 0
        %v5106 = vsel %vm444, %v4935, 0
        %v5109 = vsel %vm444, %v4936, 0
        %v5112 = vsel %vm444, %v4937, 0
        %v5115 = vsel %vm444, %v4938, 0
        %v5118 = vsel %vm444, %v4939, 0
        %v5121 = vsel %vm444, %v4940, 0
        %v5124 = vsel %vm444, %v4941, 0
        %v5127 = vsel %vm444, %v4942, 0
        %v5130 = vsel %vm444, %v4943, 0
        %v5133 = vsel %vm444, %v4944, 0
        %v5136 = vsel %vm444, %v4945, 0
        %5138 = vmatprep.subr.mxu0 %v547
        %5139 = vmatpush1.msra.mxu0 %v545
        %5140 = vmatprep.subr.mxu0 0.0
        %5141 = vmatpush1.msra.mxu0 0.0
        %5142 = vmatprep.subr.mxu0 0.0
        %5143 = vmatpush1.msra.mxu0 0.0
        %5144 = vmatprep.subr.mxu0 0.0
        %5145 = vmatpush1.msra.mxu0 0.0
        %5146 = vmatprep.subr.mxu0 0.0
        %5147 = vmatpush1.msra.mxu0 0.0
        %5148 = vmatprep.subr.mxu0 0.0
        %5149 = vmatpush1.msra.mxu0 0.0
        %5150 = vmatprep.subr.mxu0 0.0
        %5151 = vmatpush1.msra.mxu0 0.0
        %5152 = vmatprep.subr.mxu0 0.0
        %5153 = vmatpush1.msra.mxu0 0.0
        %5154 = vmatprep.subr.mxu0 0.0
        %5155 = vmatpush1.msra.mxu0 0.0
        %5156 = vmatprep.subr.mxu0 0.0
        %5157 = vmatpush1.msra.mxu0 0.0
        %5158 = vmatprep.subr.mxu0 0.0
        %5159 = vmatpush1.msra.mxu0 0.0
        %5160 = vmatprep.subr.mxu0 0.0
        %5161 = vmatpush1.msra.mxu0 0.0
        %5162 = vmatprep.subr.mxu0 0.0
        %5163 = vmatpush1.msra.mxu0 0.0
        %5164 = vmatprep.subr.mxu0 0.0
        %5165 = vmatpush1.msra.mxu0 0.0
        %5166 = vmatprep.subr.mxu0 0.0
        %5167 = vmatpush1.msra.mxu0 0.0
        %5168 = vmatprep.subr.mxu0 0.0
        %5169 = vmatpush1.msra.mxu0 0.0
        %5170 = vmatprep.subr.mxu0 0.0
        %5171 = vmatpush1.msra.mxu0 0.0
        %5172 = vmatprep.subr.mxu0 0.0
        %5173 = vmatpush1.msra.mxu0 0.0
        %5174 = vmatprep.subr.mxu0 0.0
        %5175 = vmatpush1.msra.mxu0 0.0
        %5176 = vmatprep.subr.mxu0 0.0
        %5177 = vmatpush1.msra.mxu0 0.0
        %5178 = vmatprep.subr.mxu0 0.0
        %5179 = vmatpush1.msra.mxu0 0.0
        %5180 = vmatprep.subr.mxu0 0.0
        %5181 = vmatpush1.msra.mxu0 0.0
        %5182 = vmatprep.subr.mxu0 0.0
        %5183 = vmatpush1.msra.mxu0 0.0
        %5184 = vmatprep.subr.mxu0 0.0
        %5185 = vmatpush1.msra.mxu0 0.0
        %5186 = vmatprep.subr.mxu0 0.0
        %5187 = vmatpush1.msra.mxu0 0.0
        %5188 = vmatprep.subr.mxu0 0.0
        %5189 = vmatpush1.msra.mxu0 0.0
        %5190 = vmatprep.subr.mxu0 0.0
        %5191 = vmatpush1.msra.mxu0 0.0
        %5192 = vmatprep.subr.mxu0 0.0
        %5193 = vmatpush1.msra.mxu0 0.0
        %5194 = vmatprep.subr.mxu0 0.0
        %5195 = vmatpush1.msra.mxu0 0.0
        %5196 = vmatprep.subr.mxu0 0.0
        %5197 = vmatpush1.msra.mxu0 0.0
        %5198 = vmatprep.subr.mxu0 0.0
        %5199 = vmatpush1.msra.mxu0 0.0
        %5200 = vmatprep.subr.mxu0 0.0
        %5201 = vmatpush1.msra.mxu0 0.0
        %5202 = vmatprep.mubr.f32.mxu0 0.0
        %5203 = vmatmul.mubr.f32.gmra.mrb[0].mxu0 %v4947
        %v5204 = vpop.f32.mrb[0].mxu0
        %v5205 = vadd.f32 0.0, %v5204
        %v5206 = vpop.f32.mrb[0].mxu0
        %v5207 = vadd.f32 0.0, %v5206
        %5208 = vmatprep.mubr.f32.mxu0 0.0
        %5209 = vmatmul.mubr.f32.gmra.mrb[0].mxu0 %v4950
        %v5210 = vpop.f32.mrb[0].mxu0
        %v5211 = vadd.f32 0.0, %v5210
        %v5212 = vpop.f32.mrb[0].mxu0
        %v5213 = vadd.f32 0.0, %v5212
        %5214 = vmatprep.mubr.f32.mxu0 0.0
        %5215 = vmatmul.mubr.f32.gmra.mrb[0].mxu0 %v4953
        %v5216 = vpop.f32.mrb[0].mxu0
        %v5217 = vadd.f32 0.0, %v5216
        %v5218 = vpop.f32.mrb[0].mxu0
        %v5219 = vadd.f32 0.0, %v5218
        %5220 = vmatprep.mubr.f32.mxu0 0.0
        %5221 = vmatmul.mubr.f32.gmra.mrb[0].mxu0 %v4956
        %v5222 = vpop.f32.mrb[0].mxu0
        %v5223 = vadd.f32 0.0, %v5222
        %v5224 = vpop.f32.mrb[0].mxu0
        %v5225 = vadd.f32 0.0, %v5224
        %5226 = vmatprep.mubr.f32.mxu0 0.0
        %5227 = vmatmul.mubr.f32.gmra.mrb[0].mxu0 %v4959
        %v5228 = vpop.f32.mrb[0].mxu0
        %v5229 = vadd.f32 0.0, %v5228
        %v5230 = vpop.f32.mrb[0].mxu0
        %v5231 = vadd.f32 0.0, %v5230
        %5232 = vmatprep.mubr.f32.mxu0 0.0
        %5233 = vmatmul.mubr.f32.gmra.mrb[0].mxu0 %v4962
        %v5234 = vpop.f32.mrb[0].mxu0
        %v5235 = vadd.f32 0.0, %v5234
        %v5236 = vpop.f32.mrb[0].mxu0
        %v5237 = vadd.f32 0.0, %v5236
        %5238 = vmatprep.mubr.f32.mxu0 0.0
        %5239 = vmatmul.mubr.f32.gmra.mrb[0].mxu0 %v4965
        %v5240 = vpop.f32.mrb[0].mxu0
        %v5241 = vadd.f32 0.0, %v5240
        %v5242 = vpop.f32.mrb[0].mxu0
        %v5243 = vadd.f32 0.0, %v5242
        %5244 = vmatprep.mubr.f32.mxu0 0.0
        %5245 = vmatmul.mubr.f32.gmra.mrb[0].mxu0 %v4968
        %v5246 = vpop.f32.mrb[0].mxu0
        %v5247 = vadd.f32 0.0, %v5246
        %v5248 = vpop.f32.mrb[0].mxu0
        %v5249 = vadd.f32 0.0, %v5248
        %5250 = vmatprep.mubr.f32.mxu0 0.0
        %5251 = vmatmul.mubr.f32.gmra.mrb[0].mxu0 %v4971
        %v5252 = vpop.f32.mrb[0].mxu0
        %v5253 = vadd.f32 0.0, %v5252
        %v5254 = vpop.f32.mrb[0].mxu0
        %v5255 = vadd.f32 0.0, %v5254
        %5256 = vmatprep.mubr.f32.mxu0 0.0
        %5257 = vmatmul.mubr.f32.gmra.mrb[0].mxu0 %v4974
        %v5258 = vpop.f32.mrb[0].mxu0
        %v5259 = vadd.f32 0.0, %v5258
        %v5260 = vpop.f32.mrb[0].mxu0
        %v5261 = vadd.f32 0.0, %v5260
        %5262 = vmatprep.mubr.f32.mxu0 0.0
        %5263 = vmatmul.mubr.f32.gmra.mrb[0].mxu0 %v4977
        %v5264 = vpop.f32.mrb[0].mxu0
        %v5265 = vadd.f32 0.0, %v5264
        %v5266 = vpop.f32.mrb[0].mxu0
        %v5267 = vadd.f32 0.0, %v5266
        %5268 = vmatprep.mubr.f32.mxu0 0.0
        %5269 = vmatmul.mubr.f32.gmra.mrb[0].mxu0 %v4980
        %v5270 = vpop.f32.mrb[0].mxu0
        %v5271 = vadd.f32 0.0, %v5270
        %v5272 = vpop.f32.mrb[0].mxu0
        %v5273 = vadd.f32 0.0, %v5272
        %5274 = vmatprep.mubr.f32.mxu0 0.0
        %5275 = vmatmul.mubr.f32.gmra.mrb[0].mxu0 %v4983
        %v5276 = vpop.f32.mrb[0].mxu0
        %v5277 = vadd.f32 0.0, %v5276
        %v5278 = vpop.f32.mrb[0].mxu0
        %v5279 = vadd.f32 0.0, %v5278
        %5280 = vmatprep.mubr.f32.mxu0 0.0
        %5281 = vmatmul.mubr.f32.gmra.mrb[0].mxu0 %v4986
        %v5282 = vpop.f32.mrb[0].mxu0
        %v5283 = vadd.f32 0.0, %v5282
        %v5284 = vpop.f32.mrb[0].mxu0
        %v5285 = vadd.f32 0.0, %v5284
        %5286 = vmatprep.mubr.f32.mxu0 0.0
        %5287 = vmatmul.mubr.f32.gmra.mrb[0].mxu0 %v4989
        %v5288 = vpop.f32.mrb[0].mxu0
        %v5289 = vadd.f32 0.0, %v5288
        %v5290 = vpop.f32.mrb[0].mxu0
        %v5291 = vadd.f32 0.0, %v5290
        %5292 = vmatprep.mubr.f32.mxu0 0.0
        %5293 = vmatmul.mubr.f32.gmra.mrb[0].mxu0 %v4992
        %v5294 = vpop.f32.mrb[0].mxu0
        %v5295 = vadd.f32 0.0, %v5294
        %v5296 = vpop.f32.mrb[0].mxu0
        %v5297 = vadd.f32 0.0, %v5296
        %5298 = vmatprep.mubr.f32.mxu0 0.0
        %5299 = vmatmul.mubr.f32.gmra.mrb[0].mxu0 %v4995
        %v5300 = vpop.f32.mrb[0].mxu0
        %v5301 = vadd.f32 0.0, %v5300
        %v5302 = vpop.f32.mrb[0].mxu0
        %v5303 = vadd.f32 0.0, %v5302
        %5304 = vmatprep.mubr.f32.mxu0 0.0
        %5305 = vmatmul.mubr.f32.gmra.mrb[0].mxu0 %v4998
        %v5306 = vpop.f32.mrb[0].mxu0
        %v5307 = vadd.f32 0.0, %v5306
        %v5308 = vpop.f32.mrb[0].mxu0
        %v5309 = vadd.f32 0.0, %v5308
        %5310 = vmatprep.mubr.f32.mxu0 0.0
        %5311 = vmatmul.mubr.f32.gmra.mrb[0].mxu0 %v5001
        %v5312 = vpop.f32.mrb[0].mxu0
        %v5313 = vadd.f32 0.0, %v5312
        %v5314 = vpop.f32.mrb[0].mxu0
        %v5315 = vadd.f32 0.0, %v5314
        %5316 = vmatprep.mubr.f32.mxu0 0.0
        %5317 = vmatmul.mubr.f32.gmra.mrb[0].mxu0 %v5004
        %v5318 = vpop.f32.mrb[0].mxu0
        %v5319 = vadd.f32 0.0, %v5318
        %v5320 = vpop.f32.mrb[0].mxu0
        %v5321 = vadd.f32 0.0, %v5320
        %5322 = vmatprep.mubr.f32.mxu0 0.0
        %5323 = vmatmul.mubr.f32.gmra.mrb[0].mxu0 %v5007
        %v5324 = vpop.f32.mrb[0].mxu0
        %v5325 = vadd.f32 0.0, %v5324
        %v5326 = vpop.f32.mrb[0].mxu0
        %v5327 = vadd.f32 0.0, %v5326
        %5328 = vmatprep.mubr.f32.mxu0 0.0
        %5329 = vmatmul.mubr.f32.gmra.mrb[0].mxu0 %v5010
        %v5330 = vpop.f32.mrb[0].mxu0
        %v5331 = vadd.f32 0.0, %v5330
        %v5332 = vpop.f32.mrb[0].mxu0
        %v5333 = vadd.f32 0.0, %v5332
        %5334 = vmatprep.mubr.f32.mxu0 0.0
        %5335 = vmatmul.mubr.f32.gmra.mrb[0].mxu0 %v5013
        %v5336 = vpop.f32.mrb[0].mxu0
        %v5337 = vadd.f32 0.0, %v5336
        %v5338 = vpop.f32.mrb[0].mxu0
        %v5339 = vadd.f32 0.0, %v5338
        %5340 = vmatprep.mubr.f32.mxu0 0.0
        %5341 = vmatmul.mubr.f32.gmra.mrb[0].mxu0 %v5016
        %v5342 = vpop.f32.mrb[0].mxu0
        %v5343 = vadd.f32 0.0, %v5342
        %v5344 = vpop.f32.mrb[0].mxu0
        %v5345 = vadd.f32 0.0, %v5344
        %5346 = vmatprep.mubr.f32.mxu0 0.0
        %5347 = vmatmul.mubr.f32.gmra.mrb[0].mxu0 %v5019
        %v5348 = vpop.f32.mrb[0].mxu0
        %v5349 = vadd.f32 0.0, %v5348
        %v5350 = vpop.f32.mrb[0].mxu0
        %v5351 = vadd.f32 0.0, %v5350
        %5352 = vmatprep.mubr.f32.mxu0 0.0
        %5353 = vmatmul.mubr.f32.gmra.mrb[0].mxu0 %v5022
        %v5354 = vpop.f32.mrb[0].mxu0
        %v5355 = vadd.f32 0.0, %v5354
        %v5356 = vpop.f32.mrb[0].mxu0
        %v5357 = vadd.f32 0.0, %v5356
        %5358 = vmatprep.mubr.f32.mxu0 0.0
        %5359 = vmatmul.mubr.f32.gmra.mrb[0].mxu0 %v5025
        %v5360 = vpop.f32.mrb[0].mxu0
        %v5361 = vadd.f32 0.0, %v5360
        %v5362 = vpop.f32.mrb[0].mxu0
        %v5363 = vadd.f32 0.0, %v5362
        %5364 = vmatprep.mubr.f32.mxu0 0.0
        %5365 = vmatmul.mubr.f32.gmra.mrb[0].mxu0 %v5028
        %v5366 = vpop.f32.mrb[0].mxu0
        %v5367 = vadd.f32 0.0, %v5366
        %v5368 = vpop.f32.mrb[0].mxu0
        %v5369 = vadd.f32 0.0, %v5368
        %5370 = vmatprep.mubr.f32.mxu0 0.0
        %5371 = vmatmul.mubr.f32.gmra.mrb[0].mxu0 %v5031
        %v5372 = vpop.f32.mrb[0].mxu0
        %v5373 = vadd.f32 0.0, %v5372
        %v5374 = vpop.f32.mrb[0].mxu0
        %v5375 = vadd.f32 0.0, %v5374
        %5376 = vmatprep.mubr.f32.mxu0 0.0
        %5377 = vmatmul.mubr.f32.gmra.mrb[0].mxu0 %v5034
        %v5378 = vpop.f32.mrb[0].mxu0
        %v5379 = vadd.f32 0.0, %v5378
        %v5380 = vpop.f32.mrb[0].mxu0
        %v5381 = vadd.f32 0.0, %v5380
        %5382 = vmatprep.mubr.f32.mxu0 0.0
        %5383 = vmatmul.mubr.f32.gmra.mrb[0].mxu0 %v5037
        %v5384 = vpop.f32.mrb[0].mxu0
        %v5385 = vadd.f32 0.0, %v5384
        %v5386 = vpop.f32.mrb[0].mxu0
        %v5387 = vadd.f32 0.0, %v5386
        %5388 = vmatprep.mubr.f32.mxu0 0.0
        %5389 = vmatmul.mubr.f32.gmra.mrb[0].mxu0 %v5040
        %v5390 = vpop.f32.mrb[0].mxu0
        %v5391 = vadd.f32 0.0, %v5390
        %v5392 = vpop.f32.mrb[0].mxu0
        %v5393 = vadd.f32 0.0, %v5392
        %5394 = vmatprep.mubr.f32.mxu0 0.0
        %5395 = vmatmul.mubr.f32.gmra.mrb[0].mxu0 %v5043
        %v5396 = vpop.f32.mrb[0].mxu0
        %v5397 = vadd.f32 0.0, %v5396
        %v5398 = vpop.f32.mrb[0].mxu0
        %v5399 = vadd.f32 0.0, %v5398
        %5400 = vmatprep.mubr.f32.mxu0 0.0
        %5401 = vmatmul.mubr.f32.gmra.mrb[0].mxu0 %v5046
        %v5402 = vpop.f32.mrb[0].mxu0
        %v5403 = vadd.f32 0.0, %v5402
        %v5404 = vpop.f32.mrb[0].mxu0
        %v5405 = vadd.f32 0.0, %v5404
        %5406 = vmatprep.mubr.f32.mxu0 0.0
        %5407 = vmatmul.mubr.f32.gmra.mrb[0].mxu0 %v5049
        %v5408 = vpop.f32.mrb[0].mxu0
        %v5409 = vadd.f32 0.0, %v5408
        %v5410 = vpop.f32.mrb[0].mxu0
        %v5411 = vadd.f32 0.0, %v5410
        %5412 = vmatprep.mubr.f32.mxu0 0.0
        %5413 = vmatmul.mubr.f32.gmra.mrb[0].mxu0 %v5052
        %v5414 = vpop.f32.mrb[0].mxu0
        %v5415 = vadd.f32 0.0, %v5414
        %v5416 = vpop.f32.mrb[0].mxu0
        %v5417 = vadd.f32 0.0, %v5416
        %5418 = vmatprep.mubr.f32.mxu0 0.0
        %5419 = vmatmul.mubr.f32.gmra.mrb[0].mxu0 %v5055
        %v5420 = vpop.f32.mrb[0].mxu0
        %v5421 = vadd.f32 0.0, %v5420
        %v5422 = vpop.f32.mrb[0].mxu0
        %v5423 = vadd.f32 0.0, %v5422
        %5424 = vmatprep.mubr.f32.mxu0 0.0
        %5425 = vmatmul.mubr.f32.gmra.mrb[0].mxu0 %v5058
        %v5426 = vpop.f32.mrb[0].mxu0
        %v5427 = vadd.f32 0.0, %v5426
        %v5428 = vpop.f32.mrb[0].mxu0
        %v5429 = vadd.f32 0.0, %v5428
        %5430 = vmatprep.mubr.f32.mxu0 0.0
        %5431 = vmatmul.mubr.f32.gmra.mrb[0].mxu0 %v5061
        %v5432 = vpop.f32.mrb[0].mxu0
        %v5433 = vadd.f32 0.0, %v5432
        %v5434 = vpop.f32.mrb[0].mxu0
        %v5435 = vadd.f32 0.0, %v5434
        %5436 = vmatprep.mubr.f32.mxu0 0.0
        %5437 = vmatmul.mubr.f32.gmra.mrb[0].mxu0 %v5064
        %v5438 = vpop.f32.mrb[0].mxu0
        %v5439 = vadd.f32 0.0, %v5438
        %v5440 = vpop.f32.mrb[0].mxu0
        %v5441 = vadd.f32 0.0, %v5440
        %5442 = vmatprep.mubr.f32.mxu0 0.0
        %5443 = vmatmul.mubr.f32.gmra.mrb[0].mxu0 %v5067
        %v5444 = vpop.f32.mrb[0].mxu0
        %v5445 = vadd.f32 0.0, %v5444
        %v5446 = vpop.f32.mrb[0].mxu0
        %v5447 = vadd.f32 0.0, %v5446
        %5448 = vmatprep.mubr.f32.mxu0 0.0
        %5449 = vmatmul.mubr.f32.gmra.mrb[0].mxu0 %v5070
        %v5450 = vpop.f32.mrb[0].mxu0
        %v5451 = vadd.f32 0.0, %v5450
        %v5452 = vpop.f32.mrb[0].mxu0
        %v5453 = vadd.f32 0.0, %v5452
        %5454 = vmatprep.mubr.f32.mxu0 0.0
        %5455 = vmatmul.mubr.f32.gmra.mrb[0].mxu0 %v5073
        %v5456 = vpop.f32.mrb[0].mxu0
        %v5457 = vadd.f32 0.0, %v5456
        %v5458 = vpop.f32.mrb[0].mxu0
        %v5459 = vadd.f32 0.0, %v5458
        %5460 = vmatprep.mubr.f32.mxu0 0.0
        %5461 = vmatmul.mubr.f32.gmra.mrb[0].mxu0 %v5076
        %v5462 = vpop.f32.mrb[0].mxu0
        %v5463 = vadd.f32 0.0, %v5462
        %v5464 = vpop.f32.mrb[0].mxu0
        %v5465 = vadd.f32 0.0, %v5464
        %5466 = vmatprep.mubr.f32.mxu0 0.0
        %5467 = vmatmul.mubr.f32.gmra.mrb[0].mxu0 %v5079
        %v5468 = vpop.f32.mrb[0].mxu0
        %v5469 = vadd.f32 0.0, %v5468
        %v5470 = vpop.f32.mrb[0].mxu0
        %v5471 = vadd.f32 0.0, %v5470
        %5472 = vmatprep.mubr.f32.mxu0 0.0
        %5473 = vmatmul.mubr.f32.gmra.mrb[0].mxu0 %v5082
        %v5474 = vpop.f32.mrb[0].mxu0
        %v5475 = vadd.f32 0.0, %v5474
        %v5476 = vpop.f32.mrb[0].mxu0
        %v5477 = vadd.f32 0.0, %v5476
        %5478 = vmatprep.mubr.f32.mxu0 0.0
        %5479 = vmatmul.mubr.f32.gmra.mrb[0].mxu0 %v5085
        %v5480 = vpop.f32.mrb[0].mxu0
        %v5481 = vadd.f32 0.0, %v5480
        %v5482 = vpop.f32.mrb[0].mxu0
        %v5483 = vadd.f32 0.0, %v5482
        %5484 = vmatprep.mubr.f32.mxu0 0.0
        %5485 = vmatmul.mubr.f32.gmra.mrb[0].mxu0 %v5088
        %v5486 = vpop.f32.mrb[0].mxu0
        %v5487 = vadd.f32 0.0, %v5486
        %v5488 = vpop.f32.mrb[0].mxu0
        %v5489 = vadd.f32 0.0, %v5488
        %5490 = vmatprep.mubr.f32.mxu0 0.0
        %5491 = vmatmul.mubr.f32.gmra.mrb[0].mxu0 %v5091
        %v5492 = vpop.f32.mrb[0].mxu0
        %v5493 = vadd.f32 0.0, %v5492
        %v5494 = vpop.f32.mrb[0].mxu0
        %v5495 = vadd.f32 0.0, %v5494
        %5496 = vmatprep.mubr.f32.mxu0 0.0
        %5497 = vmatmul.mubr.f32.gmra.mrb[0].mxu0 %v5094
        %v5498 = vpop.f32.mrb[0].mxu0
        %v5499 = vadd.f32 0.0, %v5498
        %v5500 = vpop.f32.mrb[0].mxu0
        %v5501 = vadd.f32 0.0, %v5500
        %5502 = vmatprep.mubr.f32.mxu0 0.0
        %5503 = vmatmul.mubr.f32.gmra.mrb[0].mxu0 %v5097
        %v5504 = vpop.f32.mrb[0].mxu0
        %v5505 = vadd.f32 0.0, %v5504
        %v5506 = vpop.f32.mrb[0].mxu0
        %v5507 = vadd.f32 0.0, %v5506
        %5508 = vmatprep.mubr.f32.mxu0 0.0
        %5509 = vmatmul.mubr.f32.gmra.mrb[0].mxu0 %v5100
        %v5510 = vpop.f32.mrb[0].mxu0
        %v5511 = vadd.f32 0.0, %v5510
        %v5512 = vpop.f32.mrb[0].mxu0
        %v5513 = vadd.f32 0.0, %v5512
        %5514 = vmatprep.mubr.f32.mxu0 0.0
        %5515 = vmatmul.mubr.f32.gmra.mrb[0].mxu0 %v5103
        %v5516 = vpop.f32.mrb[0].mxu0
        %v5517 = vadd.f32 0.0, %v5516
        %v5518 = vpop.f32.mrb[0].mxu0
        %v5519 = vadd.f32 0.0, %v5518
        %5520 = vmatprep.mubr.f32.mxu0 0.0
        %5521 = vmatmul.mubr.f32.gmra.mrb[0].mxu0 %v5106
        %v5522 = vpop.f32.mrb[0].mxu0
        %v5523 = vadd.f32 0.0, %v5522
        %v5524 = vpop.f32.mrb[0].mxu0
        %v5525 = vadd.f32 0.0, %v5524
        %5526 = vmatprep.mubr.f32.mxu0 0.0
        %5527 = vmatmul.mubr.f32.gmra.mrb[0].mxu0 %v5109
        %v5528 = vpop.f32.mrb[0].mxu0
        %v5529 = vadd.f32 0.0, %v5528
        %v5530 = vpop.f32.mrb[0].mxu0
        %v5531 = vadd.f32 0.0, %v5530
        %5532 = vmatprep.mubr.f32.mxu0 0.0
        %5533 = vmatmul.mubr.f32.gmra.mrb[0].mxu0 %v5112
        %v5534 = vpop.f32.mrb[0].mxu0
        %v5535 = vadd.f32 0.0, %v5534
        %v5536 = vpop.f32.mrb[0].mxu0
        %v5537 = vadd.f32 0.0, %v5536
        %5538 = vmatprep.mubr.f32.mxu0 0.0
        %5539 = vmatmul.mubr.f32.gmra.mrb[0].mxu0 %v5115
        %v5540 = vpop.f32.mrb[0].mxu0
        %v5541 = vadd.f32 0.0, %v5540
        %v5542 = vpop.f32.mrb[0].mxu0
        %v5543 = vadd.f32 0.0, %v5542
        %5544 = vmatprep.mubr.f32.mxu0 0.0
        %5545 = vmatmul.mubr.f32.gmra.mrb[0].mxu0 %v5118
        %v5546 = vpop.f32.mrb[0].mxu0
        %v5547 = vadd.f32 0.0, %v5546
        %v5548 = vpop.f32.mrb[0].mxu0
        %v5549 = vadd.f32 0.0, %v5548
        %5550 = vmatprep.mubr.f32.mxu0 0.0
        %5551 = vmatmul.mubr.f32.gmra.mrb[0].mxu0 %v5121
        %v5552 = vpop.f32.mrb[0].mxu0
        %v5553 = vadd.f32 0.0, %v5552
        %v5554 = vpop.f32.mrb[0].mxu0
        %v5555 = vadd.f32 0.0, %v5554
        %5556 = vmatprep.mubr.f32.mxu0 0.0
        %5557 = vmatmul.mubr.f32.gmra.mrb[0].mxu0 %v5124
        %v5558 = vpop.f32.mrb[0].mxu0
        %v5559 = vadd.f32 0.0, %v5558
        %v5560 = vpop.f32.mrb[0].mxu0
        %v5561 = vadd.f32 0.0, %v5560
        %5562 = vmatprep.mubr.f32.mxu0 0.0
        %5563 = vmatmul.mubr.f32.gmra.mrb[0].mxu0 %v5127
        %v5564 = vpop.f32.mrb[0].mxu0
        %v5565 = vadd.f32 0.0, %v5564
        %v5566 = vpop.f32.mrb[0].mxu0
        %v5567 = vadd.f32 0.0, %v5566
        %5568 = vmatprep.mubr.f32.mxu0 0.0
        %5569 = vmatmul.mubr.f32.gmra.mrb[0].mxu0 %v5130
        %v5570 = vpop.f32.mrb[0].mxu0
        %v5571 = vadd.f32 0.0, %v5570
        %v5572 = vpop.f32.mrb[0].mxu0
        %v5573 = vadd.f32 0.0, %v5572
        %5574 = vmatprep.mubr.f32.mxu0 0.0
        %5575 = vmatmul.mubr.f32.gmra.mrb[0].mxu0 %v5133
        %v5576 = vpop.f32.mrb[0].mxu0
        %v5577 = vadd.f32 0.0, %v5576
        %v5578 = vpop.f32.mrb[0].mxu0
        %v5579 = vadd.f32 0.0, %v5578
        %5580 = vmatprep.mubr.f32.mxu0 0.0
        %5581 = vmatmul.mubr.f32.gmra.mrb[0].mxu0 %v5136
        %v5582 = vpop.f32.mrb[0].mxu0
        %v5583 = vadd.f32 0.0, %v5582
        %v5584 = vpop.f32.mrb[0].mxu0
        %v5585 = vadd.f32 0.0, %v5584
        %5586 = vdwg.mxu0
        %5587 = vmatprep.subr.mxu0 %v642
        %5588 = vmatpush1.msra.mxu0 %v640
        %5589 = vmatprep.subr.mxu0 0.0
        %5590 = vmatpush1.msra.mxu0 0.0
        %5591 = vmatprep.subr.mxu0 0.0
        %5592 = vmatpush1.msra.mxu0 0.0
        %5593 = vmatprep.subr.mxu0 0.0
        %5594 = vmatpush1.msra.mxu0 0.0
        %5595 = vmatprep.subr.mxu0 0.0
        %5596 = vmatpush1.msra.mxu0 0.0
        %5597 = vmatprep.subr.mxu0 0.0
        %5598 = vmatpush1.msra.mxu0 0.0
        %5599 = vmatprep.subr.mxu0 0.0
        %5600 = vmatpush1.msra.mxu0 0.0
        %5601 = vmatprep.subr.mxu0 0.0
        %5602 = vmatpush1.msra.mxu0 0.0
        %5603 = vmatprep.subr.mxu0 0.0
        %5604 = vmatpush1.msra.mxu0 0.0
        %5605 = vmatprep.subr.mxu0 0.0
        %5606 = vmatpush1.msra.mxu0 0.0
        %5607 = vmatprep.subr.mxu0 0.0
        %5608 = vmatpush1.msra.mxu0 0.0
        %5609 = vmatprep.subr.mxu0 0.0
        %5610 = vmatpush1.msra.mxu0 0.0
        %5611 = vmatprep.subr.mxu0 0.0
        %5612 = vmatpush1.msra.mxu0 0.0
        %5613 = vmatprep.subr.mxu0 0.0
        %5614 = vmatpush1.msra.mxu0 0.0
        %5615 = vmatprep.subr.mxu0 0.0
        %5616 = vmatpush1.msra.mxu0 0.0
        %5617 = vmatprep.subr.mxu0 0.0
        %5618 = vmatpush1.msra.mxu0 0.0
        %5619 = vmatprep.subr.mxu0 0.0
        %5620 = vmatpush1.msra.mxu0 0.0
        %5621 = vmatprep.subr.mxu0 0.0
        %5622 = vmatpush1.msra.mxu0 0.0
        %5623 = vmatprep.subr.mxu0 0.0
        %5624 = vmatpush1.msra.mxu0 0.0
        %5625 = vmatprep.subr.mxu0 0.0
        %5626 = vmatpush1.msra.mxu0 0.0
        %5627 = vmatprep.subr.mxu0 0.0
        %5628 = vmatpush1.msra.mxu0 0.0
        %5629 = vmatprep.subr.mxu0 0.0
        %5630 = vmatpush1.msra.mxu0 0.0
        %5631 = vmatprep.subr.mxu0 0.0
        %5632 = vmatpush1.msra.mxu0 0.0
        %5633 = vmatprep.subr.mxu0 0.0
        %5634 = vmatpush1.msra.mxu0 0.0
        %5635 = vmatprep.subr.mxu0 0.0
        %5636 = vmatpush1.msra.mxu0 0.0
        %5637 = vmatprep.subr.mxu0 0.0
        %5638 = vmatpush1.msra.mxu0 0.0
        %5639 = vmatprep.subr.mxu0 0.0
        %5640 = vmatpush1.msra.mxu0 0.0
        %5641 = vmatprep.subr.mxu0 0.0
        %5642 = vmatpush1.msra.mxu0 0.0
        %5643 = vmatprep.subr.mxu0 0.0
        %5644 = vmatpush1.msra.mxu0 0.0
        %5645 = vmatprep.subr.mxu0 0.0
        %5646 = vmatpush1.msra.mxu0 0.0
        %5647 = vmatprep.subr.mxu0 0.0
        %5648 = vmatpush1.msra.mxu0 0.0
        %5649 = vmatprep.subr.mxu0 0.0
        %5650 = vmatpush1.msra.mxu0 0.0
        %5651 = vmatprep.mubr.f32.mxu0 0.0
        %5652 = vmatmul.mubr.f32.gmra.mrb[0].mxu0 %v4947
        %v5653 = vpop.f32.mrb[0].mxu0
        %v5654 = vadd.f32 0.0, %v5653
        %v5655 = vpop.f32.mrb[0].mxu0
        %v5656 = vadd.f32 0.0, %v5655
        %5657 = vmatprep.mubr.f32.mxu0 0.0
        %5658 = vmatmul.mubr.f32.gmra.mrb[0].mxu0 %v4950
        %v5659 = vpop.f32.mrb[0].mxu0
        %v5660 = vadd.f32 0.0, %v5659
        %v5661 = vpop.f32.mrb[0].mxu0
        %v5662 = vadd.f32 0.0, %v5661
        %5663 = vmatprep.mubr.f32.mxu0 0.0
        %5664 = vmatmul.mubr.f32.gmra.mrb[0].mxu0 %v4953
        %v5665 = vpop.f32.mrb[0].mxu0
        %v5666 = vadd.f32 0.0, %v5665
        %v5667 = vpop.f32.mrb[0].mxu0
        %v5668 = vadd.f32 0.0, %v5667
        %5669 = vmatprep.mubr.f32.mxu0 0.0
        %5670 = vmatmul.mubr.f32.gmra.mrb[0].mxu0 %v4956
        %v5671 = vpop.f32.mrb[0].mxu0
        %v5672 = vadd.f32 0.0, %v5671
        %v5673 = vpop.f32.mrb[0].mxu0
        %v5674 = vadd.f32 0.0, %v5673
        %5675 = vmatprep.mubr.f32.mxu0 0.0
        %5676 = vmatmul.mubr.f32.gmra.mrb[0].mxu0 %v4959
        %v5677 = vpop.f32.mrb[0].mxu0
        %v5678 = vadd.f32 0.0, %v5677
        %v5679 = vpop.f32.mrb[0].mxu0
        %v5680 = vadd.f32 0.0, %v5679
        %5681 = vmatprep.mubr.f32.mxu0 0.0
        %5682 = vmatmul.mubr.f32.gmra.mrb[0].mxu0 %v4962
        %v5683 = vpop.f32.mrb[0].mxu0
        %v5684 = vadd.f32 0.0, %v5683
        %v5685 = vpop.f32.mrb[0].mxu0
        %v5686 = vadd.f32 0.0, %v5685
        %5687 = vmatprep.mubr.f32.mxu0 0.0
        %5688 = vmatmul.mubr.f32.gmra.mrb[0].mxu0 %v4965
        %v5689 = vpop.f32.mrb[0].mxu0
        %v5690 = vadd.f32 0.0, %v5689
        %v5691 = vpop.f32.mrb[0].mxu0
        %v5692 = vadd.f32 0.0, %v5691
        %5693 = vmatprep.mubr.f32.mxu0 0.0
        %5694 = vmatmul.mubr.f32.gmra.mrb[0].mxu0 %v4968
        %v5695 = vpop.f32.mrb[0].mxu0
        %v5696 = vadd.f32 0.0, %v5695
        %v5697 = vpop.f32.mrb[0].mxu0
        %v5698 = vadd.f32 0.0, %v5697
        %5699 = vmatprep.mubr.f32.mxu0 0.0
        %5700 = vmatmul.mubr.f32.gmra.mrb[0].mxu0 %v4971
        %v5701 = vpop.f32.mrb[0].mxu0
        %v5702 = vadd.f32 0.0, %v5701
        %v5703 = vpop.f32.mrb[0].mxu0
        %v5704 = vadd.f32 0.0, %v5703
        %5705 = vmatprep.mubr.f32.mxu0 0.0
        %5706 = vmatmul.mubr.f32.gmra.mrb[0].mxu0 %v4974
        %v5707 = vpop.f32.mrb[0].mxu0
        %v5708 = vadd.f32 0.0, %v5707
        %v5709 = vpop.f32.mrb[0].mxu0
        %v5710 = vadd.f32 0.0, %v5709
        %5711 = vmatprep.mubr.f32.mxu0 0.0
        %5712 = vmatmul.mubr.f32.gmra.mrb[0].mxu0 %v4977
        %v5713 = vpop.f32.mrb[0].mxu0
        %v5714 = vadd.f32 0.0, %v5713
        %v5715 = vpop.f32.mrb[0].mxu0
        %v5716 = vadd.f32 0.0, %v5715
        %5717 = vmatprep.mubr.f32.mxu0 0.0
        %5718 = vmatmul.mubr.f32.gmra.mrb[0].mxu0 %v4980
        %v5719 = vpop.f32.mrb[0].mxu0
        %v5720 = vadd.f32 0.0, %v5719
        %v5721 = vpop.f32.mrb[0].mxu0
        %v5722 = vadd.f32 0.0, %v5721
        %5723 = vmatprep.mubr.f32.mxu0 0.0
        %5724 = vmatmul.mubr.f32.gmra.mrb[0].mxu0 %v4983
        %v5725 = vpop.f32.mrb[0].mxu0
        %v5726 = vadd.f32 0.0, %v5725
        %v5727 = vpop.f32.mrb[0].mxu0
        %v5728 = vadd.f32 0.0, %v5727
        %5729 = vmatprep.mubr.f32.mxu0 0.0
        %5730 = vmatmul.mubr.f32.gmra.mrb[0].mxu0 %v4986
        %v5731 = vpop.f32.mrb[0].mxu0
        %v5732 = vadd.f32 0.0, %v5731
        %v5733 = vpop.f32.mrb[0].mxu0
        %v5734 = vadd.f32 0.0, %v5733
        %5735 = vmatprep.mubr.f32.mxu0 0.0
        %5736 = vmatmul.mubr.f32.gmra.mrb[0].mxu0 %v4989
        %v5737 = vpop.f32.mrb[0].mxu0
        %v5738 = vadd.f32 0.0, %v5737
        %v5739 = vpop.f32.mrb[0].mxu0
        %v5740 = vadd.f32 0.0, %v5739
        %5741 = vmatprep.mubr.f32.mxu0 0.0
        %5742 = vmatmul.mubr.f32.gmra.mrb[0].mxu0 %v4992
        %v5743 = vpop.f32.mrb[0].mxu0
        %v5744 = vadd.f32 0.0, %v5743
        %v5745 = vpop.f32.mrb[0].mxu0
        %v5746 = vadd.f32 0.0, %v5745
        %5747 = vmatprep.mubr.f32.mxu0 0.0
        %5748 = vmatmul.mubr.f32.gmra.mrb[0].mxu0 %v4995
        %v5749 = vpop.f32.mrb[0].mxu0
        %v5750 = vadd.f32 0.0, %v5749
        %v5751 = vpop.f32.mrb[0].mxu0
        %v5752 = vadd.f32 0.0, %v5751
        %5753 = vmatprep.mubr.f32.mxu0 0.0
        %5754 = vmatmul.mubr.f32.gmra.mrb[0].mxu0 %v4998
        %v5755 = vpop.f32.mrb[0].mxu0
        %v5756 = vadd.f32 0.0, %v5755
        %v5757 = vpop.f32.mrb[0].mxu0
        %v5758 = vadd.f32 0.0, %v5757
        %5759 = vmatprep.mubr.f32.mxu0 0.0
        %5760 = vmatmul.mubr.f32.gmra.mrb[0].mxu0 %v5001
        %v5761 = vpop.f32.mrb[0].mxu0
        %v5762 = vadd.f32 0.0, %v5761
        %v5763 = vpop.f32.mrb[0].mxu0
        %v5764 = vadd.f32 0.0, %v5763
        %5765 = vmatprep.mubr.f32.mxu0 0.0
        %5766 = vmatmul.mubr.f32.gmra.mrb[0].mxu0 %v5004
        %v5767 = vpop.f32.mrb[0].mxu0
        %v5768 = vadd.f32 0.0, %v5767
        %v5769 = vpop.f32.mrb[0].mxu0
        %v5770 = vadd.f32 0.0, %v5769
        %5771 = vmatprep.mubr.f32.mxu0 0.0
        %5772 = vmatmul.mubr.f32.gmra.mrb[0].mxu0 %v5007
        %v5773 = vpop.f32.mrb[0].mxu0
        %v5774 = vadd.f32 0.0, %v5773
        %v5775 = vpop.f32.mrb[0].mxu0
        %v5776 = vadd.f32 0.0, %v5775
        %5777 = vmatprep.mubr.f32.mxu0 0.0
        %5778 = vmatmul.mubr.f32.gmra.mrb[0].mxu0 %v5010
        %v5779 = vpop.f32.mrb[0].mxu0
        %v5780 = vadd.f32 0.0, %v5779
        %v5781 = vpop.f32.mrb[0].mxu0
        %v5782 = vadd.f32 0.0, %v5781
        %5783 = vmatprep.mubr.f32.mxu0 0.0
        %5784 = vmatmul.mubr.f32.gmra.mrb[0].mxu0 %v5013
        %v5785 = vpop.f32.mrb[0].mxu0
        %v5786 = vadd.f32 0.0, %v5785
        %v5787 = vpop.f32.mrb[0].mxu0
        %v5788 = vadd.f32 0.0, %v5787
        %5789 = vmatprep.mubr.f32.mxu0 0.0
        %5790 = vmatmul.mubr.f32.gmra.mrb[0].mxu0 %v5016
        %v5791 = vpop.f32.mrb[0].mxu0
        %v5792 = vadd.f32 0.0, %v5791
        %v5793 = vpop.f32.mrb[0].mxu0
        %v5794 = vadd.f32 0.0, %v5793
        %5795 = vmatprep.mubr.f32.mxu0 0.0
        %5796 = vmatmul.mubr.f32.gmra.mrb[0].mxu0 %v5019
        %v5797 = vpop.f32.mrb[0].mxu0
        %v5798 = vadd.f32 0.0, %v5797
        %v5799 = vpop.f32.mrb[0].mxu0
        %v5800 = vadd.f32 0.0, %v5799
        %5801 = vmatprep.mubr.f32.mxu0 0.0
        %5802 = vmatmul.mubr.f32.gmra.mrb[0].mxu0 %v5022
        %v5803 = vpop.f32.mrb[0].mxu0
        %v5804 = vadd.f32 0.0, %v5803
        %v5805 = vpop.f32.mrb[0].mxu0
        %v5806 = vadd.f32 0.0, %v5805
        %5807 = vmatprep.mubr.f32.mxu0 0.0
        %5808 = vmatmul.mubr.f32.gmra.mrb[0].mxu0 %v5025
        %v5809 = vpop.f32.mrb[0].mxu0
        %v5810 = vadd.f32 0.0, %v5809
        %v5811 = vpop.f32.mrb[0].mxu0
        %v5812 = vadd.f32 0.0, %v5811
        %5813 = vmatprep.mubr.f32.mxu0 0.0
        %5814 = vmatmul.mubr.f32.gmra.mrb[0].mxu0 %v5028
        %v5815 = vpop.f32.mrb[0].mxu0
        %v5816 = vadd.f32 0.0, %v5815
        %v5817 = vpop.f32.mrb[0].mxu0
        %v5818 = vadd.f32 0.0, %v5817
        %5819 = vmatprep.mubr.f32.mxu0 0.0
        %5820 = vmatmul.mubr.f32.gmra.mrb[0].mxu0 %v5031
        %v5821 = vpop.f32.mrb[0].mxu0
        %v5822 = vadd.f32 0.0, %v5821
        %v5823 = vpop.f32.mrb[0].mxu0
        %v5824 = vadd.f32 0.0, %v5823
        %5825 = vmatprep.mubr.f32.mxu0 0.0
        %5826 = vmatmul.mubr.f32.gmra.mrb[0].mxu0 %v5034
        %v5827 = vpop.f32.mrb[0].mxu0
        %v5828 = vadd.f32 0.0, %v5827
        %v5829 = vpop.f32.mrb[0].mxu0
        %v5830 = vadd.f32 0.0, %v5829
        %5831 = vmatprep.mubr.f32.mxu0 0.0
        %5832 = vmatmul.mubr.f32.gmra.mrb[0].mxu0 %v5037
        %v5833 = vpop.f32.mrb[0].mxu0
        %v5834 = vadd.f32 0.0, %v5833
        %v5835 = vpop.f32.mrb[0].mxu0
        %v5836 = vadd.f32 0.0, %v5835
        %5837 = vmatprep.mubr.f32.mxu0 0.0
        %5838 = vmatmul.mubr.f32.gmra.mrb[0].mxu0 %v5040
        %v5839 = vpop.f32.mrb[0].mxu0
        %v5840 = vadd.f32 0.0, %v5839
        %v5841 = vpop.f32.mrb[0].mxu0
        %v5842 = vadd.f32 0.0, %v5841
        %5843 = vmatprep.mubr.f32.mxu0 0.0
        %5844 = vmatmul.mubr.f32.gmra.mrb[0].mxu0 %v5043
        %v5845 = vpop.f32.mrb[0].mxu0
        %v5846 = vadd.f32 0.0, %v5845
        %v5847 = vpop.f32.mrb[0].mxu0
        %v5848 = vadd.f32 0.0, %v5847
        %5849 = vmatprep.mubr.f32.mxu0 0.0
        %5850 = vmatmul.mubr.f32.gmra.mrb[0].mxu0 %v5046
        %v5851 = vpop.f32.mrb[0].mxu0
        %v5852 = vadd.f32 0.0, %v5851
        %v5853 = vpop.f32.mrb[0].mxu0
        %v5854 = vadd.f32 0.0, %v5853
        %5855 = vmatprep.mubr.f32.mxu0 0.0
        %5856 = vmatmul.mubr.f32.gmra.mrb[0].mxu0 %v5049
        %v5857 = vpop.f32.mrb[0].mxu0
        %v5858 = vadd.f32 0.0, %v5857
        %v5859 = vpop.f32.mrb[0].mxu0
        %v5860 = vadd.f32 0.0, %v5859
        %5861 = vmatprep.mubr.f32.mxu0 0.0
        %5862 = vmatmul.mubr.f32.gmra.mrb[0].mxu0 %v5052
        %v5863 = vpop.f32.mrb[0].mxu0
        %v5864 = vadd.f32 0.0, %v5863
        %v5865 = vpop.f32.mrb[0].mxu0
        %v5866 = vadd.f32 0.0, %v5865
        %5867 = vmatprep.mubr.f32.mxu0 0.0
        %5868 = vmatmul.mubr.f32.gmra.mrb[0].mxu0 %v5055
        %v5869 = vpop.f32.mrb[0].mxu0
        %v5870 = vadd.f32 0.0, %v5869
        %v5871 = vpop.f32.mrb[0].mxu0
        %v5872 = vadd.f32 0.0, %v5871
        %5873 = vmatprep.mubr.f32.mxu0 0.0
        %5874 = vmatmul.mubr.f32.gmra.mrb[0].mxu0 %v5058
        %v5875 = vpop.f32.mrb[0].mxu0
        %v5876 = vadd.f32 0.0, %v5875
        %v5877 = vpop.f32.mrb[0].mxu0
        %v5878 = vadd.f32 0.0, %v5877
        %5879 = vmatprep.mubr.f32.mxu0 0.0
        %5880 = vmatmul.mubr.f32.gmra.mrb[0].mxu0 %v5061
        %v5881 = vpop.f32.mrb[0].mxu0
        %v5882 = vadd.f32 0.0, %v5881
        %v5883 = vpop.f32.mrb[0].mxu0
        %v5884 = vadd.f32 0.0, %v5883
        %5885 = vmatprep.mubr.f32.mxu0 0.0
        %5886 = vmatmul.mubr.f32.gmra.mrb[0].mxu0 %v5064
        %v5887 = vpop.f32.mrb[0].mxu0
        %v5888 = vadd.f32 0.0, %v5887
        %v5889 = vpop.f32.mrb[0].mxu0
        %v5890 = vadd.f32 0.0, %v5889
        %5891 = vmatprep.mubr.f32.mxu0 0.0
        %5892 = vmatmul.mubr.f32.gmra.mrb[0].mxu0 %v5067
        %v5893 = vpop.f32.mrb[0].mxu0
        %v5894 = vadd.f32 0.0, %v5893
        %v5895 = vpop.f32.mrb[0].mxu0
        %v5896 = vadd.f32 0.0, %v5895
        %5897 = vmatprep.mubr.f32.mxu0 0.0
        %5898 = vmatmul.mubr.f32.gmra.mrb[0].mxu0 %v5070
        %v5899 = vpop.f32.mrb[0].mxu0
        %v5900 = vadd.f32 0.0, %v5899
        %v5901 = vpop.f32.mrb[0].mxu0
        %v5902 = vadd.f32 0.0, %v5901
        %5903 = vmatprep.mubr.f32.mxu0 0.0
        %5904 = vmatmul.mubr.f32.gmra.mrb[0].mxu0 %v5073
        %v5905 = vpop.f32.mrb[0].mxu0
        %v5906 = vadd.f32 0.0, %v5905
        %v5907 = vpop.f32.mrb[0].mxu0
        %v5908 = vadd.f32 0.0, %v5907
        %5909 = vmatprep.mubr.f32.mxu0 0.0
        %5910 = vmatmul.mubr.f32.gmra.mrb[0].mxu0 %v5076
        %v5911 = vpop.f32.mrb[0].mxu0
        %v5912 = vadd.f32 0.0, %v5911
        %v5913 = vpop.f32.mrb[0].mxu0
        %v5914 = vadd.f32 0.0, %v5913
        %5915 = vmatprep.mubr.f32.mxu0 0.0
        %5916 = vmatmul.mubr.f32.gmra.mrb[0].mxu0 %v5079
        %v5917 = vpop.f32.mrb[0].mxu0
        %v5918 = vadd.f32 0.0, %v5917
        %v5919 = vpop.f32.mrb[0].mxu0
        %v5920 = vadd.f32 0.0, %v5919
        %5921 = vmatprep.mubr.f32.mxu0 0.0
        %5922 = vmatmul.mubr.f32.gmra.mrb[0].mxu0 %v5082
        %v5923 = vpop.f32.mrb[0].mxu0
        %v5924 = vadd.f32 0.0, %v5923
        %v5925 = vpop.f32.mrb[0].mxu0
        %v5926 = vadd.f32 0.0, %v5925
        %5927 = vmatprep.mubr.f32.mxu0 0.0
        %5928 = vmatmul.mubr.f32.gmra.mrb[0].mxu0 %v5085
        %v5929 = vpop.f32.mrb[0].mxu0
        %v5930 = vadd.f32 0.0, %v5929
        %v5931 = vpop.f32.mrb[0].mxu0
        %v5932 = vadd.f32 0.0, %v5931
        %5933 = vmatprep.mubr.f32.mxu0 0.0
        %5934 = vmatmul.mubr.f32.gmra.mrb[0].mxu0 %v5088
        %v5935 = vpop.f32.mrb[0].mxu0
        %v5936 = vadd.f32 0.0, %v5935
        %v5937 = vpop.f32.mrb[0].mxu0
        %v5938 = vadd.f32 0.0, %v5937
        %5939 = vmatprep.mubr.f32.mxu0 0.0
        %5940 = vmatmul.mubr.f32.gmra.mrb[0].mxu0 %v5091
        %v5941 = vpop.f32.mrb[0].mxu0
        %v5942 = vadd.f32 0.0, %v5941
        %v5943 = vpop.f32.mrb[0].mxu0
        %v5944 = vadd.f32 0.0, %v5943
        %5945 = vmatprep.mubr.f32.mxu0 0.0
        %5946 = vmatmul.mubr.f32.gmra.mrb[0].mxu0 %v5094
        %v5947 = vpop.f32.mrb[0].mxu0
        %v5948 = vadd.f32 0.0, %v5947
        %v5949 = vpop.f32.mrb[0].mxu0
        %v5950 = vadd.f32 0.0, %v5949
        %5951 = vmatprep.mubr.f32.mxu0 0.0
        %5952 = vmatmul.mubr.f32.gmra.mrb[0].mxu0 %v5097
        %v5953 = vpop.f32.mrb[0].mxu0
        %v5954 = vadd.f32 0.0, %v5953
        %v5955 = vpop.f32.mrb[0].mxu0
        %v5956 = vadd.f32 0.0, %v5955
        %5957 = vmatprep.mubr.f32.mxu0 0.0
        %5958 = vmatmul.mubr.f32.gmra.mrb[0].mxu0 %v5100
        %v5959 = vpop.f32.mrb[0].mxu0
        %v5960 = vadd.f32 0.0, %v5959
        %v5961 = vpop.f32.mrb[0].mxu0
        %v5962 = vadd.f32 0.0, %v5961
        %5963 = vmatprep.mubr.f32.mxu0 0.0
        %5964 = vmatmul.mubr.f32.gmra.mrb[0].mxu0 %v5103
        %v5965 = vpop.f32.mrb[0].mxu0
        %v5966 = vadd.f32 0.0, %v5965
        %v5967 = vpop.f32.mrb[0].mxu0
        %v5968 = vadd.f32 0.0, %v5967
        %5969 = vmatprep.mubr.f32.mxu0 0.0
        %5970 = vmatmul.mubr.f32.gmra.mrb[0].mxu0 %v5106
        %v5971 = vpop.f32.mrb[0].mxu0
        %v5972 = vadd.f32 0.0, %v5971
        %v5973 = vpop.f32.mrb[0].mxu0
        %v5974 = vadd.f32 0.0, %v5973
        %5975 = vmatprep.mubr.f32.mxu0 0.0
        %5976 = vmatmul.mubr.f32.gmra.mrb[0].mxu0 %v5109
        %v5977 = vpop.f32.mrb[0].mxu0
        %v5978 = vadd.f32 0.0, %v5977
        %v5979 = vpop.f32.mrb[0].mxu0
        %v5980 = vadd.f32 0.0, %v5979
        %5981 = vmatprep.mubr.f32.mxu0 0.0
        %5982 = vmatmul.mubr.f32.gmra.mrb[0].mxu0 %v5112
        %v5983 = vpop.f32.mrb[0].mxu0
        %v5984 = vadd.f32 0.0, %v5983
        %v5985 = vpop.f32.mrb[0].mxu0
        %v5986 = vadd.f32 0.0, %v5985
        %5987 = vmatprep.mubr.f32.mxu0 0.0
        %5988 = vmatmul.mubr.f32.gmra.mrb[0].mxu0 %v5115
        %v5989 = vpop.f32.mrb[0].mxu0
        %v5990 = vadd.f32 0.0, %v5989
        %v5991 = vpop.f32.mrb[0].mxu0
        %v5992 = vadd.f32 0.0, %v5991
        %5993 = vmatprep.mubr.f32.mxu0 0.0
        %5994 = vmatmul.mubr.f32.gmra.mrb[0].mxu0 %v5118
        %v5995 = vpop.f32.mrb[0].mxu0
        %v5996 = vadd.f32 0.0, %v5995
        %v5997 = vpop.f32.mrb[0].mxu0
        %v5998 = vadd.f32 0.0, %v5997
        %5999 = vmatprep.mubr.f32.mxu0 0.0
        %6000 = vmatmul.mubr.f32.gmra.mrb[0].mxu0 %v5121
        %v6001 = vpop.f32.mrb[0].mxu0
        %v6002 = vadd.f32 0.0, %v6001
        %v6003 = vpop.f32.mrb[0].mxu0
        %v6004 = vadd.f32 0.0, %v6003
        %6005 = vmatprep.mubr.f32.mxu0 0.0
        %6006 = vmatmul.mubr.f32.gmra.mrb[0].mxu0 %v5124
        %v6007 = vpop.f32.mrb[0].mxu0
        %v6008 = vadd.f32 0.0, %v6007
        %v6009 = vpop.f32.mrb[0].mxu0
        %v6010 = vadd.f32 0.0, %v6009
        %6011 = vmatprep.mubr.f32.mxu0 0.0
        %6012 = vmatmul.mubr.f32.gmra.mrb[0].mxu0 %v5127
        %v6013 = vpop.f32.mrb[0].mxu0
        %v6014 = vadd.f32 0.0, %v6013
        %v6015 = vpop.f32.mrb[0].mxu0
        %v6016 = vadd.f32 0.0, %v6015
        %6017 = vmatprep.mubr.f32.mxu0 0.0
        %6018 = vmatmul.mubr.f32.gmra.mrb[0].mxu0 %v5130
        %v6019 = vpop.f32.mrb[0].mxu0
        %v6020 = vadd.f32 0.0, %v6019
        %v6021 = vpop.f32.mrb[0].mxu0
        %v6022 = vadd.f32 0.0, %v6021
        %6023 = vmatprep.mubr.f32.mxu0 0.0
        %6024 = vmatmul.mubr.f32.gmra.mrb[0].mxu0 %v5133
        %v6025 = vpop.f32.mrb[0].mxu0
        %v6026 = vadd.f32 0.0, %v6025
        %v6027 = vpop.f32.mrb[0].mxu0
        %v6028 = vadd.f32 0.0, %v6027
        %6029 = vmatprep.mubr.f32.mxu0 0.0
        %6030 = vmatmul.mubr.f32.gmra.mrb[0].mxu0 %v5136
        %v6031 = vpop.f32.mrb[0].mxu0
        %v6032 = vadd.f32 0.0, %v6031
        %v6033 = vpop.f32.mrb[0].mxu0
        %v6034 = vadd.f32 0.0, %v6033
        %6035 = vdwg.mxu0
        %s6036 = scalar_lea.vmem %s261, 6144 [#allocation2]
        %6037 = vst [vmem:[%s6036] sm:$0xff] %v5205
        %6038 = vst [vmem:[%s6036 + $0x8] sm:$0xff] %v5207
        %6039 = vst [vmem:[%s6036 + $0x10] sm:$0xff] %v5654
        %6040 = vst [vmem:[%s6036 + $0x18] sm:$0xff] %v5656
        %6041 = vst [vmem:[%s6036 + $0x20] sm:$0xff] %v5211
        %6042 = vst [vmem:[%s6036 + $0x28] sm:$0xff] %v5213
        %6043 = vst [vmem:[%s6036 + $0x30] sm:$0xff] %v5660
        %6044 = vst [vmem:[%s6036 + $0x38] sm:$0xff] %v5662
        %6045 = vst [vmem:[%s6036 + $0x40] sm:$0xff] %v5217
        %6046 = vst [vmem:[%s6036 + $0x48] sm:$0xff] %v5219
        %6047 = vst [vmem:[%s6036 + $0x50] sm:$0xff] %v5666
        %6048 = vst [vmem:[%s6036 + $0x58] sm:$0xff] %v5668
        %6049 = vst [vmem:[%s6036 + $0x60] sm:$0xff] %v5223
        %6050 = vst [vmem:[%s6036 + $0x68] sm:$0xff] %v5225
        %6051 = vst [vmem:[%s6036 + $0x70] sm:$0xff] %v5672
        %6052 = vst [vmem:[%s6036 + $0x78] sm:$0xff] %v5674
        %6053 = vst [vmem:[%s6036 + $0x80] sm:$0xff] %v5229
        %6054 = vst [vmem:[%s6036 + $0x88] sm:$0xff] %v5231
        %6055 = vst [vmem:[%s6036 + $0x90] sm:$0xff] %v5678
        %6056 = vst [vmem:[%s6036 + $0x98] sm:$0xff] %v5680
        %6057 = vst [vmem:[%s6036 + $0xa0] sm:$0xff] %v5235
        %6058 = vst [vmem:[%s6036 + $0xa8] sm:$0xff] %v5237
        %6059 = vst [vmem:[%s6036 + $0xb0] sm:$0xff] %v5684
        %6060 = vst [vmem:[%s6036 + $0xb8] sm:$0xff] %v5686
        %6061 = vst [vmem:[%s6036 + $0xc0] sm:$0xff] %v5241
        %6062 = vst [vmem:[%s6036 + $0xc8] sm:$0xff] %v5243
        %6063 = vst [vmem:[%s6036 + $0xd0] sm:$0xff] %v5690
        %6064 = vst [vmem:[%s6036 + $0xd8] sm:$0xff] %v5692
        %6065 = vst [vmem:[%s6036 + $0xe0] sm:$0xff] %v5247
        %6066 = vst [vmem:[%s6036 + $0xe8] sm:$0xff] %v5249
        %6067 = vst [vmem:[%s6036 + $0xf0] sm:$0xff] %v5696
        %6068 = vst [vmem:[%s6036 + $0xf8] sm:$0xff] %v5698
        %6069 = vst [vmem:[%s6036 + $0x100] sm:$0xff] %v5253
        %6070 = vst [vmem:[%s6036 + $0x108] sm:$0xff] %v5255
        %6071 = vst [vmem:[%s6036 + $0x110] sm:$0xff] %v5702
        %6072 = vst [vmem:[%s6036 + $0x118] sm:$0xff] %v5704
        %6073 = vst [vmem:[%s6036 + $0x120] sm:$0xff] %v5259
        %6074 = vst [vmem:[%s6036 + $0x128] sm:$0xff] %v5261
        %6075 = vst [vmem:[%s6036 + $0x130] sm:$0xff] %v5708
        %6076 = vst [vmem:[%s6036 + $0x138] sm:$0xff] %v5710
        %6077 = vst [vmem:[%s6036 + $0x140] sm:$0xff] %v5265
        %6078 = vst [vmem:[%s6036 + $0x148] sm:$0xff] %v5267
        %6079 = vst [vmem:[%s6036 + $0x150] sm:$0xff] %v5714
        %6080 = vst [vmem:[%s6036 + $0x158] sm:$0xff] %v5716
        %6081 = vst [vmem:[%s6036 + $0x160] sm:$0xff] %v5271
        %6082 = vst [vmem:[%s6036 + $0x168] sm:$0xff] %v5273
        %6083 = vst [vmem:[%s6036 + $0x170] sm:$0xff] %v5720
        %6084 = vst [vmem:[%s6036 + $0x178] sm:$0xff] %v5722
        %6085 = vst [vmem:[%s6036 + $0x180] sm:$0xff] %v5277
        %6086 = vst [vmem:[%s6036 + $0x188] sm:$0xff] %v5279
        %6087 = vst [vmem:[%s6036 + $0x190] sm:$0xff] %v5726
        %6088 = vst [vmem:[%s6036 + $0x198] sm:$0xff] %v5728
        %6089 = vst [vmem:[%s6036 + $0x1a0] sm:$0xff] %v5283
        %6090 = vst [vmem:[%s6036 + $0x1a8] sm:$0xff] %v5285
        %6091 = vst [vmem:[%s6036 + $0x1b0] sm:$0xff] %v5732
        %6092 = vst [vmem:[%s6036 + $0x1b8] sm:$0xff] %v5734
        %6093 = vst [vmem:[%s6036 + $0x1c0] sm:$0xff] %v5289
        %6094 = vst [vmem:[%s6036 + $0x1c8] sm:$0xff] %v5291
        %6095 = vst [vmem:[%s6036 + $0x1d0] sm:$0xff] %v5738
        %6096 = vst [vmem:[%s6036 + $0x1d8] sm:$0xff] %v5740
        %6097 = vst [vmem:[%s6036 + $0x1e0] sm:$0xff] %v5295
        %6098 = vst [vmem:[%s6036 + $0x1e8] sm:$0xff] %v5297
        %6099 = vst [vmem:[%s6036 + $0x1f0] sm:$0xff] %v5744
        %6100 = vst [vmem:[%s6036 + $0x1f8] sm:$0xff] %v5746
        %6101 = vst [vmem:[%s6036 + $0x200] sm:$0xff] %v5301
        %6102 = vst [vmem:[%s6036 + $0x208] sm:$0xff] %v5303
        %6103 = vst [vmem:[%s6036 + $0x210] sm:$0xff] %v5750
        %6104 = vst [vmem:[%s6036 + $0x218] sm:$0xff] %v5752
        %6105 = vst [vmem:[%s6036 + $0x220] sm:$0xff] %v5307
        %6106 = vst [vmem:[%s6036 + $0x228] sm:$0xff] %v5309
        %6107 = vst [vmem:[%s6036 + $0x230] sm:$0xff] %v5756
        %6108 = vst [vmem:[%s6036 + $0x238] sm:$0xff] %v5758
        %6109 = vst [vmem:[%s6036 + $0x240] sm:$0xff] %v5313
        %6110 = vst [vmem:[%s6036 + $0x248] sm:$0xff] %v5315
        %6111 = vst [vmem:[%s6036 + $0x250] sm:$0xff] %v5762
        %6112 = vst [vmem:[%s6036 + $0x258] sm:$0xff] %v5764
        %6113 = vst [vmem:[%s6036 + $0x260] sm:$0xff] %v5319
        %6114 = vst [vmem:[%s6036 + $0x268] sm:$0xff] %v5321
        %6115 = vst [vmem:[%s6036 + $0x270] sm:$0xff] %v5768
        %6116 = vst [vmem:[%s6036 + $0x278] sm:$0xff] %v5770
        %6117 = vst [vmem:[%s6036 + $0x280] sm:$0xff] %v5325
        %6118 = vst [vmem:[%s6036 + $0x288] sm:$0xff] %v5327
        %6119 = vst [vmem:[%s6036 + $0x290] sm:$0xff] %v5774
        %6120 = vst [vmem:[%s6036 + $0x298] sm:$0xff] %v5776
        %6121 = vst [vmem:[%s6036 + $0x2a0] sm:$0xff] %v5331
        %6122 = vst [vmem:[%s6036 + $0x2a8] sm:$0xff] %v5333
        %6123 = vst [vmem:[%s6036 + $0x2b0] sm:$0xff] %v5780
        %6124 = vst [vmem:[%s6036 + $0x2b8] sm:$0xff] %v5782
        %6125 = vst [vmem:[%s6036 + $0x2c0] sm:$0xff] %v5337
        %6126 = vst [vmem:[%s6036 + $0x2c8] sm:$0xff] %v5339
        %6127 = vst [vmem:[%s6036 + $0x2d0] sm:$0xff] %v5786
        %6128 = vst [vmem:[%s6036 + $0x2d8] sm:$0xff] %v5788
        %6129 = vst [vmem:[%s6036 + $0x2e0] sm:$0xff] %v5343
        %6130 = vst [vmem:[%s6036 + $0x2e8] sm:$0xff] %v5345
        %6131 = vst [vmem:[%s6036 + $0x2f0] sm:$0xff] %v5792
        %6132 = vst [vmem:[%s6036 + $0x2f8] sm:$0xff] %v5794
        %6133 = vst [vmem:[%s6036 + $0x300] sm:$0xff] %v5349
        %6134 = vst [vmem:[%s6036 + $0x308] sm:$0xff] %v5351
        %6135 = vst [vmem:[%s6036 + $0x310] sm:$0xff] %v5798
        %6136 = vst [vmem:[%s6036 + $0x318] sm:$0xff] %v5800
        %6137 = vst [vmem:[%s6036 + $0x320] sm:$0xff] %v5355
        %6138 = vst [vmem:[%s6036 + $0x328] sm:$0xff] %v5357
        %6139 = vst [vmem:[%s6036 + $0x330] sm:$0xff] %v5804
        %6140 = vst [vmem:[%s6036 + $0x338] sm:$0xff] %v5806
        %6141 = vst [vmem:[%s6036 + $0x340] sm:$0xff] %v5361
        %6142 = vst [vmem:[%s6036 + $0x348] sm:$0xff] %v5363
        %6143 = vst [vmem:[%s6036 + $0x350] sm:$0xff] %v5810
        %6144 = vst [vmem:[%s6036 + $0x358] sm:$0xff] %v5812
        %6145 = vst [vmem:[%s6036 + $0x360] sm:$0xff] %v5367
        %6146 = vst [vmem:[%s6036 + $0x368] sm:$0xff] %v5369
        %6147 = vst [vmem:[%s6036 + $0x370] sm:$0xff] %v5816
        %6148 = vst [vmem:[%s6036 + $0x378] sm:$0xff] %v5818
        %6149 = vst [vmem:[%s6036 + $0x380] sm:$0xff] %v5373
        %6150 = vst [vmem:[%s6036 + $0x388] sm:$0xff] %v5375
        %6151 = vst [vmem:[%s6036 + $0x390] sm:$0xff] %v5822
        %6152 = vst [vmem:[%s6036 + $0x398] sm:$0xff] %v5824
        %6153 = vst [vmem:[%s6036 + $0x3a0] sm:$0xff] %v5379
        %6154 = vst [vmem:[%s6036 + $0x3a8] sm:$0xff] %v5381
        %6155 = vst [vmem:[%s6036 + $0x3b0] sm:$0xff] %v5828
        %6156 = vst [vmem:[%s6036 + $0x3b8] sm:$0xff] %v5830
        %6157 = vst [vmem:[%s6036 + $0x3c0] sm:$0xff] %v5385
        %6158 = vst [vmem:[%s6036 + $0x3c8] sm:$0xff] %v5387
        %6159 = vst [vmem:[%s6036 + $0x3d0] sm:$0xff] %v5834
        %6160 = vst [vmem:[%s6036 + $0x3d8] sm:$0xff] %v5836
        %6161 = vst [vmem:[%s6036 + $0x3e0] sm:$0xff] %v5391
        %6162 = vst [vmem:[%s6036 + $0x3e8] sm:$0xff] %v5393
        %6163 = vst [vmem:[%s6036 + $0x3f0] sm:$0xff] %v5840
        %6164 = vst [vmem:[%s6036 + $0x3f8] sm:$0xff] %v5842
        %6165 = vst [vmem:[%s6036 + $0x400] sm:$0xff] %v5397
        %6166 = vst [vmem:[%s6036 + $0x408] sm:$0xff] %v5399
        %6167 = vst [vmem:[%s6036 + $0x410] sm:$0xff] %v5846
        %6168 = vst [vmem:[%s6036 + $0x418] sm:$0xff] %v5848
        %6169 = vst [vmem:[%s6036 + $0x420] sm:$0xff] %v5403
        %6170 = vst [vmem:[%s6036 + $0x428] sm:$0xff] %v5405
        %6171 = vst [vmem:[%s6036 + $0x430] sm:$0xff] %v5852
        %6172 = vst [vmem:[%s6036 + $0x438] sm:$0xff] %v5854
        %6173 = vst [vmem:[%s6036 + $0x440] sm:$0xff] %v5409
        %6174 = vst [vmem:[%s6036 + $0x448] sm:$0xff] %v5411
        %6175 = vst [vmem:[%s6036 + $0x450] sm:$0xff] %v5858
        %6176 = vst [vmem:[%s6036 + $0x458] sm:$0xff] %v5860
        %6177 = vst [vmem:[%s6036 + $0x460] sm:$0xff] %v5415
        %6178 = vst [vmem:[%s6036 + $0x468] sm:$0xff] %v5417
        %6179 = vst [vmem:[%s6036 + $0x470] sm:$0xff] %v5864
        %6180 = vst [vmem:[%s6036 + $0x478] sm:$0xff] %v5866
        %6181 = vst [vmem:[%s6036 + $0x480] sm:$0xff] %v5421
        %6182 = vst [vmem:[%s6036 + $0x488] sm:$0xff] %v5423
        %6183 = vst [vmem:[%s6036 + $0x490] sm:$0xff] %v5870
        %6184 = vst [vmem:[%s6036 + $0x498] sm:$0xff] %v5872
        %6185 = vst [vmem:[%s6036 + $0x4a0] sm:$0xff] %v5427
        %6186 = vst [vmem:[%s6036 + $0x4a8] sm:$0xff] %v5429
        %6187 = vst [vmem:[%s6036 + $0x4b0] sm:$0xff] %v5876
        %6188 = vst [vmem:[%s6036 + $0x4b8] sm:$0xff] %v5878
        %6189 = vst [vmem:[%s6036 + $0x4c0] sm:$0xff] %v5433
        %6190 = vst [vmem:[%s6036 + $0x4c8] sm:$0xff] %v5435
        %6191 = vst [vmem:[%s6036 + $0x4d0] sm:$0xff] %v5882
        %6192 = vst [vmem:[%s6036 + $0x4d8] sm:$0xff] %v5884
        %6193 = vst [vmem:[%s6036 + $0x4e0] sm:$0xff] %v5439
        %6194 = vst [vmem:[%s6036 + $0x4e8] sm:$0xff] %v5441
        %6195 = vst [vmem:[%s6036 + $0x4f0] sm:$0xff] %v5888
        %6196 = vst [vmem:[%s6036 + $0x4f8] sm:$0xff] %v5890
        %6197 = vst [vmem:[%s6036 + $0x500] sm:$0xff] %v5445
        %6198 = vst [vmem:[%s6036 + $0x508] sm:$0xff] %v5447
        %6199 = vst [vmem:[%s6036 + $0x510] sm:$0xff] %v5894
        %6200 = vst [vmem:[%s6036 + $0x518] sm:$0xff] %v5896
        %6201 = vst [vmem:[%s6036 + $0x520] sm:$0xff] %v5451
        %6202 = vst [vmem:[%s6036 + $0x528] sm:$0xff] %v5453
        %6203 = vst [vmem:[%s6036 + $0x530] sm:$0xff] %v5900
        %6204 = vst [vmem:[%s6036 + $0x538] sm:$0xff] %v5902
        %6205 = vst [vmem:[%s6036 + $0x540] sm:$0xff] %v5457
        %6206 = vst [vmem:[%s6036 + $0x548] sm:$0xff] %v5459
        %6207 = vst [vmem:[%s6036 + $0x550] sm:$0xff] %v5906
        %6208 = vst [vmem:[%s6036 + $0x558] sm:$0xff] %v5908
        %6209 = vst [vmem:[%s6036 + $0x560] sm:$0xff] %v5463
        %6210 = vst [vmem:[%s6036 + $0x568] sm:$0xff] %v5465
        %6211 = vst [vmem:[%s6036 + $0x570] sm:$0xff] %v5912
        %6212 = vst [vmem:[%s6036 + $0x578] sm:$0xff] %v5914
        %6213 = vst [vmem:[%s6036 + $0x580] sm:$0xff] %v5469
        %6214 = vst [vmem:[%s6036 + $0x588] sm:$0xff] %v5471
        %6215 = vst [vmem:[%s6036 + $0x590] sm:$0xff] %v5918
        %6216 = vst [vmem:[%s6036 + $0x598] sm:$0xff] %v5920
        %6217 = vst [vmem:[%s6036 + $0x5a0] sm:$0xff] %v5475
        %6218 = vst [vmem:[%s6036 + $0x5a8] sm:$0xff] %v5477
        %6219 = vst [vmem:[%s6036 + $0x5b0] sm:$0xff] %v5924
        %6220 = vst [vmem:[%s6036 + $0x5b8] sm:$0xff] %v5926
        %6221 = vst [vmem:[%s6036 + $0x5c0] sm:$0xff] %v5481
        %6222 = vst [vmem:[%s6036 + $0x5c8] sm:$0xff] %v5483
        %6223 = vst [vmem:[%s6036 + $0x5d0] sm:$0xff] %v5930
        %6224 = vst [vmem:[%s6036 + $0x5d8] sm:$0xff] %v5932
        %6225 = vst [vmem:[%s6036 + $0x5e0] sm:$0xff] %v5487
        %6226 = vst [vmem:[%s6036 + $0x5e8] sm:$0xff] %v5489
        %6227 = vst [vmem:[%s6036 + $0x5f0] sm:$0xff] %v5936
        %6228 = vst [vmem:[%s6036 + $0x5f8] sm:$0xff] %v5938
        %6229 = vst [vmem:[%s6036 + $0x600] sm:$0xff] %v5493
        %6230 = vst [vmem:[%s6036 + $0x608] sm:$0xff] %v5495
        %6231 = vst [vmem:[%s6036 + $0x610] sm:$0xff] %v5942
        %6232 = vst [vmem:[%s6036 + $0x618] sm:$0xff] %v5944
        %6233 = vst [vmem:[%s6036 + $0x620] sm:$0xff] %v5499
        %6234 = vst [vmem:[%s6036 + $0x628] sm:$0xff] %v5501
        %6235 = vst [vmem:[%s6036 + $0x630] sm:$0xff] %v5948
        %6236 = vst [vmem:[%s6036 + $0x638] sm:$0xff] %v5950
        %6237 = vst [vmem:[%s6036 + $0x640] sm:$0xff] %v5505
        %6238 = vst [vmem:[%s6036 + $0x648] sm:$0xff] %v5507
        %6239 = vst [vmem:[%s6036 + $0x650] sm:$0xff] %v5954
        %6240 = vst [vmem:[%s6036 + $0x658] sm:$0xff] %v5956
        %6241 = vst [vmem:[%s6036 + $0x660] sm:$0xff] %v5511
        %6242 = vst [vmem:[%s6036 + $0x668] sm:$0xff] %v5513
        %6243 = vst [vmem:[%s6036 + $0x670] sm:$0xff] %v5960
        %6244 = vst [vmem:[%s6036 + $0x678] sm:$0xff] %v5962
        %6245 = vst [vmem:[%s6036 + $0x680] sm:$0xff] %v5517
        %6246 = vst [vmem:[%s6036 + $0x688] sm:$0xff] %v5519
        %6247 = vst [vmem:[%s6036 + $0x690] sm:$0xff] %v5966
        %6248 = vst [vmem:[%s6036 + $0x698] sm:$0xff] %v5968
        %6249 = vst [vmem:[%s6036 + $0x6a0] sm:$0xff] %v5523
        %6250 = vst [vmem:[%s6036 + $0x6a8] sm:$0xff] %v5525
        %6251 = vst [vmem:[%s6036 + $0x6b0] sm:$0xff] %v5972
        %6252 = vst [vmem:[%s6036 + $0x6b8] sm:$0xff] %v5974
        %6253 = vst [vmem:[%s6036 + $0x6c0] sm:$0xff] %v5529
        %6254 = vst [vmem:[%s6036 + $0x6c8] sm:$0xff] %v5531
        %6255 = vst [vmem:[%s6036 + $0x6d0] sm:$0xff] %v5978
        %6256 = vst [vmem:[%s6036 + $0x6d8] sm:$0xff] %v5980
        %6257 = vst [vmem:[%s6036 + $0x6e0] sm:$0xff] %v5535
        %6258 = vst [vmem:[%s6036 + $0x6e8] sm:$0xff] %v5537
        %6259 = vst [vmem:[%s6036 + $0x6f0] sm:$0xff] %v5984
        %6260 = vst [vmem:[%s6036 + $0x6f8] sm:$0xff] %v5986
        %6261 = vst [vmem:[%s6036 + $0x700] sm:$0xff] %v5541
        %6262 = vst [vmem:[%s6036 + $0x708] sm:$0xff] %v5543
        %6263 = vst [vmem:[%s6036 + $0x710] sm:$0xff] %v5990
        %6264 = vst [vmem:[%s6036 + $0x718] sm:$0xff] %v5992
        %6265 = vst [vmem:[%s6036 + $0x720] sm:$0xff] %v5547
        %6266 = vst [vmem:[%s6036 + $0x728] sm:$0xff] %v5549
        %6267 = vst [vmem:[%s6036 + $0x730] sm:$0xff] %v5996
        %6268 = vst [vmem:[%s6036 + $0x738] sm:$0xff] %v5998
        %6269 = vst [vmem:[%s6036 + $0x740] sm:$0xff] %v5553
        %6270 = vst [vmem:[%s6036 + $0x748] sm:$0xff] %v5555
        %6271 = vst [vmem:[%s6036 + $0x750] sm:$0xff] %v6002
        %6272 = vst [vmem:[%s6036 + $0x758] sm:$0xff] %v6004
        %6273 = vst [vmem:[%s6036 + $0x760] sm:$0xff] %v5559
        %6274 = vst [vmem:[%s6036 + $0x768] sm:$0xff] %v5561
        %6275 = vst [vmem:[%s6036 + $0x770] sm:$0xff] %v6008
        %6276 = vst [vmem:[%s6036 + $0x778] sm:$0xff] %v6010
        %6277 = vst [vmem:[%s6036 + $0x780] sm:$0xff] %v5565
        %6278 = vst [vmem:[%s6036 + $0x788] sm:$0xff] %v5567
        %6279 = vst [vmem:[%s6036 + $0x790] sm:$0xff] %v6014
        %6280 = vst [vmem:[%s6036 + $0x798] sm:$0xff] %v6016
        %6281 = vst [vmem:[%s6036 + $0x7a0] sm:$0xff] %v5571
        %6282 = vst [vmem:[%s6036 + $0x7a8] sm:$0xff] %v5573
        %6283 = vst [vmem:[%s6036 + $0x7b0] sm:$0xff] %v6020
        %6284 = vst [vmem:[%s6036 + $0x7b8] sm:$0xff] %v6022
        %6285 = vst [vmem:[%s6036 + $0x7c0] sm:$0xff] %v5577
        %6286 = vst [vmem:[%s6036 + $0x7c8] sm:$0xff] %v5579
        %6287 = vst [vmem:[%s6036 + $0x7d0] sm:$0xff] %v6026
        %6288 = vst [vmem:[%s6036 + $0x7d8] sm:$0xff] %v6028
        %6289 = vst [vmem:[%s6036 + $0x7e0] sm:$0xff] %v5583
        %6290 = vst [vmem:[%s6036 + $0x7e8] sm:$0xff] %v5585
        %6291 = vst [vmem:[%s6036 + $0x7f0] sm:$0xff] %v6032
        %6292 = vst [vmem:[%s6036 + $0x7f8] sm:$0xff] %v6034
        %v6293 = vld [vmem:[%s3] sm:$0xff]
        %v6294 = vld [vmem:[%s3 + $0x8] sm:$0xff]
        %v6295 = vld [vmem:[%s3 + $0x10] sm:$0xff]
        %v6296 = vld [vmem:[%s3 + $0x18] sm:$0xff]
        %v6297 = vld [vmem:[%s3 + $0x20] sm:$0xff]
        %v6298 = vld [vmem:[%s3 + $0x28] sm:$0xff]
        %v6299 = vld [vmem:[%s3 + $0x30] sm:$0xff]
        %v6300 = vld [vmem:[%s3 + $0x38] sm:$0xff]
        %v6301 = vld [vmem:[%s3 + $0x40] sm:$0xff]
        %v6302 = vld [vmem:[%s3 + $0x48] sm:$0xff]
        %v6303 = vld [vmem:[%s3 + $0x50] sm:$0xff]
        %v6304 = vld [vmem:[%s3 + $0x58] sm:$0xff]
        %v6305 = vld [vmem:[%s3 + $0x60] sm:$0xff]
        %v6306 = vld [vmem:[%s3 + $0x68] sm:$0xff]
        %v6307 = vld [vmem:[%s3 + $0x70] sm:$0xff]
        %v6308 = vld [vmem:[%s3 + $0x78] sm:$0xff]
        %v6309 = vld [vmem:[%s3 + $0x80] sm:$0xff]
        %v6310 = vld [vmem:[%s3 + $0x88] sm:$0xff]
        %v6311 = vld [vmem:[%s3 + $0x90] sm:$0xff]
        %v6312 = vld [vmem:[%s3 + $0x98] sm:$0xff]
        %v6313 = vld [vmem:[%s3 + $0xa0] sm:$0xff]
        %v6314 = vld [vmem:[%s3 + $0xa8] sm:$0xff]
        %v6315 = vld [vmem:[%s3 + $0xb0] sm:$0xff]
        %v6316 = vld [vmem:[%s3 + $0xb8] sm:$0xff]
        %v6317 = vld [vmem:[%s3 + $0xc0] sm:$0xff]
        %v6318 = vld [vmem:[%s3 + $0xc8] sm:$0xff]
        %v6319 = vld [vmem:[%s3 + $0xd0] sm:$0xff]
        %v6320 = vld [vmem:[%s3 + $0xd8] sm:$0xff]
        %v6321 = vld [vmem:[%s3 + $0xe0] sm:$0xff]
        %v6322 = vld [vmem:[%s3 + $0xe8] sm:$0xff]
        %v6323 = vld [vmem:[%s3 + $0xf0] sm:$0xff]
        %v6324 = vld [vmem:[%s3 + $0xf8] sm:$0xff]
        %v6325 = vld [vmem:[%s3 + $0x100] sm:$0xff]
        %v6326 = vld [vmem:[%s3 + $0x108] sm:$0xff]
        %v6327 = vld [vmem:[%s3 + $0x110] sm:$0xff]
        %v6328 = vld [vmem:[%s3 + $0x118] sm:$0xff]
        %v6329 = vld [vmem:[%s3 + $0x120] sm:$0xff]
        %v6330 = vld [vmem:[%s3 + $0x128] sm:$0xff]
        %v6331 = vld [vmem:[%s3 + $0x130] sm:$0xff]
        %v6332 = vld [vmem:[%s3 + $0x138] sm:$0xff]
        %v6333 = vld [vmem:[%s3 + $0x140] sm:$0xff]
        %v6334 = vld [vmem:[%s3 + $0x148] sm:$0xff]
        %v6335 = vld [vmem:[%s3 + $0x150] sm:$0xff]
        %v6336 = vld [vmem:[%s3 + $0x158] sm:$0xff]
        %v6337 = vld [vmem:[%s3 + $0x160] sm:$0xff]
        %v6338 = vld [vmem:[%s3 + $0x168] sm:$0xff]
        %v6339 = vld [vmem:[%s3 + $0x170] sm:$0xff]
        %v6340 = vld [vmem:[%s3 + $0x178] sm:$0xff]
        %v6341 = vld [vmem:[%s3 + $0x180] sm:$0xff]
        %v6342 = vld [vmem:[%s3 + $0x188] sm:$0xff]
        %v6343 = vld [vmem:[%s3 + $0x190] sm:$0xff]
        %v6344 = vld [vmem:[%s3 + $0x198] sm:$0xff]
        %v6345 = vld [vmem:[%s3 + $0x1a0] sm:$0xff]
        %v6346 = vld [vmem:[%s3 + $0x1a8] sm:$0xff]
        %v6347 = vld [vmem:[%s3 + $0x1b0] sm:$0xff]
        %v6348 = vld [vmem:[%s3 + $0x1b8] sm:$0xff]
        %v6349 = vld [vmem:[%s3 + $0x1c0] sm:$0xff]
        %v6350 = vld [vmem:[%s3 + $0x1c8] sm:$0xff]
        %v6351 = vld [vmem:[%s3 + $0x1d0] sm:$0xff]
        %v6352 = vld [vmem:[%s3 + $0x1d8] sm:$0xff]
        %v6353 = vld [vmem:[%s3 + $0x1e0] sm:$0xff]
        %v6354 = vld [vmem:[%s3 + $0x1e8] sm:$0xff]
        %v6355 = vld [vmem:[%s3 + $0x1f0] sm:$0xff]
        %v6356 = vld [vmem:[%s3 + $0x1f8] sm:$0xff]
        %v6358 = vsel %vm444, %v6293, 0
        %v6361 = vsel %vm444, %v6294, 0
        %v6364 = vsel %vm444, %v6295, 0
        %v6367 = vsel %vm444, %v6296, 0
        %v6370 = vsel %vm444, %v6297, 0
        %v6373 = vsel %vm444, %v6298, 0
        %v6376 = vsel %vm444, %v6299, 0
        %v6379 = vsel %vm444, %v6300, 0
        %v6382 = vsel %vm444, %v6301, 0
        %v6385 = vsel %vm444, %v6302, 0
        %v6388 = vsel %vm444, %v6303, 0
        %v6391 = vsel %vm444, %v6304, 0
        %v6394 = vsel %vm444, %v6305, 0
        %v6397 = vsel %vm444, %v6306, 0
        %v6400 = vsel %vm444, %v6307, 0
        %v6403 = vsel %vm444, %v6308, 0
        %v6406 = vsel %vm444, %v6309, 0
        %v6409 = vsel %vm444, %v6310, 0
        %v6412 = vsel %vm444, %v6311, 0
        %v6415 = vsel %vm444, %v6312, 0
        %v6418 = vsel %vm444, %v6313, 0
        %v6421 = vsel %vm444, %v6314, 0
        %v6424 = vsel %vm444, %v6315, 0
        %v6427 = vsel %vm444, %v6316, 0
        %v6430 = vsel %vm444, %v6317, 0
        %v6433 = vsel %vm444, %v6318, 0
        %v6436 = vsel %vm444, %v6319, 0
        %v6439 = vsel %vm444, %v6320, 0
        %v6442 = vsel %vm444, %v6321, 0
        %v6445 = vsel %vm444, %v6322, 0
        %v6448 = vsel %vm444, %v6323, 0
        %v6451 = vsel %vm444, %v6324, 0
        %v6454 = vsel %vm444, %v6325, 0
        %v6457 = vsel %vm444, %v6326, 0
        %v6460 = vsel %vm444, %v6327, 0
        %v6463 = vsel %vm444, %v6328, 0
        %v6466 = vsel %vm444, %v6329, 0
        %v6469 = vsel %vm444, %v6330, 0
        %v6472 = vsel %vm444, %v6331, 0
        %v6475 = vsel %vm444, %v6332, 0
        %v6478 = vsel %vm444, %v6333, 0
        %v6481 = vsel %vm444, %v6334, 0
        %v6484 = vsel %vm444, %v6335, 0
        %v6487 = vsel %vm444, %v6336, 0
        %v6490 = vsel %vm444, %v6337, 0
        %v6493 = vsel %vm444, %v6338, 0
        %v6496 = vsel %vm444, %v6339, 0
        %v6499 = vsel %vm444, %v6340, 0
        %v6502 = vsel %vm444, %v6341, 0
        %v6505 = vsel %vm444, %v6342, 0
        %v6508 = vsel %vm444, %v6343, 0
        %v6511 = vsel %vm444, %v6344, 0
        %v6514 = vsel %vm444, %v6345, 0
        %v6517 = vsel %vm444, %v6346, 0
        %v6520 = vsel %vm444, %v6347, 0
        %v6523 = vsel %vm444, %v6348, 0
        %v6526 = vsel %vm444, %v6349, 0
        %v6529 = vsel %vm444, %v6350, 0
        %v6532 = vsel %vm444, %v6351, 0
        %v6535 = vsel %vm444, %v6352, 0
        %v6538 = vsel %vm444, %v6353, 0
        %v6541 = vsel %vm444, %v6354, 0
        %v6544 = vsel %vm444, %v6355, 0
        %v6547 = vsel %vm444, %v6356, 0
        %6549 = vmatprep.subr.mxu0 %v553
        %6550 = vmatpush1.msra.mxu0 %v551
        %6551 = vmatprep.subr.mxu0 0.0
        %6552 = vmatpush1.msra.mxu0 0.0
        %6553 = vmatprep.subr.mxu0 0.0
        %6554 = vmatpush1.msra.mxu0 0.0
        %6555 = vmatprep.subr.mxu0 0.0
        %6556 = vmatpush1.msra.mxu0 0.0
        %6557 = vmatprep.subr.mxu0 0.0
        %6558 = vmatpush1.msra.mxu0 0.0
        %6559 = vmatprep.subr.mxu0 0.0
        %6560 = vmatpush1.msra.mxu0 0.0
        %6561 = vmatprep.subr.mxu0 0.0
        %6562 = vmatpush1.msra.mxu0 0.0
        %6563 = vmatprep.subr.mxu0 0.0
        %6564 = vmatpush1.msra.mxu0 0.0
        %6565 = vmatprep.subr.mxu0 0.0
        %6566 = vmatpush1.msra.mxu0 0.0
        %6567 = vmatprep.subr.mxu0 0.0
        %6568 = vmatpush1.msra.mxu0 0.0
        %6569 = vmatprep.subr.mxu0 0.0
        %6570 = vmatpush1.msra.mxu0 0.0
        %6571 = vmatprep.subr.mxu0 0.0
        %6572 = vmatpush1.msra.mxu0 0.0
        %6573 = vmatprep.subr.mxu0 0.0
        %6574 = vmatpush1.msra.mxu0 0.0
        %6575 = vmatprep.subr.mxu0 0.0
        %6576 = vmatpush1.msra.mxu0 0.0
        %6577 = vmatprep.subr.mxu0 0.0
        %6578 = vmatpush1.msra.mxu0 0.0
        %6579 = vmatprep.subr.mxu0 0.0
        %6580 = vmatpush1.msra.mxu0 0.0
        %6581 = vmatprep.subr.mxu0 0.0
        %6582 = vmatpush1.msra.mxu0 0.0
        %6583 = vmatprep.subr.mxu0 0.0
        %6584 = vmatpush1.msra.mxu0 0.0
        %6585 = vmatprep.subr.mxu0 0.0
        %6586 = vmatpush1.msra.mxu0 0.0
        %6587 = vmatprep.subr.mxu0 0.0
        %6588 = vmatpush1.msra.mxu0 0.0
        %6589 = vmatprep.subr.mxu0 0.0
        %6590 = vmatpush1.msra.mxu0 0.0
        %6591 = vmatprep.subr.mxu0 0.0
        %6592 = vmatpush1.msra.mxu0 0.0
        %6593 = vmatprep.subr.mxu0 0.0
        %6594 = vmatpush1.msra.mxu0 0.0
        %6595 = vmatprep.subr.mxu0 0.0
        %6596 = vmatpush1.msra.mxu0 0.0
        %6597 = vmatprep.subr.mxu0 0.0
        %6598 = vmatpush1.msra.mxu0 0.0
        %6599 = vmatprep.subr.mxu0 0.0
        %6600 = vmatpush1.msra.mxu0 0.0
        %6601 = vmatprep.subr.mxu0 0.0
        %6602 = vmatpush1.msra.mxu0 0.0
        %6603 = vmatprep.subr.mxu0 0.0
        %6604 = vmatpush1.msra.mxu0 0.0
        %6605 = vmatprep.subr.mxu0 0.0
        %6606 = vmatpush1.msra.mxu0 0.0
        %6607 = vmatprep.subr.mxu0 0.0
        %6608 = vmatpush1.msra.mxu0 0.0
        %6609 = vmatprep.subr.mxu0 0.0
        %6610 = vmatpush1.msra.mxu0 0.0
        %6611 = vmatprep.subr.mxu0 0.0
        %6612 = vmatpush1.msra.mxu0 0.0
        %6613 = vmatprep.mubr.f32.mxu0 0.0
        %6614 = vmatmul.mubr.f32.gmra.mrb[0].mxu0 %v6358
        %v6615 = vpop.f32.mrb[0].mxu0
        %v6616 = vadd.f32 0.0, %v6615
        %v6617 = vpop.f32.mrb[0].mxu0
        %v6618 = vadd.f32 0.0, %v6617
        %6619 = vmatprep.mubr.f32.mxu0 0.0
        %6620 = vmatmul.mubr.f32.gmra.mrb[0].mxu0 %v6361
        %v6621 = vpop.f32.mrb[0].mxu0
        %v6622 = vadd.f32 0.0, %v6621
        %v6623 = vpop.f32.mrb[0].mxu0
        %v6624 = vadd.f32 0.0, %v6623
        %6625 = vmatprep.mubr.f32.mxu0 0.0
        %6626 = vmatmul.mubr.f32.gmra.mrb[0].mxu0 %v6364
        %v6627 = vpop.f32.mrb[0].mxu0
        %v6628 = vadd.f32 0.0, %v6627
        %v6629 = vpop.f32.mrb[0].mxu0
        %v6630 = vadd.f32 0.0, %v6629
        %6631 = vmatprep.mubr.f32.mxu0 0.0
        %6632 = vmatmul.mubr.f32.gmra.mrb[0].mxu0 %v6367
        %v6633 = vpop.f32.mrb[0].mxu0
        %v6634 = vadd.f32 0.0, %v6633
        %v6635 = vpop.f32.mrb[0].mxu0
        %v6636 = vadd.f32 0.0, %v6635
        %6637 = vmatprep.mubr.f32.mxu0 0.0
        %6638 = vmatmul.mubr.f32.gmra.mrb[0].mxu0 %v6370
        %v6639 = vpop.f32.mrb[0].mxu0
        %v6640 = vadd.f32 0.0, %v6639
        %v6641 = vpop.f32.mrb[0].mxu0
        %v6642 = vadd.f32 0.0, %v6641
        %6643 = vmatprep.mubr.f32.mxu0 0.0
        %6644 = vmatmul.mubr.f32.gmra.mrb[0].mxu0 %v6373
        %v6645 = vpop.f32.mrb[0].mxu0
        %v6646 = vadd.f32 0.0, %v6645
        %v6647 = vpop.f32.mrb[0].mxu0
        %v6648 = vadd.f32 0.0, %v6647
        %6649 = vmatprep.mubr.f32.mxu0 0.0
        %6650 = vmatmul.mubr.f32.gmra.mrb[0].mxu0 %v6376
        %v6651 = vpop.f32.mrb[0].mxu0
        %v6652 = vadd.f32 0.0, %v6651
        %v6653 = vpop.f32.mrb[0].mxu0
        %v6654 = vadd.f32 0.0, %v6653
        %6655 = vmatprep.mubr.f32.mxu0 0.0
        %6656 = vmatmul.mubr.f32.gmra.mrb[0].mxu0 %v6379
        %v6657 = vpop.f32.mrb[0].mxu0
        %v6658 = vadd.f32 0.0, %v6657
        %v6659 = vpop.f32.mrb[0].mxu0
        %v6660 = vadd.f32 0.0, %v6659
        %6661 = vmatprep.mubr.f32.mxu0 0.0
        %6662 = vmatmul.mubr.f32.gmra.mrb[0].mxu0 %v6382
        %v6663 = vpop.f32.mrb[0].mxu0
        %v6664 = vadd.f32 0.0, %v6663
        %v6665 = vpop.f32.mrb[0].mxu0
        %v6666 = vadd.f32 0.0, %v6665
        %6667 = vmatprep.mubr.f32.mxu0 0.0
        %6668 = vmatmul.mubr.f32.gmra.mrb[0].mxu0 %v6385
        %v6669 = vpop.f32.mrb[0].mxu0
        %v6670 = vadd.f32 0.0, %v6669
        %v6671 = vpop.f32.mrb[0].mxu0
        %v6672 = vadd.f32 0.0, %v6671
        %6673 = vmatprep.mubr.f32.mxu0 0.0
        %6674 = vmatmul.mubr.f32.gmra.mrb[0].mxu0 %v6388
        %v6675 = vpop.f32.mrb[0].mxu0
        %v6676 = vadd.f32 0.0, %v6675
        %v6677 = vpop.f32.mrb[0].mxu0
        %v6678 = vadd.f32 0.0, %v6677
        %6679 = vmatprep.mubr.f32.mxu0 0.0
        %6680 = vmatmul.mubr.f32.gmra.mrb[0].mxu0 %v6391
        %v6681 = vpop.f32.mrb[0].mxu0
        %v6682 = vadd.f32 0.0, %v6681
        %v6683 = vpop.f32.mrb[0].mxu0
        %v6684 = vadd.f32 0.0, %v6683
        %6685 = vmatprep.mubr.f32.mxu0 0.0
        %6686 = vmatmul.mubr.f32.gmra.mrb[0].mxu0 %v6394
        %v6687 = vpop.f32.mrb[0].mxu0
        %v6688 = vadd.f32 0.0, %v6687
        %v6689 = vpop.f32.mrb[0].mxu0
        %v6690 = vadd.f32 0.0, %v6689
        %6691 = vmatprep.mubr.f32.mxu0 0.0
        %6692 = vmatmul.mubr.f32.gmra.mrb[0].mxu0 %v6397
        %v6693 = vpop.f32.mrb[0].mxu0
        %v6694 = vadd.f32 0.0, %v6693
        %v6695 = vpop.f32.mrb[0].mxu0
        %v6696 = vadd.f32 0.0, %v6695
        %6697 = vmatprep.mubr.f32.mxu0 0.0
        %6698 = vmatmul.mubr.f32.gmra.mrb[0].mxu0 %v6400
        %v6699 = vpop.f32.mrb[0].mxu0
        %v6700 = vadd.f32 0.0, %v6699
        %v6701 = vpop.f32.mrb[0].mxu0
        %v6702 = vadd.f32 0.0, %v6701
        %6703 = vmatprep.mubr.f32.mxu0 0.0
        %6704 = vmatmul.mubr.f32.gmra.mrb[0].mxu0 %v6403
        %v6705 = vpop.f32.mrb[0].mxu0
        %v6706 = vadd.f32 0.0, %v6705
        %v6707 = vpop.f32.mrb[0].mxu0
        %v6708 = vadd.f32 0.0, %v6707
        %6709 = vmatprep.mubr.f32.mxu0 0.0
        %6710 = vmatmul.mubr.f32.gmra.mrb[0].mxu0 %v6406
        %v6711 = vpop.f32.mrb[0].mxu0
        %v6712 = vadd.f32 0.0, %v6711
        %v6713 = vpop.f32.mrb[0].mxu0
        %v6714 = vadd.f32 0.0, %v6713
        %6715 = vmatprep.mubr.f32.mxu0 0.0
        %6716 = vmatmul.mubr.f32.gmra.mrb[0].mxu0 %v6409
        %v6717 = vpop.f32.mrb[0].mxu0
        %v6718 = vadd.f32 0.0, %v6717
        %v6719 = vpop.f32.mrb[0].mxu0
        %v6720 = vadd.f32 0.0, %v6719
        %6721 = vmatprep.mubr.f32.mxu0 0.0
        %6722 = vmatmul.mubr.f32.gmra.mrb[0].mxu0 %v6412
        %v6723 = vpop.f32.mrb[0].mxu0
        %v6724 = vadd.f32 0.0, %v6723
        %v6725 = vpop.f32.mrb[0].mxu0
        %v6726 = vadd.f32 0.0, %v6725
        %6727 = vmatprep.mubr.f32.mxu0 0.0
        %6728 = vmatmul.mubr.f32.gmra.mrb[0].mxu0 %v6415
        %v6729 = vpop.f32.mrb[0].mxu0
        %v6730 = vadd.f32 0.0, %v6729
        %v6731 = vpop.f32.mrb[0].mxu0
        %v6732 = vadd.f32 0.0, %v6731
        %6733 = vmatprep.mubr.f32.mxu0 0.0
        %6734 = vmatmul.mubr.f32.gmra.mrb[0].mxu0 %v6418
        %v6735 = vpop.f32.mrb[0].mxu0
        %v6736 = vadd.f32 0.0, %v6735
        %v6737 = vpop.f32.mrb[0].mxu0
        %v6738 = vadd.f32 0.0, %v6737
        %6739 = vmatprep.mubr.f32.mxu0 0.0
        %6740 = vmatmul.mubr.f32.gmra.mrb[0].mxu0 %v6421
        %v6741 = vpop.f32.mrb[0].mxu0
        %v6742 = vadd.f32 0.0, %v6741
        %v6743 = vpop.f32.mrb[0].mxu0
        %v6744 = vadd.f32 0.0, %v6743
        %6745 = vmatprep.mubr.f32.mxu0 0.0
        %6746 = vmatmul.mubr.f32.gmra.mrb[0].mxu0 %v6424
        %v6747 = vpop.f32.mrb[0].mxu0
        %v6748 = vadd.f32 0.0, %v6747
        %v6749 = vpop.f32.mrb[0].mxu0
        %v6750 = vadd.f32 0.0, %v6749
        %6751 = vmatprep.mubr.f32.mxu0 0.0
        %6752 = vmatmul.mubr.f32.gmra.mrb[0].mxu0 %v6427
        %v6753 = vpop.f32.mrb[0].mxu0
        %v6754 = vadd.f32 0.0, %v6753
        %v6755 = vpop.f32.mrb[0].mxu0
        %v6756 = vadd.f32 0.0, %v6755
        %6757 = vmatprep.mubr.f32.mxu0 0.0
        %6758 = vmatmul.mubr.f32.gmra.mrb[0].mxu0 %v6430
        %v6759 = vpop.f32.mrb[0].mxu0
        %v6760 = vadd.f32 0.0, %v6759
        %v6761 = vpop.f32.mrb[0].mxu0
        %v6762 = vadd.f32 0.0, %v6761
        %6763 = vmatprep.mubr.f32.mxu0 0.0
        %6764 = vmatmul.mubr.f32.gmra.mrb[0].mxu0 %v6433
        %v6765 = vpop.f32.mrb[0].mxu0
        %v6766 = vadd.f32 0.0, %v6765
        %v6767 = vpop.f32.mrb[0].mxu0
        %v6768 = vadd.f32 0.0, %v6767
        %6769 = vmatprep.mubr.f32.mxu0 0.0
        %6770 = vmatmul.mubr.f32.gmra.mrb[0].mxu0 %v6436
        %v6771 = vpop.f32.mrb[0].mxu0
        %v6772 = vadd.f32 0.0, %v6771
        %v6773 = vpop.f32.mrb[0].mxu0
        %v6774 = vadd.f32 0.0, %v6773
        %6775 = vmatprep.mubr.f32.mxu0 0.0
        %6776 = vmatmul.mubr.f32.gmra.mrb[0].mxu0 %v6439
        %v6777 = vpop.f32.mrb[0].mxu0
        %v6778 = vadd.f32 0.0, %v6777
        %v6779 = vpop.f32.mrb[0].mxu0
        %v6780 = vadd.f32 0.0, %v6779
        %6781 = vmatprep.mubr.f32.mxu0 0.0
        %6782 = vmatmul.mubr.f32.gmra.mrb[0].mxu0 %v6442
        %v6783 = vpop.f32.mrb[0].mxu0
        %v6784 = vadd.f32 0.0, %v6783
        %v6785 = vpop.f32.mrb[0].mxu0
        %v6786 = vadd.f32 0.0, %v6785
        %6787 = vmatprep.mubr.f32.mxu0 0.0
        %6788 = vmatmul.mubr.f32.gmra.mrb[0].mxu0 %v6445
        %v6789 = vpop.f32.mrb[0].mxu0
        %v6790 = vadd.f32 0.0, %v6789
        %v6791 = vpop.f32.mrb[0].mxu0
        %v6792 = vadd.f32 0.0, %v6791
        %6793 = vmatprep.mubr.f32.mxu0 0.0
        %6794 = vmatmul.mubr.f32.gmra.mrb[0].mxu0 %v6448
        %v6795 = vpop.f32.mrb[0].mxu0
        %v6796 = vadd.f32 0.0, %v6795
        %v6797 = vpop.f32.mrb[0].mxu0
        %v6798 = vadd.f32 0.0, %v6797
        %6799 = vmatprep.mubr.f32.mxu0 0.0
        %6800 = vmatmul.mubr.f32.gmra.mrb[0].mxu0 %v6451
        %v6801 = vpop.f32.mrb[0].mxu0
        %v6802 = vadd.f32 0.0, %v6801
        %v6803 = vpop.f32.mrb[0].mxu0
        %v6804 = vadd.f32 0.0, %v6803
        %6805 = vmatprep.mubr.f32.mxu0 0.0
        %6806 = vmatmul.mubr.f32.gmra.mrb[0].mxu0 %v6454
        %v6807 = vpop.f32.mrb[0].mxu0
        %v6808 = vadd.f32 0.0, %v6807
        %v6809 = vpop.f32.mrb[0].mxu0
        %v6810 = vadd.f32 0.0, %v6809
        %6811 = vmatprep.mubr.f32.mxu0 0.0
        %6812 = vmatmul.mubr.f32.gmra.mrb[0].mxu0 %v6457
        %v6813 = vpop.f32.mrb[0].mxu0
        %v6814 = vadd.f32 0.0, %v6813
        %v6815 = vpop.f32.mrb[0].mxu0
        %v6816 = vadd.f32 0.0, %v6815
        %6817 = vmatprep.mubr.f32.mxu0 0.0
        %6818 = vmatmul.mubr.f32.gmra.mrb[0].mxu0 %v6460
        %v6819 = vpop.f32.mrb[0].mxu0
        %v6820 = vadd.f32 0.0, %v6819
        %v6821 = vpop.f32.mrb[0].mxu0
        %v6822 = vadd.f32 0.0, %v6821
        %6823 = vmatprep.mubr.f32.mxu0 0.0
        %6824 = vmatmul.mubr.f32.gmra.mrb[0].mxu0 %v6463
        %v6825 = vpop.f32.mrb[0].mxu0
        %v6826 = vadd.f32 0.0, %v6825
        %v6827 = vpop.f32.mrb[0].mxu0
        %v6828 = vadd.f32 0.0, %v6827
        %6829 = vmatprep.mubr.f32.mxu0 0.0
        %6830 = vmatmul.mubr.f32.gmra.mrb[0].mxu0 %v6466
        %v6831 = vpop.f32.mrb[0].mxu0
        %v6832 = vadd.f32 0.0, %v6831
        %v6833 = vpop.f32.mrb[0].mxu0
        %v6834 = vadd.f32 0.0, %v6833
        %6835 = vmatprep.mubr.f32.mxu0 0.0
        %6836 = vmatmul.mubr.f32.gmra.mrb[0].mxu0 %v6469
        %v6837 = vpop.f32.mrb[0].mxu0
        %v6838 = vadd.f32 0.0, %v6837
        %v6839 = vpop.f32.mrb[0].mxu0
        %v6840 = vadd.f32 0.0, %v6839
        %6841 = vmatprep.mubr.f32.mxu0 0.0
        %6842 = vmatmul.mubr.f32.gmra.mrb[0].mxu0 %v6472
        %v6843 = vpop.f32.mrb[0].mxu0
        %v6844 = vadd.f32 0.0, %v6843
        %v6845 = vpop.f32.mrb[0].mxu0
        %v6846 = vadd.f32 0.0, %v6845
        %6847 = vmatprep.mubr.f32.mxu0 0.0
        %6848 = vmatmul.mubr.f32.gmra.mrb[0].mxu0 %v6475
        %v6849 = vpop.f32.mrb[0].mxu0
        %v6850 = vadd.f32 0.0, %v6849
        %v6851 = vpop.f32.mrb[0].mxu0
        %v6852 = vadd.f32 0.0, %v6851
        %6853 = vmatprep.mubr.f32.mxu0 0.0
        %6854 = vmatmul.mubr.f32.gmra.mrb[0].mxu0 %v6478
        %v6855 = vpop.f32.mrb[0].mxu0
        %v6856 = vadd.f32 0.0, %v6855
        %v6857 = vpop.f32.mrb[0].mxu0
        %v6858 = vadd.f32 0.0, %v6857
        %6859 = vmatprep.mubr.f32.mxu0 0.0
        %6860 = vmatmul.mubr.f32.gmra.mrb[0].mxu0 %v6481
        %v6861 = vpop.f32.mrb[0].mxu0
        %v6862 = vadd.f32 0.0, %v6861
        %v6863 = vpop.f32.mrb[0].mxu0
        %v6864 = vadd.f32 0.0, %v6863
        %6865 = vmatprep.mubr.f32.mxu0 0.0
        %6866 = vmatmul.mubr.f32.gmra.mrb[0].mxu0 %v6484
        %v6867 = vpop.f32.mrb[0].mxu0
        %v6868 = vadd.f32 0.0, %v6867
        %v6869 = vpop.f32.mrb[0].mxu0
        %v6870 = vadd.f32 0.0, %v6869
        %6871 = vmatprep.mubr.f32.mxu0 0.0
        %6872 = vmatmul.mubr.f32.gmra.mrb[0].mxu0 %v6487
        %v6873 = vpop.f32.mrb[0].mxu0
        %v6874 = vadd.f32 0.0, %v6873
        %v6875 = vpop.f32.mrb[0].mxu0
        %v6876 = vadd.f32 0.0, %v6875
        %6877 = vmatprep.mubr.f32.mxu0 0.0
        %6878 = vmatmul.mubr.f32.gmra.mrb[0].mxu0 %v6490
        %v6879 = vpop.f32.mrb[0].mxu0
        %v6880 = vadd.f32 0.0, %v6879
        %v6881 = vpop.f32.mrb[0].mxu0
        %v6882 = vadd.f32 0.0, %v6881
        %6883 = vmatprep.mubr.f32.mxu0 0.0
        %6884 = vmatmul.mubr.f32.gmra.mrb[0].mxu0 %v6493
        %v6885 = vpop.f32.mrb[0].mxu0
        %v6886 = vadd.f32 0.0, %v6885
        %v6887 = vpop.f32.mrb[0].mxu0
        %v6888 = vadd.f32 0.0, %v6887
        %6889 = vmatprep.mubr.f32.mxu0 0.0
        %6890 = vmatmul.mubr.f32.gmra.mrb[0].mxu0 %v6496
        %v6891 = vpop.f32.mrb[0].mxu0
        %v6892 = vadd.f32 0.0, %v6891
        %v6893 = vpop.f32.mrb[0].mxu0
        %v6894 = vadd.f32 0.0, %v6893
        %6895 = vmatprep.mubr.f32.mxu0 0.0
        %6896 = vmatmul.mubr.f32.gmra.mrb[0].mxu0 %v6499
        %v6897 = vpop.f32.mrb[0].mxu0
        %v6898 = vadd.f32 0.0, %v6897
        %v6899 = vpop.f32.mrb[0].mxu0
        %v6900 = vadd.f32 0.0, %v6899
        %6901 = vmatprep.mubr.f32.mxu0 0.0
        %6902 = vmatmul.mubr.f32.gmra.mrb[0].mxu0 %v6502
        %v6903 = vpop.f32.mrb[0].mxu0
        %v6904 = vadd.f32 0.0, %v6903
        %v6905 = vpop.f32.mrb[0].mxu0
        %v6906 = vadd.f32 0.0, %v6905
        %6907 = vmatprep.mubr.f32.mxu0 0.0
        %6908 = vmatmul.mubr.f32.gmra.mrb[0].mxu0 %v6505
        %v6909 = vpop.f32.mrb[0].mxu0
        %v6910 = vadd.f32 0.0, %v6909
        %v6911 = vpop.f32.mrb[0].mxu0
        %v6912 = vadd.f32 0.0, %v6911
        %6913 = vmatprep.mubr.f32.mxu0 0.0
        %6914 = vmatmul.mubr.f32.gmra.mrb[0].mxu0 %v6508
        %v6915 = vpop.f32.mrb[0].mxu0
        %v6916 = vadd.f32 0.0, %v6915
        %v6917 = vpop.f32.mrb[0].mxu0
        %v6918 = vadd.f32 0.0, %v6917
        %6919 = vmatprep.mubr.f32.mxu0 0.0
        %6920 = vmatmul.mubr.f32.gmra.mrb[0].mxu0 %v6511
        %v6921 = vpop.f32.mrb[0].mxu0
        %v6922 = vadd.f32 0.0, %v6921
        %v6923 = vpop.f32.mrb[0].mxu0
        %v6924 = vadd.f32 0.0, %v6923
        %6925 = vmatprep.mubr.f32.mxu0 0.0
        %6926 = vmatmul.mubr.f32.gmra.mrb[0].mxu0 %v6514
        %v6927 = vpop.f32.mrb[0].mxu0
        %v6928 = vadd.f32 0.0, %v6927
        %v6929 = vpop.f32.mrb[0].mxu0
        %v6930 = vadd.f32 0.0, %v6929
        %6931 = vmatprep.mubr.f32.mxu0 0.0
        %6932 = vmatmul.mubr.f32.gmra.mrb[0].mxu0 %v6517
        %v6933 = vpop.f32.mrb[0].mxu0
        %v6934 = vadd.f32 0.0, %v6933
        %v6935 = vpop.f32.mrb[0].mxu0
        %v6936 = vadd.f32 0.0, %v6935
        %6937 = vmatprep.mubr.f32.mxu0 0.0
        %6938 = vmatmul.mubr.f32.gmra.mrb[0].mxu0 %v6520
        %v6939 = vpop.f32.mrb[0].mxu0
        %v6940 = vadd.f32 0.0, %v6939
        %v6941 = vpop.f32.mrb[0].mxu0
        %v6942 = vadd.f32 0.0, %v6941
        %6943 = vmatprep.mubr.f32.mxu0 0.0
        %6944 = vmatmul.mubr.f32.gmra.mrb[0].mxu0 %v6523
        %v6945 = vpop.f32.mrb[0].mxu0
        %v6946 = vadd.f32 0.0, %v6945
        %v6947 = vpop.f32.mrb[0].mxu0
        %v6948 = vadd.f32 0.0, %v6947
        %6949 = vmatprep.mubr.f32.mxu0 0.0
        %6950 = vmatmul.mubr.f32.gmra.mrb[0].mxu0 %v6526
        %v6951 = vpop.f32.mrb[0].mxu0
        %v6952 = vadd.f32 0.0, %v6951
        %v6953 = vpop.f32.mrb[0].mxu0
        %v6954 = vadd.f32 0.0, %v6953
        %6955 = vmatprep.mubr.f32.mxu0 0.0
        %6956 = vmatmul.mubr.f32.gmra.mrb[0].mxu0 %v6529
        %v6957 = vpop.f32.mrb[0].mxu0
        %v6958 = vadd.f32 0.0, %v6957
        %v6959 = vpop.f32.mrb[0].mxu0
        %v6960 = vadd.f32 0.0, %v6959
        %6961 = vmatprep.mubr.f32.mxu0 0.0
        %6962 = vmatmul.mubr.f32.gmra.mrb[0].mxu0 %v6532
        %v6963 = vpop.f32.mrb[0].mxu0
        %v6964 = vadd.f32 0.0, %v6963
        %v6965 = vpop.f32.mrb[0].mxu0
        %v6966 = vadd.f32 0.0, %v6965
        %6967 = vmatprep.mubr.f32.mxu0 0.0
        %6968 = vmatmul.mubr.f32.gmra.mrb[0].mxu0 %v6535
        %v6969 = vpop.f32.mrb[0].mxu0
        %v6970 = vadd.f32 0.0, %v6969
        %v6971 = vpop.f32.mrb[0].mxu0
        %v6972 = vadd.f32 0.0, %v6971
        %6973 = vmatprep.mubr.f32.mxu0 0.0
        %6974 = vmatmul.mubr.f32.gmra.mrb[0].mxu0 %v6538
        %v6975 = vpop.f32.mrb[0].mxu0
        %v6976 = vadd.f32 0.0, %v6975
        %v6977 = vpop.f32.mrb[0].mxu0
        %v6978 = vadd.f32 0.0, %v6977
        %6979 = vmatprep.mubr.f32.mxu0 0.0
        %6980 = vmatmul.mubr.f32.gmra.mrb[0].mxu0 %v6541
        %v6981 = vpop.f32.mrb[0].mxu0
        %v6982 = vadd.f32 0.0, %v6981
        %v6983 = vpop.f32.mrb[0].mxu0
        %v6984 = vadd.f32 0.0, %v6983
        %6985 = vmatprep.mubr.f32.mxu0 0.0
        %6986 = vmatmul.mubr.f32.gmra.mrb[0].mxu0 %v6544
        %v6987 = vpop.f32.mrb[0].mxu0
        %v6988 = vadd.f32 0.0, %v6987
        %v6989 = vpop.f32.mrb[0].mxu0
        %v6990 = vadd.f32 0.0, %v6989
        %6991 = vmatprep.mubr.f32.mxu0 0.0
        %6992 = vmatmul.mubr.f32.gmra.mrb[0].mxu0 %v6547
        %v6993 = vpop.f32.mrb[0].mxu0
        %v6994 = vadd.f32 0.0, %v6993
        %v6995 = vpop.f32.mrb[0].mxu0
        %v6996 = vadd.f32 0.0, %v6995
        %6997 = vdwg.mxu0
        %6998 = vmatprep.subr.mxu0 %v648
        %6999 = vmatpush1.msra.mxu0 %v646
        %7000 = vmatprep.subr.mxu0 0.0
        %7001 = vmatpush1.msra.mxu0 0.0
        %7002 = vmatprep.subr.mxu0 0.0
        %7003 = vmatpush1.msra.mxu0 0.0
        %7004 = vmatprep.subr.mxu0 0.0
        %7005 = vmatpush1.msra.mxu0 0.0
        %7006 = vmatprep.subr.mxu0 0.0
        %7007 = vmatpush1.msra.mxu0 0.0
        %7008 = vmatprep.subr.mxu0 0.0
        %7009 = vmatpush1.msra.mxu0 0.0
        %7010 = vmatprep.subr.mxu0 0.0
        %7011 = vmatpush1.msra.mxu0 0.0
        %7012 = vmatprep.subr.mxu0 0.0
        %7013 = vmatpush1.msra.mxu0 0.0
        %7014 = vmatprep.subr.mxu0 0.0
        %7015 = vmatpush1.msra.mxu0 0.0
        %7016 = vmatprep.subr.mxu0 0.0
        %7017 = vmatpush1.msra.mxu0 0.0
        %7018 = vmatprep.subr.mxu0 0.0
        %7019 = vmatpush1.msra.mxu0 0.0
        %7020 = vmatprep.subr.mxu0 0.0
        %7021 = vmatpush1.msra.mxu0 0.0
        %7022 = vmatprep.subr.mxu0 0.0
        %7023 = vmatpush1.msra.mxu0 0.0
        %7024 = vmatprep.subr.mxu0 0.0
        %7025 = vmatpush1.msra.mxu0 0.0
        %7026 = vmatprep.subr.mxu0 0.0
        %7027 = vmatpush1.msra.mxu0 0.0
        %7028 = vmatprep.subr.mxu0 0.0
        %7029 = vmatpush1.msra.mxu0 0.0
        %7030 = vmatprep.subr.mxu0 0.0
        %7031 = vmatpush1.msra.mxu0 0.0
        %7032 = vmatprep.subr.mxu0 0.0
        %7033 = vmatpush1.msra.mxu0 0.0
        %7034 = vmatprep.subr.mxu0 0.0
        %7035 = vmatpush1.msra.mxu0 0.0
        %7036 = vmatprep.subr.mxu0 0.0
        %7037 = vmatpush1.msra.mxu0 0.0
        %7038 = vmatprep.subr.mxu0 0.0
        %7039 = vmatpush1.msra.mxu0 0.0
        %7040 = vmatprep.subr.mxu0 0.0
        %7041 = vmatpush1.msra.mxu0 0.0
        %7042 = vmatprep.subr.mxu0 0.0
        %7043 = vmatpush1.msra.mxu0 0.0
        %7044 = vmatprep.subr.mxu0 0.0
        %7045 = vmatpush1.msra.mxu0 0.0
        %7046 = vmatprep.subr.mxu0 0.0
        %7047 = vmatpush1.msra.mxu0 0.0
        %7048 = vmatprep.subr.mxu0 0.0
        %7049 = vmatpush1.msra.mxu0 0.0
        %7050 = vmatprep.subr.mxu0 0.0
        %7051 = vmatpush1.msra.mxu0 0.0
        %7052 = vmatprep.subr.mxu0 0.0
        %7053 = vmatpush1.msra.mxu0 0.0
        %7054 = vmatprep.subr.mxu0 0.0
        %7055 = vmatpush1.msra.mxu0 0.0
        %7056 = vmatprep.subr.mxu0 0.0
        %7057 = vmatpush1.msra.mxu0 0.0
        %7058 = vmatprep.subr.mxu0 0.0
        %7059 = vmatpush1.msra.mxu0 0.0
        %7060 = vmatprep.subr.mxu0 0.0
        %7061 = vmatpush1.msra.mxu0 0.0
        %7062 = vmatprep.mubr.f32.mxu0 0.0
        %7063 = vmatmul.mubr.f32.gmra.mrb[0].mxu0 %v6358
        %v7064 = vpop.f32.mrb[0].mxu0
        %v7065 = vadd.f32 0.0, %v7064
        %v7066 = vpop.f32.mrb[0].mxu0
        %v7067 = vadd.f32 0.0, %v7066
        %7068 = vmatprep.mubr.f32.mxu0 0.0
        %7069 = vmatmul.mubr.f32.gmra.mrb[0].mxu0 %v6361
        %v7070 = vpop.f32.mrb[0].mxu0
        %v7071 = vadd.f32 0.0, %v7070
        %v7072 = vpop.f32.mrb[0].mxu0
        %v7073 = vadd.f32 0.0, %v7072
        %7074 = vmatprep.mubr.f32.mxu0 0.0
        %7075 = vmatmul.mubr.f32.gmra.mrb[0].mxu0 %v6364
        %v7076 = vpop.f32.mrb[0].mxu0
        %v7077 = vadd.f32 0.0, %v7076
        %v7078 = vpop.f32.mrb[0].mxu0
        %v7079 = vadd.f32 0.0, %v7078
        %7080 = vmatprep.mubr.f32.mxu0 0.0
        %7081 = vmatmul.mubr.f32.gmra.mrb[0].mxu0 %v6367
        %v7082 = vpop.f32.mrb[0].mxu0
        %v7083 = vadd.f32 0.0, %v7082
        %v7084 = vpop.f32.mrb[0].mxu0
        %v7085 = vadd.f32 0.0, %v7084
        %7086 = vmatprep.mubr.f32.mxu0 0.0
        %7087 = vmatmul.mubr.f32.gmra.mrb[0].mxu0 %v6370
        %v7088 = vpop.f32.mrb[0].mxu0
        %v7089 = vadd.f32 0.0, %v7088
        %v7090 = vpop.f32.mrb[0].mxu0
        %v7091 = vadd.f32 0.0, %v7090
        %7092 = vmatprep.mubr.f32.mxu0 0.0
        %7093 = vmatmul.mubr.f32.gmra.mrb[0].mxu0 %v6373
        %v7094 = vpop.f32.mrb[0].mxu0
        %v7095 = vadd.f32 0.0, %v7094
        %v7096 = vpop.f32.mrb[0].mxu0
        %v7097 = vadd.f32 0.0, %v7096
        %7098 = vmatprep.mubr.f32.mxu0 0.0
        %7099 = vmatmul.mubr.f32.gmra.mrb[0].mxu0 %v6376
        %v7100 = vpop.f32.mrb[0].mxu0
        %v7101 = vadd.f32 0.0, %v7100
        %v7102 = vpop.f32.mrb[0].mxu0
        %v7103 = vadd.f32 0.0, %v7102
        %7104 = vmatprep.mubr.f32.mxu0 0.0
        %7105 = vmatmul.mubr.f32.gmra.mrb[0].mxu0 %v6379
        %v7106 = vpop.f32.mrb[0].mxu0
        %v7107 = vadd.f32 0.0, %v7106
        %v7108 = vpop.f32.mrb[0].mxu0
        %v7109 = vadd.f32 0.0, %v7108
        %7110 = vmatprep.mubr.f32.mxu0 0.0
        %7111 = vmatmul.mubr.f32.gmra.mrb[0].mxu0 %v6382
        %v7112 = vpop.f32.mrb[0].mxu0
        %v7113 = vadd.f32 0.0, %v7112
        %v7114 = vpop.f32.mrb[0].mxu0
        %v7115 = vadd.f32 0.0, %v7114
        %7116 = vmatprep.mubr.f32.mxu0 0.0
        %7117 = vmatmul.mubr.f32.gmra.mrb[0].mxu0 %v6385
        %v7118 = vpop.f32.mrb[0].mxu0
        %v7119 = vadd.f32 0.0, %v7118
        %v7120 = vpop.f32.mrb[0].mxu0
        %v7121 = vadd.f32 0.0, %v7120
        %7122 = vmatprep.mubr.f32.mxu0 0.0
        %7123 = vmatmul.mubr.f32.gmra.mrb[0].mxu0 %v6388
        %v7124 = vpop.f32.mrb[0].mxu0
        %v7125 = vadd.f32 0.0, %v7124
        %v7126 = vpop.f32.mrb[0].mxu0
        %v7127 = vadd.f32 0.0, %v7126
        %7128 = vmatprep.mubr.f32.mxu0 0.0
        %7129 = vmatmul.mubr.f32.gmra.mrb[0].mxu0 %v6391
        %v7130 = vpop.f32.mrb[0].mxu0
        %v7131 = vadd.f32 0.0, %v7130
        %v7132 = vpop.f32.mrb[0].mxu0
        %v7133 = vadd.f32 0.0, %v7132
        %7134 = vmatprep.mubr.f32.mxu0 0.0
        %7135 = vmatmul.mubr.f32.gmra.mrb[0].mxu0 %v6394
        %v7136 = vpop.f32.mrb[0].mxu0
        %v7137 = vadd.f32 0.0, %v7136
        %v7138 = vpop.f32.mrb[0].mxu0
        %v7139 = vadd.f32 0.0, %v7138
        %7140 = vmatprep.mubr.f32.mxu0 0.0
        %7141 = vmatmul.mubr.f32.gmra.mrb[0].mxu0 %v6397
        %v7142 = vpop.f32.mrb[0].mxu0
        %v7143 = vadd.f32 0.0, %v7142
        %v7144 = vpop.f32.mrb[0].mxu0
        %v7145 = vadd.f32 0.0, %v7144
        %7146 = vmatprep.mubr.f32.mxu0 0.0
        %7147 = vmatmul.mubr.f32.gmra.mrb[0].mxu0 %v6400
        %v7148 = vpop.f32.mrb[0].mxu0
        %v7149 = vadd.f32 0.0, %v7148
        %v7150 = vpop.f32.mrb[0].mxu0
        %v7151 = vadd.f32 0.0, %v7150
        %7152 = vmatprep.mubr.f32.mxu0 0.0
        %7153 = vmatmul.mubr.f32.gmra.mrb[0].mxu0 %v6403
        %v7154 = vpop.f32.mrb[0].mxu0
        %v7155 = vadd.f32 0.0, %v7154
        %v7156 = vpop.f32.mrb[0].mxu0
        %v7157 = vadd.f32 0.0, %v7156
        %7158 = vmatprep.mubr.f32.mxu0 0.0
        %7159 = vmatmul.mubr.f32.gmra.mrb[0].mxu0 %v6406
        %v7160 = vpop.f32.mrb[0].mxu0
        %v7161 = vadd.f32 0.0, %v7160
        %v7162 = vpop.f32.mrb[0].mxu0
        %v7163 = vadd.f32 0.0, %v7162
        %7164 = vmatprep.mubr.f32.mxu0 0.0
        %7165 = vmatmul.mubr.f32.gmra.mrb[0].mxu0 %v6409
        %v7166 = vpop.f32.mrb[0].mxu0
        %v7167 = vadd.f32 0.0, %v7166
        %v7168 = vpop.f32.mrb[0].mxu0
        %v7169 = vadd.f32 0.0, %v7168
        %7170 = vmatprep.mubr.f32.mxu0 0.0
        %7171 = vmatmul.mubr.f32.gmra.mrb[0].mxu0 %v6412
        %v7172 = vpop.f32.mrb[0].mxu0
        %v7173 = vadd.f32 0.0, %v7172
        %v7174 = vpop.f32.mrb[0].mxu0
        %v7175 = vadd.f32 0.0, %v7174
        %7176 = vmatprep.mubr.f32.mxu0 0.0
        %7177 = vmatmul.mubr.f32.gmra.mrb[0].mxu0 %v6415
        %v7178 = vpop.f32.mrb[0].mxu0
        %v7179 = vadd.f32 0.0, %v7178
        %v7180 = vpop.f32.mrb[0].mxu0
        %v7181 = vadd.f32 0.0, %v7180
        %7182 = vmatprep.mubr.f32.mxu0 0.0
        %7183 = vmatmul.mubr.f32.gmra.mrb[0].mxu0 %v6418
        %v7184 = vpop.f32.mrb[0].mxu0
        %v7185 = vadd.f32 0.0, %v7184
        %v7186 = vpop.f32.mrb[0].mxu0
        %v7187 = vadd.f32 0.0, %v7186
        %7188 = vmatprep.mubr.f32.mxu0 0.0
        %7189 = vmatmul.mubr.f32.gmra.mrb[0].mxu0 %v6421
        %v7190 = vpop.f32.mrb[0].mxu0
        %v7191 = vadd.f32 0.0, %v7190
        %v7192 = vpop.f32.mrb[0].mxu0
        %v7193 = vadd.f32 0.0, %v7192
        %7194 = vmatprep.mubr.f32.mxu0 0.0
        %7195 = vmatmul.mubr.f32.gmra.mrb[0].mxu0 %v6424
        %v7196 = vpop.f32.mrb[0].mxu0
        %v7197 = vadd.f32 0.0, %v7196
        %v7198 = vpop.f32.mrb[0].mxu0
        %v7199 = vadd.f32 0.0, %v7198
        %7200 = vmatprep.mubr.f32.mxu0 0.0
        %7201 = vmatmul.mubr.f32.gmra.mrb[0].mxu0 %v6427
        %v7202 = vpop.f32.mrb[0].mxu0
        %v7203 = vadd.f32 0.0, %v7202
        %v7204 = vpop.f32.mrb[0].mxu0
        %v7205 = vadd.f32 0.0, %v7204
        %7206 = vmatprep.mubr.f32.mxu0 0.0
        %7207 = vmatmul.mubr.f32.gmra.mrb[0].mxu0 %v6430
        %v7208 = vpop.f32.mrb[0].mxu0
        %v7209 = vadd.f32 0.0, %v7208
        %v7210 = vpop.f32.mrb[0].mxu0
        %v7211 = vadd.f32 0.0, %v7210
        %7212 = vmatprep.mubr.f32.mxu0 0.0
        %7213 = vmatmul.mubr.f32.gmra.mrb[0].mxu0 %v6433
        %v7214 = vpop.f32.mrb[0].mxu0
        %v7215 = vadd.f32 0.0, %v7214
        %v7216 = vpop.f32.mrb[0].mxu0
        %v7217 = vadd.f32 0.0, %v7216
        %7218 = vmatprep.mubr.f32.mxu0 0.0
        %7219 = vmatmul.mubr.f32.gmra.mrb[0].mxu0 %v6436
        %v7220 = vpop.f32.mrb[0].mxu0
        %v7221 = vadd.f32 0.0, %v7220
        %v7222 = vpop.f32.mrb[0].mxu0
        %v7223 = vadd.f32 0.0, %v7222
        %7224 = vmatprep.mubr.f32.mxu0 0.0
        %7225 = vmatmul.mubr.f32.gmra.mrb[0].mxu0 %v6439
        %v7226 = vpop.f32.mrb[0].mxu0
        %v7227 = vadd.f32 0.0, %v7226
        %v7228 = vpop.f32.mrb[0].mxu0
        %v7229 = vadd.f32 0.0, %v7228
        %7230 = vmatprep.mubr.f32.mxu0 0.0
        %7231 = vmatmul.mubr.f32.gmra.mrb[0].mxu0 %v6442
        %v7232 = vpop.f32.mrb[0].mxu0
        %v7233 = vadd.f32 0.0, %v7232
        %v7234 = vpop.f32.mrb[0].mxu0
        %v7235 = vadd.f32 0.0, %v7234
        %7236 = vmatprep.mubr.f32.mxu0 0.0
        %7237 = vmatmul.mubr.f32.gmra.mrb[0].mxu0 %v6445
        %v7238 = vpop.f32.mrb[0].mxu0
        %v7239 = vadd.f32 0.0, %v7238
        %v7240 = vpop.f32.mrb[0].mxu0
        %v7241 = vadd.f32 0.0, %v7240
        %7242 = vmatprep.mubr.f32.mxu0 0.0
        %7243 = vmatmul.mubr.f32.gmra.mrb[0].mxu0 %v6448
        %v7244 = vpop.f32.mrb[0].mxu0
        %v7245 = vadd.f32 0.0, %v7244
        %v7246 = vpop.f32.mrb[0].mxu0
        %v7247 = vadd.f32 0.0, %v7246
        %7248 = vmatprep.mubr.f32.mxu0 0.0
        %7249 = vmatmul.mubr.f32.gmra.mrb[0].mxu0 %v6451
        %v7250 = vpop.f32.mrb[0].mxu0
        %v7251 = vadd.f32 0.0, %v7250
        %v7252 = vpop.f32.mrb[0].mxu0
        %v7253 = vadd.f32 0.0, %v7252
        %7254 = vmatprep.mubr.f32.mxu0 0.0
        %7255 = vmatmul.mubr.f32.gmra.mrb[0].mxu0 %v6454
        %v7256 = vpop.f32.mrb[0].mxu0
        %v7257 = vadd.f32 0.0, %v7256
        %v7258 = vpop.f32.mrb[0].mxu0
        %v7259 = vadd.f32 0.0, %v7258
        %7260 = vmatprep.mubr.f32.mxu0 0.0
        %7261 = vmatmul.mubr.f32.gmra.mrb[0].mxu0 %v6457
        %v7262 = vpop.f32.mrb[0].mxu0
        %v7263 = vadd.f32 0.0, %v7262
        %v7264 = vpop.f32.mrb[0].mxu0
        %v7265 = vadd.f32 0.0, %v7264
        %7266 = vmatprep.mubr.f32.mxu0 0.0
        %7267 = vmatmul.mubr.f32.gmra.mrb[0].mxu0 %v6460
        %v7268 = vpop.f32.mrb[0].mxu0
        %v7269 = vadd.f32 0.0, %v7268
        %v7270 = vpop.f32.mrb[0].mxu0
        %v7271 = vadd.f32 0.0, %v7270
        %7272 = vmatprep.mubr.f32.mxu0 0.0
        %7273 = vmatmul.mubr.f32.gmra.mrb[0].mxu0 %v6463
        %v7274 = vpop.f32.mrb[0].mxu0
        %v7275 = vadd.f32 0.0, %v7274
        %v7276 = vpop.f32.mrb[0].mxu0
        %v7277 = vadd.f32 0.0, %v7276
        %7278 = vmatprep.mubr.f32.mxu0 0.0
        %7279 = vmatmul.mubr.f32.gmra.mrb[0].mxu0 %v6466
        %v7280 = vpop.f32.mrb[0].mxu0
        %v7281 = vadd.f32 0.0, %v7280
        %v7282 = vpop.f32.mrb[0].mxu0
        %v7283 = vadd.f32 0.0, %v7282
        %7284 = vmatprep.mubr.f32.mxu0 0.0
        %7285 = vmatmul.mubr.f32.gmra.mrb[0].mxu0 %v6469
        %v7286 = vpop.f32.mrb[0].mxu0
        %v7287 = vadd.f32 0.0, %v7286
        %v7288 = vpop.f32.mrb[0].mxu0
        %v7289 = vadd.f32 0.0, %v7288
        %7290 = vmatprep.mubr.f32.mxu0 0.0
        %7291 = vmatmul.mubr.f32.gmra.mrb[0].mxu0 %v6472
        %v7292 = vpop.f32.mrb[0].mxu0
        %v7293 = vadd.f32 0.0, %v7292
        %v7294 = vpop.f32.mrb[0].mxu0
        %v7295 = vadd.f32 0.0, %v7294
        %7296 = vmatprep.mubr.f32.mxu0 0.0
        %7297 = vmatmul.mubr.f32.gmra.mrb[0].mxu0 %v6475
        %v7298 = vpop.f32.mrb[0].mxu0
        %v7299 = vadd.f32 0.0, %v7298
        %v7300 = vpop.f32.mrb[0].mxu0
        %v7301 = vadd.f32 0.0, %v7300
        %7302 = vmatprep.mubr.f32.mxu0 0.0
        %7303 = vmatmul.mubr.f32.gmra.mrb[0].mxu0 %v6478
        %v7304 = vpop.f32.mrb[0].mxu0
        %v7305 = vadd.f32 0.0, %v7304
        %v7306 = vpop.f32.mrb[0].mxu0
        %v7307 = vadd.f32 0.0, %v7306
        %7308 = vmatprep.mubr.f32.mxu0 0.0
        %7309 = vmatmul.mubr.f32.gmra.mrb[0].mxu0 %v6481
        %v7310 = vpop.f32.mrb[0].mxu0
        %v7311 = vadd.f32 0.0, %v7310
        %v7312 = vpop.f32.mrb[0].mxu0
        %v7313 = vadd.f32 0.0, %v7312
        %7314 = vmatprep.mubr.f32.mxu0 0.0
        %7315 = vmatmul.mubr.f32.gmra.mrb[0].mxu0 %v6484
        %v7316 = vpop.f32.mrb[0].mxu0
        %v7317 = vadd.f32 0.0, %v7316
        %v7318 = vpop.f32.mrb[0].mxu0
        %v7319 = vadd.f32 0.0, %v7318
        %7320 = vmatprep.mubr.f32.mxu0 0.0
        %7321 = vmatmul.mubr.f32.gmra.mrb[0].mxu0 %v6487
        %v7322 = vpop.f32.mrb[0].mxu0
        %v7323 = vadd.f32 0.0, %v7322
        %v7324 = vpop.f32.mrb[0].mxu0
        %v7325 = vadd.f32 0.0, %v7324
        %7326 = vmatprep.mubr.f32.mxu0 0.0
        %7327 = vmatmul.mubr.f32.gmra.mrb[0].mxu0 %v6490
        %v7328 = vpop.f32.mrb[0].mxu0
        %v7329 = vadd.f32 0.0, %v7328
        %v7330 = vpop.f32.mrb[0].mxu0
        %v7331 = vadd.f32 0.0, %v7330
        %7332 = vmatprep.mubr.f32.mxu0 0.0
        %7333 = vmatmul.mubr.f32.gmra.mrb[0].mxu0 %v6493
        %v7334 = vpop.f32.mrb[0].mxu0
        %v7335 = vadd.f32 0.0, %v7334
        %v7336 = vpop.f32.mrb[0].mxu0
        %v7337 = vadd.f32 0.0, %v7336
        %7338 = vmatprep.mubr.f32.mxu0 0.0
        %7339 = vmatmul.mubr.f32.gmra.mrb[0].mxu0 %v6496
        %v7340 = vpop.f32.mrb[0].mxu0
        %v7341 = vadd.f32 0.0, %v7340
        %v7342 = vpop.f32.mrb[0].mxu0
        %v7343 = vadd.f32 0.0, %v7342
        %7344 = vmatprep.mubr.f32.mxu0 0.0
        %7345 = vmatmul.mubr.f32.gmra.mrb[0].mxu0 %v6499
        %v7346 = vpop.f32.mrb[0].mxu0
        %v7347 = vadd.f32 0.0, %v7346
        %v7348 = vpop.f32.mrb[0].mxu0
        %v7349 = vadd.f32 0.0, %v7348
        %7350 = vmatprep.mubr.f32.mxu0 0.0
        %7351 = vmatmul.mubr.f32.gmra.mrb[0].mxu0 %v6502
        %v7352 = vpop.f32.mrb[0].mxu0
        %v7353 = vadd.f32 0.0, %v7352
        %v7354 = vpop.f32.mrb[0].mxu0
        %v7355 = vadd.f32 0.0, %v7354
        %7356 = vmatprep.mubr.f32.mxu0 0.0
        %7357 = vmatmul.mubr.f32.gmra.mrb[0].mxu0 %v6505
        %v7358 = vpop.f32.mrb[0].mxu0
        %v7359 = vadd.f32 0.0, %v7358
        %v7360 = vpop.f32.mrb[0].mxu0
        %v7361 = vadd.f32 0.0, %v7360
        %7362 = vmatprep.mubr.f32.mxu0 0.0
        %7363 = vmatmul.mubr.f32.gmra.mrb[0].mxu0 %v6508
        %v7364 = vpop.f32.mrb[0].mxu0
        %v7365 = vadd.f32 0.0, %v7364
        %v7366 = vpop.f32.mrb[0].mxu0
        %v7367 = vadd.f32 0.0, %v7366
        %7368 = vmatprep.mubr.f32.mxu0 0.0
        %7369 = vmatmul.mubr.f32.gmra.mrb[0].mxu0 %v6511
        %v7370 = vpop.f32.mrb[0].mxu0
        %v7371 = vadd.f32 0.0, %v7370
        %v7372 = vpop.f32.mrb[0].mxu0
        %v7373 = vadd.f32 0.0, %v7372
        %7374 = vmatprep.mubr.f32.mxu0 0.0
        %7375 = vmatmul.mubr.f32.gmra.mrb[0].mxu0 %v6514
        %v7376 = vpop.f32.mrb[0].mxu0
        %v7377 = vadd.f32 0.0, %v7376
        %v7378 = vpop.f32.mrb[0].mxu0
        %v7379 = vadd.f32 0.0, %v7378
        %7380 = vmatprep.mubr.f32.mxu0 0.0
        %7381 = vmatmul.mubr.f32.gmra.mrb[0].mxu0 %v6517
        %v7382 = vpop.f32.mrb[0].mxu0
        %v7383 = vadd.f32 0.0, %v7382
        %v7384 = vpop.f32.mrb[0].mxu0
        %v7385 = vadd.f32 0.0, %v7384
        %7386 = vmatprep.mubr.f32.mxu0 0.0
        %7387 = vmatmul.mubr.f32.gmra.mrb[0].mxu0 %v6520
        %v7388 = vpop.f32.mrb[0].mxu0
        %v7389 = vadd.f32 0.0, %v7388
        %v7390 = vpop.f32.mrb[0].mxu0
        %v7391 = vadd.f32 0.0, %v7390
        %7392 = vmatprep.mubr.f32.mxu0 0.0
        %7393 = vmatmul.mubr.f32.gmra.mrb[0].mxu0 %v6523
        %v7394 = vpop.f32.mrb[0].mxu0
        %v7395 = vadd.f32 0.0, %v7394
        %v7396 = vpop.f32.mrb[0].mxu0
        %v7397 = vadd.f32 0.0, %v7396
        %7398 = vmatprep.mubr.f32.mxu0 0.0
        %7399 = vmatmul.mubr.f32.gmra.mrb[0].mxu0 %v6526
        %v7400 = vpop.f32.mrb[0].mxu0
        %v7401 = vadd.f32 0.0, %v7400
        %v7402 = vpop.f32.mrb[0].mxu0
        %v7403 = vadd.f32 0.0, %v7402
        %7404 = vmatprep.mubr.f32.mxu0 0.0
        %7405 = vmatmul.mubr.f32.gmra.mrb[0].mxu0 %v6529
        %v7406 = vpop.f32.mrb[0].mxu0
        %v7407 = vadd.f32 0.0, %v7406
        %v7408 = vpop.f32.mrb[0].mxu0
        %v7409 = vadd.f32 0.0, %v7408
        %7410 = vmatprep.mubr.f32.mxu0 0.0
        %7411 = vmatmul.mubr.f32.gmra.mrb[0].mxu0 %v6532
        %v7412 = vpop.f32.mrb[0].mxu0
        %v7413 = vadd.f32 0.0, %v7412
        %v7414 = vpop.f32.mrb[0].mxu0
        %v7415 = vadd.f32 0.0, %v7414
        %7416 = vmatprep.mubr.f32.mxu0 0.0
        %7417 = vmatmul.mubr.f32.gmra.mrb[0].mxu0 %v6535
        %v7418 = vpop.f32.mrb[0].mxu0
        %v7419 = vadd.f32 0.0, %v7418
        %v7420 = vpop.f32.mrb[0].mxu0
        %v7421 = vadd.f32 0.0, %v7420
        %7422 = vmatprep.mubr.f32.mxu0 0.0
        %7423 = vmatmul.mubr.f32.gmra.mrb[0].mxu0 %v6538
        %v7424 = vpop.f32.mrb[0].mxu0
        %v7425 = vadd.f32 0.0, %v7424
        %v7426 = vpop.f32.mrb[0].mxu0
        %v7427 = vadd.f32 0.0, %v7426
        %7428 = vmatprep.mubr.f32.mxu0 0.0
        %7429 = vmatmul.mubr.f32.gmra.mrb[0].mxu0 %v6541
        %v7430 = vpop.f32.mrb[0].mxu0
        %v7431 = vadd.f32 0.0, %v7430
        %v7432 = vpop.f32.mrb[0].mxu0
        %v7433 = vadd.f32 0.0, %v7432
        %7434 = vmatprep.mubr.f32.mxu0 0.0
        %7435 = vmatmul.mubr.f32.gmra.mrb[0].mxu0 %v6544
        %v7436 = vpop.f32.mrb[0].mxu0
        %v7437 = vadd.f32 0.0, %v7436
        %v7438 = vpop.f32.mrb[0].mxu0
        %v7439 = vadd.f32 0.0, %v7438
        %7440 = vmatprep.mubr.f32.mxu0 0.0
        %7441 = vmatmul.mubr.f32.gmra.mrb[0].mxu0 %v6547
        %v7442 = vpop.f32.mrb[0].mxu0
        %v7443 = vadd.f32 0.0, %v7442
        %v7444 = vpop.f32.mrb[0].mxu0
        %v7445 = vadd.f32 0.0, %v7444
        %7446 = vdwg.mxu0
        %s7447 = scalar_lea.vmem %s261, 8192 [#allocation2]
        %7448 = vst [vmem:[%s7447] sm:$0xff] %v6616
        %7449 = vst [vmem:[%s7447 + $0x8] sm:$0xff] %v6618
        %7450 = vst [vmem:[%s7447 + $0x10] sm:$0xff] %v7065
        %7451 = vst [vmem:[%s7447 + $0x18] sm:$0xff] %v7067
        %7452 = vst [vmem:[%s7447 + $0x20] sm:$0xff] %v6622
        %7453 = vst [vmem:[%s7447 + $0x28] sm:$0xff] %v6624
        %7454 = vst [vmem:[%s7447 + $0x30] sm:$0xff] %v7071
        %7455 = vst [vmem:[%s7447 + $0x38] sm:$0xff] %v7073
        %7456 = vst [vmem:[%s7447 + $0x40] sm:$0xff] %v6628
        %7457 = vst [vmem:[%s7447 + $0x48] sm:$0xff] %v6630
        %7458 = vst [vmem:[%s7447 + $0x50] sm:$0xff] %v7077
        %7459 = vst [vmem:[%s7447 + $0x58] sm:$0xff] %v7079
        %7460 = vst [vmem:[%s7447 + $0x60] sm:$0xff] %v6634
        %7461 = vst [vmem:[%s7447 + $0x68] sm:$0xff] %v6636
        %7462 = vst [vmem:[%s7447 + $0x70] sm:$0xff] %v7083
        %7463 = vst [vmem:[%s7447 + $0x78] sm:$0xff] %v7085
        %7464 = vst [vmem:[%s7447 + $0x80] sm:$0xff] %v6640
        %7465 = vst [vmem:[%s7447 + $0x88] sm:$0xff] %v6642
        %7466 = vst [vmem:[%s7447 + $0x90] sm:$0xff] %v7089
        %7467 = vst [vmem:[%s7447 + $0x98] sm:$0xff] %v7091
        %7468 = vst [vmem:[%s7447 + $0xa0] sm:$0xff] %v6646
        %7469 = vst [vmem:[%s7447 + $0xa8] sm:$0xff] %v6648
        %7470 = vst [vmem:[%s7447 + $0xb0] sm:$0xff] %v7095
        %7471 = vst [vmem:[%s7447 + $0xb8] sm:$0xff] %v7097
        %7472 = vst [vmem:[%s7447 + $0xc0] sm:$0xff] %v6652
        %7473 = vst [vmem:[%s7447 + $0xc8] sm:$0xff] %v6654
        %7474 = vst [vmem:[%s7447 + $0xd0] sm:$0xff] %v7101
        %7475 = vst [vmem:[%s7447 + $0xd8] sm:$0xff] %v7103
        %7476 = vst [vmem:[%s7447 + $0xe0] sm:$0xff] %v6658
        %7477 = vst [vmem:[%s7447 + $0xe8] sm:$0xff] %v6660
        %7478 = vst [vmem:[%s7447 + $0xf0] sm:$0xff] %v7107
        %7479 = vst [vmem:[%s7447 + $0xf8] sm:$0xff] %v7109
        %7480 = vst [vmem:[%s7447 + $0x100] sm:$0xff] %v6664
        %7481 = vst [vmem:[%s7447 + $0x108] sm:$0xff] %v6666
        %7482 = vst [vmem:[%s7447 + $0x110] sm:$0xff] %v7113
        %7483 = vst [vmem:[%s7447 + $0x118] sm:$0xff] %v7115
        %7484 = vst [vmem:[%s7447 + $0x120] sm:$0xff] %v6670
        %7485 = vst [vmem:[%s7447 + $0x128] sm:$0xff] %v6672
        %7486 = vst [vmem:[%s7447 + $0x130] sm:$0xff] %v7119
        %7487 = vst [vmem:[%s7447 + $0x138] sm:$0xff] %v7121
        %7488 = vst [vmem:[%s7447 + $0x140] sm:$0xff] %v6676
        %7489 = vst [vmem:[%s7447 + $0x148] sm:$0xff] %v6678
        %7490 = vst [vmem:[%s7447 + $0x150] sm:$0xff] %v7125
        %7491 = vst [vmem:[%s7447 + $0x158] sm:$0xff] %v7127
        %7492 = vst [vmem:[%s7447 + $0x160] sm:$0xff] %v6682
        %7493 = vst [vmem:[%s7447 + $0x168] sm:$0xff] %v6684
        %7494 = vst [vmem:[%s7447 + $0x170] sm:$0xff] %v7131
        %7495 = vst [vmem:[%s7447 + $0x178] sm:$0xff] %v7133
        %7496 = vst [vmem:[%s7447 + $0x180] sm:$0xff] %v6688
        %7497 = vst [vmem:[%s7447 + $0x188] sm:$0xff] %v6690
        %7498 = vst [vmem:[%s7447 + $0x190] sm:$0xff] %v7137
        %7499 = vst [vmem:[%s7447 + $0x198] sm:$0xff] %v7139
        %7500 = vst [vmem:[%s7447 + $0x1a0] sm:$0xff] %v6694
        %7501 = vst [vmem:[%s7447 + $0x1a8] sm:$0xff] %v6696
        %7502 = vst [vmem:[%s7447 + $0x1b0] sm:$0xff] %v7143
        %7503 = vst [vmem:[%s7447 + $0x1b8] sm:$0xff] %v7145
        %7504 = vst [vmem:[%s7447 + $0x1c0] sm:$0xff] %v6700
        %7505 = vst [vmem:[%s7447 + $0x1c8] sm:$0xff] %v6702
        %7506 = vst [vmem:[%s7447 + $0x1d0] sm:$0xff] %v7149
        %7507 = vst [vmem:[%s7447 + $0x1d8] sm:$0xff] %v7151
        %7508 = vst [vmem:[%s7447 + $0x1e0] sm:$0xff] %v6706
        %7509 = vst [vmem:[%s7447 + $0x1e8] sm:$0xff] %v6708
        %7510 = vst [vmem:[%s7447 + $0x1f0] sm:$0xff] %v7155
        %7511 = vst [vmem:[%s7447 + $0x1f8] sm:$0xff] %v7157
        %7512 = vst [vmem:[%s7447 + $0x200] sm:$0xff] %v6712
        %7513 = vst [vmem:[%s7447 + $0x208] sm:$0xff] %v6714
        %7514 = vst [vmem:[%s7447 + $0x210] sm:$0xff] %v7161
        %7515 = vst [vmem:[%s7447 + $0x218] sm:$0xff] %v7163
        %7516 = vst [vmem:[%s7447 + $0x220] sm:$0xff] %v6718
        %7517 = vst [vmem:[%s7447 + $0x228] sm:$0xff] %v6720
        %7518 = vst [vmem:[%s7447 + $0x230] sm:$0xff] %v7167
        %7519 = vst [vmem:[%s7447 + $0x238] sm:$0xff] %v7169
        %7520 = vst [vmem:[%s7447 + $0x240] sm:$0xff] %v6724
        %7521 = vst [vmem:[%s7447 + $0x248] sm:$0xff] %v6726
        %7522 = vst [vmem:[%s7447 + $0x250] sm:$0xff] %v7173
        %7523 = vst [vmem:[%s7447 + $0x258] sm:$0xff] %v7175
        %7524 = vst [vmem:[%s7447 + $0x260] sm:$0xff] %v6730
        %7525 = vst [vmem:[%s7447 + $0x268] sm:$0xff] %v6732
        %7526 = vst [vmem:[%s7447 + $0x270] sm:$0xff] %v7179
        %7527 = vst [vmem:[%s7447 + $0x278] sm:$0xff] %v7181
        %7528 = vst [vmem:[%s7447 + $0x280] sm:$0xff] %v6736
        %7529 = vst [vmem:[%s7447 + $0x288] sm:$0xff] %v6738
        %7530 = vst [vmem:[%s7447 + $0x290] sm:$0xff] %v7185
        %7531 = vst [vmem:[%s7447 + $0x298] sm:$0xff] %v7187
        %7532 = vst [vmem:[%s7447 + $0x2a0] sm:$0xff] %v6742
        %7533 = vst [vmem:[%s7447 + $0x2a8] sm:$0xff] %v6744
        %7534 = vst [vmem:[%s7447 + $0x2b0] sm:$0xff] %v7191
        %7535 = vst [vmem:[%s7447 + $0x2b8] sm:$0xff] %v7193
        %7536 = vst [vmem:[%s7447 + $0x2c0] sm:$0xff] %v6748
        %7537 = vst [vmem:[%s7447 + $0x2c8] sm:$0xff] %v6750
        %7538 = vst [vmem:[%s7447 + $0x2d0] sm:$0xff] %v7197
        %7539 = vst [vmem:[%s7447 + $0x2d8] sm:$0xff] %v7199
        %7540 = vst [vmem:[%s7447 + $0x2e0] sm:$0xff] %v6754
        %7541 = vst [vmem:[%s7447 + $0x2e8] sm:$0xff] %v6756
        %7542 = vst [vmem:[%s7447 + $0x2f0] sm:$0xff] %v7203
        %7543 = vst [vmem:[%s7447 + $0x2f8] sm:$0xff] %v7205
        %7544 = vst [vmem:[%s7447 + $0x300] sm:$0xff] %v6760
        %7545 = vst [vmem:[%s7447 + $0x308] sm:$0xff] %v6762
        %7546 = vst [vmem:[%s7447 + $0x310] sm:$0xff] %v7209
        %7547 = vst [vmem:[%s7447 + $0x318] sm:$0xff] %v7211
        %7548 = vst [vmem:[%s7447 + $0x320] sm:$0xff] %v6766
        %7549 = vst [vmem:[%s7447 + $0x328] sm:$0xff] %v6768
        %7550 = vst [vmem:[%s7447 + $0x330] sm:$0xff] %v7215
        %7551 = vst [vmem:[%s7447 + $0x338] sm:$0xff] %v7217
        %7552 = vst [vmem:[%s7447 + $0x340] sm:$0xff] %v6772
        %7553 = vst [vmem:[%s7447 + $0x348] sm:$0xff] %v6774
        %7554 = vst [vmem:[%s7447 + $0x350] sm:$0xff] %v7221
        %7555 = vst [vmem:[%s7447 + $0x358] sm:$0xff] %v7223
        %7556 = vst [vmem:[%s7447 + $0x360] sm:$0xff] %v6778
        %7557 = vst [vmem:[%s7447 + $0x368] sm:$0xff] %v6780
        %7558 = vst [vmem:[%s7447 + $0x370] sm:$0xff] %v7227
        %7559 = vst [vmem:[%s7447 + $0x378] sm:$0xff] %v7229
        %7560 = vst [vmem:[%s7447 + $0x380] sm:$0xff] %v6784
        %7561 = vst [vmem:[%s7447 + $0x388] sm:$0xff] %v6786
        %7562 = vst [vmem:[%s7447 + $0x390] sm:$0xff] %v7233
        %7563 = vst [vmem:[%s7447 + $0x398] sm:$0xff] %v7235
        %7564 = vst [vmem:[%s7447 + $0x3a0] sm:$0xff] %v6790
        %7565 = vst [vmem:[%s7447 + $0x3a8] sm:$0xff] %v6792
        %7566 = vst [vmem:[%s7447 + $0x3b0] sm:$0xff] %v7239
        %7567 = vst [vmem:[%s7447 + $0x3b8] sm:$0xff] %v7241
        %7568 = vst [vmem:[%s7447 + $0x3c0] sm:$0xff] %v6796
        %7569 = vst [vmem:[%s7447 + $0x3c8] sm:$0xff] %v6798
        %7570 = vst [vmem:[%s7447 + $0x3d0] sm:$0xff] %v7245
        %7571 = vst [vmem:[%s7447 + $0x3d8] sm:$0xff] %v7247
        %7572 = vst [vmem:[%s7447 + $0x3e0] sm:$0xff] %v6802
        %7573 = vst [vmem:[%s7447 + $0x3e8] sm:$0xff] %v6804
        %7574 = vst [vmem:[%s7447 + $0x3f0] sm:$0xff] %v7251
        %7575 = vst [vmem:[%s7447 + $0x3f8] sm:$0xff] %v7253
        %7576 = vst [vmem:[%s7447 + $0x400] sm:$0xff] %v6808
        %7577 = vst [vmem:[%s7447 + $0x408] sm:$0xff] %v6810
        %7578 = vst [vmem:[%s7447 + $0x410] sm:$0xff] %v7257
        %7579 = vst [vmem:[%s7447 + $0x418] sm:$0xff] %v7259
        %7580 = vst [vmem:[%s7447 + $0x420] sm:$0xff] %v6814
        %7581 = vst [vmem:[%s7447 + $0x428] sm:$0xff] %v6816
        %7582 = vst [vmem:[%s7447 + $0x430] sm:$0xff] %v7263
        %7583 = vst [vmem:[%s7447 + $0x438] sm:$0xff] %v7265
        %7584 = vst [vmem:[%s7447 + $0x440] sm:$0xff] %v6820
        %7585 = vst [vmem:[%s7447 + $0x448] sm:$0xff] %v6822
        %7586 = vst [vmem:[%s7447 + $0x450] sm:$0xff] %v7269
        %7587 = vst [vmem:[%s7447 + $0x458] sm:$0xff] %v7271
        %7588 = vst [vmem:[%s7447 + $0x460] sm:$0xff] %v6826
        %7589 = vst [vmem:[%s7447 + $0x468] sm:$0xff] %v6828
        %7590 = vst [vmem:[%s7447 + $0x470] sm:$0xff] %v7275
        %7591 = vst [vmem:[%s7447 + $0x478] sm:$0xff] %v7277
        %7592 = vst [vmem:[%s7447 + $0x480] sm:$0xff] %v6832
        %7593 = vst [vmem:[%s7447 + $0x488] sm:$0xff] %v6834
        %7594 = vst [vmem:[%s7447 + $0x490] sm:$0xff] %v7281
        %7595 = vst [vmem:[%s7447 + $0x498] sm:$0xff] %v7283
        %7596 = vst [vmem:[%s7447 + $0x4a0] sm:$0xff] %v6838
        %7597 = vst [vmem:[%s7447 + $0x4a8] sm:$0xff] %v6840
        %7598 = vst [vmem:[%s7447 + $0x4b0] sm:$0xff] %v7287
        %7599 = vst [vmem:[%s7447 + $0x4b8] sm:$0xff] %v7289
        %7600 = vst [vmem:[%s7447 + $0x4c0] sm:$0xff] %v6844
        %7601 = vst [vmem:[%s7447 + $0x4c8] sm:$0xff] %v6846
        %7602 = vst [vmem:[%s7447 + $0x4d0] sm:$0xff] %v7293
        %7603 = vst [vmem:[%s7447 + $0x4d8] sm:$0xff] %v7295
        %7604 = vst [vmem:[%s7447 + $0x4e0] sm:$0xff] %v6850
        %7605 = vst [vmem:[%s7447 + $0x4e8] sm:$0xff] %v6852
        %7606 = vst [vmem:[%s7447 + $0x4f0] sm:$0xff] %v7299
        %7607 = vst [vmem:[%s7447 + $0x4f8] sm:$0xff] %v7301
        %7608 = vst [vmem:[%s7447 + $0x500] sm:$0xff] %v6856
        %7609 = vst [vmem:[%s7447 + $0x508] sm:$0xff] %v6858
        %7610 = vst [vmem:[%s7447 + $0x510] sm:$0xff] %v7305
        %7611 = vst [vmem:[%s7447 + $0x518] sm:$0xff] %v7307
        %7612 = vst [vmem:[%s7447 + $0x520] sm:$0xff] %v6862
        %7613 = vst [vmem:[%s7447 + $0x528] sm:$0xff] %v6864
        %7614 = vst [vmem:[%s7447 + $0x530] sm:$0xff] %v7311
        %7615 = vst [vmem:[%s7447 + $0x538] sm:$0xff] %v7313
        %7616 = vst [vmem:[%s7447 + $0x540] sm:$0xff] %v6868
        %7617 = vst [vmem:[%s7447 + $0x548] sm:$0xff] %v6870
        %7618 = vst [vmem:[%s7447 + $0x550] sm:$0xff] %v7317
        %7619 = vst [vmem:[%s7447 + $0x558] sm:$0xff] %v7319
        %7620 = vst [vmem:[%s7447 + $0x560] sm:$0xff] %v6874
        %7621 = vst [vmem:[%s7447 + $0x568] sm:$0xff] %v6876
        %7622 = vst [vmem:[%s7447 + $0x570] sm:$0xff] %v7323
        %7623 = vst [vmem:[%s7447 + $0x578] sm:$0xff] %v7325
        %7624 = vst [vmem:[%s7447 + $0x580] sm:$0xff] %v6880
        %7625 = vst [vmem:[%s7447 + $0x588] sm:$0xff] %v6882
        %7626 = vst [vmem:[%s7447 + $0x590] sm:$0xff] %v7329
        %7627 = vst [vmem:[%s7447 + $0x598] sm:$0xff] %v7331
        %7628 = vst [vmem:[%s7447 + $0x5a0] sm:$0xff] %v6886
        %7629 = vst [vmem:[%s7447 + $0x5a8] sm:$0xff] %v6888
        %7630 = vst [vmem:[%s7447 + $0x5b0] sm:$0xff] %v7335
        %7631 = vst [vmem:[%s7447 + $0x5b8] sm:$0xff] %v7337
        %7632 = vst [vmem:[%s7447 + $0x5c0] sm:$0xff] %v6892
        %7633 = vst [vmem:[%s7447 + $0x5c8] sm:$0xff] %v6894
        %7634 = vst [vmem:[%s7447 + $0x5d0] sm:$0xff] %v7341
        %7635 = vst [vmem:[%s7447 + $0x5d8] sm:$0xff] %v7343
        %7636 = vst [vmem:[%s7447 + $0x5e0] sm:$0xff] %v6898
        %7637 = vst [vmem:[%s7447 + $0x5e8] sm:$0xff] %v6900
        %7638 = vst [vmem:[%s7447 + $0x5f0] sm:$0xff] %v7347
        %7639 = vst [vmem:[%s7447 + $0x5f8] sm:$0xff] %v7349
        %7640 = vst [vmem:[%s7447 + $0x600] sm:$0xff] %v6904
        %7641 = vst [vmem:[%s7447 + $0x608] sm:$0xff] %v6906
        %7642 = vst [vmem:[%s7447 + $0x610] sm:$0xff] %v7353
        %7643 = vst [vmem:[%s7447 + $0x618] sm:$0xff] %v7355
        %7644 = vst [vmem:[%s7447 + $0x620] sm:$0xff] %v6910
        %7645 = vst [vmem:[%s7447 + $0x628] sm:$0xff] %v6912
        %7646 = vst [vmem:[%s7447 + $0x630] sm:$0xff] %v7359
        %7647 = vst [vmem:[%s7447 + $0x638] sm:$0xff] %v7361
        %7648 = vst [vmem:[%s7447 + $0x640] sm:$0xff] %v6916
        %7649 = vst [vmem:[%s7447 + $0x648] sm:$0xff] %v6918
        %7650 = vst [vmem:[%s7447 + $0x650] sm:$0xff] %v7365
        %7651 = vst [vmem:[%s7447 + $0x658] sm:$0xff] %v7367
        %7652 = vst [vmem:[%s7447 + $0x660] sm:$0xff] %v6922
        %7653 = vst [vmem:[%s7447 + $0x668] sm:$0xff] %v6924
        %7654 = vst [vmem:[%s7447 + $0x670] sm:$0xff] %v7371
        %7655 = vst [vmem:[%s7447 + $0x678] sm:$0xff] %v7373
        %7656 = vst [vmem:[%s7447 + $0x680] sm:$0xff] %v6928
        %7657 = vst [vmem:[%s7447 + $0x688] sm:$0xff] %v6930
        %7658 = vst [vmem:[%s7447 + $0x690] sm:$0xff] %v7377
        %7659 = vst [vmem:[%s7447 + $0x698] sm:$0xff] %v7379
        %7660 = vst [vmem:[%s7447 + $0x6a0] sm:$0xff] %v6934
        %7661 = vst [vmem:[%s7447 + $0x6a8] sm:$0xff] %v6936
        %7662 = vst [vmem:[%s7447 + $0x6b0] sm:$0xff] %v7383
        %7663 = vst [vmem:[%s7447 + $0x6b8] sm:$0xff] %v7385
        %7664 = vst [vmem:[%s7447 + $0x6c0] sm:$0xff] %v6940
        %7665 = vst [vmem:[%s7447 + $0x6c8] sm:$0xff] %v6942
        %7666 = vst [vmem:[%s7447 + $0x6d0] sm:$0xff] %v7389
        %7667 = vst [vmem:[%s7447 + $0x6d8] sm:$0xff] %v7391
        %7668 = vst [vmem:[%s7447 + $0x6e0] sm:$0xff] %v6946
        %7669 = vst [vmem:[%s7447 + $0x6e8] sm:$0xff] %v6948
        %7670 = vst [vmem:[%s7447 + $0x6f0] sm:$0xff] %v7395
        %7671 = vst [vmem:[%s7447 + $0x6f8] sm:$0xff] %v7397
        %7672 = vst [vmem:[%s7447 + $0x700] sm:$0xff] %v6952
        %7673 = vst [vmem:[%s7447 + $0x708] sm:$0xff] %v6954
        %7674 = vst [vmem:[%s7447 + $0x710] sm:$0xff] %v7401
        %7675 = vst [vmem:[%s7447 + $0x718] sm:$0xff] %v7403
        %7676 = vst [vmem:[%s7447 + $0x720] sm:$0xff] %v6958
        %7677 = vst [vmem:[%s7447 + $0x728] sm:$0xff] %v6960
        %7678 = vst [vmem:[%s7447 + $0x730] sm:$0xff] %v7407
        %7679 = vst [vmem:[%s7447 + $0x738] sm:$0xff] %v7409
        %7680 = vst [vmem:[%s7447 + $0x740] sm:$0xff] %v6964
        %7681 = vst [vmem:[%s7447 + $0x748] sm:$0xff] %v6966
        %7682 = vst [vmem:[%s7447 + $0x750] sm:$0xff] %v7413
        %7683 = vst [vmem:[%s7447 + $0x758] sm:$0xff] %v7415
        %7684 = vst [vmem:[%s7447 + $0x760] sm:$0xff] %v6970
        %7685 = vst [vmem:[%s7447 + $0x768] sm:$0xff] %v6972
        %7686 = vst [vmem:[%s7447 + $0x770] sm:$0xff] %v7419
        %7687 = vst [vmem:[%s7447 + $0x778] sm:$0xff] %v7421
        %7688 = vst [vmem:[%s7447 + $0x780] sm:$0xff] %v6976
        %7689 = vst [vmem:[%s7447 + $0x788] sm:$0xff] %v6978
        %7690 = vst [vmem:[%s7447 + $0x790] sm:$0xff] %v7425
        %7691 = vst [vmem:[%s7447 + $0x798] sm:$0xff] %v7427
        %7692 = vst [vmem:[%s7447 + $0x7a0] sm:$0xff] %v6982
        %7693 = vst [vmem:[%s7447 + $0x7a8] sm:$0xff] %v6984
        %7694 = vst [vmem:[%s7447 + $0x7b0] sm:$0xff] %v7431
        %7695 = vst [vmem:[%s7447 + $0x7b8] sm:$0xff] %v7433
        %7696 = vst [vmem:[%s7447 + $0x7c0] sm:$0xff] %v6988
        %7697 = vst [vmem:[%s7447 + $0x7c8] sm:$0xff] %v6990
        %7698 = vst [vmem:[%s7447 + $0x7d0] sm:$0xff] %v7437
        %7699 = vst [vmem:[%s7447 + $0x7d8] sm:$0xff] %v7439
        %7700 = vst [vmem:[%s7447 + $0x7e0] sm:$0xff] %v6994
        %7701 = vst [vmem:[%s7447 + $0x7e8] sm:$0xff] %v6996
        %7702 = vst [vmem:[%s7447 + $0x7f0] sm:$0xff] %v7443
        %7703 = vst [vmem:[%s7447 + $0x7f8] sm:$0xff] %v7445
        %s7704 = sand.u32 %s161, 1
        %s7705 = scalar_lea.sflag [#allocation3], %s7704
        %s7706 = sand.u32 %s161, 1
        %s7707 = smul.addr %s7706, 10240
        %s7708 = scalar_lea.vmem [#allocation2], %s7707
        // Predicated region
        $region41: #{custom_dpt_forward.3} parent=39 // pred_check
          %p7709 = pneg %p171
        $region42: #{custom_dpt_forward.3} parent=39 // pred_check_branch
          %7711 = sbr.rel (%p7709) target = $region44
        $region43: #{custom_dpt_forward.3} parent=39 // pred_region
          %s7712 = smul.u32 5, %s24
          %s7714 = ssub.s32 163840, 163840
          %7715 = vsyncadd %s7705, %s7714
          %s7716 = smul.addr %s7712, 256
          %s7717 = smul.addr %s23, 3840
          %s7718 = sadd.s32 %s7716, %s7717
          %s7719 = smul.addr %s7718, 128
          %s7720 = scalar_lea.hbm %s5, %s7719
          %s7721 = sshll.u32 %s7708, 4
          %s7722 = int_to_ptr.vmem [resolvable:$true] %s7721
          %7727 = dma.vmem_to_hbm [thread:$0]  %s7722, 163840, %s7720, %s7705, 512, 512, 32
        $region44: #{custom_dpt_forward.3} parent=39 // pred_fallthru
          _
      $region40: #{custom_dpt_forward.3} parent=5 // pred_fallthru
        _
      %p7728 = scmp.le.s32.totalorder 2, %s14
      // Predicated region
      $region45: #{custom_dpt_forward.3} parent=5 // pred_check
        %p7729 = pneg %p7728
      $region46: #{custom_dpt_forward.3} parent=5 // pred_check_branch
        %7731 = sbr.rel (%p7729) target = $region48
      $region47: #{custom_dpt_forward.3} parent=5 // pred_region
        %s7732 = ssub.s32 %s14, 2
        // Predicated region
        $region49: #{custom_dpt_forward.3} parent=47 // pred_check
          %p7733 = pneg %p177
        $region50: #{custom_dpt_forward.3} parent=47 // pred_check_branch
          %7735 = sbr.rel (%p7733) target = $region52
        $region51: #{custom_dpt_forward.3} parent=47 // pred_region
          %s7736 = sand.u32 %s162, 1
          %s7737 = scalar_lea.sflag [#allocation3], %s7736
          %s7738 = sand.u32 %s162, 1
          %s7739 = smul.addr %s7738, 10240
          %s7740 = scalar_lea.vmem [#allocation2], %s7739
          %7741 = dma.done %s7737, 163840
        $region52: #{custom_dpt_forward.3} parent=47 // pred_fallthru
          _
      $region48: #{custom_dpt_forward.3} parent=5 // pred_fallthru
        _
    $region6: #{custom_dpt_forward.3} parent=1 // loop_footer
      %s18 = sadd.s32 1, %s14
    $region7: #{custom_dpt_forward.3} parent=1 // loop_footer_branch
      %13 = sbr.rel target = $region3
    $region8: #{custom_dpt_forward.3} parent=1 // loop_exit
      _
    %7742 = vsyncpa [#allocation3], 1
    %s7743 = scalar_lea.sflag [#allocation3], 1
    %7744 = vsyncpa %s7743, 1

</llo_original>
